<compile_context>
chip_gen: v5e
topology: v5e:2x2
jax: 0.10.0
libtpu: 0.0.40
codegen_flags: <defaults>
</compile_context>

<pallas_src>
import math
from functools import partial

import jax
import jax.numpy as jnp
from jax.experimental import pallas as pl
from jax.experimental.pallas import tpu as pltpu


_BLOCK_KEYS = (
    "ln1_g", "ln1_b", "wq1", "wk1", "wv1", "wo1", "bo1",
    "ln2_g", "ln2_b", "wq2", "wk2", "wv2", "wo2", "bo2",
    "ln3_g", "ln3_b", "ff_wa", "ff_ba", "ff_wg", "ff_bg", "ff_w2", "ff_b2",
)


# ------------------------------ in-kernel helpers ----------------------------


def _layernorm(x, g, b, eps):
    mu = jnp.mean(x, axis=-1, keepdims=True)
    xc = x - mu
    var = jnp.mean(xc * xc, axis=-1, keepdims=True)
    return xc * jax.lax.rsqrt(var + eps) * g + b


def _gelu_exact(x):
    # matches torch F.gelu default (erf form)
    return 0.5 * x * (1.0 + jax.lax.erf(x * (1.0 / math.sqrt(2.0))))


def _attention(hn_bf, ctx_bf, wq_ref, wk_ref, wv_ref, wo_ref, bo_ref, residual,
               *, heads, dim_head, tq):
    """Multi-head attention with fused lane-dense projections + q-row tiling."""
    n = hn_bf.shape[0]
    scale = 1.0 / math.sqrt(dim_head)
    wq, wo, bo = wq_ref[...], wo_ref[...], bo_ref[...]
    # K/V projected once for the full (self- or cross-) context, kept bf16 only.
    k = jnp.dot(ctx_bf, wk_ref[...],
                preferred_element_type=jnp.float32).astype(jnp.bfloat16)
    v = jnp.dot(ctx_bf, wv_ref[...],
                preferred_element_type=jnp.float32).astype(jnp.bfloat16)
    out_chunks = []
    for i in range(n // tq):
        rows = slice(i * tq, (i + 1) * tq)
        # scale folded into q (tq, inner) instead of the (tq, M) score tensor.
        q = (jnp.dot(hn_bf[rows, :], wq, preferred_element_type=jnp.float32)
             * scale).astype(jnp.bfloat16)
        head_outs = []
        for hh in range(heads):
            cols = slice(hh * dim_head, (hh + 1) * dim_head)
            s = jax.lax.dot_general(q[:, cols], k[:, cols],
                                    (((1,), (1,)), ((), ())),
                                    preferred_element_type=jnp.float32)  # (tq, M)
            mx = jnp.max(s, axis=-1, keepdims=True)
            p = jnp.exp(s - mx)
            l = jnp.sum(p, axis=-1, keepdims=True)
            o = jnp.dot(p.astype(jnp.bfloat16), v[:, cols],
                        preferred_element_type=jnp.float32)              # (tq, dh)
            head_outs.append(o * pl.reciprocal(l, approx=True))
        attn = jnp.concatenate(head_outs, axis=-1).astype(jnp.bfloat16)  # (tq, inner)
        # single lane-dense Wo matmul also performs the head reduction.
        proj = jnp.dot(attn, wo, preferred_element_type=jnp.float32)     # (tq, D)
        out_chunks.append(proj + bo + residual[rows, :])
    return out_chunks[0] if len(out_chunks) == 1 else jnp.concatenate(out_chunks, axis=0)


def _geglu_ff(hn_bf, wa_ref, ba_ref, wg_ref, bg_ref, w2_ref, b2_ref, residual, *, tq):
    n = hn_bf.shape[0]
    wa, ba = wa_ref[...], ba_ref[...]
    wg, bg = wg_ref[...], bg_ref[...]
    w2, b2 = w2_ref[...], b2_ref[...]
    out_chunks = []
    for i in range(n // tq):
        rows = slice(i * tq, (i + 1) * tq)
        xc = hn_bf[rows, :]
        a = jnp.dot(xc, wa, preferred_element_type=jnp.float32) + ba
        g = jnp.dot(xc, wg, preferred_element_type=jnp.float32) + bg
        hidden = (a * _gelu_exact(g)).astype(jnp.bfloat16)
        out_chunks.append(jnp.dot(hidden, w2, preferred_element_type=jnp.float32)
                          + b2 + residual[rows, :])
    return out_chunks[0] if len(out_chunks) == 1 else jnp.concatenate(out_chunks, axis=0)


# ------------------------------- fused kernel --------------------------------


def fused_kernel(*refs, depth, heads, dim_head, eps_gn, eps_ln, has_context, tq):
    it = iter(refs)
    x_ref = next(it)                                   # (1, C, HW), NCHW layout
    ctx_ref = next(it) if has_context else None        # (1, M, Dc)
    gn_g_ref, gn_b_ref, gsel_ref = next(it), next(it), next(it)
    w_in_ref, b_in_ref = next(it), next(it)
    blocks = [tuple(next(it) for _ in range(len(_BLOCK_KEYS)))
              for _ in range(depth)]
    w_out_ref, b_out_ref = next(it), next(it)
    o_ref = next(it)                                   # (1, C, HW)

    # NCHW tile -> sequence-major (HW, C) with one in-kernel XLU transpose
    # (no wrapper-side HBM transpose passes).
    x_in = jnp.transpose(x_ref[0])                     # (HW, C) f32
    hw, c = x_in.shape
    gsel = gsel_ref[...]                               # (G, C) one-hot reduce
    cg = c // gsel.shape[0]
    inv_count = 1.0 / (hw * cg)

    # --- GroupNorm(32, C) with two-pass statistics + proj_in (1x1 conv) -----
    ch_sum = jnp.sum(x_in, axis=0, keepdims=True)                      # (1, C)
    grp_sum = jax.lax.dot_general(ch_sum, gsel, (((1,), (1,)), ((), ())),
                                  preferred_element_type=jnp.float32)  # (1, G)
    mean_c = jnp.dot(grp_sum, gsel,
                     preferred_element_type=jnp.float32) * inv_count   # (1, C)
    xc = x_in - mean_c
    ch_sq = jnp.sum(xc * xc, axis=0, keepdims=True)
    grp_sq = jax.lax.dot_general(ch_sq, gsel, (((1,), (1,)), ((), ())),
                                 preferred_element_type=jnp.float32)
    var_c = jnp.dot(grp_sq, gsel,
                    preferred_element_type=jnp.float32) * inv_count
    xn = xc * jax.lax.rsqrt(var_c + eps_gn) * gn_g_ref[...] + gn_b_ref[...]
    h = (jnp.dot(xn.astype(jnp.bfloat16), w_in_ref[...],
                 preferred_element_type=jnp.float32) + b_in_ref[...])  # (HW, D)

    ctx_bf = ctx_ref[0].astype(jnp.bfloat16) if has_context else None

    # --- transformer blocks (statically unrolled over depth) ----------------
    for blk in blocks:
        (ln1_g, ln1_b, wq1, wk1, wv1, wo1, bo1,
         ln2_g, ln2_b, wq2, wk2, wv2, wo2, bo2,
         ln3_g, ln3_b, ff_wa, ff_ba, ff_wg, ff_bg, ff_w2, ff_b2) = blk

        hn = _layernorm(h, ln1_g[...], ln1_b[...], eps_ln).astype(jnp.bfloat16)
        h = _attention(hn, hn, wq1, wk1, wv1, wo1, bo1, h,
                       heads=heads, dim_head=dim_head, tq=tq)

        hn = _layernorm(h, ln2_g[...], ln2_b[...], eps_ln).astype(jnp.bfloat16)
        ctx2 = ctx_bf if has_context else hn
        h = _attention(hn, ctx2, wq2, wk2, wv2, wo2, bo2, h,
                       heads=heads, dim_head=dim_head, tq=tq)

        hn = _layernorm(h, ln3_g[...], ln3_b[...], eps_ln).astype(jnp.bfloat16)
        h = _geglu_ff(hn, ff_wa, ff_ba, ff_wg, ff_bg, ff_w2, ff_b2, h, tq=tq)

    # --- proj_out (1x1 conv, zero-initialized) + outer residual -------------
    out_nc = (jnp.dot(h.astype(jnp.bfloat16), w_out_ref[...],
                      preferred_element_type=jnp.float32)
              + b_out_ref[...] + x_in)                                  # (HW, C)
    # Store in NCHW layout: lane dim = HW (128-dense at real LDM sizes).
    o_ref[0] = jnp.transpose(out_nc)


# ------------------------------ module wrapper --------------------------------


def _const_spec(arr):
    nd = arr.ndim
    return pl.BlockSpec(arr.shape, lambda b, _nd=nd: (0,) * _nd)


def spatial_transformer(x_nchw, context, params, heads, dim_head, tq_max=512):
    """SpatialTransformer.forward: x (B, C, H, W), context (B, M, ctx_dim) | None."""
    B, C, H, W = x_nchw.shape
    HW = H * W
    x_flat = x_nchw.reshape(B, C, HW)          # free reshape, no HBM transpose
    has_context = context is not None

    tq = min(tq_max, HW)
    assert HW % tq == 0 and tq % 8 == 0, "HW must be a multiple of the q-tile"

    args = [x_flat]
    specs = [pl.BlockSpec((1, C, HW), lambda b: (b, 0, 0))]
    if has_context:
        M, Dc = context.shape[1], context.shape[2]
        args.append(context)
        specs.append(pl.BlockSpec((1, M, Dc), lambda b: (b, 0, 0)))

    flat_w = [params["gn_g"], params["gn_b"], params["gsel"],
              params["w_in"], params["b_in"]]
    for blk in params["blocks"]:
        flat_w += [blk[k] for k in _BLOCK_KEYS]
    flat_w += [params["w_out"], params["b_out"]]
    args += flat_w
    specs += [_const_spec(w) for w in flat_w]

    kernel = partial(fused_kernel, depth=len(params["blocks"]), heads=heads,
                     dim_head=dim_head, eps_gn=1e-6, eps_ln=1e-5,
                     has_context=has_context, tq=tq)

    out = pl.pallas_call(
        kernel,
        out_shape=jax.ShapeDtypeStruct((B, C, HW), jnp.float32),
        grid=(B,),
        in_specs=specs,
        out_specs=pl.BlockSpec((1, C, HW), lambda b: (b, 0, 0)),
        compiler_params=pltpu.CompilerParams(
            dimension_semantics=("parallel",),
            vmem_limit_bytes=64 * 1024 * 1024),
    )(*args)
    return out.reshape(B, C, H, W)


# ------------------------- pure-JAX reference (f32/bf16) ----------------------


def spatial_transformer_ref(x, context, params, heads, dim_head):
    """Straightforward JAX reference with the same bf16-matmul / f32-accumulate
    policy as the kernel (used for the non-zero proj_out correctness check)."""
    B, C, H, W = x.shape
    HW = H * W
    dh = dim_head
    inner = heads * dh
    G = params["gsel"].shape[0]
    f32, bf16 = jnp.float32, jnp.bfloat16

    def mm(a, b):
        return jnp.einsum("...ij,jk->...ik", a.astype(bf16), b.astype(bf16),
                          preferred_element_type=f32)

    x_flat = x.reshape(B, C, HW).astype(f32)
    xg = x_flat.reshape(B, G, (C // G) * HW)
    mu = jnp.mean(xg, axis=-1, keepdims=True)
    var = jnp.mean((xg - mu) ** 2, axis=-1, keepdims=True)
    xn = ((xg - mu) * jax.lax.rsqrt(var + 1e-6)).reshape(B, C, HW)
    xn = (xn * params["gn_g"].reshape(1, C, 1).astype(f32)
          + params["gn_b"].reshape(1, C, 1).astype(f32))
    xn = jnp.transpose(xn, (0, 2, 1))                               # (B, HW, C)
    h = mm(xn, params["w_in"]) + params["b_in"].astype(f32)

    def layernorm(v, g, b):
        m = jnp.mean(v, -1, keepdims=True)
        vc = v - m
        s = jnp.mean(vc * vc, -1, keepdims=True)
        return vc * jax.lax.rsqrt(s + 1e-5) + 0.0 * g.astype(f32) \
            if False else vc * jax.lax.rsqrt(s + 1e-5) * g.astype(f32) + b.astype(f32)

    def attention(hn, ctx, wq, wk, wv, wo, bo):
        n, m = hn.shape[1], ctx.shape[1]
        q = (mm(hn, wq) / math.sqrt(dh)).astype(bf16).reshape(B, n, heads, dh)
        k = mm(ctx, wk).astype(bf16).reshape(B, m, heads, dh)
        v = mm(ctx, wv).astype(bf16).reshape(B, m, heads, dh)
        s = jnp.einsum("bnhd,bmhd->bhnm", q, k, preferred_element_type=f32)
        s = s - jnp.max(s, axis=-1, keepdims=True)
        p = jnp.exp(s)
        p = p / jnp.sum(p, axis=-1, keepdims=True)
        o = jnp.einsum("bhnm,bmhd->bnhd", p.astype(bf16), v,
                       preferred_element_type=f32).reshape(B, n, inner)
        return mm(o, wo) + bo.astype(f32)

    for blk in params["blocks"]:
        hn = layernorm(h, blk["ln1_g"], blk["ln1_b"])
        h = attention(hn, hn, blk["wq1"], blk["wk1"], blk["wv1"],
                      blk["wo1"], blk["bo1"]) + h
        hn = layernorm(h, blk["ln2_g"], blk["ln2_b"])
        ctx = context.astype(f32) if context is not None else hn
        h = attention(hn, ctx, blk["wq2"], blk["wk2"], blk["wv2"],
                      blk["wo2"], blk["bo2"]) + h
        hn = layernorm(h, blk["ln3_g"], blk["ln3_b"])
        a = mm(hn, blk["ff_wa"]) + blk["ff_ba"].astype(f32)
        g = mm(hn, blk["ff_wg"]) + blk["ff_bg"].astype(f32)
        h = mm(a * _gelu_exact(g), blk["ff_w2"]) + blk["ff_b2"].astype(f32) + h

    out = mm(h, params["w_out"]) + params["b_out"].astype(f32)      # (B, HW, C)
    out = jnp.transpose(out, (0, 2, 1)).reshape(B, C, H, W)
    return out + x


# ------------------------------ parameter init --------------------------------


def init_params(key, in_channels, n_heads, d_head, depth, context_dim):
    inner = n_heads * d_head
    ctx_dim = context_dim if context_dim is not None else inner
    ff_inner = 4 * inner
    num_groups = 32
    keys = iter(jax.random.split(key, 1 + 11 * depth))

    def w(shape, fan_in):
        return (jax.random.normal(next(keys), shape, jnp.float32)
                / math.sqrt(fan_in)).astype(jnp.bfloat16)

    cg = in_channels // num_groups
    gid = jnp.arange(in_channels) // cg
    gsel = (jnp.arange(num_groups)[:, None] == gid[None, :]).astype(jnp.float32)

    params = {
        "gn_g": jnp.ones((1, in_channels), jnp.float32),
        "gn_b": jnp.zeros((1, in_channels), jnp.float32),
        "gsel": gsel,                                   # (G, C) one-hot reduce
        "w_in": w((in_channels, inner), in_channels),
        "b_in": jnp.zeros((1, inner), jnp.float32),
        # proj_out is zero_module'd -> exact zeros
        "w_out": jnp.zeros((inner, in_channels), jnp.bfloat16),
        "b_out": jnp.zeros((1, in_channels), jnp.float32),
        "blocks": [],
    }
    for _ in range(depth):
        blk = {
            "ln1_g": jnp.ones((1, inner), jnp.float32),
            "ln1_b": jnp.zeros((1, inner), jnp.float32),
            "ln2_g": jnp.ones((1, inner), jnp.float32),
            "ln2_b": jnp.zeros((1, inner), jnp.float32),
            "ln3_g": jnp.ones((1, inner), jnp.float32),
            "ln3_b": jnp.zeros((1, inner), jnp.float32),
            # fused lane-dense projections (last dim = inner / multiple of heads*dh)
            "wq1": w((inner, inner), inner),
            "wk1": w((inner, inner), inner),
            "wv1": w((inner, inner), inner),
            "wo1": w((inner, inner), inner),
            "bo1": jnp.zeros((1, inner), jnp.float32),
            "wq2": w((inner, inner), inner),
            "wk2": w((ctx_dim, inner), ctx_dim),
            "wv2": w((ctx_dim, inner), ctx_dim),
            "wo2": w((inner, inner), inner),
            "bo2": jnp.zeros((1, inner), jnp.float32),
            # GEGLU FF: separate value / gate projections
            "ff_wa": w((inner, ff_inner), inner),
            "ff_ba": jnp.zeros((1, ff_inner), jnp.float32),
            "ff_wg": w((inner, ff_inner), inner),
            "ff_bg": jnp.zeros((1, ff_inner), jnp.float32),
            "ff_w2": w((ff_inner, inner), ff_inner),
            "ff_b2": jnp.zeros((1, inner), jnp.float32),
        }
        params["blocks"].append(blk)
    return params


# ------------------------------------ main ------------------------------------


if __name__ == "__main__":
    # SpatialTransformer(in_channels=64, n_heads=4, d_head=16, depth=1, context_dim=32)
    B, C, H, W = 2, 64, 8, 8          # in_channels must be divisible by 32 (GroupNorm)
    n_heads, d_head = 4, 16
    depth = 1
    context_dim, ctx_len = 32, 8
    inner = n_heads * d_head

    key = jax.random.PRNGKey(0)
    kx, kc, kp, kw, kb = jax.random.split(key, 5)
    x = jax.random.normal(kx, (B, C, H, W), jnp.float32)
    context = jax.random.normal(kc, (B, ctx_len, context_dim), jnp.float32)
    params = init_params(kp, C, n_heads, d_head, depth=depth, context_dim=context_dim)

    # 1) Module as specified: proj_out is zero_module'd -> output == input exactly.
    out0 = jax.block_until_ready(spatial_transformer(x, context, params, n_heads, d_head))
    assert out0.shape == (B, C, H, W)
    assert bool(jnp.all(jnp.isfinite(out0)))
    assert bool(jnp.allclose(out0, x, atol=1e-5, rtol=0.0))

    # 2) Non-zero proj_out: validates GroupNorm / attention / GEGLU math against
    #    a pure-JAX reference (bf16 matmuls, f32 accumulation) with tolerance.
    params_nz = dict(params)
    params_nz["w_out"] = (jax.random.normal(kw, (inner, C), jnp.float32)
                          / math.sqrt(inner)).astype(jnp.bfloat16)
    params_nz["b_out"] = 0.1 * jax.random.normal(kb, (1, C), jnp.float32)
    out = jax.block_until_ready(
        spatial_transformer(x, context, params_nz, n_heads, d_head))
    ref = spatial_transformer_ref(x, context, params_nz, n_heads, d_head)
    assert bool(jnp.all(jnp.isfinite(out)))
    max_err = float(jnp.max(jnp.abs(out - ref)))
    assert max_err < 3e-2, f"max abs error vs reference too large: {max_err}"

    print("KERNEL_OK")
</pallas_src>

<mosaic_0001>
module attributes {stable_mosaic.version = 11 : i64} {
  func.func @fused_kernel(%arg0: i32, %arg1: memref<1x64x64xf32, #tpu.memory_space<vmem>>, %arg2: memref<1x8x32xf32, #tpu.memory_space<vmem>>, %arg3: memref<1x64xf32, #tpu.memory_space<vmem>>, %arg4: memref<1x64xf32, #tpu.memory_space<vmem>>, %arg5: memref<32x64xf32, #tpu.memory_space<vmem>>, %arg6: memref<64x64xbf16, #tpu.memory_space<vmem>>, %arg7: memref<1x64xf32, #tpu.memory_space<vmem>>, %arg8: memref<1x64xf32, #tpu.memory_space<vmem>>, %arg9: memref<1x64xf32, #tpu.memory_space<vmem>>, %arg10: memref<64x64xbf16, #tpu.memory_space<vmem>>, %arg11: memref<64x64xbf16, #tpu.memory_space<vmem>>, %arg12: memref<64x64xbf16, #tpu.memory_space<vmem>>, %arg13: memref<64x64xbf16, #tpu.memory_space<vmem>>, %arg14: memref<1x64xf32, #tpu.memory_space<vmem>>, %arg15: memref<1x64xf32, #tpu.memory_space<vmem>>, %arg16: memref<1x64xf32, #tpu.memory_space<vmem>>, %arg17: memref<64x64xbf16, #tpu.memory_space<vmem>>, %arg18: memref<32x64xbf16, #tpu.memory_space<vmem>>, %arg19: memref<32x64xbf16, #tpu.memory_space<vmem>>, %arg20: memref<64x64xbf16, #tpu.memory_space<vmem>>, %arg21: memref<1x64xf32, #tpu.memory_space<vmem>>, %arg22: memref<1x64xf32, #tpu.memory_space<vmem>>, %arg23: memref<1x64xf32, #tpu.memory_space<vmem>>, %arg24: memref<64x256xbf16, #tpu.memory_space<vmem>>, %arg25: memref<1x256xf32, #tpu.memory_space<vmem>>, %arg26: memref<64x256xbf16, #tpu.memory_space<vmem>>, %arg27: memref<1x256xf32, #tpu.memory_space<vmem>>, %arg28: memref<256x64xbf16, #tpu.memory_space<vmem>>, %arg29: memref<1x64xf32, #tpu.memory_space<vmem>>, %arg30: memref<64x64xbf16, #tpu.memory_space<vmem>>, %arg31: memref<1x64xf32, #tpu.memory_space<vmem>>, %arg32: memref<1x64x64xf32, #tpu.memory_space<vmem>>) attributes {dimension_semantics = [#tpu.dimension_semantics<parallel>], iteration_bounds = array<i64: 2>, scalar_prefetch = 0 : i64, scratch_operands = 0 : i64, tpu.core_type = #tpu.core_type<tc>, window_params = [{transform_indices = @transform_0, window_bounds = array<i64: 1, 64, 64>}, {transform_indices = @transform_1, window_bounds = array<i64: 1, 8, 32>}, {pipeline_mode = #tpu.pipeline_mode<synchronous>, transform_indices = @transform_2, window_bounds = array<i64: 1, 64>}, {pipeline_mode = #tpu.pipeline_mode<synchronous>, transform_indices = @transform_3, window_bounds = array<i64: 1, 64>}, {pipeline_mode = #tpu.pipeline_mode<synchronous>, transform_indices = @transform_4, window_bounds = array<i64: 32, 64>}, {pipeline_mode = #tpu.pipeline_mode<synchronous>, transform_indices = @transform_5, window_bounds = array<i64: 64, 64>}, {pipeline_mode = #tpu.pipeline_mode<synchronous>, transform_indices = @transform_6, window_bounds = array<i64: 1, 64>}, {pipeline_mode = #tpu.pipeline_mode<synchronous>, transform_indices = @transform_7, window_bounds = array<i64: 1, 64>}, {pipeline_mode = #tpu.pipeline_mode<synchronous>, transform_indices = @transform_8, window_bounds = array<i64: 1, 64>}, {pipeline_mode = #tpu.pipeline_mode<synchronous>, transform_indices = @transform_9, window_bounds = array<i64: 64, 64>}, {pipeline_mode = #tpu.pipeline_mode<synchronous>, transform_indices = @transform_10, window_bounds = array<i64: 64, 64>}, {pipeline_mode = #tpu.pipeline_mode<synchronous>, transform_indices = @transform_11, window_bounds = array<i64: 64, 64>}, {pipeline_mode = #tpu.pipeline_mode<synchronous>, transform_indices = @transform_12, window_bounds = array<i64: 64, 64>}, {pipeline_mode = #tpu.pipeline_mode<synchronous>, transform_indices = @transform_13, window_bounds = array<i64: 1, 64>}, {pipeline_mode = #tpu.pipeline_mode<synchronous>, transform_indices = @transform_14, window_bounds = array<i64: 1, 64>}, {pipeline_mode = #tpu.pipeline_mode<synchronous>, transform_indices = @transform_15, window_bounds = array<i64: 1, 64>}, {pipeline_mode = #tpu.pipeline_mode<synchronous>, transform_indices = @transform_16, window_bounds = array<i64: 64, 64>}, {pipeline_mode = #tpu.pipeline_mode<synchronous>, transform_indices = @transform_17, window_bounds = array<i64: 32, 64>}, {pipeline_mode = #tpu.pipeline_mode<synchronous>, transform_indices = @transform_18, window_bounds = array<i64: 32, 64>}, {pipeline_mode = #tpu.pipeline_mode<synchronous>, transform_indices = @transform_19, window_bounds = array<i64: 64, 64>}, {pipeline_mode = #tpu.pipeline_mode<synchronous>, transform_indices = @transform_20, window_bounds = array<i64: 1, 64>}, {pipeline_mode = #tpu.pipeline_mode<synchronous>, transform_indices = @transform_21, window_bounds = array<i64: 1, 64>}, {pipeline_mode = #tpu.pipeline_mode<synchronous>, transform_indices = @transform_22, window_bounds = array<i64: 1, 64>}, {pipeline_mode = #tpu.pipeline_mode<synchronous>, transform_indices = @transform_23, window_bounds = array<i64: 64, 256>}, {pipeline_mode = #tpu.pipeline_mode<synchronous>, transform_indices = @transform_24, window_bounds = array<i64: 1, 256>}, {pipeline_mode = #tpu.pipeline_mode<synchronous>, transform_indices = @transform_25, window_bounds = array<i64: 64, 256>}, {pipeline_mode = #tpu.pipeline_mode<synchronous>, transform_indices = @transform_26, window_bounds = array<i64: 1, 256>}, {pipeline_mode = #tpu.pipeline_mode<synchronous>, transform_indices = @transform_27, window_bounds = array<i64: 256, 64>}, {pipeline_mode = #tpu.pipeline_mode<synchronous>, transform_indices = @transform_28, window_bounds = array<i64: 1, 64>}, {pipeline_mode = #tpu.pipeline_mode<synchronous>, transform_indices = @transform_29, window_bounds = array<i64: 64, 64>}, {pipeline_mode = #tpu.pipeline_mode<synchronous>, transform_indices = @transform_30, window_bounds = array<i64: 1, 64>}, {transform_indices = @transform_31, window_bounds = array<i64: 1, 64, 64>}]} {
    %c0 = arith.constant 0 : index
    %c0_0 = arith.constant 0 : index
    %c0_1 = arith.constant 0 : index
    %0 = vector.load %arg1[%c0, %c0_0, %c0_1] : memref<1x64x64xf32, #tpu.memory_space<vmem>>, vector<1x64x64xf32>
    %1 = vector.shape_cast %0 : vector<1x64x64xf32> to vector<64x64xf32>
    %2 = tpu.transpose %1, [1, 0] : vector<64x64xf32> -> vector<64x64xf32>
    %c0_2 = arith.constant 0 : index
    %c0_3 = arith.constant 0 : index
    %3 = vector.load %arg5[%c0_2, %c0_3] : memref<32x64xf32, #tpu.memory_space<vmem>>, vector<32x64xf32>
    %cst = arith.constant dense<0.000000e+00> : vector<64xf32>
    %4 = vector.multi_reduction <add>, %2, %cst [0] : vector<64x64xf32> to vector<64xf32>
    %5 = vector.shape_cast %4 : vector<64xf32> to vector<1x64xf32>
    %cst_4 = arith.constant dense<0.000000e+00> : vector<1x32xf32>
    %6 = tpu.matmul %5, %3, %cst_4 {dimension_numbers = #tpu.dot_dimension_numbers<[1], [1], [0], [0], [0, 0, 1, 0], [], []>} : vector<1x64xf32>, vector<32x64xf32>, vector<1x32xf32> -> vector<1x32xf32>
    %cst_5 = arith.constant dense<0.000000e+00> : vector<1x64xf32>
    %7 = tpu.matmul %6, %3, %cst_5 {dimension_numbers = #tpu.dot_dimension_numbers<[1], [0], [0], [1], [0, 0, 1, 1], [], []>} : vector<1x32xf32>, vector<32x64xf32>, vector<1x64xf32> -> vector<1x64xf32>
    %cst_6 = arith.constant 7.812500e-03 : f32
    %8 = vector.broadcast %cst_6 : f32 to vector<1x64xf32>
    %9 = arith.mulf %7, %8 : vector<1x64xf32>
    %10 = vector.broadcast %9 : vector<1x64xf32> to vector<64x64xf32>
    %11 = arith.subf %2, %10 : vector<64x64xf32>
    %12 = arith.mulf %11, %11 : vector<64x64xf32>
    %cst_7 = arith.constant dense<0.000000e+00> : vector<64xf32>
    %13 = vector.multi_reduction <add>, %12, %cst_7 [0] : vector<64x64xf32> to vector<64xf32>
    %14 = vector.shape_cast %13 : vector<64xf32> to vector<1x64xf32>
    %cst_8 = arith.constant dense<0.000000e+00> : vector<1x32xf32>
    %15 = tpu.matmul %14, %3, %cst_8 {dimension_numbers = #tpu.dot_dimension_numbers<[1], [1], [0], [0], [0, 0, 1, 0], [], []>} : vector<1x64xf32>, vector<32x64xf32>, vector<1x32xf32> -> vector<1x32xf32>
    %cst_9 = arith.constant dense<0.000000e+00> : vector<1x64xf32>
    %16 = tpu.matmul %15, %3, %cst_9 {dimension_numbers = #tpu.dot_dimension_numbers<[1], [0], [0], [1], [0, 0, 1, 1], [], []>} : vector<1x32xf32>, vector<32x64xf32>, vector<1x64xf32> -> vector<1x64xf32>
    %cst_10 = arith.constant 7.812500e-03 : f32
    %17 = vector.broadcast %cst_10 : f32 to vector<1x64xf32>
    %18 = arith.mulf %16, %17 : vector<1x64xf32>
    %cst_11 = arith.constant 9.99999997E-7 : f32
    %19 = vector.broadcast %cst_11 : f32 to vector<1x64xf32>
    %20 = arith.addf %18, %19 : vector<1x64xf32>
    %21 = math.rsqrt %20 : vector<1x64xf32>
    %22 = vector.broadcast %21 : vector<1x64xf32> to vector<64x64xf32>
    %23 = arith.mulf %11, %22 : vector<64x64xf32>
    %c0_12 = arith.constant 0 : index
    %c0_13 = arith.constant 0 : index
    %24 = vector.load %arg3[%c0_12, %c0_13] : memref<1x64xf32, #tpu.memory_space<vmem>>, vector<1x64xf32>
    %25 = vector.broadcast %24 : vector<1x64xf32> to vector<64x64xf32>
    %26 = arith.mulf %23, %25 : vector<64x64xf32>
    %c0_14 = arith.constant 0 : index
    %c0_15 = arith.constant 0 : index
    %27 = vector.load %arg4[%c0_14, %c0_15] : memref<1x64xf32, #tpu.memory_space<vmem>>, vector<1x64xf32>
    %28 = vector.broadcast %27 : vector<1x64xf32> to vector<64x64xf32>
    %29 = arith.addf %26, %28 : vector<64x64xf32>
    %30 = arith.truncf %29 : vector<64x64xf32> to vector<64x64xbf16>
    %c0_16 = arith.constant 0 : index
    %c0_17 = arith.constant 0 : index
    %31 = vector.load %arg6[%c0_16, %c0_17] : memref<64x64xbf16, #tpu.memory_space<vmem>>, vector<64x64xbf16>
    %cst_18 = arith.constant dense<0.000000e+00> : vector<64x64xf32>
    %32 = tpu.matmul %30, %31, %cst_18 {dimension_numbers = #tpu.dot_dimension_numbers<[1], [0], [0], [1], [0, 0, 1, 1], [], []>} : vector<64x64xbf16>, vector<64x64xbf16>, vector<64x64xf32> -> vector<64x64xf32>
    %c0_19 = arith.constant 0 : index
    %c0_20 = arith.constant 0 : index
    %33 = vector.load %arg7[%c0_19, %c0_20] : memref<1x64xf32, #tpu.memory_space<vmem>>, vector<1x64xf32>
    %34 = vector.broadcast %33 : vector<1x64xf32> to vector<64x64xf32>
    %35 = arith.addf %32, %34 : vector<64x64xf32>
    %c0_21 = arith.constant 0 : index
    %c0_22 = arith.constant 0 : index
    %c0_23 = arith.constant 0 : index
    %36 = vector.load %arg2[%c0_21, %c0_22, %c0_23] : memref<1x8x32xf32, #tpu.memory_space<vmem>>, vector<1x8x32xf32>
    %37 = vector.shape_cast %36 : vector<1x8x32xf32> to vector<8x32xf32>
    %38 = arith.truncf %37 : vector<8x32xf32> to vector<8x32xbf16>
    %c0_24 = arith.constant 0 : index
    %c0_25 = arith.constant 0 : index
    %39 = vector.load %arg8[%c0_24, %c0_25] : memref<1x64xf32, #tpu.memory_space<vmem>>, vector<1x64xf32>
    %c0_26 = arith.constant 0 : index
    %c0_27 = arith.constant 0 : index
    %40 = vector.load %arg9[%c0_26, %c0_27] : memref<1x64xf32, #tpu.memory_space<vmem>>, vector<1x64xf32>
    %cst_28 = arith.constant dense<0.000000e+00> : vector<64xf32>
    %41 = vector.multi_reduction <add>, %35, %cst_28 [1] : vector<64x64xf32> to vector<64xf32>
    %42 = vector.shape_cast %41 : vector<64xf32> to vector<64x1xf32>
    %cst_29 = arith.constant 6.400000e+01 : f32
    %43 = vector.broadcast %cst_29 : f32 to vector<64x1xf32>
    %44 = arith.divf %42, %43 : vector<64x1xf32>
    %45 = vector.broadcast %44 : vector<64x1xf32> to vector<64x64xf32>
    %46 = arith.subf %35, %45 : vector<64x64xf32>
    %47 = arith.mulf %46, %46 : vector<64x64xf32>
    %cst_30 = arith.constant dense<0.000000e+00> : vector<64xf32>
    %48 = vector.multi_reduction <add>, %47, %cst_30 [1] : vector<64x64xf32> to vector<64xf32>
    %49 = vector.shape_cast %48 : vector<64xf32> to vector<64x1xf32>
    %cst_31 = arith.constant 6.400000e+01 : f32
    %50 = vector.broadcast %cst_31 : f32 to vector<64x1xf32>
    %51 = arith.divf %49, %50 : vector<64x1xf32>
    %cst_32 = arith.constant 9.99999974E-6 : f32
    %52 = vector.broadcast %cst_32 : f32 to vector<64x1xf32>
    %53 = arith.addf %51, %52 : vector<64x1xf32>
    %54 = math.rsqrt %53 : vector<64x1xf32>
    %55 = vector.broadcast %54 : vector<64x1xf32> to vector<64x64xf32>
    %56 = arith.mulf %46, %55 : vector<64x64xf32>
    %57 = vector.broadcast %39 : vector<1x64xf32> to vector<64x64xf32>
    %58 = arith.mulf %56, %57 : vector<64x64xf32>
    %59 = vector.broadcast %40 : vector<1x64xf32> to vector<64x64xf32>
    %60 = arith.addf %58, %59 : vector<64x64xf32>
    %61 = arith.truncf %60 : vector<64x64xf32> to vector<64x64xbf16>
    %c0_33 = arith.constant 0 : index
    %c0_34 = arith.constant 0 : index
    %62 = vector.load %arg10[%c0_33, %c0_34] : memref<64x64xbf16, #tpu.memory_space<vmem>>, vector<64x64xbf16>
    %c0_35 = arith.constant 0 : index
    %c0_36 = arith.constant 0 : index
    %63 = vector.load %arg13[%c0_35, %c0_36] : memref<64x64xbf16, #tpu.memory_space<vmem>>, vector<64x64xbf16>
    %c0_37 = arith.constant 0 : index
    %c0_38 = arith.constant 0 : index
    %64 = vector.load %arg14[%c0_37, %c0_38] : memref<1x64xf32, #tpu.memory_space<vmem>>, vector<1x64xf32>
    %c0_39 = arith.constant 0 : index
    %c0_40 = arith.constant 0 : index
    %65 = vector.load %arg11[%c0_39, %c0_40] : memref<64x64xbf16, #tpu.memory_space<vmem>>, vector<64x64xbf16>
    %cst_41 = arith.constant dense<0.000000e+00> : vector<64x64xf32>
    %66 = tpu.matmul %61, %65, %cst_41 {dimension_numbers = #tpu.dot_dimension_numbers<[1], [0], [0], [1], [0, 0, 1, 1], [], []>} : vector<64x64xbf16>, vector<64x64xbf16>, vector<64x64xf32> -> vector<64x64xf32>
    %67 = arith.truncf %66 : vector<64x64xf32> to vector<64x64xbf16>
    %c0_42 = arith.constant 0 : index
    %c0_43 = arith.constant 0 : index
    %68 = vector.load %arg12[%c0_42, %c0_43] : memref<64x64xbf16, #tpu.memory_space<vmem>>, vector<64x64xbf16>
    %cst_44 = arith.constant dense<0.000000e+00> : vector<64x64xf32>
    %69 = tpu.matmul %61, %68, %cst_44 {dimension_numbers = #tpu.dot_dimension_numbers<[1], [0], [0], [1], [0, 0, 1, 1], [], []>} : vector<64x64xbf16>, vector<64x64xbf16>, vector<64x64xf32> -> vector<64x64xf32>
    %70 = arith.truncf %69 : vector<64x64xf32> to vector<64x64xbf16>
    %cst_45 = arith.constant dense<0.000000e+00> : vector<64x64xf32>
    %71 = tpu.matmul %61, %62, %cst_45 {dimension_numbers = #tpu.dot_dimension_numbers<[1], [0], [0], [1], [0, 0, 1, 1], [], []>} : vector<64x64xbf16>, vector<64x64xbf16>, vector<64x64xf32> -> vector<64x64xf32>
    %cst_46 = arith.constant 2.500000e-01 : f32
    %72 = vector.broadcast %cst_46 : f32 to vector<64x64xf32>
    %73 = arith.mulf %71, %72 : vector<64x64xf32>
    %74 = arith.truncf %73 : vector<64x64xf32> to vector<64x64xbf16>
    %75 = vector.extract_strided_slice %74 {offsets = [0, 0], sizes = [64, 16], strides = [1, 1]} : vector<64x64xbf16> to vector<64x16xbf16>
    %76 = vector.extract_strided_slice %67 {offsets = [0, 0], sizes = [64, 16], strides = [1, 1]} : vector<64x64xbf16> to vector<64x16xbf16>
    %cst_47 = arith.constant dense<0.000000e+00> : vector<64x64xf32>
    %77 = tpu.matmul %75, %76, %cst_47 {dimension_numbers = #tpu.dot_dimension_numbers<[1], [1], [0], [0], [0, 0, 1, 0], [], []>} : vector<64x16xbf16>, vector<64x16xbf16>, vector<64x64xf32> -> vector<64x64xf32>
    %cst_48 = arith.constant dense<0xFF800000> : vector<64xf32>
    %78 = vector.multi_reduction <maximumf>, %77, %cst_48 [1] : vector<64x64xf32> to vector<64xf32>
    %79 = vector.shape_cast %78 : vector<64xf32> to vector<64x1xf32>
    %80 = vector.broadcast %79 : vector<64x1xf32> to vector<64x64xf32>
    %81 = arith.subf %77, %80 : vector<64x64xf32>
    %82 = math.exp %81 : vector<64x64xf32>
    %cst_49 = arith.constant dense<0.000000e+00> : vector<64xf32>
    %83 = vector.multi_reduction <add>, %82, %cst_49 [1] : vector<64x64xf32> to vector<64xf32>
    %84 = vector.shape_cast %83 : vector<64xf32> to vector<64x1xf32>
    %85 = arith.truncf %82 : vector<64x64xf32> to vector<64x64xbf16>
    %86 = vector.extract_strided_slice %70 {offsets = [0, 0], sizes = [64, 16], strides = [1, 1]} : vector<64x64xbf16> to vector<64x16xbf16>
    %cst_50 = arith.constant dense<0.000000e+00> : vector<64x16xf32>
    %87 = tpu.matmul %85, %86, %cst_50 {dimension_numbers = #tpu.dot_dimension_numbers<[1], [0], [0], [1], [0, 0, 1, 1], [], []>} : vector<64x64xbf16>, vector<64x16xbf16>, vector<64x16xf32> -> vector<64x16xf32>
    %88 = tpu.reciprocal %84 {approx = true} : vector<64x1xf32> -> vector<64x1xf32>
    %89 = vector.broadcast %88 : vector<64x1xf32> to vector<64x16xf32>
    %90 = arith.mulf %87, %89 : vector<64x16xf32>
    %91 = vector.extract_strided_slice %74 {offsets = [0, 16], sizes = [64, 16], strides = [1, 1]} : vector<64x64xbf16> to vector<64x16xbf16>
    %92 = vector.extract_strided_slice %67 {offsets = [0, 16], sizes = [64, 16], strides = [1, 1]} : vector<64x64xbf16> to vector<64x16xbf16>
    %cst_51 = arith.constant dense<0.000000e+00> : vector<64x64xf32>
    %93 = tpu.matmul %91, %92, %cst_51 {dimension_numbers = #tpu.dot_dimension_numbers<[1], [1], [0], [0], [0, 0, 1, 0], [], []>} : vector<64x16xbf16>, vector<64x16xbf16>, vector<64x64xf32> -> vector<64x64xf32>
    %cst_52 = arith.constant dense<0xFF800000> : vector<64xf32>
    %94 = vector.multi_reduction <maximumf>, %93, %cst_52 [1] : vector<64x64xf32> to vector<64xf32>
    %95 = vector.shape_cast %94 : vector<64xf32> to vector<64x1xf32>
    %96 = vector.broadcast %95 : vector<64x1xf32> to vector<64x64xf32>
    %97 = arith.subf %93, %96 : vector<64x64xf32>
    %98 = math.exp %97 : vector<64x64xf32>
    %cst_53 = arith.constant dense<0.000000e+00> : vector<64xf32>
    %99 = vector.multi_reduction <add>, %98, %cst_53 [1] : vector<64x64xf32> to vector<64xf32>
    %100 = vector.shape_cast %99 : vector<64xf32> to vector<64x1xf32>
    %101 = arith.truncf %98 : vector<64x64xf32> to vector<64x64xbf16>
    %102 = vector.extract_strided_slice %70 {offsets = [0, 16], sizes = [64, 16], strides = [1, 1]} : vector<64x64xbf16> to vector<64x16xbf16>
    %cst_54 = arith.constant dense<0.000000e+00> : vector<64x16xf32>
    %103 = tpu.matmul %101, %102, %cst_54 {dimension_numbers = #tpu.dot_dimension_numbers<[1], [0], [0], [1], [0, 0, 1, 1], [], []>} : vector<64x64xbf16>, vector<64x16xbf16>, vector<64x16xf32> -> vector<64x16xf32>
    %104 = tpu.reciprocal %100 {approx = true} : vector<64x1xf32> -> vector<64x1xf32>
    %105 = vector.broadcast %104 : vector<64x1xf32> to vector<64x16xf32>
    %106 = arith.mulf %103, %105 : vector<64x16xf32>
    %107 = vector.extract_strided_slice %74 {offsets = [0, 32], sizes = [64, 16], strides = [1, 1]} : vector<64x64xbf16> to vector<64x16xbf16>
    %108 = vector.extract_strided_slice %67 {offsets = [0, 32], sizes = [64, 16], strides = [1, 1]} : vector<64x64xbf16> to vector<64x16xbf16>
    %cst_55 = arith.constant dense<0.000000e+00> : vector<64x64xf32>
    %109 = tpu.matmul %107, %108, %cst_55 {dimension_numbers = #tpu.dot_dimension_numbers<[1], [1], [0], [0], [0, 0, 1, 0], [], []>} : vector<64x16xbf16>, vector<64x16xbf16>, vector<64x64xf32> -> vector<64x64xf32>
    %cst_56 = arith.constant dense<0xFF800000> : vector<64xf32>
    %110 = vector.multi_reduction <maximumf>, %109, %cst_56 [1] : vector<64x64xf32> to vector<64xf32>
    %111 = vector.shape_cast %110 : vector<64xf32> to vector<64x1xf32>
    %112 = vector.broadcast %111 : vector<64x1xf32> to vector<64x64xf32>
    %113 = arith.subf %109, %112 : vector<64x64xf32>
    %114 = math.exp %113 : vector<64x64xf32>
    %cst_57 = arith.constant dense<0.000000e+00> : vector<64xf32>
    %115 = vector.multi_reduction <add>, %114, %cst_57 [1] : vector<64x64xf32> to vector<64xf32>
    %116 = vector.shape_cast %115 : vector<64xf32> to vector<64x1xf32>
    %117 = arith.truncf %114 : vector<64x64xf32> to vector<64x64xbf16>
    %118 = vector.extract_strided_slice %70 {offsets = [0, 32], sizes = [64, 16], strides = [1, 1]} : vector<64x64xbf16> to vector<64x16xbf16>
    %cst_58 = arith.constant dense<0.000000e+00> : vector<64x16xf32>
    %119 = tpu.matmul %117, %118, %cst_58 {dimension_numbers = #tpu.dot_dimension_numbers<[1], [0], [0], [1], [0, 0, 1, 1], [], []>} : vector<64x64xbf16>, vector<64x16xbf16>, vector<64x16xf32> -> vector<64x16xf32>
    %120 = tpu.reciprocal %116 {approx = true} : vector<64x1xf32> -> vector<64x1xf32>
    %121 = vector.broadcast %120 : vector<64x1xf32> to vector<64x16xf32>
    %122 = arith.mulf %119, %121 : vector<64x16xf32>
    %123 = vector.extract_strided_slice %74 {offsets = [0, 48], sizes = [64, 16], strides = [1, 1]} : vector<64x64xbf16> to vector<64x16xbf16>
    %124 = vector.extract_strided_slice %67 {offsets = [0, 48], sizes = [64, 16], strides = [1, 1]} : vector<64x64xbf16> to vector<64x16xbf16>
    %cst_59 = arith.constant dense<0.000000e+00> : vector<64x64xf32>
    %125 = tpu.matmul %123, %124, %cst_59 {dimension_numbers = #tpu.dot_dimension_numbers<[1], [1], [0], [0], [0, 0, 1, 0], [], []>} : vector<64x16xbf16>, vector<64x16xbf16>, vector<64x64xf32> -> vector<64x64xf32>
    %cst_60 = arith.constant dense<0xFF800000> : vector<64xf32>
    %126 = vector.multi_reduction <maximumf>, %125, %cst_60 [1] : vector<64x64xf32> to vector<64xf32>
    %127 = vector.shape_cast %126 : vector<64xf32> to vector<64x1xf32>
    %128 = vector.broadcast %127 : vector<64x1xf32> to vector<64x64xf32>
    %129 = arith.subf %125, %128 : vector<64x64xf32>
    %130 = math.exp %129 : vector<64x64xf32>
    %cst_61 = arith.constant dense<0.000000e+00> : vector<64xf32>
    %131 = vector.multi_reduction <add>, %130, %cst_61 [1] : vector<64x64xf32> to vector<64xf32>
    %132 = vector.shape_cast %131 : vector<64xf32> to vector<64x1xf32>
    %133 = arith.truncf %130 : vector<64x64xf32> to vector<64x64xbf16>
    %134 = vector.extract_strided_slice %70 {offsets = [0, 48], sizes = [64, 16], strides = [1, 1]} : vector<64x64xbf16> to vector<64x16xbf16>
    %cst_62 = arith.constant dense<0.000000e+00> : vector<64x16xf32>
    %135 = tpu.matmul %133, %134, %cst_62 {dimension_numbers = #tpu.dot_dimension_numbers<[1], [0], [0], [1], [0, 0, 1, 1], [], []>} : vector<64x64xbf16>, vector<64x16xbf16>, vector<64x16xf32> -> vector<64x16xf32>
    %136 = tpu.reciprocal %132 {approx = true} : vector<64x1xf32> -> vector<64x1xf32>
    %137 = vector.broadcast %136 : vector<64x1xf32> to vector<64x16xf32>
    %138 = arith.mulf %135, %137 : vector<64x16xf32>
    %139 = tpu.concatenate %90, %106, %122, %138 in 1 : vector<64x16xf32>, vector<64x16xf32>, vector<64x16xf32>, vector<64x16xf32> -> vector<64x64xf32>
    %140 = arith.truncf %139 : vector<64x64xf32> to vector<64x64xbf16>
    %cst_63 = arith.constant dense<0.000000e+00> : vector<64x64xf32>
    %141 = tpu.matmul %140, %63, %cst_63 {dimension_numbers = #tpu.dot_dimension_numbers<[1], [0], [0], [1], [0, 0, 1, 1], [], []>} : vector<64x64xbf16>, vector<64x64xbf16>, vector<64x64xf32> -> vector<64x64xf32>
    %142 = vector.broadcast %64 : vector<1x64xf32> to vector<64x64xf32>
    %143 = arith.addf %141, %142 : vector<64x64xf32>
    %144 = arith.addf %143, %35 : vector<64x64xf32>
    %c0_64 = arith.constant 0 : index
    %c0_65 = arith.constant 0 : index
    %145 = vector.load %arg15[%c0_64, %c0_65] : memref<1x64xf32, #tpu.memory_space<vmem>>, vector<1x64xf32>
    %c0_66 = arith.constant 0 : index
    %c0_67 = arith.constant 0 : index
    %146 = vector.load %arg16[%c0_66, %c0_67] : memref<1x64xf32, #tpu.memory_space<vmem>>, vector<1x64xf32>
    %cst_68 = arith.constant dense<0.000000e+00> : vector<64xf32>
    %147 = vector.multi_reduction <add>, %144, %cst_68 [1] : vector<64x64xf32> to vector<64xf32>
    %148 = vector.shape_cast %147 : vector<64xf32> to vector<64x1xf32>
    %cst_69 = arith.constant 6.400000e+01 : f32
    %149 = vector.broadcast %cst_69 : f32 to vector<64x1xf32>
    %150 = arith.divf %148, %149 : vector<64x1xf32>
    %151 = vector.broadcast %150 : vector<64x1xf32> to vector<64x64xf32>
    %152 = arith.subf %144, %151 : vector<64x64xf32>
    %153 = arith.mulf %152, %152 : vector<64x64xf32>
    %cst_70 = arith.constant dense<0.000000e+00> : vector<64xf32>
    %154 = vector.multi_reduction <add>, %153, %cst_70 [1] : vector<64x64xf32> to vector<64xf32>
    %155 = vector.shape_cast %154 : vector<64xf32> to vector<64x1xf32>
    %cst_71 = arith.constant 6.400000e+01 : f32
    %156 = vector.broadcast %cst_71 : f32 to vector<64x1xf32>
    %157 = arith.divf %155, %156 : vector<64x1xf32>
    %cst_72 = arith.constant 9.99999974E-6 : f32
    %158 = vector.broadcast %cst_72 : f32 to vector<64x1xf32>
    %159 = arith.addf %157, %158 : vector<64x1xf32>
    %160 = math.rsqrt %159 : vector<64x1xf32>
    %161 = vector.broadcast %160 : vector<64x1xf32> to vector<64x64xf32>
    %162 = arith.mulf %152, %161 : vector<64x64xf32>
    %163 = vector.broadcast %145 : vector<1x64xf32> to vector<64x64xf32>
    %164 = arith.mulf %162, %163 : vector<64x64xf32>
    %165 = vector.broadcast %146 : vector<1x64xf32> to vector<64x64xf32>
    %166 = arith.addf %164, %165 : vector<64x64xf32>
    %167 = arith.truncf %166 : vector<64x64xf32> to vector<64x64xbf16>
    %c0_73 = arith.constant 0 : index
    %c0_74 = arith.constant 0 : index
    %168 = vector.load %arg17[%c0_73, %c0_74] : memref<64x64xbf16, #tpu.memory_space<vmem>>, vector<64x64xbf16>
    %c0_75 = arith.constant 0 : index
    %c0_76 = arith.constant 0 : index
    %169 = vector.load %arg20[%c0_75, %c0_76] : memref<64x64xbf16, #tpu.memory_space<vmem>>, vector<64x64xbf16>
    %c0_77 = arith.constant 0 : index
    %c0_78 = arith.constant 0 : index
    %170 = vector.load %arg21[%c0_77, %c0_78] : memref<1x64xf32, #tpu.memory_space<vmem>>, vector<1x64xf32>
    %c0_79 = arith.constant 0 : index
    %c0_80 = arith.constant 0 : index
    %171 = vector.load %arg18[%c0_79, %c0_80] : memref<32x64xbf16, #tpu.memory_space<vmem>>, vector<32x64xbf16>
    %cst_81 = arith.constant dense<0.000000e+00> : vector<8x64xf32>
    %172 = tpu.matmul %38, %171, %cst_81 {dimension_numbers = #tpu.dot_dimension_numbers<[1], [0], [0], [1], [0, 0, 1, 1], [], []>} : vector<8x32xbf16>, vector<32x64xbf16>, vector<8x64xf32> -> vector<8x64xf32>
    %173 = arith.truncf %172 : vector<8x64xf32> to vector<8x64xbf16>
    %c0_82 = arith.constant 0 : index
    %c0_83 = arith.constant 0 : index
    %174 = vector.load %arg19[%c0_82, %c0_83] : memref<32x64xbf16, #tpu.memory_space<vmem>>, vector<32x64xbf16>
    %cst_84 = arith.constant dense<0.000000e+00> : vector<8x64xf32>
    %175 = tpu.matmul %38, %174, %cst_84 {dimension_numbers = #tpu.dot_dimension_numbers<[1], [0], [0], [1], [0, 0, 1, 1], [], []>} : vector<8x32xbf16>, vector<32x64xbf16>, vector<8x64xf32> -> vector<8x64xf32>
    %176 = arith.truncf %175 : vector<8x64xf32> to vector<8x64xbf16>
    %cst_85 = arith.constant dense<0.000000e+00> : vector<64x64xf32>
    %177 = tpu.matmul %167, %168, %cst_85 {dimension_numbers = #tpu.dot_dimension_numbers<[1], [0], [0], [1], [0, 0, 1, 1], [], []>} : vector<64x64xbf16>, vector<64x64xbf16>, vector<64x64xf32> -> vector<64x64xf32>
    %cst_86 = arith.constant 2.500000e-01 : f32
    %178 = vector.broadcast %cst_86 : f32 to vector<64x64xf32>
    %179 = arith.mulf %177, %178 : vector<64x64xf32>
    %180 = arith.truncf %179 : vector<64x64xf32> to vector<64x64xbf16>
    %181 = vector.extract_strided_slice %180 {offsets = [0, 0], sizes = [64, 16], strides = [1, 1]} : vector<64x64xbf16> to vector<64x16xbf16>
    %182 = vector.extract_strided_slice %173 {offsets = [0, 0], sizes = [8, 16], strides = [1, 1]} : vector<8x64xbf16> to vector<8x16xbf16>
    %cst_87 = arith.constant dense<0.000000e+00> : vector<64x8xf32>
    %183 = tpu.matmul %181, %182, %cst_87 {dimension_numbers = #tpu.dot_dimension_numbers<[1], [1], [0], [0], [0, 0, 1, 0], [], []>} : vector<64x16xbf16>, vector<8x16xbf16>, vector<64x8xf32> -> vector<64x8xf32>
    %cst_88 = arith.constant dense<0xFF800000> : vector<64xf32>
    %184 = vector.multi_reduction <maximumf>, %183, %cst_88 [1] : vector<64x8xf32> to vector<64xf32>
    %185 = vector.shape_cast %184 : vector<64xf32> to vector<64x1xf32>
    %186 = vector.broadcast %185 : vector<64x1xf32> to vector<64x8xf32>
    %187 = arith.subf %183, %186 : vector<64x8xf32>
    %188 = math.exp %187 : vector<64x8xf32>
    %cst_89 = arith.constant dense<0.000000e+00> : vector<64xf32>
    %189 = vector.multi_reduction <add>, %188, %cst_89 [1] : vector<64x8xf32> to vector<64xf32>
    %190 = vector.shape_cast %189 : vector<64xf32> to vector<64x1xf32>
    %191 = arith.truncf %188 : vector<64x8xf32> to vector<64x8xbf16>
    %192 = vector.extract_strided_slice %176 {offsets = [0, 0], sizes = [8, 16], strides = [1, 1]} : vector<8x64xbf16> to vector<8x16xbf16>
    %cst_90 = arith.constant dense<0.000000e+00> : vector<64x16xf32>
    %193 = tpu.matmul %191, %192, %cst_90 {dimension_numbers = #tpu.dot_dimension_numbers<[1], [0], [0], [1], [0, 0, 1, 1], [], []>} : vector<64x8xbf16>, vector<8x16xbf16>, vector<64x16xf32> -> vector<64x16xf32>
    %194 = tpu.reciprocal %190 {approx = true} : vector<64x1xf32> -> vector<64x1xf32>
    %195 = vector.broadcast %194 : vector<64x1xf32> to vector<64x16xf32>
    %196 = arith.mulf %193, %195 : vector<64x16xf32>
    %197 = vector.extract_strided_slice %180 {offsets = [0, 16], sizes = [64, 16], strides = [1, 1]} : vector<64x64xbf16> to vector<64x16xbf16>
    %198 = vector.extract_strided_slice %173 {offsets = [0, 16], sizes = [8, 16], strides = [1, 1]} : vector<8x64xbf16> to vector<8x16xbf16>
    %cst_91 = arith.constant dense<0.000000e+00> : vector<64x8xf32>
    %199 = tpu.matmul %197, %198, %cst_91 {dimension_numbers = #tpu.dot_dimension_numbers<[1], [1], [0], [0], [0, 0, 1, 0], [], []>} : vector<64x16xbf16>, vector<8x16xbf16>, vector<64x8xf32> -> vector<64x8xf32>
    %cst_92 = arith.constant dense<0xFF800000> : vector<64xf32>
    %200 = vector.multi_reduction <maximumf>, %199, %cst_92 [1] : vector<64x8xf32> to vector<64xf32>
    %201 = vector.shape_cast %200 : vector<64xf32> to vector<64x1xf32>
    %202 = vector.broadcast %201 : vector<64x1xf32> to vector<64x8xf32>
    %203 = arith.subf %199, %202 : vector<64x8xf32>
    %204 = math.exp %203 : vector<64x8xf32>
    %cst_93 = arith.constant dense<0.000000e+00> : vector<64xf32>
    %205 = vector.multi_reduction <add>, %204, %cst_93 [1] : vector<64x8xf32> to vector<64xf32>
    %206 = vector.shape_cast %205 : vector<64xf32> to vector<64x1xf32>
    %207 = arith.truncf %204 : vector<64x8xf32> to vector<64x8xbf16>
    %208 = vector.extract_strided_slice %176 {offsets = [0, 16], sizes = [8, 16], strides = [1, 1]} : vector<8x64xbf16> to vector<8x16xbf16>
    %cst_94 = arith.constant dense<0.000000e+00> : vector<64x16xf32>
    %209 = tpu.matmul %207, %208, %cst_94 {dimension_numbers = #tpu.dot_dimension_numbers<[1], [0], [0], [1], [0, 0, 1, 1], [], []>} : vector<64x8xbf16>, vector<8x16xbf16>, vector<64x16xf32> -> vector<64x16xf32>
    %210 = tpu.reciprocal %206 {approx = true} : vector<64x1xf32> -> vector<64x1xf32>
    %211 = vector.broadcast %210 : vector<64x1xf32> to vector<64x16xf32>
    %212 = arith.mulf %209, %211 : vector<64x16xf32>
    %213 = vector.extract_strided_slice %180 {offsets = [0, 32], sizes = [64, 16], strides = [1, 1]} : vector<64x64xbf16> to vector<64x16xbf16>
    %214 = vector.extract_strided_slice %173 {offsets = [0, 32], sizes = [8, 16], strides = [1, 1]} : vector<8x64xbf16> to vector<8x16xbf16>
    %cst_95 = arith.constant dense<0.000000e+00> : vector<64x8xf32>
    %215 = tpu.matmul %213, %214, %cst_95 {dimension_numbers = #tpu.dot_dimension_numbers<[1], [1], [0], [0], [0, 0, 1, 0], [], []>} : vector<64x16xbf16>, vector<8x16xbf16>, vector<64x8xf32> -> vector<64x8xf32>
    %cst_96 = arith.constant dense<0xFF800000> : vector<64xf32>
    %216 = vector.multi_reduction <maximumf>, %215, %cst_96 [1] : vector<64x8xf32> to vector<64xf32>
    %217 = vector.shape_cast %216 : vector<64xf32> to vector<64x1xf32>
    %218 = vector.broadcast %217 : vector<64x1xf32> to vector<64x8xf32>
    %219 = arith.subf %215, %218 : vector<64x8xf32>
    %220 = math.exp %219 : vector<64x8xf32>
    %cst_97 = arith.constant dense<0.000000e+00> : vector<64xf32>
    %221 = vector.multi_reduction <add>, %220, %cst_97 [1] : vector<64x8xf32> to vector<64xf32>
    %222 = vector.shape_cast %221 : vector<64xf32> to vector<64x1xf32>
    %223 = arith.truncf %220 : vector<64x8xf32> to vector<64x8xbf16>
    %224 = vector.extract_strided_slice %176 {offsets = [0, 32], sizes = [8, 16], strides = [1, 1]} : vector<8x64xbf16> to vector<8x16xbf16>
    %cst_98 = arith.constant dense<0.000000e+00> : vector<64x16xf32>
    %225 = tpu.matmul %223, %224, %cst_98 {dimension_numbers = #tpu.dot_dimension_numbers<[1], [0], [0], [1], [0, 0, 1, 1], [], []>} : vector<64x8xbf16>, vector<8x16xbf16>, vector<64x16xf32> -> vector<64x16xf32>
    %226 = tpu.reciprocal %222 {approx = true} : vector<64x1xf32> -> vector<64x1xf32>
    %227 = vector.broadcast %226 : vector<64x1xf32> to vector<64x16xf32>
    %228 = arith.mulf %225, %227 : vector<64x16xf32>
    %229 = vector.extract_strided_slice %180 {offsets = [0, 48], sizes = [64, 16], strides = [1, 1]} : vector<64x64xbf16> to vector<64x16xbf16>
    %230 = vector.extract_strided_slice %173 {offsets = [0, 48], sizes = [8, 16], strides = [1, 1]} : vector<8x64xbf16> to vector<8x16xbf16>
    %cst_99 = arith.constant dense<0.000000e+00> : vector<64x8xf32>
    %231 = tpu.matmul %229, %230, %cst_99 {dimension_numbers = #tpu.dot_dimension_numbers<[1], [1], [0], [0], [0, 0, 1, 0], [], []>} : vector<64x16xbf16>, vector<8x16xbf16>, vector<64x8xf32> -> vector<64x8xf32>
    %cst_100 = arith.constant dense<0xFF800000> : vector<64xf32>
    %232 = vector.multi_reduction <maximumf>, %231, %cst_100 [1] : vector<64x8xf32> to vector<64xf32>
    %233 = vector.shape_cast %232 : vector<64xf32> to vector<64x1xf32>
    %234 = vector.broadcast %233 : vector<64x1xf32> to vector<64x8xf32>
    %235 = arith.subf %231, %234 : vector<64x8xf32>
    %236 = math.exp %235 : vector<64x8xf32>
    %cst_101 = arith.constant dense<0.000000e+00> : vector<64xf32>
    %237 = vector.multi_reduction <add>, %236, %cst_101 [1] : vector<64x8xf32> to vector<64xf32>
    %238 = vector.shape_cast %237 : vector<64xf32> to vector<64x1xf32>
    %239 = arith.truncf %236 : vector<64x8xf32> to vector<64x8xbf16>
    %240 = vector.extract_strided_slice %176 {offsets = [0, 48], sizes = [8, 16], strides = [1, 1]} : vector<8x64xbf16> to vector<8x16xbf16>
    %cst_102 = arith.constant dense<0.000000e+00> : vector<64x16xf32>
    %241 = tpu.matmul %239, %240, %cst_102 {dimension_numbers = #tpu.dot_dimension_numbers<[1], [0], [0], [1], [0, 0, 1, 1], [], []>} : vector<64x8xbf16>, vector<8x16xbf16>, vector<64x16xf32> -> vector<64x16xf32>
    %242 = tpu.reciprocal %238 {approx = true} : vector<64x1xf32> -> vector<64x1xf32>
    %243 = vector.broadcast %242 : vector<64x1xf32> to vector<64x16xf32>
    %244 = arith.mulf %241, %243 : vector<64x16xf32>
    %245 = tpu.concatenate %196, %212, %228, %244 in 1 : vector<64x16xf32>, vector<64x16xf32>, vector<64x16xf32>, vector<64x16xf32> -> vector<64x64xf32>
    %246 = arith.truncf %245 : vector<64x64xf32> to vector<64x64xbf16>
    %cst_103 = arith.constant dense<0.000000e+00> : vector<64x64xf32>
    %247 = tpu.matmul %246, %169, %cst_103 {dimension_numbers = #tpu.dot_dimension_numbers<[1], [0], [0], [1], [0, 0, 1, 1], [], []>} : vector<64x64xbf16>, vector<64x64xbf16>, vector<64x64xf32> -> vector<64x64xf32>
    %248 = vector.broadcast %170 : vector<1x64xf32> to vector<64x64xf32>
    %249 = arith.addf %247, %248 : vector<64x64xf32>
    %250 = arith.addf %249, %144 : vector<64x64xf32>
    %c0_104 = arith.constant 0 : index
    %c0_105 = arith.constant 0 : index
    %251 = vector.load %arg22[%c0_104, %c0_105] : memref<1x64xf32, #tpu.memory_space<vmem>>, vector<1x64xf32>
    %c0_106 = arith.constant 0 : index
    %c0_107 = arith.constant 0 : index
    %252 = vector.load %arg23[%c0_106, %c0_107] : memref<1x64xf32, #tpu.memory_space<vmem>>, vector<1x64xf32>
    %cst_108 = arith.constant dense<0.000000e+00> : vector<64xf32>
    %253 = vector.multi_reduction <add>, %250, %cst_108 [1] : vector<64x64xf32> to vector<64xf32>
    %254 = vector.shape_cast %253 : vector<64xf32> to vector<64x1xf32>
    %cst_109 = arith.constant 6.400000e+01 : f32
    %255 = vector.broadcast %cst_109 : f32 to vector<64x1xf32>
    %256 = arith.divf %254, %255 : vector<64x1xf32>
    %257 = vector.broadcast %256 : vector<64x1xf32> to vector<64x64xf32>
    %258 = arith.subf %250, %257 : vector<64x64xf32>
    %259 = arith.mulf %258, %258 : vector<64x64xf32>
    %cst_110 = arith.constant dense<0.000000e+00> : vector<64xf32>
    %260 = vector.multi_reduction <add>, %259, %cst_110 [1] : vector<64x64xf32> to vector<64xf32>
    %261 = vector.shape_cast %260 : vector<64xf32> to vector<64x1xf32>
    %cst_111 = arith.constant 6.400000e+01 : f32
    %262 = vector.broadcast %cst_111 : f32 to vector<64x1xf32>
    %263 = arith.divf %261, %262 : vector<64x1xf32>
    %cst_112 = arith.constant 9.99999974E-6 : f32
    %264 = vector.broadcast %cst_112 : f32 to vector<64x1xf32>
    %265 = arith.addf %263, %264 : vector<64x1xf32>
    %266 = math.rsqrt %265 : vector<64x1xf32>
    %267 = vector.broadcast %266 : vector<64x1xf32> to vector<64x64xf32>
    %268 = arith.mulf %258, %267 : vector<64x64xf32>
    %269 = vector.broadcast %251 : vector<1x64xf32> to vector<64x64xf32>
    %270 = arith.mulf %268, %269 : vector<64x64xf32>
    %271 = vector.broadcast %252 : vector<1x64xf32> to vector<64x64xf32>
    %272 = arith.addf %270, %271 : vector<64x64xf32>
    %273 = arith.truncf %272 : vector<64x64xf32> to vector<64x64xbf16>
    %c0_113 = arith.constant 0 : index
    %c0_114 = arith.constant 0 : index
    %274 = vector.load %arg24[%c0_113, %c0_114] : memref<64x256xbf16, #tpu.memory_space<vmem>>, vector<64x256xbf16>
    %c0_115 = arith.constant 0 : index
    %c0_116 = arith.constant 0 : index
    %275 = vector.load %arg25[%c0_115, %c0_116] : memref<1x256xf32, #tpu.memory_space<vmem>>, vector<1x256xf32>
    %c0_117 = arith.constant 0 : index
    %c0_118 = arith.constant 0 : index
    %276 = vector.load %arg26[%c0_117, %c0_118] : memref<64x256xbf16, #tpu.memory_space<vmem>>, vector<64x256xbf16>
    %c0_119 = arith.constant 0 : index
    %c0_120 = arith.constant 0 : index
    %277 = vector.load %arg27[%c0_119, %c0_120] : memref<1x256xf32, #tpu.memory_space<vmem>>, vector<1x256xf32>
    %c0_121 = arith.constant 0 : index
    %c0_122 = arith.constant 0 : index
    %278 = vector.load %arg28[%c0_121, %c0_122] : memref<256x64xbf16, #tpu.memory_space<vmem>>, vector<256x64xbf16>
    %c0_123 = arith.constant 0 : index
    %c0_124 = arith.constant 0 : index
    %279 = vector.load %arg29[%c0_123, %c0_124] : memref<1x64xf32, #tpu.memory_space<vmem>>, vector<1x64xf32>
    %cst_125 = arith.constant dense<0.000000e+00> : vector<64x256xf32>
    %280 = tpu.matmul %273, %274, %cst_125 {dimension_numbers = #tpu.dot_dimension_numbers<[1], [0], [0], [1], [0, 0, 1, 1], [], []>} : vector<64x64xbf16>, vector<64x256xbf16>, vector<64x256xf32> -> vector<64x256xf32>
    %281 = vector.broadcast %275 : vector<1x256xf32> to vector<64x256xf32>
    %282 = arith.addf %280, %281 : vector<64x256xf32>
    %cst_126 = arith.constant dense<0.000000e+00> : vector<64x256xf32>
    %283 = tpu.matmul %273, %276, %cst_126 {dimension_numbers = #tpu.dot_dimension_numbers<[1], [0], [0], [1], [0, 0, 1, 1], [], []>} : vector<64x64xbf16>, vector<64x256xbf16>, vector<64x256xf32> -> vector<64x256xf32>
    %284 = vector.broadcast %277 : vector<1x256xf32> to vector<64x256xf32>
    %285 = arith.addf %283, %284 : vector<64x256xf32>
    %cst_127 = arith.constant 5.000000e-01 : f32
    %286 = vector.broadcast %cst_127 : f32 to vector<64x256xf32>
    %287 = arith.mulf %286, %285 : vector<64x256xf32>
    %cst_128 = arith.constant 0.707106769 : f32
    %288 = vector.broadcast %cst_128 : f32 to vector<64x256xf32>
    %289 = arith.mulf %285, %288 : vector<64x256xf32>
    %290 = math.erf %289 : vector<64x256xf32>
    %cst_129 = arith.constant 1.000000e+00 : f32
    %291 = vector.broadcast %cst_129 : f32 to vector<64x256xf32>
    %292 = arith.addf %291, %290 : vector<64x256xf32>
    %293 = arith.mulf %287, %292 : vector<64x256xf32>
    %294 = arith.mulf %282, %293 : vector<64x256xf32>
    %295 = arith.truncf %294 : vector<64x256xf32> to vector<64x256xbf16>
    %cst_130 = arith.constant dense<0.000000e+00> : vector<64x64xf32>
    %296 = tpu.matmul %295, %278, %cst_130 {dimension_numbers = #tpu.dot_dimension_numbers<[1], [0], [0], [1], [0, 0, 1, 1], [], []>} : vector<64x256xbf16>, vector<256x64xbf16>, vector<64x64xf32> -> vector<64x64xf32>
    %297 = vector.broadcast %279 : vector<1x64xf32> to vector<64x64xf32>
    %298 = arith.addf %296, %297 : vector<64x64xf32>
    %299 = arith.addf %298, %250 : vector<64x64xf32>
    %300 = arith.truncf %299 : vector<64x64xf32> to vector<64x64xbf16>
    %c0_131 = arith.constant 0 : index
    %c0_132 = arith.constant 0 : index
    %301 = vector.load %arg30[%c0_131, %c0_132] : memref<64x64xbf16, #tpu.memory_space<vmem>>, vector<64x64xbf16>
    %cst_133 = arith.constant dense<0.000000e+00> : vector<64x64xf32>
    %302 = tpu.matmul %300, %301, %cst_133 {dimension_numbers = #tpu.dot_dimension_numbers<[1], [0], [0], [1], [0, 0, 1, 1], [], []>} : vector<64x64xbf16>, vector<64x64xbf16>, vector<64x64xf32> -> vector<64x64xf32>
    %c0_134 = arith.constant 0 : index
    %c0_135 = arith.constant 0 : index
    %303 = vector.load %arg31[%c0_134, %c0_135] : memref<1x64xf32, #tpu.memory_space<vmem>>, vector<1x64xf32>
    %304 = vector.broadcast %303 : vector<1x64xf32> to vector<64x64xf32>
    %305 = arith.addf %302, %304 : vector<64x64xf32>
    %306 = arith.addf %305, %2 : vector<64x64xf32>
    %307 = tpu.transpose %306, [1, 0] : vector<64x64xf32> -> vector<64x64xf32>
    %c0_136 = arith.constant 0 : index
    %c0_137 = arith.constant 0 : index
    %c0_138 = arith.constant 0 : index
    %308 = vector.load %arg32[%c0_136, %c0_137, %c0_138] : memref<1x64x64xf32, #tpu.memory_space<vmem>>, vector<1x64x64xf32>
    %309 = vector.shape_cast %308 : vector<1x64x64xf32> to vector<64x64xf32>
    %310 = vector.shape_cast %307 : vector<64x64xf32> to vector<1x64x64xf32>
    tpu.vector_store %arg32[%c0_136, %c0_137, %c0_138], %310 {strides = array<i32>} : memref<1x64x64xf32, #tpu.memory_space<vmem>>, vector<1x64x64xf32>,
    return
  }
  func.func @transform_0(%arg0: i32) -> (i32, i32, i32) {
    %c0_i32 = arith.constant 0 : i32
    %c0_i32_0 = arith.constant 0 : i32
    %c0_i32_1 = arith.constant 0 : i32
    return %arg0, %c0_i32, %c0_i32_0 : i32, i32, i32
  }
  func.func @transform_1(%arg0: i32) -> (i32, i32, i32) {
    %c0_i32 = arith.constant 0 : i32
    %c0_i32_0 = arith.constant 0 : i32
    %c0_i32_1 = arith.constant 0 : i32
    return %arg0, %c0_i32, %c0_i32_0 : i32, i32, i32
  }
  func.func @transform_2(%arg0: i32) -> (i32, i32) {
    %c0_i32 = arith.constant 0 : i32
    %c0_i32_0 = arith.constant 0 : i32
    %c0_i32_1 = arith.constant 0 : i32
    return %c0_i32, %c0_i32_0 : i32, i32
  }
  func.func @transform_3(%arg0: i32) -> (i32, i32) {
    %c0_i32 = arith.constant 0 : i32
    %c0_i32_0 = arith.constant 0 : i32
    %c0_i32_1 = arith.constant 0 : i32
    return %c0_i32, %c0_i32_0 : i32, i32
  }
  func.func @transform_4(%arg0: i32) -> (i32, i32) {
    %c0_i32 = arith.constant 0 : i32
    %c0_i32_0 = arith.constant 0 : i32
    %c0_i32_1 = arith.constant 0 : i32
    return %c0_i32, %c0_i32_0 : i32, i32
  }
  func.func @transform_5(%arg0: i32) -> (i32, i32) {
    %c0_i32 = arith.constant 0 : i32
    %c0_i32_0 = arith.constant 0 : i32
    %c0_i32_1 = arith.constant 0 : i32
    return %c0_i32, %c0_i32_0 : i32, i32
  }
  func.func @transform_6(%arg0: i32) -> (i32, i32) {
    %c0_i32 = arith.constant 0 : i32
    %c0_i32_0 = arith.constant 0 : i32
    %c0_i32_1 = arith.constant 0 : i32
    return %c0_i32, %c0_i32_0 : i32, i32
  }
  func.func @transform_7(%arg0: i32) -> (i32, i32) {
    %c0_i32 = arith.constant 0 : i32
    %c0_i32_0 = arith.constant 0 : i32
    %c0_i32_1 = arith.constant 0 : i32
    return %c0_i32, %c0_i32_0 : i32, i32
  }
  func.func @transform_8(%arg0: i32) -> (i32, i32) {
    %c0_i32 = arith.constant 0 : i32
    %c0_i32_0 = arith.constant 0 : i32
    %c0_i32_1 = arith.constant 0 : i32
    return %c0_i32, %c0_i32_0 : i32, i32
  }
  func.func @transform_9(%arg0: i32) -> (i32, i32) {
    %c0_i32 = arith.constant 0 : i32
    %c0_i32_0 = arith.constant 0 : i32
    %c0_i32_1 = arith.constant 0 : i32
    return %c0_i32, %c0_i32_0 : i32, i32
  }
  func.func @transform_10(%arg0: i32) -> (i32, i32) {
    %c0_i32 = arith.constant 0 : i32
    %c0_i32_0 = arith.constant 0 : i32
    %c0_i32_1 = arith.constant 0 : i32
    return %c0_i32, %c0_i32_0 : i32, i32
  }
  func.func @transform_11(%arg0: i32) -> (i32, i32) {
    %c0_i32 = arith.constant 0 : i32
    %c0_i32_0 = arith.constant 0 : i32
    %c0_i32_1 = arith.constant 0 : i32
    return %c0_i32, %c0_i32_0 : i32, i32
  }
  func.func @transform_12(%arg0: i32) -> (i32, i32) {
    %c0_i32 = arith.constant 0 : i32
    %c0_i32_0 = arith.constant 0 : i32
    %c0_i32_1 = arith.constant 0 : i32
    return %c0_i32, %c0_i32_0 : i32, i32
  }
  func.func @transform_13(%arg0: i32) -> (i32, i32) {
    %c0_i32 = arith.constant 0 : i32
    %c0_i32_0 = arith.constant 0 : i32
    %c0_i32_1 = arith.constant 0 : i32
    return %c0_i32, %c0_i32_0 : i32, i32
  }
  func.func @transform_14(%arg0: i32) -> (i32, i32) {
    %c0_i32 = arith.constant 0 : i32
    %c0_i32_0 = arith.constant 0 : i32
    %c0_i32_1 = arith.constant 0 : i32
    return %c0_i32, %c0_i32_0 : i32, i32
  }
  func.func @transform_15(%arg0: i32) -> (i32, i32) {
    %c0_i32 = arith.constant 0 : i32
    %c0_i32_0 = arith.constant 0 : i32
    %c0_i32_1 = arith.constant 0 : i32
    return %c0_i32, %c0_i32_0 : i32, i32
  }
  func.func @transform_16(%arg0: i32) -> (i32, i32) {
    %c0_i32 = arith.constant 0 : i32
    %c0_i32_0 = arith.constant 0 : i32
    %c0_i32_1 = arith.constant 0 : i32
    return %c0_i32, %c0_i32_0 : i32, i32
  }
  func.func @transform_17(%arg0: i32) -> (i32, i32) {
    %c0_i32 = arith.constant 0 : i32
    %c0_i32_0 = arith.constant 0 : i32
    %c0_i32_1 = arith.constant 0 : i32
    return %c0_i32, %c0_i32_0 : i32, i32
  }
  func.func @transform_18(%arg0: i32) -> (i32, i32) {
    %c0_i32 = arith.constant 0 : i32
    %c0_i32_0 = arith.constant 0 : i32
    %c0_i32_1 = arith.constant 0 : i32
    return %c0_i32, %c0_i32_0 : i32, i32
  }
  func.func @transform_19(%arg0: i32) -> (i32, i32) {
    %c0_i32 = arith.constant 0 : i32
    %c0_i32_0 = arith.constant 0 : i32
    %c0_i32_1 = arith.constant 0 : i32
    return %c0_i32, %c0_i32_0 : i32, i32
  }
  func.func @transform_20(%arg0: i32) -> (i32, i32) {
    %c0_i32 = arith.constant 0 : i32
    %c0_i32_0 = arith.constant 0 : i32
    %c0_i32_1 = arith.constant 0 : i32
    return %c0_i32, %c0_i32_0 : i32, i32
  }
  func.func @transform_21(%arg0: i32) -> (i32, i32) {
    %c0_i32 = arith.constant 0 : i32
    %c0_i32_0 = arith.constant 0 : i32
    %c0_i32_1 = arith.constant 0 : i32
    return %c0_i32, %c0_i32_0 : i32, i32
  }
  func.func @transform_22(%arg0: i32) -> (i32, i32) {
    %c0_i32 = arith.constant 0 : i32
    %c0_i32_0 = arith.constant 0 : i32
    %c0_i32_1 = arith.constant 0 : i32
    return %c0_i32, %c0_i32_0 : i32, i32
  }
  func.func @transform_23(%arg0: i32) -> (i32, i32) {
    %c0_i32 = arith.constant 0 : i32
    %c0_i32_0 = arith.constant 0 : i32
    %c0_i32_1 = arith.constant 0 : i32
    return %c0_i32, %c0_i32_0 : i32, i32
  }
  func.func @transform_24(%arg0: i32) -> (i32, i32) {
    %c0_i32 = arith.constant 0 : i32
    %c0_i32_0 = arith.constant 0 : i32
    %c0_i32_1 = arith.constant 0 : i32
    return %c0_i32, %c0_i32_0 : i32, i32
  }
  func.func @transform_25(%arg0: i32) -> (i32, i32) {
    %c0_i32 = arith.constant 0 : i32
    %c0_i32_0 = arith.constant 0 : i32
    %c0_i32_1 = arith.constant 0 : i32
    return %c0_i32, %c0_i32_0 : i32, i32
  }
  func.func @transform_26(%arg0: i32) -> (i32, i32) {
    %c0_i32 = arith.constant 0 : i32
    %c0_i32_0 = arith.constant 0 : i32
    %c0_i32_1 = arith.constant 0 : i32
    return %c0_i32, %c0_i32_0 : i32, i32
  }
  func.func @transform_27(%arg0: i32) -> (i32, i32) {
    %c0_i32 = arith.constant 0 : i32
    %c0_i32_0 = arith.constant 0 : i32
    %c0_i32_1 = arith.constant 0 : i32
    return %c0_i32, %c0_i32_0 : i32, i32
  }
  func.func @transform_28(%arg0: i32) -> (i32, i32) {
    %c0_i32 = arith.constant 0 : i32
    %c0_i32_0 = arith.constant 0 : i32
    %c0_i32_1 = arith.constant 0 : i32
    return %c0_i32, %c0_i32_0 : i32, i32
  }
  func.func @transform_29(%arg0: i32) -> (i32, i32) {
    %c0_i32 = arith.constant 0 : i32
    %c0_i32_0 = arith.constant 0 : i32
    %c0_i32_1 = arith.constant 0 : i32
    return %c0_i32, %c0_i32_0 : i32, i32
  }
  func.func @transform_30(%arg0: i32) -> (i32, i32) {
    %c0_i32 = arith.constant 0 : i32
    %c0_i32_0 = arith.constant 0 : i32
    %c0_i32_1 = arith.constant 0 : i32
    return %c0_i32, %c0_i32_0 : i32, i32
  }
  func.func @transform_31(%arg0: i32) -> (i32, i32, i32) {
    %c0_i32 = arith.constant 0 : i32
    %c0_i32_0 = arith.constant 0 : i32
    %c0_i32_1 = arith.constant 0 : i32
    return %arg0, %c0_i32, %c0_i32_0 : i32, i32, i32
  }
}

</mosaic_0001>

<llo_original>
// kernel: tpu_custom_call.1
$region0: #{tpu_custom_call.1}
  #allocation0 [shape = 'u32[]', space=smem, size = 0x4, offset = 0x4, fixed_abs, tag = 'smem constant byte address 0x4 - core index']
  #allocation1 [shape = 'u32[72,128]{1,0:T(1,128)}', space=vmem, size = 0x9000, scoped, tag = 'internal scratch']
  %s0 = inlined_call_operand.smem [shape: u32[32], index: -1, kind: input, shape index: {}]
  %s1 = sld [smem:[%s0]]
  %s2 = scalar_lea.smem %s0, 1
  %s3 = sld [smem:[%s2]]
  %s4 = scalar_lea.smem %s0, 2
  %s5 = sld [smem:[%s4]]
  %s6 = scalar_lea.smem %s0, 3
  %s7 = sld [smem:[%s6]]
  %s8 = scalar_lea.smem %s0, 4
  %s9 = sld [smem:[%s8]]
  %s10 = scalar_lea.smem %s0, 5
  %s11 = sld [smem:[%s10]]
  %s12 = scalar_lea.smem %s0, 6
  %s13 = sld [smem:[%s12]]
  %s14 = scalar_lea.smem %s0, 7
  %s15 = sld [smem:[%s14]]
  %s16 = scalar_lea.smem %s0, 8
  %s17 = sld [smem:[%s16]]
  %s18 = scalar_lea.smem %s0, 9
  %s19 = sld [smem:[%s18]]
  %s20 = scalar_lea.smem %s0, 10
  %s21 = sld [smem:[%s20]]
  %s22 = scalar_lea.smem %s0, 11
  %s23 = sld [smem:[%s22]]
  %s24 = scalar_lea.smem %s0, 12
  %s25 = sld [smem:[%s24]]
  %s26 = scalar_lea.smem %s0, 13
  %s27 = sld [smem:[%s26]]
  %s28 = scalar_lea.smem %s0, 14
  %s29 = sld [smem:[%s28]]
  %s30 = scalar_lea.smem %s0, 15
  %s31 = sld [smem:[%s30]]
  %s32 = scalar_lea.smem %s0, 16
  %s33 = sld [smem:[%s32]]
  %s34 = scalar_lea.smem %s0, 17
  %s35 = sld [smem:[%s34]]
  %s36 = scalar_lea.smem %s0, 18
  %s37 = sld [smem:[%s36]]
  %s38 = scalar_lea.smem %s0, 19
  %s39 = sld [smem:[%s38]]
  %s40 = scalar_lea.smem %s0, 20
  %s41 = sld [smem:[%s40]]
  %s42 = scalar_lea.smem %s0, 21
  %s43 = sld [smem:[%s42]]
  %s44 = scalar_lea.smem %s0, 22
  %s45 = sld [smem:[%s44]]
  %s46 = scalar_lea.smem %s0, 23
  %s47 = sld [smem:[%s46]]
  %s48 = scalar_lea.smem %s0, 24
  %s49 = sld [smem:[%s48]]
  %s50 = scalar_lea.smem %s0, 25
  %s51 = sld [smem:[%s50]]
  %s52 = scalar_lea.smem %s0, 26
  %s53 = sld [smem:[%s52]]
  %s54 = scalar_lea.smem %s0, 27
  %s55 = sld [smem:[%s54]]
  %s56 = scalar_lea.smem %s0, 28
  %s57 = sld [smem:[%s56]]
  %s58 = scalar_lea.smem %s0, 29
  %s59 = sld [smem:[%s58]]
  %s60 = scalar_lea.smem %s0, 30
  %s61 = sld [smem:[%s60]]
  %s62 = scalar_lea.smem %s0, 31
  %s63 = sld [smem:[%s62]]
  %s64 = sld [smem:[#allocation0]]
  $region249: #{tpu_custom_call.1} parent=0
    _
  %s66 = ssub.s32 1, %s64
  %s67 = scalar_select 0, %s66, %s64
  $region1: #{tpu_custom_call.1} parent=0
    #allocation2 [shape = 'u8[8192]{0}', space=vmem, size = 0x2000, scoped, tag = 'input window, operand 1']
    #allocation3 [shape = 's32[2]{0}', space=sflag, size = 0x8, scoped, tag = 'scoped memory for tpu_custom_call.1']
    #allocation4 [shape = 's32[2]{0}', space=sflag, size = 0x8, scoped, tag = 'scoped memory for tpu_custom_call.1']
    #allocation5 [shape = 'u8[512]{0}', space=vmem, size = 0x400, scoped, tag = 'input window, operand 2, single buffered']
    #allocation6 [shape = 's32[1]{0}', space=sflag, size = 0x4, scoped, tag = 'scoped memory for tpu_custom_call.1']
    #allocation7 [shape = 'u8[512]{0}', space=vmem, size = 0x400, scoped, tag = 'input window, operand 3, single buffered']
    #allocation8 [shape = 'u8[16384]{0}', space=vmem, size = 0x4000, scoped, tag = 'input window, operand 4, single buffered']
    #allocation9 [shape = 's32[1]{0}', space=sflag, size = 0x4, scoped, tag = 'scoped memory for tpu_custom_call.1']
    #allocation10 [shape = 'u8[16384]{0}', space=vmem, size = 0x4000, scoped, tag = 'input window, operand 5, single buffered']
    #allocation11 [shape = 'u8[512]{0}', space=vmem, size = 0x400, scoped, tag = 'input window, operand 6, single buffered']
    #allocation12 [shape = 's32[1]{0}', space=sflag, size = 0x4, scoped, tag = 'scoped memory for tpu_custom_call.1']
    #allocation13 [shape = 'u8[512]{0}', space=vmem, size = 0x400, scoped, tag = 'input window, operand 7, single buffered']
    #allocation14 [shape = 'u8[512]{0}', space=vmem, size = 0x400, scoped, tag = 'input window, operand 8, single buffered']
    #allocation15 [shape = 's32[1]{0}', space=sflag, size = 0x4, scoped, tag = 'scoped memory for tpu_custom_call.1']
    #allocation16 [shape = 'u8[16384]{0}', space=vmem, size = 0x4000, scoped, tag = 'input window, operand 9, single buffered']
    #allocation17 [shape = 'u8[16384]{0}', space=vmem, size = 0x4000, scoped, tag = 'input window, operand 10, single buffered']
    #allocation18 [shape = 's32[1]{0}', space=sflag, size = 0x4, scoped, tag = 'scoped memory for tpu_custom_call.1']
    #allocation19 [shape = 'u8[16384]{0}', space=vmem, size = 0x4000, scoped, tag = 'input window, operand 11, single buffered']
    #allocation20 [shape = 'u8[16384]{0}', space=vmem, size = 0x4000, scoped, tag = 'input window, operand 12, single buffered']
    #allocation21 [shape = 's32[1]{0}', space=sflag, size = 0x4, scoped, tag = 'scoped memory for tpu_custom_call.1']
    #allocation22 [shape = 'u8[512]{0}', space=vmem, size = 0x400, scoped, tag = 'input window, operand 13, single buffered']
    #allocation23 [shape = 'u8[512]{0}', space=vmem, size = 0x400, scoped, tag = 'input window, operand 14, single buffered']
    #allocation24 [shape = 's32[1]{0}', space=sflag, size = 0x4, scoped, tag = 'scoped memory for tpu_custom_call.1']
    #allocation25 [shape = 'u8[512]{0}', space=vmem, size = 0x400, scoped, tag = 'input window, operand 15, single buffered']
    #allocation26 [shape = 'u8[16384]{0}', space=vmem, size = 0x4000, scoped, tag = 'input window, operand 16, single buffered']
    #allocation27 [shape = 's32[1]{0}', space=sflag, size = 0x4, scoped, tag = 'scoped memory for tpu_custom_call.1']
    #allocation28 [shape = 'u8[8192]{0}', space=vmem, size = 0x2000, scoped, tag = 'input window, operand 17, single buffered']
    #allocation29 [shape = 'u8[16384]{0}', space=vmem, size = 0x4000, scoped, tag = 'input window, operand 19, single buffered']
    #allocation30 [shape = 's32[1]{0}', space=sflag, size = 0x4, scoped, tag = 'scoped memory for tpu_custom_call.1']
    #allocation31 [shape = 'u8[512]{0}', space=vmem, size = 0x400, scoped, tag = 'input window, operand 20, single buffered']
    #allocation32 [shape = 'u8[512]{0}', space=vmem, size = 0x400, scoped, tag = 'input window, operand 21, single buffered']
    #allocation33 [shape = 's32[1]{0}', space=sflag, size = 0x4, scoped, tag = 'scoped memory for tpu_custom_call.1']
    #allocation34 [shape = 'u8[512]{0}', space=vmem, size = 0x400, scoped, tag = 'input window, operand 22, single buffered']
    #allocation35 [shape = 'u8[32768]{0}', space=vmem, size = 0x8000, scoped, tag = 'input window, operand 25, single buffered']
    #allocation36 [shape = 's32[1]{0}', space=sflag, size = 0x4, scoped, tag = 'scoped memory for tpu_custom_call.1']
    #allocation37 [shape = 'u8[16384]{0}', space=vmem, size = 0x4000, scoped, tag = 'input window, operand 29, single buffered']
    #allocation38 [shape = 'u8[65536]{0}', space=vmem, size = 0x10000, scoped, tag = 'output window, operand 0']
    %68 = vsyncpa [#allocation3], 0
    %s69 = scalar_lea.sflag [#allocation3], 1
    %70 = vsyncpa %s69, 0
    %71 = vsyncpa [#allocation6], 0
    %72 = vsyncpa [#allocation9], 0
    %73 = vsyncpa [#allocation12], 0
    %74 = vsyncpa [#allocation15], 0
    %75 = vsyncpa [#allocation18], 0
    %76 = vsyncpa [#allocation21], 0
    %77 = vsyncpa [#allocation24], 0
    %78 = vsyncpa [#allocation27], 0
    %79 = vsyncpa [#allocation30], 0
    %80 = vsyncpa [#allocation33], 0
    %81 = vsyncpa [#allocation36], 0
    %82 = vsyncpa [#allocation4], 0
    %s83 = scalar_lea.sflag [#allocation4], 1
    %84 = vsyncpa %s83, 0
    loop: start=0, step=1, limit=4
    $region2: #{tpu_custom_call.1} parent=1 // loop_pre_header
      _
    $region3: #{tpu_custom_call.1} parent=1 // loop_header
      %s86 = sphi 0, %s90
      %p87 = scmp.ge.s32.totalorder %s86, 4
      %s96 = sphi 0, %s98
      %s99 = sphi 0, %s96
      %s100 = sphi 0, %s99
      %s116 = sphi 0, %s100
      %s122 = sphi 0, %s124
      %s125 = sphi 0, %s122
      %s126 = sphi 0, %s125
      %s142 = sphi 0, %s126
      %s146 = sphi 0, %s146
      %s148 = sphi 0, %s146
      %s149 = sphi 0, %s148
      %s163 = sphi 0, %s149
      %s167 = sphi 0, %s167
      %s169 = sphi 0, %s167
      %s170 = sphi 0, %s169
      %s184 = sphi 0, %s170
      %s188 = sphi 0, %s188
      %s190 = sphi 0, %s188
      %s191 = sphi 0, %s190
      %s205 = sphi 0, %s191
      %s209 = sphi 0, %s209
      %s211 = sphi 0, %s209
      %s212 = sphi 0, %s211
      %s226 = sphi 0, %s212
      %s230 = sphi 0, %s230
      %s232 = sphi 0, %s230
      %s233 = sphi 0, %s232
      %s247 = sphi 0, %s233
      %s251 = sphi 0, %s251
      %s253 = sphi 0, %s251
      %s254 = sphi 0, %s253
      %s268 = sphi 0, %s254
      %s272 = sphi 0, %s272
      %s274 = sphi 0, %s272
      %s275 = sphi 0, %s274
      %s289 = sphi 0, %s275
      %s293 = sphi 0, %s293
      %s295 = sphi 0, %s293
      %s296 = sphi 0, %s295
      %s310 = sphi 0, %s296
      %s314 = sphi 0, %s314
      %s316 = sphi 0, %s314
      %s317 = sphi 0, %s316
      %s331 = sphi 0, %s317
      %s335 = sphi 0, %s335
      %s337 = sphi 0, %s335
      %s338 = sphi 0, %s337
      %s352 = sphi 0, %s338
      %s356 = sphi 0, %s356
      %s358 = sphi 0, %s356
      %s359 = sphi 0, %s358
      %s373 = sphi 0, %s359
      %s377 = sphi 0, %s377
      %s379 = sphi 0, %s377
      %s380 = sphi 0, %s379
      %s394 = sphi 0, %s380
      %s398 = sphi 0, %s398
      %s400 = sphi 0, %s398
      %s401 = sphi 0, %s400
      %s415 = sphi 0, %s401
      %s419 = sphi 0, %s419
      %s421 = sphi 0, %s419
      %s422 = sphi 0, %s421
      %s436 = sphi 0, %s422
      %s440 = sphi 0, %s440
      %s442 = sphi 0, %s440
      %s443 = sphi 0, %s442
      %s457 = sphi 0, %s443
      %s461 = sphi 0, %s461
      %s463 = sphi 0, %s461
      %s464 = sphi 0, %s463
      %s478 = sphi 0, %s464
      %s482 = sphi 0, %s482
      %s484 = sphi 0, %s482
      %s485 = sphi 0, %s484
      %s499 = sphi 0, %s485
      %s503 = sphi 0, %s503
      %s505 = sphi 0, %s503
      %s506 = sphi 0, %s505
      %s520 = sphi 0, %s506
      %s524 = sphi 0, %s524
      %s526 = sphi 0, %s524
      %s527 = sphi 0, %s526
      %s541 = sphi 0, %s527
      %s545 = sphi 0, %s545
      %s547 = sphi 0, %s545
      %s548 = sphi 0, %s547
      %s562 = sphi 0, %s548
      %s566 = sphi 0, %s566
      %s568 = sphi 0, %s566
      %s569 = sphi 0, %s568
      %s583 = sphi 0, %s569
      %s587 = sphi 0, %s587
      %s589 = sphi 0, %s587
      %s590 = sphi 0, %s589
      %s604 = sphi 0, %s590
      %s608 = sphi 0, %s608
      %s610 = sphi 0, %s608
      %s611 = sphi 0, %s610
      %s625 = sphi 0, %s611
      %s629 = sphi 0, %s629
      %s631 = sphi 0, %s629
      %s632 = sphi 0, %s631
      %s646 = sphi 0, %s632
      %s650 = sphi 0, %s650
      %s652 = sphi 0, %s650
      %s653 = sphi 0, %s652
      %s667 = sphi 0, %s653
      %s671 = sphi 0, %s671
      %s673 = sphi 0, %s671
      %s674 = sphi 0, %s673
      %s688 = sphi 0, %s674
      %s692 = sphi 0, %s692
      %s694 = sphi 0, %s692
      %s695 = sphi 0, %s694
      %s709 = sphi 0, %s695
      %s713 = sphi 0, %s713
      %s715 = sphi 0, %s713
      %s716 = sphi 0, %s715
      %s730 = sphi 0, %s716
      %s734 = sphi 0, %s734
      %s736 = sphi 0, %s734
      %s737 = sphi 0, %s736
      %s751 = sphi 0, %s737
      %s757 = sphi 0, %s759
      %s760 = sphi 0, %s757
      %s761 = sphi 0, %s760
      %s777 = sphi 0, %s761
    $region4: #{tpu_custom_call.1} parent=1 // loop_header_branch
      %89 = sbr.rel (%p87) target = $region8
    $region5: #{tpu_custom_call.1} parent=1 // loop_body
      %s91 = ssub.s32 %s86, 1
      %s92 = ssub.s32 %s86, 2
      %s93 = sadd.s32 %s86, 1
      %s94 = ssub.s32 %s86, %s93
      %p95 = scmp.eq.s32.totalorder %s94, 0
      %s97 = sadd.s32 %s96, 1
      %s98 = scalar_select %p95, %s96, %s97
      %p101 = pneg %p95
      %p102 = scmp.eq.s32.totalorder %s86, 1
      %p103 = por %p101, %p102
      %p104 = scmp.ne.s32.totalorder %s96, %s99
      %p105 = scmp.eq.s32.totalorder %s86, 0
      %p106 = por %p104, %p105
      %p107 = scmp.ne.s32.totalorder %s96, %s99
      %p108 = scmp.eq.s32.totalorder %s91, 1
      %p109 = por %p107, %p108
      %p110 = scmp.ne.s32.totalorder %s99, %s100
      %p111 = scmp.eq.s32.totalorder %s91, 0
      %p112 = por %p110, %p111
      %p113 = scmp.ne.s32.totalorder %s99, %s100
      %p114 = scmp.eq.s32.totalorder %s92, 1
      %p115 = por %p113, %p114
      %p117 = scmp.ne.s32.totalorder %s100, %s116
      %p118 = scmp.eq.s32.totalorder %s92, 0
      %p119 = por %p117, %p118
      %s120 = ssub.s32 %s86, %s93
      %p121 = scmp.eq.s32.totalorder %s120, 0
      %s123 = sadd.s32 %s122, 1
      %s124 = scalar_select %p121, %s122, %s123
      %p127 = pneg %p121
      %p128 = scmp.eq.s32.totalorder %s86, 1
      %p129 = por %p127, %p128
      %p130 = scmp.ne.s32.totalorder %s122, %s125
      %p131 = scmp.eq.s32.totalorder %s86, 0
      %p132 = por %p130, %p131
      %p133 = scmp.ne.s32.totalorder %s122, %s125
      %p134 = scmp.eq.s32.totalorder %s91, 1
      %p135 = por %p133, %p134
      %p136 = scmp.ne.s32.totalorder %s125, %s126
      %p137 = scmp.eq.s32.totalorder %s91, 0
      %p138 = por %p136, %p137
      %p139 = scmp.ne.s32.totalorder %s125, %s126
      %p140 = scmp.eq.s32.totalorder %s92, 1
      %p141 = por %p139, %p140
      %p143 = scmp.ne.s32.totalorder %s126, %s142
      %p144 = scmp.eq.s32.totalorder %s92, 0
      %p145 = por %p143, %p144
      %s147 = sadd.s32 %s146, 1
      %p150 = scmp.eq.s32.totalorder %s86, 1
      %p151 = scmp.ne.s32.totalorder %s146, %s148
      %p152 = scmp.eq.s32.totalorder %s86, 0
      %p153 = por %p151, %p152
      %p154 = scmp.ne.s32.totalorder %s146, %s148
      %p155 = scmp.eq.s32.totalorder %s91, 1
      %p156 = por %p154, %p155
      %p157 = scmp.ne.s32.totalorder %s148, %s149
      %p158 = scmp.eq.s32.totalorder %s91, 0
      %p159 = por %p157, %p158
      %p160 = scmp.ne.s32.totalorder %s148, %s149
      %p161 = scmp.eq.s32.totalorder %s92, 1
      %p162 = por %p160, %p161
      %p164 = scmp.ne.s32.totalorder %s149, %s163
      %p165 = scmp.eq.s32.totalorder %s92, 0
      %p166 = por %p164, %p165
      %s168 = sadd.s32 %s167, 1
      %p171 = scmp.eq.s32.totalorder %s86, 1
      %p172 = scmp.ne.s32.totalorder %s167, %s169
      %p173 = scmp.eq.s32.totalorder %s86, 0
      %p174 = por %p172, %p173
      %p175 = scmp.ne.s32.totalorder %s167, %s169
      %p176 = scmp.eq.s32.totalorder %s91, 1
      %p177 = por %p175, %p176
      %p178 = scmp.ne.s32.totalorder %s169, %s170
      %p179 = scmp.eq.s32.totalorder %s91, 0
      %p180 = por %p178, %p179
      %p181 = scmp.ne.s32.totalorder %s169, %s170
      %p182 = scmp.eq.s32.totalorder %s92, 1
      %p183 = por %p181, %p182
      %p185 = scmp.ne.s32.totalorder %s170, %s184
      %p186 = scmp.eq.s32.totalorder %s92, 0
      %p187 = por %p185, %p186
      %s189 = sadd.s32 %s188, 1
      %p192 = scmp.eq.s32.totalorder %s86, 1
      %p193 = scmp.ne.s32.totalorder %s188, %s190
      %p194 = scmp.eq.s32.totalorder %s86, 0
      %p195 = por %p193, %p194
      %p196 = scmp.ne.s32.totalorder %s188, %s190
      %p197 = scmp.eq.s32.totalorder %s91, 1
      %p198 = por %p196, %p197
      %p199 = scmp.ne.s32.totalorder %s190, %s191
      %p200 = scmp.eq.s32.totalorder %s91, 0
      %p201 = por %p199, %p200
      %p202 = scmp.ne.s32.totalorder %s190, %s191
      %p203 = scmp.eq.s32.totalorder %s92, 1
      %p204 = por %p202, %p203
      %p206 = scmp.ne.s32.totalorder %s191, %s205
      %p207 = scmp.eq.s32.totalorder %s92, 0
      %p208 = por %p206, %p207
      %s210 = sadd.s32 %s209, 1
      %p213 = scmp.eq.s32.totalorder %s86, 1
      %p214 = scmp.ne.s32.totalorder %s209, %s211
      %p215 = scmp.eq.s32.totalorder %s86, 0
      %p216 = por %p214, %p215
      %p217 = scmp.ne.s32.totalorder %s209, %s211
      %p218 = scmp.eq.s32.totalorder %s91, 1
      %p219 = por %p217, %p218
      %p220 = scmp.ne.s32.totalorder %s211, %s212
      %p221 = scmp.eq.s32.totalorder %s91, 0
      %p222 = por %p220, %p221
      %p223 = scmp.ne.s32.totalorder %s211, %s212
      %p224 = scmp.eq.s32.totalorder %s92, 1
      %p225 = por %p223, %p224
      %p227 = scmp.ne.s32.totalorder %s212, %s226
      %p228 = scmp.eq.s32.totalorder %s92, 0
      %p229 = por %p227, %p228
      %s231 = sadd.s32 %s230, 1
      %p234 = scmp.eq.s32.totalorder %s86, 1
      %p235 = scmp.ne.s32.totalorder %s230, %s232
      %p236 = scmp.eq.s32.totalorder %s86, 0
      %p237 = por %p235, %p236
      %p238 = scmp.ne.s32.totalorder %s230, %s232
      %p239 = scmp.eq.s32.totalorder %s91, 1
      %p240 = por %p238, %p239
      %p241 = scmp.ne.s32.totalorder %s232, %s233
      %p242 = scmp.eq.s32.totalorder %s91, 0
      %p243 = por %p241, %p242
      %p244 = scmp.ne.s32.totalorder %s232, %s233
      %p245 = scmp.eq.s32.totalorder %s92, 1
      %p246 = por %p244, %p245
      %p248 = scmp.ne.s32.totalorder %s233, %s247
      %p249 = scmp.eq.s32.totalorder %s92, 0
      %p250 = por %p248, %p249
      %s252 = sadd.s32 %s251, 1
      %p255 = scmp.eq.s32.totalorder %s86, 1
      %p256 = scmp.ne.s32.totalorder %s251, %s253
      %p257 = scmp.eq.s32.totalorder %s86, 0
      %p258 = por %p256, %p257
      %p259 = scmp.ne.s32.totalorder %s251, %s253
      %p260 = scmp.eq.s32.totalorder %s91, 1
      %p261 = por %p259, %p260
      %p262 = scmp.ne.s32.totalorder %s253, %s254
      %p263 = scmp.eq.s32.totalorder %s91, 0
      %p264 = por %p262, %p263
      %p265 = scmp.ne.s32.totalorder %s253, %s254
      %p266 = scmp.eq.s32.totalorder %s92, 1
      %p267 = por %p265, %p266
      %p269 = scmp.ne.s32.totalorder %s254, %s268
      %p270 = scmp.eq.s32.totalorder %s92, 0
      %p271 = por %p269, %p270
      %s273 = sadd.s32 %s272, 1
      %p276 = scmp.eq.s32.totalorder %s86, 1
      %p277 = scmp.ne.s32.totalorder %s272, %s274
      %p278 = scmp.eq.s32.totalorder %s86, 0
      %p279 = por %p277, %p278
      %p280 = scmp.ne.s32.totalorder %s272, %s274
      %p281 = scmp.eq.s32.totalorder %s91, 1
      %p282 = por %p280, %p281
      %p283 = scmp.ne.s32.totalorder %s274, %s275
      %p284 = scmp.eq.s32.totalorder %s91, 0
      %p285 = por %p283, %p284
      %p286 = scmp.ne.s32.totalorder %s274, %s275
      %p287 = scmp.eq.s32.totalorder %s92, 1
      %p288 = por %p286, %p287
      %p290 = scmp.ne.s32.totalorder %s275, %s289
      %p291 = scmp.eq.s32.totalorder %s92, 0
      %p292 = por %p290, %p291
      %s294 = sadd.s32 %s293, 1
      %p297 = scmp.eq.s32.totalorder %s86, 1
      %p298 = scmp.ne.s32.totalorder %s293, %s295
      %p299 = scmp.eq.s32.totalorder %s86, 0
      %p300 = por %p298, %p299
      %p301 = scmp.ne.s32.totalorder %s293, %s295
      %p302 = scmp.eq.s32.totalorder %s91, 1
      %p303 = por %p301, %p302
      %p304 = scmp.ne.s32.totalorder %s295, %s296
      %p305 = scmp.eq.s32.totalorder %s91, 0
      %p306 = por %p304, %p305
      %p307 = scmp.ne.s32.totalorder %s295, %s296
      %p308 = scmp.eq.s32.totalorder %s92, 1
      %p309 = por %p307, %p308
      %p311 = scmp.ne.s32.totalorder %s296, %s310
      %p312 = scmp.eq.s32.totalorder %s92, 0
      %p313 = por %p311, %p312
      %s315 = sadd.s32 %s314, 1
      %p318 = scmp.eq.s32.totalorder %s86, 1
      %p319 = scmp.ne.s32.totalorder %s314, %s316
      %p320 = scmp.eq.s32.totalorder %s86, 0
      %p321 = por %p319, %p320
      %p322 = scmp.ne.s32.totalorder %s314, %s316
      %p323 = scmp.eq.s32.totalorder %s91, 1
      %p324 = por %p322, %p323
      %p325 = scmp.ne.s32.totalorder %s316, %s317
      %p326 = scmp.eq.s32.totalorder %s91, 0
      %p327 = por %p325, %p326
      %p328 = scmp.ne.s32.totalorder %s316, %s317
      %p329 = scmp.eq.s32.totalorder %s92, 1
      %p330 = por %p328, %p329
      %p332 = scmp.ne.s32.totalorder %s317, %s331
      %p333 = scmp.eq.s32.totalorder %s92, 0
      %p334 = por %p332, %p333
      %s336 = sadd.s32 %s335, 1
      %p339 = scmp.eq.s32.totalorder %s86, 1
      %p340 = scmp.ne.s32.totalorder %s335, %s337
      %p341 = scmp.eq.s32.totalorder %s86, 0
      %p342 = por %p340, %p341
      %p343 = scmp.ne.s32.totalorder %s335, %s337
      %p344 = scmp.eq.s32.totalorder %s91, 1
      %p345 = por %p343, %p344
      %p346 = scmp.ne.s32.totalorder %s337, %s338
      %p347 = scmp.eq.s32.totalorder %s91, 0
      %p348 = por %p346, %p347
      %p349 = scmp.ne.s32.totalorder %s337, %s338
      %p350 = scmp.eq.s32.totalorder %s92, 1
      %p351 = por %p349, %p350
      %p353 = scmp.ne.s32.totalorder %s338, %s352
      %p354 = scmp.eq.s32.totalorder %s92, 0
      %p355 = por %p353, %p354
      %s357 = sadd.s32 %s356, 1
      %p360 = scmp.eq.s32.totalorder %s86, 1
      %p361 = scmp.ne.s32.totalorder %s356, %s358
      %p362 = scmp.eq.s32.totalorder %s86, 0
      %p363 = por %p361, %p362
      %p364 = scmp.ne.s32.totalorder %s356, %s358
      %p365 = scmp.eq.s32.totalorder %s91, 1
      %p366 = por %p364, %p365
      %p367 = scmp.ne.s32.totalorder %s358, %s359
      %p368 = scmp.eq.s32.totalorder %s91, 0
      %p369 = por %p367, %p368
      %p370 = scmp.ne.s32.totalorder %s358, %s359
      %p371 = scmp.eq.s32.totalorder %s92, 1
      %p372 = por %p370, %p371
      %p374 = scmp.ne.s32.totalorder %s359, %s373
      %p375 = scmp.eq.s32.totalorder %s92, 0
      %p376 = por %p374, %p375
      %s378 = sadd.s32 %s377, 1
      %p381 = scmp.eq.s32.totalorder %s86, 1
      %p382 = scmp.ne.s32.totalorder %s377, %s379
      %p383 = scmp.eq.s32.totalorder %s86, 0
      %p384 = por %p382, %p383
      %p385 = scmp.ne.s32.totalorder %s377, %s379
      %p386 = scmp.eq.s32.totalorder %s91, 1
      %p387 = por %p385, %p386
      %p388 = scmp.ne.s32.totalorder %s379, %s380
      %p389 = scmp.eq.s32.totalorder %s91, 0
      %p390 = por %p388, %p389
      %p391 = scmp.ne.s32.totalorder %s379, %s380
      %p392 = scmp.eq.s32.totalorder %s92, 1
      %p393 = por %p391, %p392
      %p395 = scmp.ne.s32.totalorder %s380, %s394
      %p396 = scmp.eq.s32.totalorder %s92, 0
      %p397 = por %p395, %p396
      %s399 = sadd.s32 %s398, 1
      %p402 = scmp.eq.s32.totalorder %s86, 1
      %p403 = scmp.ne.s32.totalorder %s398, %s400
      %p404 = scmp.eq.s32.totalorder %s86, 0
      %p405 = por %p403, %p404
      %p406 = scmp.ne.s32.totalorder %s398, %s400
      %p407 = scmp.eq.s32.totalorder %s91, 1
      %p408 = por %p406, %p407
      %p409 = scmp.ne.s32.totalorder %s400, %s401
      %p410 = scmp.eq.s32.totalorder %s91, 0
      %p411 = por %p409, %p410
      %p412 = scmp.ne.s32.totalorder %s400, %s401
      %p413 = scmp.eq.s32.totalorder %s92, 1
      %p414 = por %p412, %p413
      %p416 = scmp.ne.s32.totalorder %s401, %s415
      %p417 = scmp.eq.s32.totalorder %s92, 0
      %p418 = por %p416, %p417
      %s420 = sadd.s32 %s419, 1
      %p423 = scmp.eq.s32.totalorder %s86, 1
      %p424 = scmp.ne.s32.totalorder %s419, %s421
      %p425 = scmp.eq.s32.totalorder %s86, 0
      %p426 = por %p424, %p425
      %p427 = scmp.ne.s32.totalorder %s419, %s421
      %p428 = scmp.eq.s32.totalorder %s91, 1
      %p429 = por %p427, %p428
      %p430 = scmp.ne.s32.totalorder %s421, %s422
      %p431 = scmp.eq.s32.totalorder %s91, 0
      %p432 = por %p430, %p431
      %p433 = scmp.ne.s32.totalorder %s421, %s422
      %p434 = scmp.eq.s32.totalorder %s92, 1
      %p435 = por %p433, %p434
      %p437 = scmp.ne.s32.totalorder %s422, %s436
      %p438 = scmp.eq.s32.totalorder %s92, 0
      %p439 = por %p437, %p438
      %s441 = sadd.s32 %s440, 1
      %p444 = scmp.eq.s32.totalorder %s86, 1
      %p445 = scmp.ne.s32.totalorder %s440, %s442
      %p446 = scmp.eq.s32.totalorder %s86, 0
      %p447 = por %p445, %p446
      %p448 = scmp.ne.s32.totalorder %s440, %s442
      %p449 = scmp.eq.s32.totalorder %s91, 1
      %p450 = por %p448, %p449
      %p451 = scmp.ne.s32.totalorder %s442, %s443
      %p452 = scmp.eq.s32.totalorder %s91, 0
      %p453 = por %p451, %p452
      %p454 = scmp.ne.s32.totalorder %s442, %s443
      %p455 = scmp.eq.s32.totalorder %s92, 1
      %p456 = por %p454, %p455
      %p458 = scmp.ne.s32.totalorder %s443, %s457
      %p459 = scmp.eq.s32.totalorder %s92, 0
      %p460 = por %p458, %p459
      %s462 = sadd.s32 %s461, 1
      %p465 = scmp.eq.s32.totalorder %s86, 1
      %p466 = scmp.ne.s32.totalorder %s461, %s463
      %p467 = scmp.eq.s32.totalorder %s86, 0
      %p468 = por %p466, %p467
      %p469 = scmp.ne.s32.totalorder %s461, %s463
      %p470 = scmp.eq.s32.totalorder %s91, 1
      %p471 = por %p469, %p470
      %p472 = scmp.ne.s32.totalorder %s463, %s464
      %p473 = scmp.eq.s32.totalorder %s91, 0
      %p474 = por %p472, %p473
      %p475 = scmp.ne.s32.totalorder %s463, %s464
      %p476 = scmp.eq.s32.totalorder %s92, 1
      %p477 = por %p475, %p476
      %p479 = scmp.ne.s32.totalorder %s464, %s478
      %p480 = scmp.eq.s32.totalorder %s92, 0
      %p481 = por %p479, %p480
      %s483 = sadd.s32 %s482, 1
      %p486 = scmp.eq.s32.totalorder %s86, 1
      %p487 = scmp.ne.s32.totalorder %s482, %s484
      %p488 = scmp.eq.s32.totalorder %s86, 0
      %p489 = por %p487, %p488
      %p490 = scmp.ne.s32.totalorder %s482, %s484
      %p491 = scmp.eq.s32.totalorder %s91, 1
      %p492 = por %p490, %p491
      %p493 = scmp.ne.s32.totalorder %s484, %s485
      %p494 = scmp.eq.s32.totalorder %s91, 0
      %p495 = por %p493, %p494
      %p496 = scmp.ne.s32.totalorder %s484, %s485
      %p497 = scmp.eq.s32.totalorder %s92, 1
      %p498 = por %p496, %p497
      %p500 = scmp.ne.s32.totalorder %s485, %s499
      %p501 = scmp.eq.s32.totalorder %s92, 0
      %p502 = por %p500, %p501
      %s504 = sadd.s32 %s503, 1
      %p507 = scmp.eq.s32.totalorder %s86, 1
      %p508 = scmp.ne.s32.totalorder %s503, %s505
      %p509 = scmp.eq.s32.totalorder %s86, 0
      %p510 = por %p508, %p509
      %p511 = scmp.ne.s32.totalorder %s503, %s505
      %p512 = scmp.eq.s32.totalorder %s91, 1
      %p513 = por %p511, %p512
      %p514 = scmp.ne.s32.totalorder %s505, %s506
      %p515 = scmp.eq.s32.totalorder %s91, 0
      %p516 = por %p514, %p515
      %p517 = scmp.ne.s32.totalorder %s505, %s506
      %p518 = scmp.eq.s32.totalorder %s92, 1
      %p519 = por %p517, %p518
      %p521 = scmp.ne.s32.totalorder %s506, %s520
      %p522 = scmp.eq.s32.totalorder %s92, 0
      %p523 = por %p521, %p522
      %s525 = sadd.s32 %s524, 1
      %p528 = scmp.eq.s32.totalorder %s86, 1
      %p529 = scmp.ne.s32.totalorder %s524, %s526
      %p530 = scmp.eq.s32.totalorder %s86, 0
      %p531 = por %p529, %p530
      %p532 = scmp.ne.s32.totalorder %s524, %s526
      %p533 = scmp.eq.s32.totalorder %s91, 1
      %p534 = por %p532, %p533
      %p535 = scmp.ne.s32.totalorder %s526, %s527
      %p536 = scmp.eq.s32.totalorder %s91, 0
      %p537 = por %p535, %p536
      %p538 = scmp.ne.s32.totalorder %s526, %s527
      %p539 = scmp.eq.s32.totalorder %s92, 1
      %p540 = por %p538, %p539
      %p542 = scmp.ne.s32.totalorder %s527, %s541
      %p543 = scmp.eq.s32.totalorder %s92, 0
      %p544 = por %p542, %p543
      %s546 = sadd.s32 %s545, 1
      %p549 = scmp.eq.s32.totalorder %s86, 1
      %p550 = scmp.ne.s32.totalorder %s545, %s547
      %p551 = scmp.eq.s32.totalorder %s86, 0
      %p552 = por %p550, %p551
      %p553 = scmp.ne.s32.totalorder %s545, %s547
      %p554 = scmp.eq.s32.totalorder %s91, 1
      %p555 = por %p553, %p554
      %p556 = scmp.ne.s32.totalorder %s547, %s548
      %p557 = scmp.eq.s32.totalorder %s91, 0
      %p558 = por %p556, %p557
      %p559 = scmp.ne.s32.totalorder %s547, %s548
      %p560 = scmp.eq.s32.totalorder %s92, 1
      %p561 = por %p559, %p560
      %p563 = scmp.ne.s32.totalorder %s548, %s562
      %p564 = scmp.eq.s32.totalorder %s92, 0
      %p565 = por %p563, %p564
      %s567 = sadd.s32 %s566, 1
      %p570 = scmp.eq.s32.totalorder %s86, 1
      %p571 = scmp.ne.s32.totalorder %s566, %s568
      %p572 = scmp.eq.s32.totalorder %s86, 0
      %p573 = por %p571, %p572
      %p574 = scmp.ne.s32.totalorder %s566, %s568
      %p575 = scmp.eq.s32.totalorder %s91, 1
      %p576 = por %p574, %p575
      %p577 = scmp.ne.s32.totalorder %s568, %s569
      %p578 = scmp.eq.s32.totalorder %s91, 0
      %p579 = por %p577, %p578
      %p580 = scmp.ne.s32.totalorder %s568, %s569
      %p581 = scmp.eq.s32.totalorder %s92, 1
      %p582 = por %p580, %p581
      %p584 = scmp.ne.s32.totalorder %s569, %s583
      %p585 = scmp.eq.s32.totalorder %s92, 0
      %p586 = por %p584, %p585
      %s588 = sadd.s32 %s587, 1
      %p591 = scmp.eq.s32.totalorder %s86, 1
      %p592 = scmp.ne.s32.totalorder %s587, %s589
      %p593 = scmp.eq.s32.totalorder %s86, 0
      %p594 = por %p592, %p593
      %p595 = scmp.ne.s32.totalorder %s587, %s589
      %p596 = scmp.eq.s32.totalorder %s91, 1
      %p597 = por %p595, %p596
      %p598 = scmp.ne.s32.totalorder %s589, %s590
      %p599 = scmp.eq.s32.totalorder %s91, 0
      %p600 = por %p598, %p599
      %p601 = scmp.ne.s32.totalorder %s589, %s590
      %p602 = scmp.eq.s32.totalorder %s92, 1
      %p603 = por %p601, %p602
      %p605 = scmp.ne.s32.totalorder %s590, %s604
      %p606 = scmp.eq.s32.totalorder %s92, 0
      %p607 = por %p605, %p606
      %s609 = sadd.s32 %s608, 1
      %p612 = scmp.eq.s32.totalorder %s86, 1
      %p613 = scmp.ne.s32.totalorder %s608, %s610
      %p614 = scmp.eq.s32.totalorder %s86, 0
      %p615 = por %p613, %p614
      %p616 = scmp.ne.s32.totalorder %s608, %s610
      %p617 = scmp.eq.s32.totalorder %s91, 1
      %p618 = por %p616, %p617
      %p619 = scmp.ne.s32.totalorder %s610, %s611
      %p620 = scmp.eq.s32.totalorder %s91, 0
      %p621 = por %p619, %p620
      %p622 = scmp.ne.s32.totalorder %s610, %s611
      %p623 = scmp.eq.s32.totalorder %s92, 1
      %p624 = por %p622, %p623
      %p626 = scmp.ne.s32.totalorder %s611, %s625
      %p627 = scmp.eq.s32.totalorder %s92, 0
      %p628 = por %p626, %p627
      %s630 = sadd.s32 %s629, 1
      %p633 = scmp.eq.s32.totalorder %s86, 1
      %p634 = scmp.ne.s32.totalorder %s629, %s631
      %p635 = scmp.eq.s32.totalorder %s86, 0
      %p636 = por %p634, %p635
      %p637 = scmp.ne.s32.totalorder %s629, %s631
      %p638 = scmp.eq.s32.totalorder %s91, 1
      %p639 = por %p637, %p638
      %p640 = scmp.ne.s32.totalorder %s631, %s632
      %p641 = scmp.eq.s32.totalorder %s91, 0
      %p642 = por %p640, %p641
      %p643 = scmp.ne.s32.totalorder %s631, %s632
      %p644 = scmp.eq.s32.totalorder %s92, 1
      %p645 = por %p643, %p644
      %p647 = scmp.ne.s32.totalorder %s632, %s646
      %p648 = scmp.eq.s32.totalorder %s92, 0
      %p649 = por %p647, %p648
      %s651 = sadd.s32 %s650, 1
      %p654 = scmp.eq.s32.totalorder %s86, 1
      %p655 = scmp.ne.s32.totalorder %s650, %s652
      %p656 = scmp.eq.s32.totalorder %s86, 0
      %p657 = por %p655, %p656
      %p658 = scmp.ne.s32.totalorder %s650, %s652
      %p659 = scmp.eq.s32.totalorder %s91, 1
      %p660 = por %p658, %p659
      %p661 = scmp.ne.s32.totalorder %s652, %s653
      %p662 = scmp.eq.s32.totalorder %s91, 0
      %p663 = por %p661, %p662
      %p664 = scmp.ne.s32.totalorder %s652, %s653
      %p665 = scmp.eq.s32.totalorder %s92, 1
      %p666 = por %p664, %p665
      %p668 = scmp.ne.s32.totalorder %s653, %s667
      %p669 = scmp.eq.s32.totalorder %s92, 0
      %p670 = por %p668, %p669
      %s672 = sadd.s32 %s671, 1
      %p675 = scmp.eq.s32.totalorder %s86, 1
      %p676 = scmp.ne.s32.totalorder %s671, %s673
      %p677 = scmp.eq.s32.totalorder %s86, 0
      %p678 = por %p676, %p677
      %p679 = scmp.ne.s32.totalorder %s671, %s673
      %p680 = scmp.eq.s32.totalorder %s91, 1
      %p681 = por %p679, %p680
      %p682 = scmp.ne.s32.totalorder %s673, %s674
      %p683 = scmp.eq.s32.totalorder %s91, 0
      %p684 = por %p682, %p683
      %p685 = scmp.ne.s32.totalorder %s673, %s674
      %p686 = scmp.eq.s32.totalorder %s92, 1
      %p687 = por %p685, %p686
      %p689 = scmp.ne.s32.totalorder %s674, %s688
      %p690 = scmp.eq.s32.totalorder %s92, 0
      %p691 = por %p689, %p690
      %s693 = sadd.s32 %s692, 1
      %p696 = scmp.eq.s32.totalorder %s86, 1
      %p697 = scmp.ne.s32.totalorder %s692, %s694
      %p698 = scmp.eq.s32.totalorder %s86, 0
      %p699 = por %p697, %p698
      %p700 = scmp.ne.s32.totalorder %s692, %s694
      %p701 = scmp.eq.s32.totalorder %s91, 1
      %p702 = por %p700, %p701
      %p703 = scmp.ne.s32.totalorder %s694, %s695
      %p704 = scmp.eq.s32.totalorder %s91, 0
      %p705 = por %p703, %p704
      %p706 = scmp.ne.s32.totalorder %s694, %s695
      %p707 = scmp.eq.s32.totalorder %s92, 1
      %p708 = por %p706, %p707
      %p710 = scmp.ne.s32.totalorder %s695, %s709
      %p711 = scmp.eq.s32.totalorder %s92, 0
      %p712 = por %p710, %p711
      %s714 = sadd.s32 %s713, 1
      %p717 = scmp.eq.s32.totalorder %s86, 1
      %p718 = scmp.ne.s32.totalorder %s713, %s715
      %p719 = scmp.eq.s32.totalorder %s86, 0
      %p720 = por %p718, %p719
      %p721 = scmp.ne.s32.totalorder %s713, %s715
      %p722 = scmp.eq.s32.totalorder %s91, 1
      %p723 = por %p721, %p722
      %p724 = scmp.ne.s32.totalorder %s715, %s716
      %p725 = scmp.eq.s32.totalorder %s91, 0
      %p726 = por %p724, %p725
      %p727 = scmp.ne.s32.totalorder %s715, %s716
      %p728 = scmp.eq.s32.totalorder %s92, 1
      %p729 = por %p727, %p728
      %p731 = scmp.ne.s32.totalorder %s716, %s730
      %p732 = scmp.eq.s32.totalorder %s92, 0
      %p733 = por %p731, %p732
      %s735 = sadd.s32 %s734, 1
      %p738 = scmp.eq.s32.totalorder %s86, 1
      %p739 = scmp.ne.s32.totalorder %s734, %s736
      %p740 = scmp.eq.s32.totalorder %s86, 0
      %p741 = por %p739, %p740
      %p742 = scmp.ne.s32.totalorder %s734, %s736
      %p743 = scmp.eq.s32.totalorder %s91, 1
      %p744 = por %p742, %p743
      %p745 = scmp.ne.s32.totalorder %s736, %s737
      %p746 = scmp.eq.s32.totalorder %s91, 0
      %p747 = por %p745, %p746
      %p748 = scmp.ne.s32.totalorder %s736, %s737
      %p749 = scmp.eq.s32.totalorder %s92, 1
      %p750 = por %p748, %p749
      %p752 = scmp.ne.s32.totalorder %s737, %s751
      %p753 = scmp.eq.s32.totalorder %s92, 0
      %p754 = por %p752, %p753
      %s755 = ssub.s32 %s86, %s93
      %p756 = scmp.eq.s32.totalorder %s755, 0
      %s758 = sadd.s32 %s757, 1
      %s759 = scalar_select %p756, %s757, %s758
      %p762 = pneg %p756
      %p763 = scmp.eq.s32.totalorder %s86, 1
      %p764 = por %p762, %p763
      %p765 = scmp.ne.s32.totalorder %s757, %s760
      %p766 = scmp.eq.s32.totalorder %s86, 0
      %p767 = por %p765, %p766
      %p768 = scmp.ne.s32.totalorder %s757, %s760
      %p769 = scmp.eq.s32.totalorder %s91, 1
      %p770 = por %p768, %p769
      %p771 = scmp.ne.s32.totalorder %s760, %s761
      %p772 = scmp.eq.s32.totalorder %s91, 0
      %p773 = por %p771, %p772
      %p774 = scmp.ne.s32.totalorder %s760, %s761
      %p775 = scmp.eq.s32.totalorder %s92, 1
      %p776 = por %p774, %p775
      %p778 = scmp.ne.s32.totalorder %s761, %s777
      %p779 = scmp.eq.s32.totalorder %s92, 0
      %p780 = por %p778, %p779
      %p781 = scmp.le.s32.totalorder 1, %s86
      %p782 = scmp.lt.s32.totalorder %s86, 3
      %p783 = pnand %p781, %p782
      %p784 = pneg %p783
      // Predicated region
      $region9: #{tpu_custom_call.1} parent=5 // pred_check
        _
      $region10: #{tpu_custom_call.1} parent=5 // pred_check_branch
        %786 = sbr.rel (%p783) target = $region12
      $region11: #{tpu_custom_call.1} parent=5 // pred_region
        %s787 = ssub.s32 %s86, 1
        // Predicated region
        $region13: #{tpu_custom_call.1} parent=11 // pred_check
          %p788 = pneg %p159
        $region14: #{tpu_custom_call.1} parent=11 // pred_check_branch
          %790 = sbr.rel (%p788) target = $region16
        $region15: #{tpu_custom_call.1} parent=11 // pred_region
          %792 = vsyncadd [#allocation6], 0
          %s794 = sshll.u32 %s5, 4
          %s795 = int_to_ptr.hbm [resolvable:$true] %s794
          %s796 = sshll.u32 [#allocation5], 4
          %s797 = int_to_ptr.vmem [resolvable:$true] %s796
          %799 = dma.hbm_to_vmem [thread:$0]  %s795, 16, %s797, [#allocation6]
        $region16: #{tpu_custom_call.1} parent=11 // pred_fallthru
          _
        // Predicated region
        $region17: #{tpu_custom_call.1} parent=11 // pred_check
          %p800 = pneg %p180
        $region18: #{tpu_custom_call.1} parent=11 // pred_check_branch
          %802 = sbr.rel (%p800) target = $region20
        $region19: #{tpu_custom_call.1} parent=11 // pred_region
          %804 = vsyncadd [#allocation6], 0
          %s806 = sshll.u32 %s7, 4
          %s807 = int_to_ptr.hbm [resolvable:$true] %s806
          %s808 = sshll.u32 [#allocation7], 4
          %s809 = int_to_ptr.vmem [resolvable:$true] %s808
          %811 = dma.hbm_to_vmem [thread:$0]  %s807, 16, %s809, [#allocation6]
        $region20: #{tpu_custom_call.1} parent=11 // pred_fallthru
          _
        // Predicated region
        $region21: #{tpu_custom_call.1} parent=11 // pred_check
          %p812 = pneg %p201
        $region22: #{tpu_custom_call.1} parent=11 // pred_check_branch
          %814 = sbr.rel (%p812) target = $region24
        $region23: #{tpu_custom_call.1} parent=11 // pred_region
          %816 = vsyncadd [#allocation9], 0
          %s817 = sshll.u32 %s9, 4
          %s818 = int_to_ptr.hbm [resolvable:$true] %s817
          %s819 = sshll.u32 [#allocation8], 4
          %s820 = int_to_ptr.vmem [resolvable:$true] %s819
          %825 = dma.hbm_to_vmem [thread:$0]  %s818, 512, %s820, [#allocation9], 128, 128, 8
        $region24: #{tpu_custom_call.1} parent=11 // pred_fallthru
          _
        // Predicated region
        $region25: #{tpu_custom_call.1} parent=11 // pred_check
          %p826 = pneg %p222
        $region26: #{tpu_custom_call.1} parent=11 // pred_check_branch
          %828 = sbr.rel (%p826) target = $region28
        $region27: #{tpu_custom_call.1} parent=11 // pred_region
          %830 = vsyncadd [#allocation9], 0
          %s831 = sshll.u32 %s11, 4
          %s832 = int_to_ptr.hbm [resolvable:$true] %s831
          %s833 = sshll.u32 [#allocation10], 4
          %s834 = int_to_ptr.vmem [resolvable:$true] %s833
          %839 = dma.hbm_to_vmem [thread:$0]  %s832, 512, %s834, [#allocation9], 64, 64, 4
        $region28: #{tpu_custom_call.1} parent=11 // pred_fallthru
          _
        // Predicated region
        $region29: #{tpu_custom_call.1} parent=11 // pred_check
          %p840 = pneg %p243
        $region30: #{tpu_custom_call.1} parent=11 // pred_check_branch
          %842 = sbr.rel (%p840) target = $region32
        $region31: #{tpu_custom_call.1} parent=11 // pred_region
          %844 = vsyncadd [#allocation12], 0
          %s846 = sshll.u32 %s13, 4
          %s847 = int_to_ptr.hbm [resolvable:$true] %s846
          %s848 = sshll.u32 [#allocation11], 4
          %s849 = int_to_ptr.vmem [resolvable:$true] %s848
          %851 = dma.hbm_to_vmem [thread:$0]  %s847, 16, %s849, [#allocation12]
        $region32: #{tpu_custom_call.1} parent=11 // pred_fallthru
          _
        // Predicated region
        $region33: #{tpu_custom_call.1} parent=11 // pred_check
          %p852 = pneg %p264
        $region34: #{tpu_custom_call.1} parent=11 // pred_check_branch
          %854 = sbr.rel (%p852) target = $region36
        $region35: #{tpu_custom_call.1} parent=11 // pred_region
          %856 = vsyncadd [#allocation12], 0
          %s858 = sshll.u32 %s15, 4
          %s859 = int_to_ptr.hbm [resolvable:$true] %s858
          %s860 = sshll.u32 [#allocation13], 4
          %s861 = int_to_ptr.vmem [resolvable:$true] %s860
          %863 = dma.hbm_to_vmem [thread:$0]  %s859, 16, %s861, [#allocation12]
        $region36: #{tpu_custom_call.1} parent=11 // pred_fallthru
          _
        // Predicated region
        $region37: #{tpu_custom_call.1} parent=11 // pred_check
          %p864 = pneg %p285
        $region38: #{tpu_custom_call.1} parent=11 // pred_check_branch
          %866 = sbr.rel (%p864) target = $region40
        $region39: #{tpu_custom_call.1} parent=11 // pred_region
          %868 = vsyncadd [#allocation15], 0
          %s870 = sshll.u32 %s17, 4
          %s871 = int_to_ptr.hbm [resolvable:$true] %s870
          %s872 = sshll.u32 [#allocation14], 4
          %s873 = int_to_ptr.vmem [resolvable:$true] %s872
          %875 = dma.hbm_to_vmem [thread:$0]  %s871, 16, %s873, [#allocation15]
        $region40: #{tpu_custom_call.1} parent=11 // pred_fallthru
          _
        // Predicated region
        $region41: #{tpu_custom_call.1} parent=11 // pred_check
          %p876 = pneg %p306
        $region42: #{tpu_custom_call.1} parent=11 // pred_check_branch
          %878 = sbr.rel (%p876) target = $region44
        $region43: #{tpu_custom_call.1} parent=11 // pred_region
          %880 = vsyncadd [#allocation15], 0
          %s881 = sshll.u32 %s19, 4
          %s882 = int_to_ptr.hbm [resolvable:$true] %s881
          %s883 = sshll.u32 [#allocation16], 4
          %s884 = int_to_ptr.vmem [resolvable:$true] %s883
          %889 = dma.hbm_to_vmem [thread:$0]  %s882, 512, %s884, [#allocation15], 64, 64, 4
        $region44: #{tpu_custom_call.1} parent=11 // pred_fallthru
          _
        // Predicated region
        $region45: #{tpu_custom_call.1} parent=11 // pred_check
          %p890 = pneg %p327
        $region46: #{tpu_custom_call.1} parent=11 // pred_check_branch
          %892 = sbr.rel (%p890) target = $region48
        $region47: #{tpu_custom_call.1} parent=11 // pred_region
          %894 = vsyncadd [#allocation18], 0
          %s895 = sshll.u32 %s21, 4
          %s896 = int_to_ptr.hbm [resolvable:$true] %s895
          %s897 = sshll.u32 [#allocation17], 4
          %s898 = int_to_ptr.vmem [resolvable:$true] %s897
          %903 = dma.hbm_to_vmem [thread:$0]  %s896, 512, %s898, [#allocation18], 64, 64, 4
        $region48: #{tpu_custom_call.1} parent=11 // pred_fallthru
          _
        // Predicated region
        $region49: #{tpu_custom_call.1} parent=11 // pred_check
          %p904 = pneg %p348
        $region50: #{tpu_custom_call.1} parent=11 // pred_check_branch
          %906 = sbr.rel (%p904) target = $region52
        $region51: #{tpu_custom_call.1} parent=11 // pred_region
          %908 = vsyncadd [#allocation18], 0
          %s909 = sshll.u32 %s23, 4
          %s910 = int_to_ptr.hbm [resolvable:$true] %s909
          %s911 = sshll.u32 [#allocation19], 4
          %s912 = int_to_ptr.vmem [resolvable:$true] %s911
          %917 = dma.hbm_to_vmem [thread:$0]  %s910, 512, %s912, [#allocation18], 64, 64, 4
        $region52: #{tpu_custom_call.1} parent=11 // pred_fallthru
          _
        // Predicated region
        $region53: #{tpu_custom_call.1} parent=11 // pred_check
          %p918 = pneg %p369
        $region54: #{tpu_custom_call.1} parent=11 // pred_check_branch
          %920 = sbr.rel (%p918) target = $region56
        $region55: #{tpu_custom_call.1} parent=11 // pred_region
          %922 = vsyncadd [#allocation21], 0
          %s923 = sshll.u32 %s25, 4
          %s924 = int_to_ptr.hbm [resolvable:$true] %s923
          %s925 = sshll.u32 [#allocation20], 4
          %s926 = int_to_ptr.vmem [resolvable:$true] %s925
          %931 = dma.hbm_to_vmem [thread:$0]  %s924, 512, %s926, [#allocation21], 64, 64, 4
        $region56: #{tpu_custom_call.1} parent=11 // pred_fallthru
          _
        // Predicated region
        $region57: #{tpu_custom_call.1} parent=11 // pred_check
          %p932 = pneg %p390
        $region58: #{tpu_custom_call.1} parent=11 // pred_check_branch
          %934 = sbr.rel (%p932) target = $region60
        $region59: #{tpu_custom_call.1} parent=11 // pred_region
          %936 = vsyncadd [#allocation21], 0
          %s938 = sshll.u32 %s27, 4
          %s939 = int_to_ptr.hbm [resolvable:$true] %s938
          %s940 = sshll.u32 [#allocation22], 4
          %s941 = int_to_ptr.vmem [resolvable:$true] %s940
          %943 = dma.hbm_to_vmem [thread:$0]  %s939, 16, %s941, [#allocation21]
        $region60: #{tpu_custom_call.1} parent=11 // pred_fallthru
          _
        // Predicated region
        $region61: #{tpu_custom_call.1} parent=11 // pred_check
          %p944 = pneg %p411
        $region62: #{tpu_custom_call.1} parent=11 // pred_check_branch
          %946 = sbr.rel (%p944) target = $region64
        $region63: #{tpu_custom_call.1} parent=11 // pred_region
          %948 = vsyncadd [#allocation24], 0
          %s950 = sshll.u32 %s29, 4
          %s951 = int_to_ptr.hbm [resolvable:$true] %s950
          %s952 = sshll.u32 [#allocation23], 4
          %s953 = int_to_ptr.vmem [resolvable:$true] %s952
          %955 = dma.hbm_to_vmem [thread:$0]  %s951, 16, %s953, [#allocation24]
        $region64: #{tpu_custom_call.1} parent=11 // pred_fallthru
          _
        // Predicated region
        $region65: #{tpu_custom_call.1} parent=11 // pred_check
          %p956 = pneg %p432
        $region66: #{tpu_custom_call.1} parent=11 // pred_check_branch
          %958 = sbr.rel (%p956) target = $region68
        $region67: #{tpu_custom_call.1} parent=11 // pred_region
          %960 = vsyncadd [#allocation24], 0
          %s962 = sshll.u32 %s31, 4
          %s963 = int_to_ptr.hbm [resolvable:$true] %s962
          %s964 = sshll.u32 [#allocation25], 4
          %s965 = int_to_ptr.vmem [resolvable:$true] %s964
          %967 = dma.hbm_to_vmem [thread:$0]  %s963, 16, %s965, [#allocation24]
        $region68: #{tpu_custom_call.1} parent=11 // pred_fallthru
          _
        // Predicated region
        $region69: #{tpu_custom_call.1} parent=11 // pred_check
          %p968 = pneg %p453
        $region70: #{tpu_custom_call.1} parent=11 // pred_check_branch
          %970 = sbr.rel (%p968) target = $region72
        $region71: #{tpu_custom_call.1} parent=11 // pred_region
          %972 = vsyncadd [#allocation27], 0
          %s973 = sshll.u32 %s33, 4
          %s974 = int_to_ptr.hbm [resolvable:$true] %s973
          %s975 = sshll.u32 [#allocation26], 4
          %s976 = int_to_ptr.vmem [resolvable:$true] %s975
          %981 = dma.hbm_to_vmem [thread:$0]  %s974, 512, %s976, [#allocation27], 64, 64, 4
        $region72: #{tpu_custom_call.1} parent=11 // pred_fallthru
          _
        // Predicated region
        $region73: #{tpu_custom_call.1} parent=11 // pred_check
          %p982 = pneg %p474
        $region74: #{tpu_custom_call.1} parent=11 // pred_check_branch
          %984 = sbr.rel (%p982) target = $region76
        $region75: #{tpu_custom_call.1} parent=11 // pred_region
          %986 = vsyncadd [#allocation27], 0
          %s987 = sshll.u32 %s35, 4
          %s988 = int_to_ptr.hbm [resolvable:$true] %s987
          %s989 = sshll.u32 [#allocation28], 4
          %s990 = int_to_ptr.vmem [resolvable:$true] %s989
          %995 = dma.hbm_to_vmem [thread:$0]  %s988, 256, %s990, [#allocation27], 64, 64, 4
        $region76: #{tpu_custom_call.1} parent=11 // pred_fallthru
          _
        // Predicated region
        $region77: #{tpu_custom_call.1} parent=11 // pred_check
          %p996 = pneg %p495
        $region78: #{tpu_custom_call.1} parent=11 // pred_check_branch
          %998 = sbr.rel (%p996) target = $region80
        $region79: #{tpu_custom_call.1} parent=11 // pred_region
          _
        $region80: #{tpu_custom_call.1} parent=11 // pred_fallthru
          _
        // Predicated region
        $region81: #{tpu_custom_call.1} parent=11 // pred_check
          %p999 = pneg %p516
        $region82: #{tpu_custom_call.1} parent=11 // pred_check_branch
          %1001 = sbr.rel (%p999) target = $region84
        $region83: #{tpu_custom_call.1} parent=11 // pred_region
          %1003 = vsyncadd [#allocation30], 0
          %s1004 = sshll.u32 %s39, 4
          %s1005 = int_to_ptr.hbm [resolvable:$true] %s1004
          %s1006 = sshll.u32 [#allocation29], 4
          %s1007 = int_to_ptr.vmem [resolvable:$true] %s1006
          %1012 = dma.hbm_to_vmem [thread:$0]  %s1005, 512, %s1007, [#allocation30], 64, 64, 4
        $region84: #{tpu_custom_call.1} parent=11 // pred_fallthru
          _
        // Predicated region
        $region85: #{tpu_custom_call.1} parent=11 // pred_check
          %p1013 = pneg %p537
        $region86: #{tpu_custom_call.1} parent=11 // pred_check_branch
          %1015 = sbr.rel (%p1013) target = $region88
        $region87: #{tpu_custom_call.1} parent=11 // pred_region
          %1017 = vsyncadd [#allocation30], 0
          %s1019 = sshll.u32 %s41, 4
          %s1020 = int_to_ptr.hbm [resolvable:$true] %s1019
          %s1021 = sshll.u32 [#allocation31], 4
          %s1022 = int_to_ptr.vmem [resolvable:$true] %s1021
          %1024 = dma.hbm_to_vmem [thread:$0]  %s1020, 16, %s1022, [#allocation30]
        $region88: #{tpu_custom_call.1} parent=11 // pred_fallthru
          _
        // Predicated region
        $region89: #{tpu_custom_call.1} parent=11 // pred_check
          %p1025 = pneg %p558
        $region90: #{tpu_custom_call.1} parent=11 // pred_check_branch
          %1027 = sbr.rel (%p1025) target = $region92
        $region91: #{tpu_custom_call.1} parent=11 // pred_region
          %1029 = vsyncadd [#allocation33], 0
          %s1031 = sshll.u32 %s43, 4
          %s1032 = int_to_ptr.hbm [resolvable:$true] %s1031
          %s1033 = sshll.u32 [#allocation32], 4
          %s1034 = int_to_ptr.vmem [resolvable:$true] %s1033
          %1036 = dma.hbm_to_vmem [thread:$0]  %s1032, 16, %s1034, [#allocation33]
        $region92: #{tpu_custom_call.1} parent=11 // pred_fallthru
          _
        // Predicated region
        $region93: #{tpu_custom_call.1} parent=11 // pred_check
          %p1037 = pneg %p579
        $region94: #{tpu_custom_call.1} parent=11 // pred_check_branch
          %1039 = sbr.rel (%p1037) target = $region96
        $region95: #{tpu_custom_call.1} parent=11 // pred_region
          %1041 = vsyncadd [#allocation33], 0
          %s1043 = sshll.u32 %s45, 4
          %s1044 = int_to_ptr.hbm [resolvable:$true] %s1043
          %s1045 = sshll.u32 [#allocation34], 4
          %s1046 = int_to_ptr.vmem [resolvable:$true] %s1045
          %1048 = dma.hbm_to_vmem [thread:$0]  %s1044, 16, %s1046, [#allocation33]
        $region96: #{tpu_custom_call.1} parent=11 // pred_fallthru
          _
        // Predicated region
        $region97: #{tpu_custom_call.1} parent=11 // pred_check
          %p1049 = pneg %p600
        $region98: #{tpu_custom_call.1} parent=11 // pred_check_branch
          %1051 = sbr.rel (%p1049) target = $region100
        $region99: #{tpu_custom_call.1} parent=11 // pred_region
          _
        $region100: #{tpu_custom_call.1} parent=11 // pred_fallthru
          _
        // Predicated region
        $region101: #{tpu_custom_call.1} parent=11 // pred_check
          %p1052 = pneg %p621
        $region102: #{tpu_custom_call.1} parent=11 // pred_check_branch
          %1054 = sbr.rel (%p1052) target = $region104
        $region103: #{tpu_custom_call.1} parent=11 // pred_region
          _
        $region104: #{tpu_custom_call.1} parent=11 // pred_fallthru
          _
        // Predicated region
        $region105: #{tpu_custom_call.1} parent=11 // pred_check
          %p1055 = pneg %p642
        $region106: #{tpu_custom_call.1} parent=11 // pred_check_branch
          %1057 = sbr.rel (%p1055) target = $region108
        $region107: #{tpu_custom_call.1} parent=11 // pred_region
          %1059 = vsyncadd [#allocation36], 0
          %s1060 = sshll.u32 %s51, 4
          %s1061 = int_to_ptr.hbm [resolvable:$true] %s1060
          %s1062 = sshll.u32 [#allocation35], 4
          %s1063 = int_to_ptr.vmem [resolvable:$true] %s1062
          %1068 = dma.hbm_to_vmem [thread:$0]  %s1061, 1024, %s1063, [#allocation36], 128, 128, 8
        $region108: #{tpu_custom_call.1} parent=11 // pred_fallthru
          _
        // Predicated region
        $region109: #{tpu_custom_call.1} parent=11 // pred_check
          %p1069 = pneg %p663
        $region110: #{tpu_custom_call.1} parent=11 // pred_check_branch
          %1071 = sbr.rel (%p1069) target = $region112
        $region111: #{tpu_custom_call.1} parent=11 // pred_region
          _
        $region112: #{tpu_custom_call.1} parent=11 // pred_fallthru
          _
        // Predicated region
        $region113: #{tpu_custom_call.1} parent=11 // pred_check
          %p1072 = pneg %p684
        $region114: #{tpu_custom_call.1} parent=11 // pred_check_branch
          %1074 = sbr.rel (%p1072) target = $region116
        $region115: #{tpu_custom_call.1} parent=11 // pred_region
          _
        $region116: #{tpu_custom_call.1} parent=11 // pred_fallthru
          _
        // Predicated region
        $region117: #{tpu_custom_call.1} parent=11 // pred_check
          %p1075 = pneg %p705
        $region118: #{tpu_custom_call.1} parent=11 // pred_check_branch
          %1077 = sbr.rel (%p1075) target = $region120
        $region119: #{tpu_custom_call.1} parent=11 // pred_region
          _
        $region120: #{tpu_custom_call.1} parent=11 // pred_fallthru
          _
        // Predicated region
        $region121: #{tpu_custom_call.1} parent=11 // pred_check
          %p1078 = pneg %p726
        $region122: #{tpu_custom_call.1} parent=11 // pred_check_branch
          %1080 = sbr.rel (%p1078) target = $region124
        $region123: #{tpu_custom_call.1} parent=11 // pred_region
          %1082 = vsyncadd [#allocation36], 0
          %s1083 = sshll.u32 %s59, 4
          %s1084 = int_to_ptr.hbm [resolvable:$true] %s1083
          %s1085 = sshll.u32 [#allocation37], 4
          %s1086 = int_to_ptr.vmem [resolvable:$true] %s1085
          %1091 = dma.hbm_to_vmem [thread:$0]  %s1084, 512, %s1086, [#allocation36], 64, 64, 4
        $region124: #{tpu_custom_call.1} parent=11 // pred_fallthru
          _
        // Predicated region
        $region125: #{tpu_custom_call.1} parent=11 // pred_check
          %p1092 = pneg %p747
        $region126: #{tpu_custom_call.1} parent=11 // pred_check_branch
          %1094 = sbr.rel (%p1092) target = $region128
        $region127: #{tpu_custom_call.1} parent=11 // pred_region
          _
        $region128: #{tpu_custom_call.1} parent=11 // pred_fallthru
          _
      $region12: #{tpu_custom_call.1} parent=5 // pred_fallthru
        _
      %p1095 = scmp.lt.s32.totalorder %s86, 2
      // Predicated region
      $region129: #{tpu_custom_call.1} parent=5 // pred_check
        %p1096 = pneg %p1095
      $region130: #{tpu_custom_call.1} parent=5 // pred_check_branch
        %1098 = sbr.rel (%p1096) target = $region132
      $region131: #{tpu_custom_call.1} parent=5 // pred_region
        // Predicated region
        $region133: #{tpu_custom_call.1} parent=131 // pred_check
          %p1099 = pneg %p106
        $region134: #{tpu_custom_call.1} parent=131 // pred_check_branch
          %1101 = sbr.rel (%p1099) target = $region136
        $region135: #{tpu_custom_call.1} parent=131 // pred_region
          %p1102 = scmp.lt.s32.totalorder %s86, 1
          %s1103 = scalar_select %p1102, %s86, 1
          %s1104 = smul.addr %s1103, 8
          %s1105 = smul.addr %s1104, 8
          %s1106 = scalar_lea.vmem %s1, %s1105
        $region136: #{tpu_custom_call.1} parent=131 // pred_fallthru
          _
        // Predicated region
        $region137: #{tpu_custom_call.1} parent=131 // pred_check
          %p1107 = pneg %p132
        $region138: #{tpu_custom_call.1} parent=131 // pred_check_branch
          %1109 = sbr.rel (%p1107) target = $region140
        $region139: #{tpu_custom_call.1} parent=131 // pred_region
          %s1110 = sand.u32 %s122, 1
          %s1111 = scalar_lea.sflag [#allocation3], %s1110
          %s1112 = sand.u32 %s122, 1
          %s1113 = smul.addr %s1112, 8
          %s1114 = scalar_lea.vmem [#allocation2], %s1113
          %1116 = vsyncadd %s1111, 0
          %s1117 = smul.addr %s86, 8
          %s1118 = scalar_lea.hbm %s3, %s1117
          %s1120 = sshll.u32 %s1118, 4
          %s1121 = int_to_ptr.hbm [resolvable:$true] %s1120
          %s1122 = sshll.u32 %s1114, 4
          %s1123 = int_to_ptr.vmem [resolvable:$true] %s1122
          %1125 = dma.hbm_to_vmem [thread:$0]  %s1121, 128, %s1123, %s1111
        $region140: #{tpu_custom_call.1} parent=131 // pred_fallthru
          _
      $region132: #{tpu_custom_call.1} parent=5 // pred_fallthru
        _
      %p1126 = scmp.le.s32.totalorder 1, %s86
      %p1127 = scmp.lt.s32.totalorder %s86, 3
      %p1128 = pnand %p1126, %p1127
      %p1129 = pneg %p1128
      // Predicated region
      $region141: #{tpu_custom_call.1} parent=5 // pred_check
        _
      $region142: #{tpu_custom_call.1} parent=5 // pred_check_branch
        %1131 = sbr.rel (%p1128) target = $region144
      $region143: #{tpu_custom_call.1} parent=5 // pred_region
        %s1132 = ssub.s32 %s86, 1
        %s1133 = sand.u32 %s125, 1
        %s1134 = scalar_lea.sflag [#allocation3], %s1133
        %s1135 = sand.u32 %s125, 1
        %s1136 = smul.addr %s1135, 8
        %s1137 = scalar_lea.vmem [#allocation2], %s1136
        // Predicated region
        $region145: #{tpu_custom_call.1} parent=143 // pred_check
          %p1138 = pneg %p138
        $region146: #{tpu_custom_call.1} parent=143 // pred_check_branch
          %1140 = sbr.rel (%p1138) target = $region148
        $region147: #{tpu_custom_call.1} parent=143 // pred_region
          %1142 = dma.done %s1134, 128
        $region148: #{tpu_custom_call.1} parent=143 // pred_fallthru
          _
        // Predicated region
        $region149: #{tpu_custom_call.1} parent=143 // pred_check
          %p1143 = pneg %p159
        $region150: #{tpu_custom_call.1} parent=143 // pred_check_branch
          %1145 = sbr.rel (%p1143) target = $region152
        $region151: #{tpu_custom_call.1} parent=143 // pred_region
          %1147 = dma.done [#allocation6], 16
        $region152: #{tpu_custom_call.1} parent=143 // pred_fallthru
          _
        // Predicated region
        $region153: #{tpu_custom_call.1} parent=143 // pred_check
          %p1148 = pneg %p180
        $region154: #{tpu_custom_call.1} parent=143 // pred_check_branch
          %1150 = sbr.rel (%p1148) target = $region156
        $region155: #{tpu_custom_call.1} parent=143 // pred_region
          %1152 = dma.done [#allocation6], 16
        $region156: #{tpu_custom_call.1} parent=143 // pred_fallthru
          _
        // Predicated region
        $region157: #{tpu_custom_call.1} parent=143 // pred_check
          %p1153 = pneg %p201
        $region158: #{tpu_custom_call.1} parent=143 // pred_check_branch
          %1155 = sbr.rel (%p1153) target = $region160
        $region159: #{tpu_custom_call.1} parent=143 // pred_region
          %1157 = dma.done [#allocation9], 512
        $region160: #{tpu_custom_call.1} parent=143 // pred_fallthru
          _
        // Predicated region
        $region161: #{tpu_custom_call.1} parent=143 // pred_check
          %p1158 = pneg %p222
        $region162: #{tpu_custom_call.1} parent=143 // pred_check_branch
          %1160 = sbr.rel (%p1158) target = $region164
        $region163: #{tpu_custom_call.1} parent=143 // pred_region
          %1162 = dma.done [#allocation9], 512
        $region164: #{tpu_custom_call.1} parent=143 // pred_fallthru
          _
        // Predicated region
        $region165: #{tpu_custom_call.1} parent=143 // pred_check
          %p1163 = pneg %p243
        $region166: #{tpu_custom_call.1} parent=143 // pred_check_branch
          %1165 = sbr.rel (%p1163) target = $region168
        $region167: #{tpu_custom_call.1} parent=143 // pred_region
          %1167 = dma.done [#allocation12], 16
        $region168: #{tpu_custom_call.1} parent=143 // pred_fallthru
          _
        // Predicated region
        $region169: #{tpu_custom_call.1} parent=143 // pred_check
          %p1168 = pneg %p264
        $region170: #{tpu_custom_call.1} parent=143 // pred_check_branch
          %1170 = sbr.rel (%p1168) target = $region172
        $region171: #{tpu_custom_call.1} parent=143 // pred_region
          %1172 = dma.done [#allocation12], 16
        $region172: #{tpu_custom_call.1} parent=143 // pred_fallthru
          _
        // Predicated region
        $region173: #{tpu_custom_call.1} parent=143 // pred_check
          %p1173 = pneg %p285
        $region174: #{tpu_custom_call.1} parent=143 // pred_check_branch
          %1175 = sbr.rel (%p1173) target = $region176
        $region175: #{tpu_custom_call.1} parent=143 // pred_region
          %1177 = dma.done [#allocation15], 16
        $region176: #{tpu_custom_call.1} parent=143 // pred_fallthru
          _
        // Predicated region
        $region177: #{tpu_custom_call.1} parent=143 // pred_check
          %p1178 = pneg %p306
        $region178: #{tpu_custom_call.1} parent=143 // pred_check_branch
          %1180 = sbr.rel (%p1178) target = $region180
        $region179: #{tpu_custom_call.1} parent=143 // pred_region
          %1182 = dma.done [#allocation15], 512
        $region180: #{tpu_custom_call.1} parent=143 // pred_fallthru
          _
        // Predicated region
        $region181: #{tpu_custom_call.1} parent=143 // pred_check
          %p1183 = pneg %p327
        $region182: #{tpu_custom_call.1} parent=143 // pred_check_branch
          %1185 = sbr.rel (%p1183) target = $region184
        $region183: #{tpu_custom_call.1} parent=143 // pred_region
          %1187 = dma.done [#allocation18], 512
        $region184: #{tpu_custom_call.1} parent=143 // pred_fallthru
          _
        // Predicated region
        $region185: #{tpu_custom_call.1} parent=143 // pred_check
          %p1188 = pneg %p348
        $region186: #{tpu_custom_call.1} parent=143 // pred_check_branch
          %1190 = sbr.rel (%p1188) target = $region188
        $region187: #{tpu_custom_call.1} parent=143 // pred_region
          %1192 = dma.done [#allocation18], 512
        $region188: #{tpu_custom_call.1} parent=143 // pred_fallthru
          _
        // Predicated region
        $region189: #{tpu_custom_call.1} parent=143 // pred_check
          %p1193 = pneg %p369
        $region190: #{tpu_custom_call.1} parent=143 // pred_check_branch
          %1195 = sbr.rel (%p1193) target = $region192
        $region191: #{tpu_custom_call.1} parent=143 // pred_region
          %1197 = dma.done [#allocation21], 512
        $region192: #{tpu_custom_call.1} parent=143 // pred_fallthru
          _
        // Predicated region
        $region193: #{tpu_custom_call.1} parent=143 // pred_check
          %p1198 = pneg %p390
        $region194: #{tpu_custom_call.1} parent=143 // pred_check_branch
          %1200 = sbr.rel (%p1198) target = $region196
        $region195: #{tpu_custom_call.1} parent=143 // pred_region
          %1202 = dma.done [#allocation21], 16
        $region196: #{tpu_custom_call.1} parent=143 // pred_fallthru
          _
        // Predicated region
        $region197: #{tpu_custom_call.1} parent=143 // pred_check
          %p1203 = pneg %p411
        $region198: #{tpu_custom_call.1} parent=143 // pred_check_branch
          %1205 = sbr.rel (%p1203) target = $region200
        $region199: #{tpu_custom_call.1} parent=143 // pred_region
          %1207 = dma.done [#allocation24], 16
        $region200: #{tpu_custom_call.1} parent=143 // pred_fallthru
          _
        // Predicated region
        $region201: #{tpu_custom_call.1} parent=143 // pred_check
          %p1208 = pneg %p432
        $region202: #{tpu_custom_call.1} parent=143 // pred_check_branch
          %1210 = sbr.rel (%p1208) target = $region204
        $region203: #{tpu_custom_call.1} parent=143 // pred_region
          %1212 = dma.done [#allocation24], 16
        $region204: #{tpu_custom_call.1} parent=143 // pred_fallthru
          _
        // Predicated region
        $region205: #{tpu_custom_call.1} parent=143 // pred_check
          %p1213 = pneg %p453
        $region206: #{tpu_custom_call.1} parent=143 // pred_check_branch
          %1215 = sbr.rel (%p1213) target = $region208
        $region207: #{tpu_custom_call.1} parent=143 // pred_region
          %1217 = dma.done [#allocation27], 512
        $region208: #{tpu_custom_call.1} parent=143 // pred_fallthru
          _
        // Predicated region
        $region209: #{tpu_custom_call.1} parent=143 // pred_check
          %p1218 = pneg %p474
        $region210: #{tpu_custom_call.1} parent=143 // pred_check_branch
          %1220 = sbr.rel (%p1218) target = $region212
        $region211: #{tpu_custom_call.1} parent=143 // pred_region
          %1222 = dma.done [#allocation27], 256
        $region212: #{tpu_custom_call.1} parent=143 // pred_fallthru
          _
        // Predicated region
        $region213: #{tpu_custom_call.1} parent=143 // pred_check
          %p1223 = pneg %p516
        $region214: #{tpu_custom_call.1} parent=143 // pred_check_branch
          %1225 = sbr.rel (%p1223) target = $region216
        $region215: #{tpu_custom_call.1} parent=143 // pred_region
          %1227 = dma.done [#allocation30], 512
        $region216: #{tpu_custom_call.1} parent=143 // pred_fallthru
          _
        // Predicated region
        $region217: #{tpu_custom_call.1} parent=143 // pred_check
          %p1228 = pneg %p537
        $region218: #{tpu_custom_call.1} parent=143 // pred_check_branch
          %1230 = sbr.rel (%p1228) target = $region220
        $region219: #{tpu_custom_call.1} parent=143 // pred_region
          %1232 = dma.done [#allocation30], 16
        $region220: #{tpu_custom_call.1} parent=143 // pred_fallthru
          _
        // Predicated region
        $region221: #{tpu_custom_call.1} parent=143 // pred_check
          %p1233 = pneg %p558
        $region222: #{tpu_custom_call.1} parent=143 // pred_check_branch
          %1235 = sbr.rel (%p1233) target = $region224
        $region223: #{tpu_custom_call.1} parent=143 // pred_region
          %1237 = dma.done [#allocation33], 16
        $region224: #{tpu_custom_call.1} parent=143 // pred_fallthru
          _
        // Predicated region
        $region225: #{tpu_custom_call.1} parent=143 // pred_check
          %p1238 = pneg %p579
        $region226: #{tpu_custom_call.1} parent=143 // pred_check_branch
          %1240 = sbr.rel (%p1238) target = $region228
        $region227: #{tpu_custom_call.1} parent=143 // pred_region
          %1242 = dma.done [#allocation33], 16
        $region228: #{tpu_custom_call.1} parent=143 // pred_fallthru
          _
        // Predicated region
        $region229: #{tpu_custom_call.1} parent=143 // pred_check
          %p1243 = pneg %p642
        $region230: #{tpu_custom_call.1} parent=143 // pred_check_branch
          %1245 = sbr.rel (%p1243) target = $region232
        $region231: #{tpu_custom_call.1} parent=143 // pred_region
          %1247 = dma.done [#allocation36], 1024
        $region232: #{tpu_custom_call.1} parent=143 // pred_fallthru
          _
        // Predicated region
        $region233: #{tpu_custom_call.1} parent=143 // pred_check
          %p1248 = pneg %p726
        $region234: #{tpu_custom_call.1} parent=143 // pred_check_branch
          %1250 = sbr.rel (%p1248) target = $region236
        $region235: #{tpu_custom_call.1} parent=143 // pred_region
          %1252 = dma.done [#allocation36], 512
        $region236: #{tpu_custom_call.1} parent=143 // pred_fallthru
          _
        %p1253 = scmp.lt.s32.totalorder %s91, 1
        %s1254 = scalar_select %p1253, %s91, 1
        %s1255 = smul.addr %s1254, 8
        %s1256 = smul.addr %s1255, 8
        %s1257 = scalar_lea.vmem %s1, %s1256
        %p1258 = pneg %p112
        %p1259 = pneg %p109
        %s1260 = sand.u32 %s125, 1
        %s1261 = scalar_lea.sflag [#allocation3], %s1260
        %s1262 = sand.u32 %s125, 1
        %s1263 = smul.addr %s1262, 8
        %s1264 = scalar_lea.vmem [#allocation2], %s1263
        %p1265 = pneg %p138
        %p1266 = pneg %p135
        %p1267 = pneg %p159
        %p1268 = pneg %p156
        %p1269 = pneg %p180
        %p1270 = pneg %p177
        %p1271 = pneg %p201
        %p1272 = pneg %p198
        %p1273 = pneg %p222
        %p1274 = pneg %p219
        %p1275 = pneg %p243
        %p1276 = pneg %p240
        %p1277 = pneg %p264
        %p1278 = pneg %p261
        %p1279 = pneg %p285
        %p1280 = pneg %p282
        %p1281 = pneg %p306
        %p1282 = pneg %p303
        %p1283 = pneg %p327
        %p1284 = pneg %p324
        %p1285 = pneg %p348
        %p1286 = pneg %p345
        %p1287 = pneg %p369
        %p1288 = pneg %p366
        %p1289 = pneg %p390
        %p1290 = pneg %p387
        %p1291 = pneg %p411
        %p1292 = pneg %p408
        %p1293 = pneg %p432
        %p1294 = pneg %p429
        %p1295 = pneg %p453
        %p1296 = pneg %p450
        %p1297 = pneg %p474
        %p1298 = pneg %p471
        %p1299 = pneg %p495
        %p1300 = pneg %p492
        %p1301 = pneg %p516
        %p1302 = pneg %p513
        %p1303 = pneg %p537
        %p1304 = pneg %p534
        %p1305 = pneg %p558
        %p1306 = pneg %p555
        %p1307 = pneg %p579
        %p1308 = pneg %p576
        %p1309 = pneg %p600
        %p1310 = pneg %p597
        %p1311 = pneg %p621
        %p1312 = pneg %p618
        %p1313 = pneg %p642
        %p1314 = pneg %p639
        %p1315 = pneg %p663
        %p1316 = pneg %p660
        %p1317 = pneg %p684
        %p1318 = pneg %p681
        %p1319 = pneg %p705
        %p1320 = pneg %p702
        %p1321 = pneg %p726
        %p1322 = pneg %p723
        %p1323 = pneg %p747
        %p1324 = pneg %p744
        %p1325 = pneg %p773
        %p1326 = pneg %p770
        %s1327 = sand.u32 %s760, 1
        %s1328 = scalar_lea.sflag [#allocation4], %s1327
        %s1329 = sand.u32 %s760, 1
        %s1330 = smul.addr %s1329, 64
        %s1331 = scalar_lea.vmem [#allocation38], %s1330
        %p1332 = scmp.lt.s32.totalorder %s91, 1
        %s1333 = scalar_select %p1332, %s91, 1
        %s1334 = smul.addr %s1333, 8
        %s1335 = smul.addr %s1334, 8
        %s1336 = scalar_lea.vmem %s1, %s1335
        %v1338 = vld [vmem:[%s1336] sm:$0xff]
        %v1339 = vld [vmem:[%s1336 + $0x8] sm:$0xff]
        %v1340 = vld [vmem:[%s1336 + $0x10] sm:$0xff]
        %v1341 = vld [vmem:[%s1336 + $0x18] sm:$0xff]
        %v1342 = vld [vmem:[%s1336 + $0x20] sm:$0xff]
        %v1343 = vld [vmem:[%s1336 + $0x28] sm:$0xff]
        %v1344 = vld [vmem:[%s1336 + $0x30] sm:$0xff]
        %v1345 = vld [vmem:[%s1336 + $0x38] sm:$0xff]
        %1346 = vxpose.xlu0.b32.start [1/16] %v1338, 128
        %1347 = vxpose.xlu0.b32.cont [2/16] %v1339, 128
        %1348 = vxpose.xlu0.b32.cont [3/16] %v1340, 128
        %1349 = vxpose.xlu0.b32.cont [4/16] %v1341, 128
        %1350 = vxpose.xlu0.b32.cont [5/16] %v1342, 128
        %1351 = vxpose.xlu0.b32.cont [6/16] %v1343, 128
        %1352 = vxpose.xlu0.b32.cont [7/16] %v1344, 128
        %1353 = vxpose.xlu0.b32.cont [8/16] %v1345, 128
        %1354 = vxpose.xlu0.b32.cont [9/16] 0.0, 128
        %1355 = vxpose.xlu0.b32.cont [10/16] 0.0, 128
        %1356 = vxpose.xlu0.b32.cont [11/16] 0.0, 128
        %1357 = vxpose.xlu0.b32.cont [12/16] 0.0, 128
        %1358 = vxpose.xlu0.b32.cont [13/16] 0.0, 128
        %1359 = vxpose.xlu0.b32.cont [14/16] 0.0, 128
        %1360 = vxpose.xlu0.b32.cont [15/16] 0.0, 128
        %1361 = vxpose.xlu0.b32.end [16/16] 0.0, 128
        %v1362 = vpop.trf.xlu0
        %v1363 = vpop.trf.xlu0
        %v1364 = vpop.trf.xlu0
        %v1365 = vpop.trf.xlu0
        %v1366 = vpop.trf.xlu0
        %v1367 = vpop.trf.xlu0
        %v1368 = vpop.trf.xlu0
        %v1369 = vpop.trf.xlu0
        %v1370 = vpop.trf.xlu0
        %v1371 = vpop.trf.xlu0
        %v1372 = vpop.trf.xlu0
        %v1373 = vpop.trf.xlu0
        %v1374 = vpop.trf.xlu0
        %v1375 = vpop.trf.xlu0
        %v1376 = vpop.trf.xlu0
        %v1377 = vpop.trf.xlu0
        %v1378 = vld [vmem:[#allocation8] sm:$0xff]
        %v1379 = vld [vmem:[#allocation8 + $0x8] sm:$0xff]
        %v1380 = vld [vmem:[#allocation8 + $0x10] sm:$0xff]
        %v1381 = vld [vmem:[#allocation8 + $0x18] sm:$0xff]
        %vm1382 = vcmask 523264
        %v1383 = vsel %vm1382, %v1362, 0.0
        %v1384 = vsel %vm1382, %v1363, 0.0
        %v1385 = vadd.f32 %v1383, %v1384
        %v1386 = vsel %vm1382, %v1364, 0.0
        %v1387 = vadd.f32 %v1385, %v1386
        %v1388 = vsel %vm1382, %v1365, 0.0
        %v1389 = vadd.f32 %v1387, %v1388
        %v1390 = vsel %vm1382, %v1366, 0.0
        %v1391 = vadd.f32 %v1389, %v1390
        %v1392 = vsel %vm1382, %v1367, 0.0
        %v1393 = vadd.f32 %v1391, %v1392
        %v1394 = vsel %vm1382, %v1368, 0.0
        %v1395 = vadd.f32 %v1393, %v1394
        %v1396 = vsel %vm1382, %v1369, 0.0
        %v1397 = vadd.f32 %v1395, %v1396
        %v1398 = vrot.slane %v1397, 4
        %v1399 = vadd.f32 %v1397, %v1398
        %v1400 = vrot.slane %v1399, 2
        %v1401 = vadd.f32 %v1399, %v1400
        %v1402 = vrot.slane %v1401, 1
        %v1403 = vadd.f32 %v1401, %v1402
        %v1405 = vsel %vm1382, %v1403, 0
        %v1408 = vsel %vm1382, %v1378, 0
        %v1411 = vsel %vm1382, %v1379, 0
        %v1414 = vsel %vm1382, %v1380, 0
        %v1417 = vsel %vm1382, %v1381, 0
        %1419 = vmatpush.xpose.msra.mxu0 0.0
        %1420 = vmatpush.xpose.msra.mxu0 0.0
        %1421 = vmatpush.xpose.msra.mxu0 0.0
        %1422 = vmatpush.xpose.msra.mxu0 0.0
        %1423 = vmatpush.xpose.msra.mxu0 0.0
        %1424 = vmatpush.xpose.msra.mxu0 0.0
        %1425 = vmatpush.xpose.msra.mxu0 0.0
        %1426 = vmatpush.xpose.msra.mxu0 0.0
        %1427 = vmatpush.xpose.msra.mxu0 0.0
        %1428 = vmatpush.xpose.msra.mxu0 0.0
        %1429 = vmatpush.xpose.msra.mxu0 0.0
        %1430 = vmatpush.xpose.msra.mxu0 0.0
        %1431 = vmatpush.xpose.msra.mxu0 %v1417
        %1432 = vmatpush.xpose.msra.mxu0 %v1414
        %1433 = vmatpush.xpose.msra.mxu0 %v1411
        %1434 = vmatpush.xpose.msra.mxu0 %v1408
        %1435 = vmatmul.f32.gmra.mxu0 %v1405
        %v1436 = vpop.f32.mrf.mxu0
        %v1437 = vadd.f32 0.0, %v1436
        %1438 = vdwg.mxu0
        %vm1439 = vcmask 261120
        %v1441 = vsel %vm1439, %v1437, 0
        %1443 = vmatpush.msra.mxu0 0.0
        %1444 = vmatpush.msra.mxu0 0.0
        %1445 = vmatpush.msra.mxu0 0.0
        %1446 = vmatpush.msra.mxu0 0.0
        %1447 = vmatpush.msra.mxu0 0.0
        %1448 = vmatpush.msra.mxu0 0.0
        %1449 = vmatpush.msra.mxu0 0.0
        %1450 = vmatpush.msra.mxu0 0.0
        %1451 = vmatpush.msra.mxu0 0.0
        %1452 = vmatpush.msra.mxu0 0.0
        %1453 = vmatpush.msra.mxu0 0.0
        %1454 = vmatpush.msra.mxu0 0.0
        %1455 = vmatpush.msra.mxu0 %v1381
        %1456 = vmatpush.msra.mxu0 %v1380
        %1457 = vmatpush.msra.mxu0 %v1379
        %1458 = vmatpush.msra.mxu0 %v1378
        %1459 = vmatmul.f32.gmra.mxu0 %v1441
        %v1460 = vpop.f32.mrf.mxu0
        %v1461 = vadd.f32 0.0, %v1460
        %1462 = vdwg.mxu0
        %v1463 = vmul.f32 %v1461, 0.0078125
        %v1464 = vperm.slane %v1463, 0
        %v1465 = vsub.f32 %v1362, %v1464
        %v1466 = vsub.f32 %v1363, %v1464
        %v1467 = vsub.f32 %v1364, %v1464
        %v1468 = vsub.f32 %v1365, %v1464
        %v1469 = vsub.f32 %v1366, %v1464
        %v1470 = vsub.f32 %v1367, %v1464
        %v1471 = vsub.f32 %v1368, %v1464
        %v1472 = vsub.f32 %v1369, %v1464
        %v1473 = vmul.f32 %v1465, %v1465
        %v1474 = vmul.f32 %v1466, %v1466
        %v1475 = vmul.f32 %v1467, %v1467
        %v1476 = vmul.f32 %v1468, %v1468
        %v1477 = vmul.f32 %v1469, %v1469
        %v1478 = vmul.f32 %v1470, %v1470
        %v1479 = vmul.f32 %v1471, %v1471
        %v1480 = vmul.f32 %v1472, %v1472
        %v1481 = vsel %vm1382, %v1473, 0.0
        %v1482 = vsel %vm1382, %v1474, 0.0
        %v1483 = vadd.f32 %v1481, %v1482
        %v1484 = vsel %vm1382, %v1475, 0.0
        %v1485 = vadd.f32 %v1483, %v1484
        %v1486 = vsel %vm1382, %v1476, 0.0
        %v1487 = vadd.f32 %v1485, %v1486
        %v1488 = vsel %vm1382, %v1477, 0.0
        %v1489 = vadd.f32 %v1487, %v1488
        %v1490 = vsel %vm1382, %v1478, 0.0
        %v1491 = vadd.f32 %v1489, %v1490
        %v1492 = vsel %vm1382, %v1479, 0.0
        %v1493 = vadd.f32 %v1491, %v1492
        %v1494 = vsel %vm1382, %v1480, 0.0
        %v1495 = vadd.f32 %v1493, %v1494
        %v1496 = vrot.slane %v1495, 4
        %v1497 = vadd.f32 %v1495, %v1496
        %v1498 = vrot.slane %v1497, 2
        %v1499 = vadd.f32 %v1497, %v1498
        %v1500 = vrot.slane %v1499, 1
        %v1501 = vadd.f32 %v1499, %v1500
        %v1503 = vsel %vm1382, %v1501, 0
        %1505 = vmatpush.xpose.msra.mxu0 0.0
        %1506 = vmatpush.xpose.msra.mxu0 0.0
        %1507 = vmatpush.xpose.msra.mxu0 0.0
        %1508 = vmatpush.xpose.msra.mxu0 0.0
        %1509 = vmatpush.xpose.msra.mxu0 0.0
        %1510 = vmatpush.xpose.msra.mxu0 0.0
        %1511 = vmatpush.xpose.msra.mxu0 0.0
        %1512 = vmatpush.xpose.msra.mxu0 0.0
        %1513 = vmatpush.xpose.msra.mxu0 0.0
        %1514 = vmatpush.xpose.msra.mxu0 0.0
        %1515 = vmatpush.xpose.msra.mxu0 0.0
        %1516 = vmatpush.xpose.msra.mxu0 0.0
        %1517 = vmatpush.xpose.msra.mxu0 %v1417
        %1518 = vmatpush.xpose.msra.mxu0 %v1414
        %1519 = vmatpush.xpose.msra.mxu0 %v1411
        %1520 = vmatpush.xpose.msra.mxu0 %v1408
        %1521 = vmatmul.f32.gmra.mxu0 %v1503
        %v1522 = vpop.f32.mrf.mxu0
        %v1523 = vadd.f32 0.0, %v1522
        %1524 = vdwg.mxu0
        %v1526 = vsel %vm1439, %v1523, 0
        %1528 = vmatpush.msra.mxu0 0.0
        %1529 = vmatpush.msra.mxu0 0.0
        %1530 = vmatpush.msra.mxu0 0.0
        %1531 = vmatpush.msra.mxu0 0.0
        %1532 = vmatpush.msra.mxu0 0.0
        %1533 = vmatpush.msra.mxu0 0.0
        %1534 = vmatpush.msra.mxu0 0.0
        %1535 = vmatpush.msra.mxu0 0.0
        %1536 = vmatpush.msra.mxu0 0.0
        %1537 = vmatpush.msra.mxu0 0.0
        %1538 = vmatpush.msra.mxu0 0.0
        %1539 = vmatpush.msra.mxu0 0.0
        %1540 = vmatpush.msra.mxu0 %v1381
        %1541 = vmatpush.msra.mxu0 %v1380
        %1542 = vmatpush.msra.mxu0 %v1379
        %1543 = vmatpush.msra.mxu0 %v1378
        %1544 = vmatmul.f32.gmra.mxu0 %v1526
        %v1545 = vpop.f32.mrf.mxu0
        %v1546 = vadd.f32 0.0, %v1545
        %1547 = vdwg.mxu0
        %v1548 = vmul.f32 %v1546, 0.0078125
        %v1549 = vadd.f32 %v1548, 1e-06
        %v1550 = vrsqrt.pop %v1549
        %v1551 = vmul.f32 %v1550, %v1549
        %v1552 = vmul.f32 %v1551, %v1550
        %v1553 = vmul.f32 0.5, %v1552
        %v1554 = vsub.f32 1.5, %v1553
        %v1555 = vmul.f32 %v1550, %v1554
        %vm1556 = vweird.f32 %v1549
        %vm1557 = vweird.f32 %v1550
        %vm1558 = vmor %vm1556, %vm1557
        %v1559 = vsel %vm1558, %v1550, %v1555
        %v1560 = vperm.slane %v1559, 0
        %v1561 = vmul.f32 %v1465, %v1560
        %v1562 = vmul.f32 %v1466, %v1560
        %v1563 = vmul.f32 %v1467, %v1560
        %v1564 = vmul.f32 %v1468, %v1560
        %v1565 = vmul.f32 %v1469, %v1560
        %v1566 = vmul.f32 %v1470, %v1560
        %v1567 = vmul.f32 %v1471, %v1560
        %v1568 = vmul.f32 %v1472, %v1560
        %v1569 = vld [vmem:[#allocation5] sm:$0x1]
        %v1571 = vperm.slane %v1569, 0
        %v1573 = vmul.f32 %v1561, %v1571
        %v1574 = vmul.f32 %v1562, %v1571
        %v1575 = vmul.f32 %v1563, %v1571
        %v1576 = vmul.f32 %v1564, %v1571
        %v1577 = vmul.f32 %v1565, %v1571
        %v1578 = vmul.f32 %v1566, %v1571
        %v1579 = vmul.f32 %v1567, %v1571
        %v1580 = vmul.f32 %v1568, %v1571
        %v1581 = vld [vmem:[#allocation7] sm:$0x1]
        %v1583 = vperm.slane %v1581, 0
        %v1585 = vadd.f32 %v1573, %v1583
        %v1586 = vadd.f32 %v1574, %v1583
        %v1587 = vadd.f32 %v1575, %v1583
        %v1588 = vadd.f32 %v1576, %v1583
        %v1589 = vadd.f32 %v1577, %v1583
        %v1590 = vadd.f32 %v1578, %v1583
        %v1591 = vadd.f32 %v1579, %v1583
        %v1592 = vadd.f32 %v1580, %v1583
        %v1593 = vpack.c.bf16 %v1586, %v1585
        %v1594 = vpack.c.bf16 %v1588, %v1587
        %v1595 = vpack.c.bf16 %v1590, %v1589
        %v1596 = vpack.c.bf16 %v1592, %v1591
        %v1597 = vld [vmem:[#allocation10] sm:$0xf]
        %v1598 = vld [vmem:[#allocation10 + $0x4] sm:$0xf]
        %v1599 = vld [vmem:[#allocation10 + $0x8] sm:$0xf]
        %v1600 = vld [vmem:[#allocation10 + $0xc] sm:$0xf]
        %v1601 = vld [vmem:[#allocation10 + $0x10] sm:$0xf]
        %v1602 = vld [vmem:[#allocation10 + $0x14] sm:$0xf]
        %v1603 = vld [vmem:[#allocation10 + $0x18] sm:$0xf]
        %v1604 = vld [vmem:[#allocation10 + $0x1c] sm:$0xf]
        %v1605 = vld [vmem:[#allocation11] sm:$0x1]
        %v1607 = vperm.slane %v1605, 0
        %v1617 = vunpack.c.l.b16 %v1597
        %v1618 = vunpack.c.l.b16 %v1598
        %v1619 = vunpack.c.l.b16 %v1599
        %v1620 = vunpack.c.l.b16 %v1600
        %v1621 = vunpack.c.l.b16 %v1601
        %v1622 = vunpack.c.l.b16 %v1602
        %v1623 = vunpack.c.l.b16 %v1603
        %v1624 = vunpack.c.l.b16 %v1604
        %v1625 = vpack.c.b16 %v1618, %v1617
        %v1626 = vpack.c.b16 %v1620, %v1619
        %v1627 = vpack.c.b16 %v1622, %v1621
        %v1628 = vpack.c.b16 %v1624, %v1623
        %v1634 = vsel %vm1382, %v1593, 0
        %v1637 = vsel %vm1382, %v1594, 0
        %v1640 = vsel %vm1382, %v1595, 0
        %v1643 = vsel %vm1382, %v1596, 0
        %1645 = vmatpush.bf16.msra.mxu0 0
        %1646 = vmatpush.bf16.msra.mxu0 0
        %1647 = vmatpush.bf16.msra.mxu0 0
        %1648 = vmatpush.bf16.msra.mxu0 0
        %1649 = vmatpush.bf16.msra.mxu0 %v1628
        %1650 = vmatpush.bf16.msra.mxu0 %v1627
        %1651 = vmatpush.bf16.msra.mxu0 %v1626
        %1652 = vmatpush.bf16.msra.mxu0 %v1625
        %1653 = vmatmul.bf16.gmra.mxu0 %v1634
        %v1654 = vpop.f32.mrf.mxu0
        %v1655 = vadd.f32 %v1607, %v1654
        %v1656 = vpop.f32.mrf.mxu0
        %v1657 = vadd.f32 %v1607, %v1656
        %1658 = vmatmul.bf16.gmra.mxu0 %v1637
        %v1659 = vpop.f32.mrf.mxu0
        %v1660 = vadd.f32 %v1607, %v1659
        %v1661 = vpop.f32.mrf.mxu0
        %v1662 = vadd.f32 %v1607, %v1661
        %1663 = vmatmul.bf16.gmra.mxu0 %v1640
        %v1664 = vpop.f32.mrf.mxu0
        %v1665 = vadd.f32 %v1607, %v1664
        %v1666 = vpop.f32.mrf.mxu0
        %v1667 = vadd.f32 %v1607, %v1666
        %1668 = vmatmul.bf16.gmra.mxu0 %v1643
        %v1669 = vpop.f32.mrf.mxu0
        %v1670 = vadd.f32 %v1607, %v1669
        %v1671 = vpop.f32.mrf.mxu0
        %v1672 = vadd.f32 %v1607, %v1671
        %1673 = vdwg.mxu0
        %v1674 = vld [vmem:[%s1137] sm:$0xff]
        %v1675 = vpack.c.bf16 %v1674, %v1674
        %v1676 = vld [vmem:[#allocation13] sm:$0x1]
        %v1677 = vld [vmem:[#allocation14] sm:$0x1]
        %v1678 = vsel %vm1382, %v1655, 0.0
        %1679 = vadd.xlane.f32.xlu0 %v1678
        %v1680 = vpop.xlane.xlu0 %1679
        %v1681 = vsel %vm1382, %v1657, 0.0
        %1682 = vadd.xlane.f32.xlu0 %v1681
        %v1683 = vpop.xlane.xlu0 %1682
        %v1684 = vsel %vm1382, %v1660, 0.0
        %1685 = vadd.xlane.f32.xlu0 %v1684
        %v1686 = vpop.xlane.xlu0 %1685
        %v1687 = vsel %vm1382, %v1662, 0.0
        %1688 = vadd.xlane.f32.xlu0 %v1687
        %v1689 = vpop.xlane.xlu0 %1688
        %v1690 = vsel %vm1382, %v1665, 0.0
        %1691 = vadd.xlane.f32.xlu0 %v1690
        %v1692 = vpop.xlane.xlu0 %1691
        %v1693 = vsel %vm1382, %v1667, 0.0
        %1694 = vadd.xlane.f32.xlu0 %v1693
        %v1695 = vpop.xlane.xlu0 %1694
        %v1696 = vsel %vm1382, %v1670, 0.0
        %1697 = vadd.xlane.f32.xlu0 %v1696
        %v1698 = vpop.xlane.xlu0 %1697
        %v1699 = vsel %vm1382, %v1672, 0.0
        %1700 = vadd.xlane.f32.xlu0 %v1699
        %v1701 = vpop.xlane.xlu0 %1700
        %v1702 = vrcp.pop 64.0
        %v1703 = vmul.f32 64.0, %v1702
        %v1704 = vsub.f32 1.0, %v1703
        %v1705 = vmul.f32 %v1702, %v1704
        %v1706 = vadd.f32 %v1702, %v1705
        %vm1707 = vweird.f32 %v1702
        %v1708 = vsel %vm1707, %v1702, %v1706
        %v1709 = vmul.f32 %v1680, %v1708
        %v1710 = vmul.f32 %v1683, %v1708
        %v1711 = vmul.f32 %v1686, %v1708
        %v1712 = vmul.f32 %v1689, %v1708
        %v1713 = vmul.f32 %v1692, %v1708
        %v1714 = vmul.f32 %v1695, %v1708
        %v1715 = vmul.f32 %v1698, %v1708
        %v1716 = vmul.f32 %v1701, %v1708
        %v1717 = vsub.f32 %v1655, %v1709
        %v1718 = vsub.f32 %v1657, %v1710
        %v1719 = vsub.f32 %v1660, %v1711
        %v1720 = vsub.f32 %v1662, %v1712
        %v1721 = vsub.f32 %v1665, %v1713
        %v1722 = vsub.f32 %v1667, %v1714
        %v1723 = vsub.f32 %v1670, %v1715
        %v1724 = vsub.f32 %v1672, %v1716
        %v1725 = vmul.f32 %v1717, %v1717
        %v1726 = vmul.f32 %v1718, %v1718
        %v1727 = vmul.f32 %v1719, %v1719
        %v1728 = vmul.f32 %v1720, %v1720
        %v1729 = vmul.f32 %v1721, %v1721
        %v1730 = vmul.f32 %v1722, %v1722
        %v1731 = vmul.f32 %v1723, %v1723
        %v1732 = vmul.f32 %v1724, %v1724
        %v1733 = vsel %vm1382, %v1725, 0.0
        %1734 = vadd.xlane.f32.xlu0 %v1733
        %v1735 = vpop.xlane.xlu0 %1734
        %v1736 = vsel %vm1382, %v1726, 0.0
        %1737 = vadd.xlane.f32.xlu0 %v1736
        %v1738 = vpop.xlane.xlu0 %1737
        %v1739 = vsel %vm1382, %v1727, 0.0
        %1740 = vadd.xlane.f32.xlu0 %v1739
        %v1741 = vpop.xlane.xlu0 %1740
        %v1742 = vsel %vm1382, %v1728, 0.0
        %1743 = vadd.xlane.f32.xlu0 %v1742
        %v1744 = vpop.xlane.xlu0 %1743
        %v1745 = vsel %vm1382, %v1729, 0.0
        %1746 = vadd.xlane.f32.xlu0 %v1745
        %v1747 = vpop.xlane.xlu0 %1746
        %v1748 = vsel %vm1382, %v1730, 0.0
        %1749 = vadd.xlane.f32.xlu0 %v1748
        %v1750 = vpop.xlane.xlu0 %1749
        %v1751 = vsel %vm1382, %v1731, 0.0
        %1752 = vadd.xlane.f32.xlu0 %v1751
        %v1753 = vpop.xlane.xlu0 %1752
        %v1754 = vsel %vm1382, %v1732, 0.0
        %1755 = vadd.xlane.f32.xlu0 %v1754
        %v1756 = vpop.xlane.xlu0 %1755
        %v1757 = vmul.f32 %v1735, %v1708
        %v1758 = vmul.f32 %v1738, %v1708
        %v1759 = vmul.f32 %v1741, %v1708
        %v1760 = vmul.f32 %v1744, %v1708
        %v1761 = vmul.f32 %v1747, %v1708
        %v1762 = vmul.f32 %v1750, %v1708
        %v1763 = vmul.f32 %v1753, %v1708
        %v1764 = vmul.f32 %v1756, %v1708
        %v1765 = vadd.f32 %v1757, 1e-05
        %v1766 = vadd.f32 %v1758, 1e-05
        %v1767 = vadd.f32 %v1759, 1e-05
        %v1768 = vadd.f32 %v1760, 1e-05
        %v1769 = vadd.f32 %v1761, 1e-05
        %v1770 = vadd.f32 %v1762, 1e-05
        %v1771 = vadd.f32 %v1763, 1e-05
        %v1772 = vadd.f32 %v1764, 1e-05
        %v1773 = vrsqrt.pop %v1765
        %v1774 = vmul.f32 %v1773, %v1765
        %v1775 = vmul.f32 %v1774, %v1773
        %v1776 = vmul.f32 0.5, %v1775
        %v1777 = vsub.f32 1.5, %v1776
        %v1778 = vmul.f32 %v1773, %v1777
        %vm1779 = vweird.f32 %v1765
        %vm1780 = vweird.f32 %v1773
        %vm1781 = vmor %vm1779, %vm1780
        %v1782 = vsel %vm1781, %v1773, %v1778
        %v1783 = vrsqrt.pop %v1766
        %v1784 = vmul.f32 %v1783, %v1766
        %v1785 = vmul.f32 %v1784, %v1783
        %v1786 = vmul.f32 0.5, %v1785
        %v1787 = vsub.f32 1.5, %v1786
        %v1788 = vmul.f32 %v1783, %v1787
        %vm1789 = vweird.f32 %v1766
        %vm1790 = vweird.f32 %v1783
        %vm1791 = vmor %vm1789, %vm1790
        %v1792 = vsel %vm1791, %v1783, %v1788
        %v1793 = vrsqrt.pop %v1767
        %v1794 = vmul.f32 %v1793, %v1767
        %v1795 = vmul.f32 %v1794, %v1793
        %v1796 = vmul.f32 0.5, %v1795
        %v1797 = vsub.f32 1.5, %v1796
        %v1798 = vmul.f32 %v1793, %v1797
        %vm1799 = vweird.f32 %v1767
        %vm1800 = vweird.f32 %v1793
        %vm1801 = vmor %vm1799, %vm1800
        %v1802 = vsel %vm1801, %v1793, %v1798
        %v1803 = vrsqrt.pop %v1768
        %v1804 = vmul.f32 %v1803, %v1768
        %v1805 = vmul.f32 %v1804, %v1803
        %v1806 = vmul.f32 0.5, %v1805
        %v1807 = vsub.f32 1.5, %v1806
        %v1808 = vmul.f32 %v1803, %v1807
        %vm1809 = vweird.f32 %v1768
        %vm1810 = vweird.f32 %v1803
        %vm1811 = vmor %vm1809, %vm1810
        %v1812 = vsel %vm1811, %v1803, %v1808
        %v1813 = vrsqrt.pop %v1769
        %v1814 = vmul.f32 %v1813, %v1769
        %v1815 = vmul.f32 %v1814, %v1813
        %v1816 = vmul.f32 0.5, %v1815
        %v1817 = vsub.f32 1.5, %v1816
        %v1818 = vmul.f32 %v1813, %v1817
        %vm1819 = vweird.f32 %v1769
        %vm1820 = vweird.f32 %v1813
        %vm1821 = vmor %vm1819, %vm1820
        %v1822 = vsel %vm1821, %v1813, %v1818
        %v1823 = vrsqrt.pop %v1770
        %v1824 = vmul.f32 %v1823, %v1770
        %v1825 = vmul.f32 %v1824, %v1823
        %v1826 = vmul.f32 0.5, %v1825
        %v1827 = vsub.f32 1.5, %v1826
        %v1828 = vmul.f32 %v1823, %v1827
        %vm1829 = vweird.f32 %v1770
        %vm1830 = vweird.f32 %v1823
        %vm1831 = vmor %vm1829, %vm1830
        %v1832 = vsel %vm1831, %v1823, %v1828
        %v1833 = vrsqrt.pop %v1771
        %v1834 = vmul.f32 %v1833, %v1771
        %v1835 = vmul.f32 %v1834, %v1833
        %v1836 = vmul.f32 0.5, %v1835
        %v1837 = vsub.f32 1.5, %v1836
        %v1838 = vmul.f32 %v1833, %v1837
        %vm1839 = vweird.f32 %v1771
        %vm1840 = vweird.f32 %v1833
        %vm1841 = vmor %vm1839, %vm1840
        %v1842 = vsel %vm1841, %v1833, %v1838
        %v1843 = vrsqrt.pop %v1772
        %v1844 = vmul.f32 %v1843, %v1772
        %v1845 = vmul.f32 %v1844, %v1843
        %v1846 = vmul.f32 0.5, %v1845
        %v1847 = vsub.f32 1.5, %v1846
        %v1848 = vmul.f32 %v1843, %v1847
        %vm1849 = vweird.f32 %v1772
        %vm1850 = vweird.f32 %v1843
        %vm1851 = vmor %vm1849, %vm1850
        %v1852 = vsel %vm1851, %v1843, %v1848
        %v1853 = vmul.f32 %v1717, %v1782
        %v1854 = vmul.f32 %v1718, %v1792
        %v1855 = vmul.f32 %v1719, %v1802
        %v1856 = vmul.f32 %v1720, %v1812
        %v1857 = vmul.f32 %v1721, %v1822
        %v1858 = vmul.f32 %v1722, %v1832
        %v1859 = vmul.f32 %v1723, %v1842
        %v1860 = vmul.f32 %v1724, %v1852
        %v1862 = vperm.slane %v1676, 0
        %v1864 = vmul.f32 %v1853, %v1862
        %v1865 = vmul.f32 %v1854, %v1862
        %v1866 = vmul.f32 %v1855, %v1862
        %v1867 = vmul.f32 %v1856, %v1862
        %v1868 = vmul.f32 %v1857, %v1862
        %v1869 = vmul.f32 %v1858, %v1862
        %v1870 = vmul.f32 %v1859, %v1862
        %v1871 = vmul.f32 %v1860, %v1862
        %v1873 = vperm.slane %v1677, 0
        %v1875 = vadd.f32 %v1864, %v1873
        %v1876 = vadd.f32 %v1865, %v1873
        %v1877 = vadd.f32 %v1866, %v1873
        %v1878 = vadd.f32 %v1867, %v1873
        %v1879 = vadd.f32 %v1868, %v1873
        %v1880 = vadd.f32 %v1869, %v1873
        %v1881 = vadd.f32 %v1870, %v1873
        %v1882 = vadd.f32 %v1871, %v1873
        %v1883 = vpack.c.bf16 %v1876, %v1875
        %v1884 = vpack.c.bf16 %v1878, %v1877
        %v1885 = vpack.c.bf16 %v1880, %v1879
        %v1886 = vpack.c.bf16 %v1882, %v1881
        %v1887 = vld [vmem:[#allocation16] sm:$0xf]
        %v1888 = vld [vmem:[#allocation16 + $0x4] sm:$0xf]
        %v1889 = vld [vmem:[#allocation16 + $0x8] sm:$0xf]
        %v1890 = vld [vmem:[#allocation16 + $0xc] sm:$0xf]
        %v1891 = vld [vmem:[#allocation16 + $0x10] sm:$0xf]
        %v1892 = vld [vmem:[#allocation16 + $0x14] sm:$0xf]
        %v1893 = vld [vmem:[#allocation16 + $0x18] sm:$0xf]
        %v1894 = vld [vmem:[#allocation16 + $0x1c] sm:$0xf]
        %v1895 = vld [vmem:[#allocation20] sm:$0xf]
        %v1896 = vld [vmem:[#allocation20 + $0x4] sm:$0xf]
        %v1897 = vld [vmem:[#allocation20 + $0x8] sm:$0xf]
        %v1898 = vld [vmem:[#allocation20 + $0xc] sm:$0xf]
        %v1899 = vld [vmem:[#allocation20 + $0x10] sm:$0xf]
        %v1900 = vld [vmem:[#allocation20 + $0x14] sm:$0xf]
        %v1901 = vld [vmem:[#allocation20 + $0x18] sm:$0xf]
        %v1902 = vld [vmem:[#allocation20 + $0x1c] sm:$0xf]
        %v1903 = vld [vmem:[#allocation22] sm:$0x1]
        %v1904 = vld [vmem:[#allocation17] sm:$0xf]
        %v1905 = vld [vmem:[#allocation17 + $0x4] sm:$0xf]
        %v1906 = vld [vmem:[#allocation17 + $0x8] sm:$0xf]
        %v1907 = vld [vmem:[#allocation17 + $0xc] sm:$0xf]
        %v1908 = vld [vmem:[#allocation17 + $0x10] sm:$0xf]
        %v1909 = vld [vmem:[#allocation17 + $0x14] sm:$0xf]
        %v1910 = vld [vmem:[#allocation17 + $0x18] sm:$0xf]
        %v1911 = vld [vmem:[#allocation17 + $0x1c] sm:$0xf]
        %v1920 = vunpack.c.l.b16 %v1904
        %v1921 = vunpack.c.l.b16 %v1905
        %v1922 = vunpack.c.l.b16 %v1906
        %v1923 = vunpack.c.l.b16 %v1907
        %v1924 = vunpack.c.l.b16 %v1908
        %v1925 = vunpack.c.l.b16 %v1909
        %v1926 = vunpack.c.l.b16 %v1910
        %v1927 = vunpack.c.l.b16 %v1911
        %v1928 = vpack.c.b16 %v1921, %v1920
        %v1929 = vpack.c.b16 %v1923, %v1922
        %v1930 = vpack.c.b16 %v1925, %v1924
        %v1931 = vpack.c.b16 %v1927, %v1926
        %v1937 = vsel %vm1382, %v1883, 0
        %v1940 = vsel %vm1382, %v1884, 0
        %v1943 = vsel %vm1382, %v1885, 0
        %v1946 = vsel %vm1382, %v1886, 0
        %1948 = vmatpush.bf16.msra.mxu0 0
        %1949 = vmatpush.bf16.msra.mxu0 0
        %1950 = vmatpush.bf16.msra.mxu0 0
        %1951 = vmatpush.bf16.msra.mxu0 0
        %1952 = vmatpush.bf16.msra.mxu0 %v1931
        %1953 = vmatpush.bf16.msra.mxu0 %v1930
        %1954 = vmatpush.bf16.msra.mxu0 %v1929
        %1955 = vmatpush.bf16.msra.mxu0 %v1928
        %1956 = vmatmul.bf16.gmra.mxu0 %v1937
        %v1957 = vpop.f32.mrf.mxu0
        %v1958 = vadd.f32 0.0, %v1957
        %v1959 = vpop.f32.mrf.mxu0
        %v1960 = vadd.f32 0.0, %v1959
        %1961 = vmatmul.bf16.gmra.mxu0 %v1940
        %v1962 = vpop.f32.mrf.mxu0
        %v1963 = vadd.f32 0.0, %v1962
        %v1964 = vpop.f32.mrf.mxu0
        %v1965 = vadd.f32 0.0, %v1964
        %1966 = vmatmul.bf16.gmra.mxu0 %v1943
        %v1967 = vpop.f32.mrf.mxu0
        %v1968 = vadd.f32 0.0, %v1967
        %v1969 = vpop.f32.mrf.mxu0
        %v1970 = vadd.f32 0.0, %v1969
        %1971 = vmatmul.bf16.gmra.mxu0 %v1946
        %v1972 = vpop.f32.mrf.mxu0
        %v1973 = vadd.f32 0.0, %v1972
        %v1974 = vpop.f32.mrf.mxu0
        %v1975 = vadd.f32 0.0, %v1974
        %1976 = vdwg.mxu0
        %v1977 = vpack.c.bf16 %v1958, %v1958
        %v1978 = vpack.c.bf16 %v1960, %v1960
        %v1979 = vpack.c.bf16 %v1963, %v1963
        %v1980 = vpack.c.bf16 %v1965, %v1965
        %v1981 = vpack.c.bf16 %v1968, %v1968
        %v1982 = vpack.c.bf16 %v1970, %v1970
        %v1983 = vpack.c.bf16 %v1973, %v1973
        %v1984 = vpack.c.bf16 %v1975, %v1975
        %v1985 = vld [vmem:[#allocation19] sm:$0xf]
        %v1986 = vld [vmem:[#allocation19 + $0x4] sm:$0xf]
        %v1987 = vld [vmem:[#allocation19 + $0x8] sm:$0xf]
        %v1988 = vld [vmem:[#allocation19 + $0xc] sm:$0xf]
        %v1989 = vld [vmem:[#allocation19 + $0x10] sm:$0xf]
        %v1990 = vld [vmem:[#allocation19 + $0x14] sm:$0xf]
        %v1991 = vld [vmem:[#allocation19 + $0x18] sm:$0xf]
        %v1992 = vld [vmem:[#allocation19 + $0x1c] sm:$0xf]
        %v2001 = vunpack.c.l.b16 %v1985
        %v2002 = vunpack.c.l.b16 %v1986
        %v2003 = vunpack.c.l.b16 %v1987
        %v2004 = vunpack.c.l.b16 %v1988
        %v2005 = vunpack.c.l.b16 %v1989
        %v2006 = vunpack.c.l.b16 %v1990
        %v2007 = vunpack.c.l.b16 %v1991
        %v2008 = vunpack.c.l.b16 %v1992
        %v2009 = vpack.c.b16 %v2002, %v2001
        %v2010 = vpack.c.b16 %v2004, %v2003
        %v2011 = vpack.c.b16 %v2006, %v2005
        %v2012 = vpack.c.b16 %v2008, %v2007
        %2017 = vmatpush.bf16.msra.mxu0 0
        %2018 = vmatpush.bf16.msra.mxu0 0
        %2019 = vmatpush.bf16.msra.mxu0 0
        %2020 = vmatpush.bf16.msra.mxu0 0
        %2021 = vmatpush.bf16.msra.mxu0 %v2012
        %2022 = vmatpush.bf16.msra.mxu0 %v2011
        %2023 = vmatpush.bf16.msra.mxu0 %v2010
        %2024 = vmatpush.bf16.msra.mxu0 %v2009
        %2025 = vmatmul.bf16.gmra.mxu0 %v1937
        %v2026 = vpop.f32.mrf.mxu0
        %v2027 = vadd.f32 0.0, %v2026
        %v2028 = vpop.f32.mrf.mxu0
        %v2029 = vadd.f32 0.0, %v2028
        %2030 = vmatmul.bf16.gmra.mxu0 %v1940
        %v2031 = vpop.f32.mrf.mxu0
        %v2032 = vadd.f32 0.0, %v2031
        %v2033 = vpop.f32.mrf.mxu0
        %v2034 = vadd.f32 0.0, %v2033
        %2035 = vmatmul.bf16.gmra.mxu0 %v1943
        %v2036 = vpop.f32.mrf.mxu0
        %v2037 = vadd.f32 0.0, %v2036
        %v2038 = vpop.f32.mrf.mxu0
        %v2039 = vadd.f32 0.0, %v2038
        %2040 = vmatmul.bf16.gmra.mxu0 %v1946
        %v2041 = vpop.f32.mrf.mxu0
        %v2042 = vadd.f32 0.0, %v2041
        %v2043 = vpop.f32.mrf.mxu0
        %v2044 = vadd.f32 0.0, %v2043
        %2045 = vdwg.mxu0
        %v2046 = vpack.c.bf16 %v2027, %v2027
        %v2047 = vpack.c.bf16 %v2029, %v2029
        %v2048 = vpack.c.bf16 %v2032, %v2032
        %v2049 = vpack.c.bf16 %v2034, %v2034
        %v2050 = vpack.c.bf16 %v2037, %v2037
        %v2051 = vpack.c.bf16 %v2039, %v2039
        %v2052 = vpack.c.bf16 %v2042, %v2042
        %v2053 = vpack.c.bf16 %v2044, %v2044
        %v2062 = vunpack.c.l.b16 %v1887
        %v2063 = vunpack.c.l.b16 %v1888
        %v2064 = vunpack.c.l.b16 %v1889
        %v2065 = vunpack.c.l.b16 %v1890
        %v2066 = vunpack.c.l.b16 %v1891
        %v2067 = vunpack.c.l.b16 %v1892
        %v2068 = vunpack.c.l.b16 %v1893
        %v2069 = vunpack.c.l.b16 %v1894
        %v2070 = vpack.c.b16 %v2063, %v2062
        %v2071 = vpack.c.b16 %v2065, %v2064
        %v2072 = vpack.c.b16 %v2067, %v2066
        %v2073 = vpack.c.b16 %v2069, %v2068
        %2078 = vmatpush.bf16.msra.mxu0 0
        %2079 = vmatpush.bf16.msra.mxu0 0
        %2080 = vmatpush.bf16.msra.mxu0 0
        %2081 = vmatpush.bf16.msra.mxu0 0
        %2082 = vmatpush.bf16.msra.mxu0 %v2073
        %2083 = vmatpush.bf16.msra.mxu0 %v2072
        %2084 = vmatpush.bf16.msra.mxu0 %v2071
        %2085 = vmatpush.bf16.msra.mxu0 %v2070
        %2086 = vmatmul.bf16.gmra.mxu0 %v1937
        %v2087 = vpop.f32.mrf.mxu0
        %v2088 = vadd.f32 0.0, %v2087
        %v2089 = vpop.f32.mrf.mxu0
        %v2090 = vadd.f32 0.0, %v2089
        %2091 = vmatmul.bf16.gmra.mxu0 %v1940
        %v2092 = vpop.f32.mrf.mxu0
        %v2093 = vadd.f32 0.0, %v2092
        %v2094 = vpop.f32.mrf.mxu0
        %v2095 = vadd.f32 0.0, %v2094
        %2096 = vmatmul.bf16.gmra.mxu0 %v1943
        %v2097 = vpop.f32.mrf.mxu0
        %v2098 = vadd.f32 0.0, %v2097
        %v2099 = vpop.f32.mrf.mxu0
        %v2100 = vadd.f32 0.0, %v2099
        %2101 = vmatmul.bf16.gmra.mxu0 %v1946
        %v2102 = vpop.f32.mrf.mxu0
        %v2103 = vadd.f32 0.0, %v2102
        %v2104 = vpop.f32.mrf.mxu0
        %v2105 = vadd.f32 0.0, %v2104
        %2106 = vdwg.mxu0
        %v2107 = vmul.f32 %v2088, 0.25
        %v2108 = vmul.f32 %v2090, 0.25
        %v2109 = vmul.f32 %v2093, 0.25
        %v2110 = vmul.f32 %v2095, 0.25
        %v2111 = vmul.f32 %v2098, 0.25
        %v2112 = vmul.f32 %v2100, 0.25
        %v2113 = vmul.f32 %v2103, 0.25
        %v2114 = vmul.f32 %v2105, 0.25
        %v2115 = vpack.c.bf16 %v2107, %v2107
        %v2116 = vpack.c.bf16 %v2108, %v2108
        %v2117 = vpack.c.bf16 %v2109, %v2109
        %v2118 = vpack.c.bf16 %v2110, %v2110
        %v2119 = vpack.c.bf16 %v2111, %v2111
        %v2120 = vpack.c.bf16 %v2112, %v2112
        %v2121 = vpack.c.bf16 %v2113, %v2113
        %v2122 = vpack.c.bf16 %v2114, %v2114
        %v2131 = vunpack.c.l.b16 %v2115
        %v2132 = vunpack.c.l.b16 %v2116
        %v2133 = vunpack.c.l.b16 %v2117
        %v2134 = vunpack.c.l.b16 %v2118
        %v2135 = vunpack.c.l.b16 %v2119
        %v2136 = vunpack.c.l.b16 %v2120
        %v2137 = vunpack.c.l.b16 %v2121
        %v2138 = vunpack.c.l.b16 %v2122
        %v2139 = vpack.c.b16 %v2132, %v2131
        %v2140 = vpack.c.b16 %v2134, %v2133
        %v2141 = vpack.c.b16 %v2136, %v2135
        %v2142 = vpack.c.b16 %v2138, %v2137
        %v2151 = vunpack.c.l.b16 %v1977
        %v2152 = vunpack.c.l.b16 %v1978
        %v2153 = vunpack.c.l.b16 %v1979
        %v2154 = vunpack.c.l.b16 %v1980
        %v2155 = vunpack.c.l.b16 %v1981
        %v2156 = vunpack.c.l.b16 %v1982
        %v2157 = vunpack.c.l.b16 %v1983
        %v2158 = vunpack.c.l.b16 %v1984
        %v2159 = vpack.c.b16 %v2152, %v2151
        %v2160 = vpack.c.b16 %v2154, %v2153
        %v2161 = vpack.c.b16 %v2156, %v2155
        %v2162 = vpack.c.b16 %v2158, %v2157
        %vm2163 = vcmask 130048
        %v2165 = vsel %vm2163, %v2139, 0
        %v2168 = vsel %vm2163, %v2140, 0
        %v2171 = vsel %vm2163, %v2141, 0
        %v2174 = vsel %vm2163, %v2142, 0
        %v2177 = vsel %vm2163, %v2159, 0
        %v2180 = vsel %vm2163, %v2160, 0
        %v2183 = vsel %vm2163, %v2161, 0
        %v2186 = vsel %vm2163, %v2162, 0
        %2188 = vmatpush.bf16.xpose.msra.mxu0 0
        %2189 = vmatpush.bf16.xpose.msra.mxu0 0
        %2190 = vmatpush.bf16.xpose.msra.mxu0 0
        %2191 = vmatpush.bf16.xpose.msra.mxu0 0
        %2192 = vmatpush.bf16.xpose.msra.mxu0 %v2186
        %2193 = vmatpush.bf16.xpose.msra.mxu0 %v2183
        %2194 = vmatpush.bf16.xpose.msra.mxu0 %v2180
        %2195 = vmatpush.bf16.xpose.msra.mxu0 %v2177
        %2196 = vmatmul.bf16.gmra.mxu0 %v2165
        %v2197 = vpop.f32.mrf.mxu0
        %v2198 = vadd.f32 0.0, %v2197
        %v2199 = vpop.f32.mrf.mxu0
        %v2200 = vadd.f32 0.0, %v2199
        %2201 = vmatmul.bf16.gmra.mxu0 %v2168
        %v2202 = vpop.f32.mrf.mxu0
        %v2203 = vadd.f32 0.0, %v2202
        %v2204 = vpop.f32.mrf.mxu0
        %v2205 = vadd.f32 0.0, %v2204
        %2206 = vmatmul.bf16.gmra.mxu0 %v2171
        %v2207 = vpop.f32.mrf.mxu0
        %v2208 = vadd.f32 0.0, %v2207
        %v2209 = vpop.f32.mrf.mxu0
        %v2210 = vadd.f32 0.0, %v2209
        %2211 = vmatmul.bf16.gmra.mxu0 %v2174
        %v2212 = vpop.f32.mrf.mxu0
        %v2213 = vadd.f32 0.0, %v2212
        %v2214 = vpop.f32.mrf.mxu0
        %v2215 = vadd.f32 0.0, %v2214
        %2216 = vdwg.mxu0
        %v2217 = vsel %vm1382, %v2198, -inf
        %2218 = vmax.xlane.f32.xlu0 %v2217
        %v2219 = vpop.xlane.xlu0 %2218
        %v2220 = vsel %vm1382, %v2200, -inf
        %2221 = vmax.xlane.f32.xlu0 %v2220
        %v2222 = vpop.xlane.xlu0 %2221
        %v2223 = vsel %vm1382, %v2203, -inf
        %2224 = vmax.xlane.f32.xlu0 %v2223
        %v2225 = vpop.xlane.xlu0 %2224
        %v2226 = vsel %vm1382, %v2205, -inf
        %2227 = vmax.xlane.f32.xlu0 %v2226
        %v2228 = vpop.xlane.xlu0 %2227
        %v2229 = vsel %vm1382, %v2208, -inf
        %2230 = vmax.xlane.f32.xlu0 %v2229
        %v2231 = vpop.xlane.xlu0 %2230
        %v2232 = vsel %vm1382, %v2210, -inf
        %2233 = vmax.xlane.f32.xlu0 %v2232
        %v2234 = vpop.xlane.xlu0 %2233
        %v2235 = vsel %vm1382, %v2213, -inf
        %2236 = vmax.xlane.f32.xlu0 %v2235
        %v2237 = vpop.xlane.xlu0 %2236
        %v2238 = vsel %vm1382, %v2215, -inf
        %2239 = vmax.xlane.f32.xlu0 %v2238
        %v2240 = vpop.xlane.xlu0 %2239
        %v2241 = vsub.f32 %v2198, %v2219
        %v2242 = vsub.f32 %v2200, %v2222
        %v2243 = vsub.f32 %v2203, %v2225
        %v2244 = vsub.f32 %v2205, %v2228
        %v2245 = vsub.f32 %v2208, %v2231
        %v2246 = vsub.f32 %v2210, %v2234
        %v2247 = vsub.f32 %v2213, %v2237
        %v2248 = vsub.f32 %v2215, %v2240
        %v2249 = vmul.f32 %v2241, 1.442695
        %v2250 = vpow.pop %v2249
        %v2251 = vmul.f32 %v2242, 1.442695
        %v2252 = vpow.pop %v2251
        %v2253 = vmul.f32 %v2243, 1.442695
        %v2254 = vpow.pop %v2253
        %v2255 = vmul.f32 %v2244, 1.442695
        %v2256 = vpow.pop %v2255
        %v2257 = vmul.f32 %v2245, 1.442695
        %v2258 = vpow.pop %v2257
        %v2259 = vmul.f32 %v2246, 1.442695
        %v2260 = vpow.pop %v2259
        %v2261 = vmul.f32 %v2247, 1.442695
        %v2262 = vpow.pop %v2261
        %v2263 = vmul.f32 %v2248, 1.442695
        %v2264 = vpow.pop %v2263
        %v2265 = vsel %vm1382, %v2250, 0.0
        %2266 = vadd.xlane.f32.xlu0 %v2265
        %v2267 = vpop.xlane.xlu0 %2266
        %v2268 = vsel %vm1382, %v2252, 0.0
        %2269 = vadd.xlane.f32.xlu0 %v2268
        %v2270 = vpop.xlane.xlu0 %2269
        %v2271 = vsel %vm1382, %v2254, 0.0
        %2272 = vadd.xlane.f32.xlu0 %v2271
        %v2273 = vpop.xlane.xlu0 %2272
        %v2274 = vsel %vm1382, %v2256, 0.0
        %2275 = vadd.xlane.f32.xlu0 %v2274
        %v2276 = vpop.xlane.xlu0 %2275
        %v2277 = vsel %vm1382, %v2258, 0.0
        %2278 = vadd.xlane.f32.xlu0 %v2277
        %v2279 = vpop.xlane.xlu0 %2278
        %v2280 = vsel %vm1382, %v2260, 0.0
        %2281 = vadd.xlane.f32.xlu0 %v2280
        %v2282 = vpop.xlane.xlu0 %2281
        %v2283 = vsel %vm1382, %v2262, 0.0
        %2284 = vadd.xlane.f32.xlu0 %v2283
        %v2285 = vpop.xlane.xlu0 %2284
        %v2286 = vsel %vm1382, %v2264, 0.0
        %2287 = vadd.xlane.f32.xlu0 %v2286
        %v2288 = vpop.xlane.xlu0 %2287
        %v2289 = vpack.c.bf16 %v2252, %v2250
        %v2290 = vpack.c.bf16 %v2256, %v2254
        %v2291 = vpack.c.bf16 %v2260, %v2258
        %v2292 = vpack.c.bf16 %v2264, %v2262
        %v2301 = vunpack.c.l.b16 %v2046
        %v2302 = vunpack.c.l.b16 %v2047
        %v2303 = vunpack.c.l.b16 %v2048
        %v2304 = vunpack.c.l.b16 %v2049
        %v2305 = vunpack.c.l.b16 %v2050
        %v2306 = vunpack.c.l.b16 %v2051
        %v2307 = vunpack.c.l.b16 %v2052
        %v2308 = vunpack.c.l.b16 %v2053
        %v2309 = vpack.c.b16 %v2302, %v2301
        %v2310 = vpack.c.b16 %v2304, %v2303
        %v2311 = vpack.c.b16 %v2306, %v2305
        %v2312 = vpack.c.b16 %v2308, %v2307
        %v2318 = vsel %vm1382, %v2289, 0
        %v2321 = vsel %vm1382, %v2290, 0
        %v2324 = vsel %vm1382, %v2291, 0
        %v2327 = vsel %vm1382, %v2292, 0
        %2329 = vmatpush.bf16.msra.mxu0 0
        %2330 = vmatpush.bf16.msra.mxu0 0
        %2331 = vmatpush.bf16.msra.mxu0 0
        %2332 = vmatpush.bf16.msra.mxu0 0
        %2333 = vmatpush.bf16.msra.mxu0 %v2312
        %2334 = vmatpush.bf16.msra.mxu0 %v2311
        %2335 = vmatpush.bf16.msra.mxu0 %v2310
        %2336 = vmatpush.bf16.msra.mxu0 %v2309
        %2337 = vmatmul.bf16.gmra.mxu0 %v2318
        %v2338 = vpop.f32.mrf.mxu0
        %v2339 = vadd.f32 0.0, %v2338
        %v2340 = vpop.f32.mrf.mxu0
        %v2341 = vadd.f32 0.0, %v2340
        %2342 = vmatmul.bf16.gmra.mxu0 %v2321
        %v2343 = vpop.f32.mrf.mxu0
        %v2344 = vadd.f32 0.0, %v2343
        %v2345 = vpop.f32.mrf.mxu0
        %v2346 = vadd.f32 0.0, %v2345
        %2347 = vmatmul.bf16.gmra.mxu0 %v2324
        %v2348 = vpop.f32.mrf.mxu0
        %v2349 = vadd.f32 0.0, %v2348
        %v2350 = vpop.f32.mrf.mxu0
        %v2351 = vadd.f32 0.0, %v2350
        %2352 = vmatmul.bf16.gmra.mxu0 %v2327
        %v2353 = vpop.f32.mrf.mxu0
        %v2354 = vadd.f32 0.0, %v2353
        %v2355 = vpop.f32.mrf.mxu0
        %v2356 = vadd.f32 0.0, %v2355
        %2357 = vdwg.mxu0
        %v2358 = vrcp.pop %v2267
        %v2359 = vrcp.pop %v2270
        %v2360 = vrcp.pop %v2273
        %v2361 = vrcp.pop %v2276
        %v2362 = vrcp.pop %v2279
        %v2363 = vrcp.pop %v2282
        %v2364 = vrcp.pop %v2285
        %v2365 = vrcp.pop %v2288
        %v2366 = vmul.f32 %v2339, %v2358
        %v2367 = vmul.f32 %v2341, %v2359
        %v2368 = vmul.f32 %v2344, %v2360
        %v2369 = vmul.f32 %v2346, %v2361
        %v2370 = vmul.f32 %v2349, %v2362
        %v2371 = vmul.f32 %v2351, %v2363
        %v2372 = vmul.f32 %v2354, %v2364
        %v2373 = vmul.f32 %v2356, %v2365
        %2374 = vrot.lane.b32.xlu0 %v2139, 112
        %v2375 = vpop.permute.xlu0 %2374
        %2376 = vrot.lane.b32.xlu0 %v2140, 112
        %v2377 = vpop.permute.xlu0 %2376
        %2378 = vrot.lane.b32.xlu0 %v2141, 112
        %v2379 = vpop.permute.xlu0 %2378
        %2380 = vrot.lane.b32.xlu0 %v2142, 112
        %v2381 = vpop.permute.xlu0 %2380
        %2382 = vrot.lane.b32.xlu0 %v2159, 112
        %v2383 = vpop.permute.xlu0 %2382
        %2384 = vrot.lane.b32.xlu0 %v2160, 112
        %v2385 = vpop.permute.xlu0 %2384
        %2386 = vrot.lane.b32.xlu0 %v2161, 112
        %v2387 = vpop.permute.xlu0 %2386
        %2388 = vrot.lane.b32.xlu0 %v2162, 112
        %v2389 = vpop.permute.xlu0 %2388
        %v2391 = vsel %vm2163, %v2375, 0
        %v2394 = vsel %vm2163, %v2377, 0
        %v2397 = vsel %vm2163, %v2379, 0
        %v2400 = vsel %vm2163, %v2381, 0
        %v2403 = vsel %vm2163, %v2383, 0
        %v2406 = vsel %vm2163, %v2385, 0
        %v2409 = vsel %vm2163, %v2387, 0
        %v2412 = vsel %vm2163, %v2389, 0
        %2414 = vmatpush.bf16.xpose.msra.mxu0 0
        %2415 = vmatpush.bf16.xpose.msra.mxu0 0
        %2416 = vmatpush.bf16.xpose.msra.mxu0 0
        %2417 = vmatpush.bf16.xpose.msra.mxu0 0
        %2418 = vmatpush.bf16.xpose.msra.mxu0 %v2412
        %2419 = vmatpush.bf16.xpose.msra.mxu0 %v2409
        %2420 = vmatpush.bf16.xpose.msra.mxu0 %v2406
        %2421 = vmatpush.bf16.xpose.msra.mxu0 %v2403
        %2422 = vmatmul.bf16.gmra.mxu0 %v2391
        %v2423 = vpop.f32.mrf.mxu0
        %v2424 = vadd.f32 0.0, %v2423
        %v2425 = vpop.f32.mrf.mxu0
        %v2426 = vadd.f32 0.0, %v2425
        %2427 = vmatmul.bf16.gmra.mxu0 %v2394
        %v2428 = vpop.f32.mrf.mxu0
        %v2429 = vadd.f32 0.0, %v2428
        %v2430 = vpop.f32.mrf.mxu0
        %v2431 = vadd.f32 0.0, %v2430
        %2432 = vmatmul.bf16.gmra.mxu0 %v2397
        %v2433 = vpop.f32.mrf.mxu0
        %v2434 = vadd.f32 0.0, %v2433
        %v2435 = vpop.f32.mrf.mxu0
        %v2436 = vadd.f32 0.0, %v2435
        %2437 = vmatmul.bf16.gmra.mxu0 %v2400
        %v2438 = vpop.f32.mrf.mxu0
        %v2439 = vadd.f32 0.0, %v2438
        %v2440 = vpop.f32.mrf.mxu0
        %v2441 = vadd.f32 0.0, %v2440
        %2442 = vdwg.mxu0
        %v2443 = vsel %vm1382, %v2424, -inf
        %2444 = vmax.xlane.f32.xlu0 %v2443
        %v2445 = vpop.xlane.xlu0 %2444
        %v2446 = vsel %vm1382, %v2426, -inf
        %2447 = vmax.xlane.f32.xlu0 %v2446
        %v2448 = vpop.xlane.xlu0 %2447
        %v2449 = vsel %vm1382, %v2429, -inf
        %2450 = vmax.xlane.f32.xlu0 %v2449
        %v2451 = vpop.xlane.xlu0 %2450
        %v2452 = vsel %vm1382, %v2431, -inf
        %2453 = vmax.xlane.f32.xlu0 %v2452
        %v2454 = vpop.xlane.xlu0 %2453
        %v2455 = vsel %vm1382, %v2434, -inf
        %2456 = vmax.xlane.f32.xlu0 %v2455
        %v2457 = vpop.xlane.xlu0 %2456
        %v2458 = vsel %vm1382, %v2436, -inf
        %2459 = vmax.xlane.f32.xlu0 %v2458
        %v2460 = vpop.xlane.xlu0 %2459
        %v2461 = vsel %vm1382, %v2439, -inf
        %2462 = vmax.xlane.f32.xlu0 %v2461
        %v2463 = vpop.xlane.xlu0 %2462
        %v2464 = vsel %vm1382, %v2441, -inf
        %2465 = vmax.xlane.f32.xlu0 %v2464
        %v2466 = vpop.xlane.xlu0 %2465
        %v2467 = vsub.f32 %v2424, %v2445
        %v2468 = vsub.f32 %v2426, %v2448
        %v2469 = vsub.f32 %v2429, %v2451
        %v2470 = vsub.f32 %v2431, %v2454
        %v2471 = vsub.f32 %v2434, %v2457
        %v2472 = vsub.f32 %v2436, %v2460
        %v2473 = vsub.f32 %v2439, %v2463
        %v2474 = vsub.f32 %v2441, %v2466
        %v2475 = vmul.f32 %v2467, 1.442695
        %v2476 = vpow.pop %v2475
        %v2477 = vmul.f32 %v2468, 1.442695
        %v2478 = vpow.pop %v2477
        %v2479 = vmul.f32 %v2469, 1.442695
        %v2480 = vpow.pop %v2479
        %v2481 = vmul.f32 %v2470, 1.442695
        %v2482 = vpow.pop %v2481
        %v2483 = vmul.f32 %v2471, 1.442695
        %v2484 = vpow.pop %v2483
        %v2485 = vmul.f32 %v2472, 1.442695
        %v2486 = vpow.pop %v2485
        %v2487 = vmul.f32 %v2473, 1.442695
        %v2488 = vpow.pop %v2487
        %v2489 = vmul.f32 %v2474, 1.442695
        %v2490 = vpow.pop %v2489
        %v2491 = vsel %vm1382, %v2476, 0.0
        %2492 = vadd.xlane.f32.xlu0 %v2491
        %v2493 = vpop.xlane.xlu0 %2492
        %v2494 = vsel %vm1382, %v2478, 0.0
        %2495 = vadd.xlane.f32.xlu0 %v2494
        %v2496 = vpop.xlane.xlu0 %2495
        %v2497 = vsel %vm1382, %v2480, 0.0
        %2498 = vadd.xlane.f32.xlu0 %v2497
        %v2499 = vpop.xlane.xlu0 %2498
        %v2500 = vsel %vm1382, %v2482, 0.0
        %2501 = vadd.xlane.f32.xlu0 %v2500
        %v2502 = vpop.xlane.xlu0 %2501
        %v2503 = vsel %vm1382, %v2484, 0.0
        %2504 = vadd.xlane.f32.xlu0 %v2503
        %v2505 = vpop.xlane.xlu0 %2504
        %v2506 = vsel %vm1382, %v2486, 0.0
        %2507 = vadd.xlane.f32.xlu0 %v2506
        %v2508 = vpop.xlane.xlu0 %2507
        %v2509 = vsel %vm1382, %v2488, 0.0
        %2510 = vadd.xlane.f32.xlu0 %v2509
        %v2511 = vpop.xlane.xlu0 %2510
        %v2512 = vsel %vm1382, %v2490, 0.0
        %2513 = vadd.xlane.f32.xlu0 %v2512
        %v2514 = vpop.xlane.xlu0 %2513
        %v2515 = vpack.c.bf16 %v2478, %v2476
        %v2516 = vpack.c.bf16 %v2482, %v2480
        %v2517 = vpack.c.bf16 %v2486, %v2484
        %v2518 = vpack.c.bf16 %v2490, %v2488
        %2519 = vrot.lane.b32.xlu0 %v2309, 112
        %v2520 = vpop.permute.xlu0 %2519
        %2521 = vrot.lane.b32.xlu0 %v2310, 112
        %v2522 = vpop.permute.xlu0 %2521
        %2523 = vrot.lane.b32.xlu0 %v2311, 112
        %v2524 = vpop.permute.xlu0 %2523
        %2525 = vrot.lane.b32.xlu0 %v2312, 112
        %v2526 = vpop.permute.xlu0 %2525
        %v2532 = vsel %vm1382, %v2515, 0
        %v2535 = vsel %vm1382, %v2516, 0
        %v2538 = vsel %vm1382, %v2517, 0
        %v2541 = vsel %vm1382, %v2518, 0
        %2543 = vmatpush.bf16.msra.mxu0 0
        %2544 = vmatpush.bf16.msra.mxu0 0
        %2545 = vmatpush.bf16.msra.mxu0 0
        %2546 = vmatpush.bf16.msra.mxu0 0
        %2547 = vmatpush.bf16.msra.mxu0 %v2526
        %2548 = vmatpush.bf16.msra.mxu0 %v2524
        %2549 = vmatpush.bf16.msra.mxu0 %v2522
        %2550 = vmatpush.bf16.msra.mxu0 %v2520
        %2551 = vmatmul.bf16.gmra.mxu0 %v2532
        %v2552 = vpop.f32.mrf.mxu0
        %v2553 = vadd.f32 0.0, %v2552
        %v2554 = vpop.f32.mrf.mxu0
        %v2555 = vadd.f32 0.0, %v2554
        %2556 = vmatmul.bf16.gmra.mxu0 %v2535
        %v2557 = vpop.f32.mrf.mxu0
        %v2558 = vadd.f32 0.0, %v2557
        %v2559 = vpop.f32.mrf.mxu0
        %v2560 = vadd.f32 0.0, %v2559
        %2561 = vmatmul.bf16.gmra.mxu0 %v2538
        %v2562 = vpop.f32.mrf.mxu0
        %v2563 = vadd.f32 0.0, %v2562
        %v2564 = vpop.f32.mrf.mxu0
        %v2565 = vadd.f32 0.0, %v2564
        %2566 = vmatmul.bf16.gmra.mxu0 %v2541
        %v2567 = vpop.f32.mrf.mxu0
        %v2568 = vadd.f32 0.0, %v2567
        %v2569 = vpop.f32.mrf.mxu0
        %v2570 = vadd.f32 0.0, %v2569
        %2571 = vdwg.mxu0
        %v2572 = vrcp.pop %v2493
        %v2573 = vrcp.pop %v2496
        %v2574 = vrcp.pop %v2499
        %v2575 = vrcp.pop %v2502
        %v2576 = vrcp.pop %v2505
        %v2577 = vrcp.pop %v2508
        %v2578 = vrcp.pop %v2511
        %v2579 = vrcp.pop %v2514
        %v2580 = vmul.f32 %v2553, %v2572
        %v2581 = vmul.f32 %v2555, %v2573
        %v2582 = vmul.f32 %v2558, %v2574
        %v2583 = vmul.f32 %v2560, %v2575
        %v2584 = vmul.f32 %v2563, %v2576
        %v2585 = vmul.f32 %v2565, %v2577
        %v2586 = vmul.f32 %v2568, %v2578
        %v2587 = vmul.f32 %v2570, %v2579
        %2588 = vrot.lane.b32.xlu0 %v2139, 96
        %v2589 = vpop.permute.xlu0 %2588
        %2590 = vrot.lane.b32.xlu0 %v2140, 96
        %v2591 = vpop.permute.xlu0 %2590
        %2592 = vrot.lane.b32.xlu0 %v2141, 96
        %v2593 = vpop.permute.xlu0 %2592
        %2594 = vrot.lane.b32.xlu0 %v2142, 96
        %v2595 = vpop.permute.xlu0 %2594
        %2596 = vrot.lane.b32.xlu0 %v2159, 96
        %v2597 = vpop.permute.xlu0 %2596
        %2598 = vrot.lane.b32.xlu0 %v2160, 96
        %v2599 = vpop.permute.xlu0 %2598
        %2600 = vrot.lane.b32.xlu0 %v2161, 96
        %v2601 = vpop.permute.xlu0 %2600
        %2602 = vrot.lane.b32.xlu0 %v2162, 96
        %v2603 = vpop.permute.xlu0 %2602
        %v2605 = vsel %vm2163, %v2589, 0
        %v2608 = vsel %vm2163, %v2591, 0
        %v2611 = vsel %vm2163, %v2593, 0
        %v2614 = vsel %vm2163, %v2595, 0
        %v2617 = vsel %vm2163, %v2597, 0
        %v2620 = vsel %vm2163, %v2599, 0
        %v2623 = vsel %vm2163, %v2601, 0
        %v2626 = vsel %vm2163, %v2603, 0
        %2628 = vmatpush.bf16.xpose.msra.mxu0 0
        %2629 = vmatpush.bf16.xpose.msra.mxu0 0
        %2630 = vmatpush.bf16.xpose.msra.mxu0 0
        %2631 = vmatpush.bf16.xpose.msra.mxu0 0
        %2632 = vmatpush.bf16.xpose.msra.mxu0 %v2626
        %2633 = vmatpush.bf16.xpose.msra.mxu0 %v2623
        %2634 = vmatpush.bf16.xpose.msra.mxu0 %v2620
        %2635 = vmatpush.bf16.xpose.msra.mxu0 %v2617
        %2636 = vmatmul.bf16.gmra.mxu0 %v2605
        %v2637 = vpop.f32.mrf.mxu0
        %v2638 = vadd.f32 0.0, %v2637
        %v2639 = vpop.f32.mrf.mxu0
        %v2640 = vadd.f32 0.0, %v2639
        %2641 = vmatmul.bf16.gmra.mxu0 %v2608
        %v2642 = vpop.f32.mrf.mxu0
        %v2643 = vadd.f32 0.0, %v2642
        %v2644 = vpop.f32.mrf.mxu0
        %v2645 = vadd.f32 0.0, %v2644
        %2646 = vmatmul.bf16.gmra.mxu0 %v2611
        %v2647 = vpop.f32.mrf.mxu0
        %v2648 = vadd.f32 0.0, %v2647
        %v2649 = vpop.f32.mrf.mxu0
        %v2650 = vadd.f32 0.0, %v2649
        %2651 = vmatmul.bf16.gmra.mxu0 %v2614
        %v2652 = vpop.f32.mrf.mxu0
        %v2653 = vadd.f32 0.0, %v2652
        %v2654 = vpop.f32.mrf.mxu0
        %v2655 = vadd.f32 0.0, %v2654
        %2656 = vdwg.mxu0
        %v2657 = vsel %vm1382, %v2638, -inf
        %2658 = vmax.xlane.f32.xlu0 %v2657
        %v2659 = vpop.xlane.xlu0 %2658
        %v2660 = vsel %vm1382, %v2640, -inf
        %2661 = vmax.xlane.f32.xlu0 %v2660
        %v2662 = vpop.xlane.xlu0 %2661
        %v2663 = vsel %vm1382, %v2643, -inf
        %2664 = vmax.xlane.f32.xlu0 %v2663
        %v2665 = vpop.xlane.xlu0 %2664
        %v2666 = vsel %vm1382, %v2645, -inf
        %2667 = vmax.xlane.f32.xlu0 %v2666
        %v2668 = vpop.xlane.xlu0 %2667
        %v2669 = vsel %vm1382, %v2648, -inf
        %2670 = vmax.xlane.f32.xlu0 %v2669
        %v2671 = vpop.xlane.xlu0 %2670
        %v2672 = vsel %vm1382, %v2650, -inf
        %2673 = vmax.xlane.f32.xlu0 %v2672
        %v2674 = vpop.xlane.xlu0 %2673
        %v2675 = vsel %vm1382, %v2653, -inf
        %2676 = vmax.xlane.f32.xlu0 %v2675
        %v2677 = vpop.xlane.xlu0 %2676
        %v2678 = vsel %vm1382, %v2655, -inf
        %2679 = vmax.xlane.f32.xlu0 %v2678
        %v2680 = vpop.xlane.xlu0 %2679
        %v2681 = vsub.f32 %v2638, %v2659
        %v2682 = vsub.f32 %v2640, %v2662
        %v2683 = vsub.f32 %v2643, %v2665
        %v2684 = vsub.f32 %v2645, %v2668
        %v2685 = vsub.f32 %v2648, %v2671
        %v2686 = vsub.f32 %v2650, %v2674
        %v2687 = vsub.f32 %v2653, %v2677
        %v2688 = vsub.f32 %v2655, %v2680
        %v2689 = vmul.f32 %v2681, 1.442695
        %v2690 = vpow.pop %v2689
        %v2691 = vmul.f32 %v2682, 1.442695
        %v2692 = vpow.pop %v2691
        %v2693 = vmul.f32 %v2683, 1.442695
        %v2694 = vpow.pop %v2693
        %v2695 = vmul.f32 %v2684, 1.442695
        %v2696 = vpow.pop %v2695
        %v2697 = vmul.f32 %v2685, 1.442695
        %v2698 = vpow.pop %v2697
        %v2699 = vmul.f32 %v2686, 1.442695
        %v2700 = vpow.pop %v2699
        %v2701 = vmul.f32 %v2687, 1.442695
        %v2702 = vpow.pop %v2701
        %v2703 = vmul.f32 %v2688, 1.442695
        %v2704 = vpow.pop %v2703
        %v2705 = vsel %vm1382, %v2690, 0.0
        %2706 = vadd.xlane.f32.xlu0 %v2705
        %v2707 = vpop.xlane.xlu0 %2706
        %v2708 = vsel %vm1382, %v2692, 0.0
        %2709 = vadd.xlane.f32.xlu0 %v2708
        %v2710 = vpop.xlane.xlu0 %2709
        %v2711 = vsel %vm1382, %v2694, 0.0
        %2712 = vadd.xlane.f32.xlu0 %v2711
        %v2713 = vpop.xlane.xlu0 %2712
        %v2714 = vsel %vm1382, %v2696, 0.0
        %2715 = vadd.xlane.f32.xlu0 %v2714
        %v2716 = vpop.xlane.xlu0 %2715
        %v2717 = vsel %vm1382, %v2698, 0.0
        %2718 = vadd.xlane.f32.xlu0 %v2717
        %v2719 = vpop.xlane.xlu0 %2718
        %v2720 = vsel %vm1382, %v2700, 0.0
        %2721 = vadd.xlane.f32.xlu0 %v2720
        %v2722 = vpop.xlane.xlu0 %2721
        %v2723 = vsel %vm1382, %v2702, 0.0
        %2724 = vadd.xlane.f32.xlu0 %v2723
        %v2725 = vpop.xlane.xlu0 %2724
        %v2726 = vsel %vm1382, %v2704, 0.0
        %2727 = vadd.xlane.f32.xlu0 %v2726
        %v2728 = vpop.xlane.xlu0 %2727
        %v2729 = vpack.c.bf16 %v2692, %v2690
        %v2730 = vpack.c.bf16 %v2696, %v2694
        %v2731 = vpack.c.bf16 %v2700, %v2698
        %v2732 = vpack.c.bf16 %v2704, %v2702
        %2733 = vrot.lane.b32.xlu0 %v2309, 96
        %v2734 = vpop.permute.xlu0 %2733
        %2735 = vrot.lane.b32.xlu0 %v2310, 96
        %v2736 = vpop.permute.xlu0 %2735
        %2737 = vrot.lane.b32.xlu0 %v2311, 96
        %v2738 = vpop.permute.xlu0 %2737
        %2739 = vrot.lane.b32.xlu0 %v2312, 96
        %v2740 = vpop.permute.xlu0 %2739
        %v2746 = vsel %vm1382, %v2729, 0
        %v2749 = vsel %vm1382, %v2730, 0
        %v2752 = vsel %vm1382, %v2731, 0
        %v2755 = vsel %vm1382, %v2732, 0
        %2757 = vmatpush.bf16.msra.mxu0 0
        %2758 = vmatpush.bf16.msra.mxu0 0
        %2759 = vmatpush.bf16.msra.mxu0 0
        %2760 = vmatpush.bf16.msra.mxu0 0
        %2761 = vmatpush.bf16.msra.mxu0 %v2740
        %2762 = vmatpush.bf16.msra.mxu0 %v2738
        %2763 = vmatpush.bf16.msra.mxu0 %v2736
        %2764 = vmatpush.bf16.msra.mxu0 %v2734
        %2765 = vmatmul.bf16.gmra.mxu0 %v2746
        %v2766 = vpop.f32.mrf.mxu0
        %v2767 = vadd.f32 0.0, %v2766
        %v2768 = vpop.f32.mrf.mxu0
        %v2769 = vadd.f32 0.0, %v2768
        %2770 = vmatmul.bf16.gmra.mxu0 %v2749
        %v2771 = vpop.f32.mrf.mxu0
        %v2772 = vadd.f32 0.0, %v2771
        %v2773 = vpop.f32.mrf.mxu0
        %v2774 = vadd.f32 0.0, %v2773
        %2775 = vmatmul.bf16.gmra.mxu0 %v2752
        %v2776 = vpop.f32.mrf.mxu0
        %v2777 = vadd.f32 0.0, %v2776
        %v2778 = vpop.f32.mrf.mxu0
        %v2779 = vadd.f32 0.0, %v2778
        %2780 = vmatmul.bf16.gmra.mxu0 %v2755
        %v2781 = vpop.f32.mrf.mxu0
        %v2782 = vadd.f32 0.0, %v2781
        %v2783 = vpop.f32.mrf.mxu0
        %v2784 = vadd.f32 0.0, %v2783
        %2785 = vdwg.mxu0
        %v2786 = vrcp.pop %v2707
        %v2787 = vrcp.pop %v2710
        %v2788 = vrcp.pop %v2713
        %v2789 = vrcp.pop %v2716
        %v2790 = vrcp.pop %v2719
        %v2791 = vrcp.pop %v2722
        %v2792 = vrcp.pop %v2725
        %v2793 = vrcp.pop %v2728
        %v2794 = vmul.f32 %v2767, %v2786
        %v2795 = vmul.f32 %v2769, %v2787
        %v2796 = vmul.f32 %v2772, %v2788
        %v2797 = vmul.f32 %v2774, %v2789
        %v2798 = vmul.f32 %v2777, %v2790
        %v2799 = vmul.f32 %v2779, %v2791
        %v2800 = vmul.f32 %v2782, %v2792
        %v2801 = vmul.f32 %v2784, %v2793
        %2802 = vrot.lane.b32.xlu0 %v2139, 80
        %v2803 = vpop.permute.xlu0 %2802
        %2804 = vrot.lane.b32.xlu0 %v2140, 80
        %v2805 = vpop.permute.xlu0 %2804
        %2806 = vrot.lane.b32.xlu0 %v2141, 80
        %v2807 = vpop.permute.xlu0 %2806
        %2808 = vrot.lane.b32.xlu0 %v2142, 80
        %v2809 = vpop.permute.xlu0 %2808
        %2810 = vrot.lane.b32.xlu0 %v2159, 80
        %v2811 = vpop.permute.xlu0 %2810
        %2812 = vrot.lane.b32.xlu0 %v2160, 80
        %v2813 = vpop.permute.xlu0 %2812
        %2814 = vrot.lane.b32.xlu0 %v2161, 80
        %v2815 = vpop.permute.xlu0 %2814
        %2816 = vrot.lane.b32.xlu0 %v2162, 80
        %v2817 = vpop.permute.xlu0 %2816
        %v2819 = vsel %vm2163, %v2803, 0
        %v2822 = vsel %vm2163, %v2805, 0
        %v2825 = vsel %vm2163, %v2807, 0
        %v2828 = vsel %vm2163, %v2809, 0
        %v2831 = vsel %vm2163, %v2811, 0
        %v2834 = vsel %vm2163, %v2813, 0
        %v2837 = vsel %vm2163, %v2815, 0
        %v2840 = vsel %vm2163, %v2817, 0
        %2842 = vmatpush.bf16.xpose.msra.mxu0 0
        %2843 = vmatpush.bf16.xpose.msra.mxu0 0
        %2844 = vmatpush.bf16.xpose.msra.mxu0 0
        %2845 = vmatpush.bf16.xpose.msra.mxu0 0
        %2846 = vmatpush.bf16.xpose.msra.mxu0 %v2840
        %2847 = vmatpush.bf16.xpose.msra.mxu0 %v2837
        %2848 = vmatpush.bf16.xpose.msra.mxu0 %v2834
        %2849 = vmatpush.bf16.xpose.msra.mxu0 %v2831
        %2850 = vmatmul.bf16.gmra.mxu0 %v2819
        %v2851 = vpop.f32.mrf.mxu0
        %v2852 = vadd.f32 0.0, %v2851
        %v2853 = vpop.f32.mrf.mxu0
        %v2854 = vadd.f32 0.0, %v2853
        %2855 = vmatmul.bf16.gmra.mxu0 %v2822
        %v2856 = vpop.f32.mrf.mxu0
        %v2857 = vadd.f32 0.0, %v2856
        %v2858 = vpop.f32.mrf.mxu0
        %v2859 = vadd.f32 0.0, %v2858
        %2860 = vmatmul.bf16.gmra.mxu0 %v2825
        %v2861 = vpop.f32.mrf.mxu0
        %v2862 = vadd.f32 0.0, %v2861
        %v2863 = vpop.f32.mrf.mxu0
        %v2864 = vadd.f32 0.0, %v2863
        %2865 = vmatmul.bf16.gmra.mxu0 %v2828
        %v2866 = vpop.f32.mrf.mxu0
        %v2867 = vadd.f32 0.0, %v2866
        %v2868 = vpop.f32.mrf.mxu0
        %v2869 = vadd.f32 0.0, %v2868
        %2870 = vdwg.mxu0
        %v2871 = vsel %vm1382, %v2852, -inf
        %2872 = vmax.xlane.f32.xlu0 %v2871
        %v2873 = vpop.xlane.xlu0 %2872
        %v2874 = vsel %vm1382, %v2854, -inf
        %2875 = vmax.xlane.f32.xlu0 %v2874
        %v2876 = vpop.xlane.xlu0 %2875
        %v2877 = vsel %vm1382, %v2857, -inf
        %2878 = vmax.xlane.f32.xlu0 %v2877
        %v2879 = vpop.xlane.xlu0 %2878
        %v2880 = vsel %vm1382, %v2859, -inf
        %2881 = vmax.xlane.f32.xlu0 %v2880
        %v2882 = vpop.xlane.xlu0 %2881
        %v2883 = vsel %vm1382, %v2862, -inf
        %2884 = vmax.xlane.f32.xlu0 %v2883
        %v2885 = vpop.xlane.xlu0 %2884
        %v2886 = vsel %vm1382, %v2864, -inf
        %2887 = vmax.xlane.f32.xlu0 %v2886
        %v2888 = vpop.xlane.xlu0 %2887
        %v2889 = vsel %vm1382, %v2867, -inf
        %2890 = vmax.xlane.f32.xlu0 %v2889
        %v2891 = vpop.xlane.xlu0 %2890
        %v2892 = vsel %vm1382, %v2869, -inf
        %2893 = vmax.xlane.f32.xlu0 %v2892
        %v2894 = vpop.xlane.xlu0 %2893
        %v2895 = vsub.f32 %v2852, %v2873
        %v2896 = vsub.f32 %v2854, %v2876
        %v2897 = vsub.f32 %v2857, %v2879
        %v2898 = vsub.f32 %v2859, %v2882
        %v2899 = vsub.f32 %v2862, %v2885
        %v2900 = vsub.f32 %v2864, %v2888
        %v2901 = vsub.f32 %v2867, %v2891
        %v2902 = vsub.f32 %v2869, %v2894
        %v2903 = vmul.f32 %v2895, 1.442695
        %v2904 = vpow.pop %v2903
        %v2905 = vmul.f32 %v2896, 1.442695
        %v2906 = vpow.pop %v2905
        %v2907 = vmul.f32 %v2897, 1.442695
        %v2908 = vpow.pop %v2907
        %v2909 = vmul.f32 %v2898, 1.442695
        %v2910 = vpow.pop %v2909
        %v2911 = vmul.f32 %v2899, 1.442695
        %v2912 = vpow.pop %v2911
        %v2913 = vmul.f32 %v2900, 1.442695
        %v2914 = vpow.pop %v2913
        %v2915 = vmul.f32 %v2901, 1.442695
        %v2916 = vpow.pop %v2915
        %v2917 = vmul.f32 %v2902, 1.442695
        %v2918 = vpow.pop %v2917
        %v2919 = vsel %vm1382, %v2904, 0.0
        %2920 = vadd.xlane.f32.xlu0 %v2919
        %v2921 = vpop.xlane.xlu0 %2920
        %v2922 = vsel %vm1382, %v2906, 0.0
        %2923 = vadd.xlane.f32.xlu0 %v2922
        %v2924 = vpop.xlane.xlu0 %2923
        %v2925 = vsel %vm1382, %v2908, 0.0
        %2926 = vadd.xlane.f32.xlu0 %v2925
        %v2927 = vpop.xlane.xlu0 %2926
        %v2928 = vsel %vm1382, %v2910, 0.0
        %2929 = vadd.xlane.f32.xlu0 %v2928
        %v2930 = vpop.xlane.xlu0 %2929
        %v2931 = vsel %vm1382, %v2912, 0.0
        %2932 = vadd.xlane.f32.xlu0 %v2931
        %v2933 = vpop.xlane.xlu0 %2932
        %v2934 = vsel %vm1382, %v2914, 0.0
        %2935 = vadd.xlane.f32.xlu0 %v2934
        %v2936 = vpop.xlane.xlu0 %2935
        %v2937 = vsel %vm1382, %v2916, 0.0
        %2938 = vadd.xlane.f32.xlu0 %v2937
        %v2939 = vpop.xlane.xlu0 %2938
        %v2940 = vsel %vm1382, %v2918, 0.0
        %2941 = vadd.xlane.f32.xlu0 %v2940
        %v2942 = vpop.xlane.xlu0 %2941
        %v2943 = vpack.c.bf16 %v2906, %v2904
        %v2944 = vpack.c.bf16 %v2910, %v2908
        %v2945 = vpack.c.bf16 %v2914, %v2912
        %v2946 = vpack.c.bf16 %v2918, %v2916
        %2947 = vrot.lane.b32.xlu0 %v2309, 80
        %v2948 = vpop.permute.xlu0 %2947
        %2949 = vrot.lane.b32.xlu0 %v2310, 80
        %v2950 = vpop.permute.xlu0 %2949
        %2951 = vrot.lane.b32.xlu0 %v2311, 80
        %v2952 = vpop.permute.xlu0 %2951
        %2953 = vrot.lane.b32.xlu0 %v2312, 80
        %v2954 = vpop.permute.xlu0 %2953
        %v2960 = vsel %vm1382, %v2943, 0
        %v2963 = vsel %vm1382, %v2944, 0
        %v2966 = vsel %vm1382, %v2945, 0
        %v2969 = vsel %vm1382, %v2946, 0
        %2971 = vmatpush.bf16.msra.mxu0 0
        %2972 = vmatpush.bf16.msra.mxu0 0
        %2973 = vmatpush.bf16.msra.mxu0 0
        %2974 = vmatpush.bf16.msra.mxu0 0
        %2975 = vmatpush.bf16.msra.mxu0 %v2954
        %2976 = vmatpush.bf16.msra.mxu0 %v2952
        %2977 = vmatpush.bf16.msra.mxu0 %v2950
        %2978 = vmatpush.bf16.msra.mxu0 %v2948
        %2979 = vmatmul.bf16.gmra.mxu0 %v2960
        %v2980 = vpop.f32.mrf.mxu0
        %v2981 = vadd.f32 0.0, %v2980
        %v2982 = vpop.f32.mrf.mxu0
        %v2983 = vadd.f32 0.0, %v2982
        %2984 = vmatmul.bf16.gmra.mxu0 %v2963
        %v2985 = vpop.f32.mrf.mxu0
        %v2986 = vadd.f32 0.0, %v2985
        %v2987 = vpop.f32.mrf.mxu0
        %v2988 = vadd.f32 0.0, %v2987
        %2989 = vmatmul.bf16.gmra.mxu0 %v2966
        %v2990 = vpop.f32.mrf.mxu0
        %v2991 = vadd.f32 0.0, %v2990
        %v2992 = vpop.f32.mrf.mxu0
        %v2993 = vadd.f32 0.0, %v2992
        %2994 = vmatmul.bf16.gmra.mxu0 %v2969
        %v2995 = vpop.f32.mrf.mxu0
        %v2996 = vadd.f32 0.0, %v2995
        %v2997 = vpop.f32.mrf.mxu0
        %v2998 = vadd.f32 0.0, %v2997
        %2999 = vdwg.mxu0
        %v3000 = vrcp.pop %v2921
        %v3001 = vrcp.pop %v2924
        %v3002 = vrcp.pop %v2927
        %v3003 = vrcp.pop %v2930
        %v3004 = vrcp.pop %v2933
        %v3005 = vrcp.pop %v2936
        %v3006 = vrcp.pop %v2939
        %v3007 = vrcp.pop %v2942
        %v3008 = vmul.f32 %v2981, %v3000
        %v3009 = vmul.f32 %v2983, %v3001
        %v3010 = vmul.f32 %v2986, %v3002
        %v3011 = vmul.f32 %v2988, %v3003
        %v3012 = vmul.f32 %v2991, %v3004
        %v3013 = vmul.f32 %v2993, %v3005
        %v3014 = vmul.f32 %v2996, %v3006
        %v3015 = vmul.f32 %v2998, %v3007
        %3024 = vrot.lane.b32.xlu0 %v2580, 16
        %v3025 = vpop.permute.xlu0 %3024
        %3026 = vrot.lane.b32.xlu0 %v2581, 16
        %v3027 = vpop.permute.xlu0 %3026
        %3028 = vrot.lane.b32.xlu0 %v2582, 16
        %v3029 = vpop.permute.xlu0 %3028
        %3030 = vrot.lane.b32.xlu0 %v2583, 16
        %v3031 = vpop.permute.xlu0 %3030
        %3032 = vrot.lane.b32.xlu0 %v2584, 16
        %v3033 = vpop.permute.xlu0 %3032
        %3034 = vrot.lane.b32.xlu0 %v2585, 16
        %v3035 = vpop.permute.xlu0 %3034
        %3036 = vrot.lane.b32.xlu0 %v2586, 16
        %v3037 = vpop.permute.xlu0 %3036
        %3038 = vrot.lane.b32.xlu0 %v2587, 16
        %v3039 = vpop.permute.xlu0 %3038
        %3056 = vrot.lane.b32.xlu0 %v2794, 32
        %v3057 = vpop.permute.xlu0 %3056
        %3058 = vrot.lane.b32.xlu0 %v2795, 32
        %v3059 = vpop.permute.xlu0 %3058
        %3060 = vrot.lane.b32.xlu0 %v2796, 32
        %v3061 = vpop.permute.xlu0 %3060
        %3062 = vrot.lane.b32.xlu0 %v2797, 32
        %v3063 = vpop.permute.xlu0 %3062
        %3064 = vrot.lane.b32.xlu0 %v2798, 32
        %v3065 = vpop.permute.xlu0 %3064
        %3066 = vrot.lane.b32.xlu0 %v2799, 32
        %v3067 = vpop.permute.xlu0 %3066
        %3068 = vrot.lane.b32.xlu0 %v2800, 32
        %v3069 = vpop.permute.xlu0 %3068
        %3070 = vrot.lane.b32.xlu0 %v2801, 32
        %v3071 = vpop.permute.xlu0 %3070
        %3088 = vrot.lane.b32.xlu0 %v3008, 48
        %v3089 = vpop.permute.xlu0 %3088
        %3090 = vrot.lane.b32.xlu0 %v3009, 48
        %v3091 = vpop.permute.xlu0 %3090
        %3092 = vrot.lane.b32.xlu0 %v3010, 48
        %v3093 = vpop.permute.xlu0 %3092
        %3094 = vrot.lane.b32.xlu0 %v3011, 48
        %v3095 = vpop.permute.xlu0 %3094
        %3096 = vrot.lane.b32.xlu0 %v3012, 48
        %v3097 = vpop.permute.xlu0 %3096
        %3098 = vrot.lane.b32.xlu0 %v3013, 48
        %v3099 = vpop.permute.xlu0 %3098
        %3100 = vrot.lane.b32.xlu0 %v3014, 48
        %v3101 = vpop.permute.xlu0 %3100
        %3102 = vrot.lane.b32.xlu0 %v3015, 48
        %v3103 = vpop.permute.xlu0 %3102
        %v3112 = vsel %vm2163, %v2366, %v3025
        %v3113 = vsel %vm2163, %v2367, %v3027
        %v3114 = vsel %vm2163, %v2368, %v3029
        %v3115 = vsel %vm2163, %v2369, %v3031
        %v3116 = vsel %vm2163, %v2370, %v3033
        %v3117 = vsel %vm2163, %v2371, %v3035
        %v3118 = vsel %vm2163, %v2372, %v3037
        %v3119 = vsel %vm2163, %v2373, %v3039
        %v3120 = vsel %vm1439, %v3112, %v3057
        %v3121 = vsel %vm1439, %v3113, %v3059
        %v3122 = vsel %vm1439, %v3114, %v3061
        %v3123 = vsel %vm1439, %v3115, %v3063
        %v3124 = vsel %vm1439, %v3116, %v3065
        %v3125 = vsel %vm1439, %v3117, %v3067
        %v3126 = vsel %vm1439, %v3118, %v3069
        %v3127 = vsel %vm1439, %v3119, %v3071
        %vm3128 = vcmask 392192
        %v3129 = vsel %vm3128, %v3120, %v3089
        %v3130 = vsel %vm3128, %v3121, %v3091
        %v3131 = vsel %vm3128, %v3122, %v3093
        %v3132 = vsel %vm3128, %v3123, %v3095
        %v3133 = vsel %vm3128, %v3124, %v3097
        %v3134 = vsel %vm3128, %v3125, %v3099
        %v3135 = vsel %vm3128, %v3126, %v3101
        %v3136 = vsel %vm3128, %v3127, %v3103
        %v3137 = vpack.c.bf16 %v3130, %v3129
        %v3138 = vpack.c.bf16 %v3132, %v3131
        %v3139 = vpack.c.bf16 %v3134, %v3133
        %v3140 = vpack.c.bf16 %v3136, %v3135
        %v3142 = vperm.slane %v1903, 0
        %v3152 = vunpack.c.l.b16 %v1895
        %v3153 = vunpack.c.l.b16 %v1896
        %v3154 = vunpack.c.l.b16 %v1897
        %v3155 = vunpack.c.l.b16 %v1898
        %v3156 = vunpack.c.l.b16 %v1899
        %v3157 = vunpack.c.l.b16 %v1900
        %v3158 = vunpack.c.l.b16 %v1901
        %v3159 = vunpack.c.l.b16 %v1902
        %v3160 = vpack.c.b16 %v3153, %v3152
        %v3161 = vpack.c.b16 %v3155, %v3154
        %v3162 = vpack.c.b16 %v3157, %v3156
        %v3163 = vpack.c.b16 %v3159, %v3158
        %v3169 = vsel %vm1382, %v3137, 0
        %v3172 = vsel %vm1382, %v3138, 0
        %v3175 = vsel %vm1382, %v3139, 0
        %v3178 = vsel %vm1382, %v3140, 0
        %3180 = vmatpush.bf16.msra.mxu0 0
        %3181 = vmatpush.bf16.msra.mxu0 0
        %3182 = vmatpush.bf16.msra.mxu0 0
        %3183 = vmatpush.bf16.msra.mxu0 0
        %3184 = vmatpush.bf16.msra.mxu0 %v3163
        %3185 = vmatpush.bf16.msra.mxu0 %v3162
        %3186 = vmatpush.bf16.msra.mxu0 %v3161
        %3187 = vmatpush.bf16.msra.mxu0 %v3160
        %3188 = vmatmul.bf16.gmra.mxu0 %v3169
        %v3189 = vpop.f32.mrf.mxu0
        %v3190 = vadd.f32 %v3142, %v3189
        %v3191 = vpop.f32.mrf.mxu0
        %v3192 = vadd.f32 %v3142, %v3191
        %3193 = vmatmul.bf16.gmra.mxu0 %v3172
        %v3194 = vpop.f32.mrf.mxu0
        %v3195 = vadd.f32 %v3142, %v3194
        %v3196 = vpop.f32.mrf.mxu0
        %v3197 = vadd.f32 %v3142, %v3196
        %3198 = vmatmul.bf16.gmra.mxu0 %v3175
        %v3199 = vpop.f32.mrf.mxu0
        %v3200 = vadd.f32 %v3142, %v3199
        %v3201 = vpop.f32.mrf.mxu0
        %v3202 = vadd.f32 %v3142, %v3201
        %3203 = vmatmul.bf16.gmra.mxu0 %v3178
        %v3204 = vpop.f32.mrf.mxu0
        %v3205 = vadd.f32 %v3142, %v3204
        %v3206 = vpop.f32.mrf.mxu0
        %v3207 = vadd.f32 %v3142, %v3206
        %3208 = vdwg.mxu0
        %v3209 = vadd.f32 %v3190, %v1655
        %v3210 = vadd.f32 %v3192, %v1657
        %v3211 = vadd.f32 %v3195, %v1660
        %v3212 = vadd.f32 %v3197, %v1662
        %v3213 = vadd.f32 %v3200, %v1665
        %v3214 = vadd.f32 %v3202, %v1667
        %v3215 = vadd.f32 %v3205, %v1670
        %v3216 = vadd.f32 %v3207, %v1672
        %v3217 = vld [vmem:[#allocation23] sm:$0x1]
        %v3218 = vld [vmem:[#allocation25] sm:$0x1]
        %v3219 = vsel %vm1382, %v3209, 0.0
        %3220 = vadd.xlane.f32.xlu0 %v3219
        %v3221 = vpop.xlane.xlu0 %3220
        %v3222 = vsel %vm1382, %v3210, 0.0
        %3223 = vadd.xlane.f32.xlu0 %v3222
        %v3224 = vpop.xlane.xlu0 %3223
        %v3225 = vsel %vm1382, %v3211, 0.0
        %3226 = vadd.xlane.f32.xlu0 %v3225
        %v3227 = vpop.xlane.xlu0 %3226
        %v3228 = vsel %vm1382, %v3212, 0.0
        %3229 = vadd.xlane.f32.xlu0 %v3228
        %v3230 = vpop.xlane.xlu0 %3229
        %v3231 = vsel %vm1382, %v3213, 0.0
        %3232 = vadd.xlane.f32.xlu0 %v3231
        %v3233 = vpop.xlane.xlu0 %3232
        %v3234 = vsel %vm1382, %v3214, 0.0
        %3235 = vadd.xlane.f32.xlu0 %v3234
        %v3236 = vpop.xlane.xlu0 %3235
        %v3237 = vsel %vm1382, %v3215, 0.0
        %3238 = vadd.xlane.f32.xlu0 %v3237
        %v3239 = vpop.xlane.xlu0 %3238
        %v3240 = vsel %vm1382, %v3216, 0.0
        %3241 = vadd.xlane.f32.xlu0 %v3240
        %v3242 = vpop.xlane.xlu0 %3241
        %v3243 = vmul.f32 %v3221, %v1708
        %v3244 = vmul.f32 %v3224, %v1708
        %v3245 = vmul.f32 %v3227, %v1708
        %v3246 = vmul.f32 %v3230, %v1708
        %v3247 = vmul.f32 %v3233, %v1708
        %v3248 = vmul.f32 %v3236, %v1708
        %v3249 = vmul.f32 %v3239, %v1708
        %v3250 = vmul.f32 %v3242, %v1708
        %v3251 = vsub.f32 %v3209, %v3243
        %v3252 = vsub.f32 %v3210, %v3244
        %v3253 = vsub.f32 %v3211, %v3245
        %v3254 = vsub.f32 %v3212, %v3246
        %v3255 = vsub.f32 %v3213, %v3247
        %v3256 = vsub.f32 %v3214, %v3248
        %v3257 = vsub.f32 %v3215, %v3249
        %v3258 = vsub.f32 %v3216, %v3250
        %v3259 = vmul.f32 %v3251, %v3251
        %v3260 = vmul.f32 %v3252, %v3252
        %v3261 = vmul.f32 %v3253, %v3253
        %v3262 = vmul.f32 %v3254, %v3254
        %v3263 = vmul.f32 %v3255, %v3255
        %v3264 = vmul.f32 %v3256, %v3256
        %v3265 = vmul.f32 %v3257, %v3257
        %v3266 = vmul.f32 %v3258, %v3258
        %v3267 = vsel %vm1382, %v3259, 0.0
        %3268 = vadd.xlane.f32.xlu0 %v3267
        %v3269 = vpop.xlane.xlu0 %3268
        %v3270 = vsel %vm1382, %v3260, 0.0
        %3271 = vadd.xlane.f32.xlu0 %v3270
        %v3272 = vpop.xlane.xlu0 %3271
        %v3273 = vsel %vm1382, %v3261, 0.0
        %3274 = vadd.xlane.f32.xlu0 %v3273
        %v3275 = vpop.xlane.xlu0 %3274
        %v3276 = vsel %vm1382, %v3262, 0.0
        %3277 = vadd.xlane.f32.xlu0 %v3276
        %v3278 = vpop.xlane.xlu0 %3277
        %v3279 = vsel %vm1382, %v3263, 0.0
        %3280 = vadd.xlane.f32.xlu0 %v3279
        %v3281 = vpop.xlane.xlu0 %3280
        %v3282 = vsel %vm1382, %v3264, 0.0
        %3283 = vadd.xlane.f32.xlu0 %v3282
        %v3284 = vpop.xlane.xlu0 %3283
        %v3285 = vsel %vm1382, %v3265, 0.0
        %3286 = vadd.xlane.f32.xlu0 %v3285
        %v3287 = vpop.xlane.xlu0 %3286
        %v3288 = vsel %vm1382, %v3266, 0.0
        %3289 = vadd.xlane.f32.xlu0 %v3288
        %v3290 = vpop.xlane.xlu0 %3289
        %v3291 = vmul.f32 %v3269, %v1708
        %v3292 = vmul.f32 %v3272, %v1708
        %v3293 = vmul.f32 %v3275, %v1708
        %v3294 = vmul.f32 %v3278, %v1708
        %v3295 = vmul.f32 %v3281, %v1708
        %v3296 = vmul.f32 %v3284, %v1708
        %v3297 = vmul.f32 %v3287, %v1708
        %v3298 = vmul.f32 %v3290, %v1708
        %v3299 = vadd.f32 %v3291, 1e-05
        %v3300 = vadd.f32 %v3292, 1e-05
        %v3301 = vadd.f32 %v3293, 1e-05
        %v3302 = vadd.f32 %v3294, 1e-05
        %v3303 = vadd.f32 %v3295, 1e-05
        %v3304 = vadd.f32 %v3296, 1e-05
        %v3305 = vadd.f32 %v3297, 1e-05
        %v3306 = vadd.f32 %v3298, 1e-05
        %v3307 = vrsqrt.pop %v3299
        %v3308 = vmul.f32 %v3307, %v3299
        %v3309 = vmul.f32 %v3308, %v3307
        %v3310 = vmul.f32 0.5, %v3309
        %v3311 = vsub.f32 1.5, %v3310
        %v3312 = vmul.f32 %v3307, %v3311
        %vm3313 = vweird.f32 %v3299
        %vm3314 = vweird.f32 %v3307
        %vm3315 = vmor %vm3313, %vm3314
        %v3316 = vsel %vm3315, %v3307, %v3312
        %v3317 = vrsqrt.pop %v3300
        %v3318 = vmul.f32 %v3317, %v3300
        %v3319 = vmul.f32 %v3318, %v3317
        %v3320 = vmul.f32 0.5, %v3319
        %v3321 = vsub.f32 1.5, %v3320
        %v3322 = vmul.f32 %v3317, %v3321
        %vm3323 = vweird.f32 %v3300
        %vm3324 = vweird.f32 %v3317
        %vm3325 = vmor %vm3323, %vm3324
        %v3326 = vsel %vm3325, %v3317, %v3322
        %v3327 = vrsqrt.pop %v3301
        %v3328 = vmul.f32 %v3327, %v3301
        %v3329 = vmul.f32 %v3328, %v3327
        %v3330 = vmul.f32 0.5, %v3329
        %v3331 = vsub.f32 1.5, %v3330
        %v3332 = vmul.f32 %v3327, %v3331
        %vm3333 = vweird.f32 %v3301
        %vm3334 = vweird.f32 %v3327
        %vm3335 = vmor %vm3333, %vm3334
        %v3336 = vsel %vm3335, %v3327, %v3332
        %v3337 = vrsqrt.pop %v3302
        %v3338 = vmul.f32 %v3337, %v3302
        %v3339 = vmul.f32 %v3338, %v3337
        %v3340 = vmul.f32 0.5, %v3339
        %v3341 = vsub.f32 1.5, %v3340
        %v3342 = vmul.f32 %v3337, %v3341
        %vm3343 = vweird.f32 %v3302
        %vm3344 = vweird.f32 %v3337
        %vm3345 = vmor %vm3343, %vm3344
        %v3346 = vsel %vm3345, %v3337, %v3342
        %v3347 = vrsqrt.pop %v3303
        %v3348 = vmul.f32 %v3347, %v3303
        %v3349 = vmul.f32 %v3348, %v3347
        %v3350 = vmul.f32 0.5, %v3349
        %v3351 = vsub.f32 1.5, %v3350
        %v3352 = vmul.f32 %v3347, %v3351
        %vm3353 = vweird.f32 %v3303
        %vm3354 = vweird.f32 %v3347
        %vm3355 = vmor %vm3353, %vm3354
        %v3356 = vsel %vm3355, %v3347, %v3352
        %v3357 = vrsqrt.pop %v3304
        %v3358 = vmul.f32 %v3357, %v3304
        %v3359 = vmul.f32 %v3358, %v3357
        %v3360 = vmul.f32 0.5, %v3359
        %v3361 = vsub.f32 1.5, %v3360
        %v3362 = vmul.f32 %v3357, %v3361
        %vm3363 = vweird.f32 %v3304
        %vm3364 = vweird.f32 %v3357
        %vm3365 = vmor %vm3363, %vm3364
        %v3366 = vsel %vm3365, %v3357, %v3362
        %v3367 = vrsqrt.pop %v3305
        %v3368 = vmul.f32 %v3367, %v3305
        %v3369 = vmul.f32 %v3368, %v3367
        %v3370 = vmul.f32 0.5, %v3369
        %v3371 = vsub.f32 1.5, %v3370
        %v3372 = vmul.f32 %v3367, %v3371
        %vm3373 = vweird.f32 %v3305
        %vm3374 = vweird.f32 %v3367
        %vm3375 = vmor %vm3373, %vm3374
        %v3376 = vsel %vm3375, %v3367, %v3372
        %v3377 = vrsqrt.pop %v3306
        %v3378 = vmul.f32 %v3377, %v3306
        %v3379 = vmul.f32 %v3378, %v3377
        %v3380 = vmul.f32 0.5, %v3379
        %v3381 = vsub.f32 1.5, %v3380
        %v3382 = vmul.f32 %v3377, %v3381
        %vm3383 = vweird.f32 %v3306
        %vm3384 = vweird.f32 %v3377
        %vm3385 = vmor %vm3383, %vm3384
        %v3386 = vsel %vm3385, %v3377, %v3382
        %v3387 = vmul.f32 %v3251, %v3316
        %v3388 = vmul.f32 %v3252, %v3326
        %v3389 = vmul.f32 %v3253, %v3336
        %v3390 = vmul.f32 %v3254, %v3346
        %v3391 = vmul.f32 %v3255, %v3356
        %v3392 = vmul.f32 %v3256, %v3366
        %v3393 = vmul.f32 %v3257, %v3376
        %v3394 = vmul.f32 %v3258, %v3386
        %v3396 = vperm.slane %v3217, 0
        %v3398 = vmul.f32 %v3387, %v3396
        %v3399 = vmul.f32 %v3388, %v3396
        %v3400 = vmul.f32 %v3389, %v3396
        %v3401 = vmul.f32 %v3390, %v3396
        %v3402 = vmul.f32 %v3391, %v3396
        %v3403 = vmul.f32 %v3392, %v3396
        %v3404 = vmul.f32 %v3393, %v3396
        %v3405 = vmul.f32 %v3394, %v3396
        %v3407 = vperm.slane %v3218, 0
        %v3409 = vadd.f32 %v3398, %v3407
        %v3410 = vadd.f32 %v3399, %v3407
        %v3411 = vadd.f32 %v3400, %v3407
        %v3412 = vadd.f32 %v3401, %v3407
        %v3413 = vadd.f32 %v3402, %v3407
        %v3414 = vadd.f32 %v3403, %v3407
        %v3415 = vadd.f32 %v3404, %v3407
        %v3416 = vadd.f32 %v3405, %v3407
        %v3417 = vpack.c.bf16 %v3410, %v3409
        %v3418 = vpack.c.bf16 %v3412, %v3411
        %v3419 = vpack.c.bf16 %v3414, %v3413
        %v3420 = vpack.c.bf16 %v3416, %v3415
        %v3421 = vld [vmem:[#allocation26] sm:$0xf]
        %v3422 = vld [vmem:[#allocation26 + $0x4] sm:$0xf]
        %v3423 = vld [vmem:[#allocation26 + $0x8] sm:$0xf]
        %v3424 = vld [vmem:[#allocation26 + $0xc] sm:$0xf]
        %v3425 = vld [vmem:[#allocation26 + $0x10] sm:$0xf]
        %v3426 = vld [vmem:[#allocation26 + $0x14] sm:$0xf]
        %v3427 = vld [vmem:[#allocation26 + $0x18] sm:$0xf]
        %v3428 = vld [vmem:[#allocation26 + $0x1c] sm:$0xf]
        %v3429 = vld [vmem:[#allocation29] sm:$0xf]
        %v3430 = vld [vmem:[#allocation29 + $0x4] sm:$0xf]
        %v3431 = vld [vmem:[#allocation29 + $0x8] sm:$0xf]
        %v3432 = vld [vmem:[#allocation29 + $0xc] sm:$0xf]
        %v3433 = vld [vmem:[#allocation29 + $0x10] sm:$0xf]
        %v3434 = vld [vmem:[#allocation29 + $0x14] sm:$0xf]
        %v3435 = vld [vmem:[#allocation29 + $0x18] sm:$0xf]
        %v3436 = vld [vmem:[#allocation29 + $0x1c] sm:$0xf]
        %v3437 = vld [vmem:[#allocation31] sm:$0x1]
        %v3438 = vld [vmem:[#allocation28] sm:$0xf]
        %v3439 = vld [vmem:[#allocation28 + $0x4] sm:$0xf]
        %v3440 = vld [vmem:[#allocation28 + $0x8] sm:$0xf]
        %v3441 = vld [vmem:[#allocation28 + $0xc] sm:$0xf]
        %v3446 = vunpack.c.l.b16 %v3438
        %v3447 = vunpack.c.l.b16 %v3439
        %v3448 = vunpack.c.l.b16 %v3440
        %v3449 = vunpack.c.l.b16 %v3441
        %v3450 = vpack.c.b16 %v3447, %v3446
        %v3451 = vpack.c.b16 %v3449, %v3448
        %v3455 = vsel %vm1439, %v1675, 0
        %3457 = vmatpush.bf16.msra.mxu0 0
        %3458 = vmatpush.bf16.msra.mxu0 0
        %3459 = vmatpush.bf16.msra.mxu0 0
        %3460 = vmatpush.bf16.msra.mxu0 0
        %3461 = vmatpush.bf16.msra.mxu0 0
        %3462 = vmatpush.bf16.msra.mxu0 0
        %3463 = vmatpush.bf16.msra.mxu0 %v3451
        %3464 = vmatpush.bf16.msra.mxu0 %v3450
        %3465 = vmatmul.bf16.gmra.mxu0 %v3455
        %v3466 = vpop.f32.mrf.mxu0
        %v3467 = vadd.f32 0.0, %v3466
        %v3468 = vpop.f32.mrf.mxu0
        %3469 = vdwg.mxu0
        %v3470 = vpack.c.bf16 %v3467, %v3467
        %v3471 = vld [vmem:[%s37] sm:$0xf]
        %v3472 = vld [vmem:[%s37 + $0x4] sm:$0xf]
        %v3473 = vld [vmem:[%s37 + $0x8] sm:$0xf]
        %v3474 = vld [vmem:[%s37 + $0xc] sm:$0xf]
        %v3479 = vunpack.c.l.b16 %v3471
        %v3480 = vunpack.c.l.b16 %v3472
        %v3481 = vunpack.c.l.b16 %v3473
        %v3482 = vunpack.c.l.b16 %v3474
        %v3483 = vpack.c.b16 %v3480, %v3479
        %v3484 = vpack.c.b16 %v3482, %v3481
        %3487 = vmatpush.bf16.msra.mxu0 0
        %3488 = vmatpush.bf16.msra.mxu0 0
        %3489 = vmatpush.bf16.msra.mxu0 0
        %3490 = vmatpush.bf16.msra.mxu0 0
        %3491 = vmatpush.bf16.msra.mxu0 0
        %3492 = vmatpush.bf16.msra.mxu0 0
        %3493 = vmatpush.bf16.msra.mxu0 %v3484
        %3494 = vmatpush.bf16.msra.mxu0 %v3483
        %3495 = vmatmul.bf16.gmra.mxu0 %v3455
        %v3496 = vpop.f32.mrf.mxu0
        %v3497 = vadd.f32 0.0, %v3496
        %v3498 = vpop.f32.mrf.mxu0
        %3499 = vdwg.mxu0
        %v3500 = vpack.c.bf16 %v3497, %v3497
        %v3509 = vunpack.c.l.b16 %v3421
        %v3510 = vunpack.c.l.b16 %v3422
        %v3511 = vunpack.c.l.b16 %v3423
        %v3512 = vunpack.c.l.b16 %v3424
        %v3513 = vunpack.c.l.b16 %v3425
        %v3514 = vunpack.c.l.b16 %v3426
        %v3515 = vunpack.c.l.b16 %v3427
        %v3516 = vunpack.c.l.b16 %v3428
        %v3517 = vpack.c.b16 %v3510, %v3509
        %v3518 = vpack.c.b16 %v3512, %v3511
        %v3519 = vpack.c.b16 %v3514, %v3513
        %v3520 = vpack.c.b16 %v3516, %v3515
        %v3526 = vsel %vm1382, %v3417, 0
        %v3529 = vsel %vm1382, %v3418, 0
        %v3532 = vsel %vm1382, %v3419, 0
        %v3535 = vsel %vm1382, %v3420, 0
        %3537 = vmatpush.bf16.msra.mxu0 0
        %3538 = vmatpush.bf16.msra.mxu0 0
        %3539 = vmatpush.bf16.msra.mxu0 0
        %3540 = vmatpush.bf16.msra.mxu0 0
        %3541 = vmatpush.bf16.msra.mxu0 %v3520
        %3542 = vmatpush.bf16.msra.mxu0 %v3519
        %3543 = vmatpush.bf16.msra.mxu0 %v3518
        %3544 = vmatpush.bf16.msra.mxu0 %v3517
        %3545 = vmatmul.bf16.gmra.mxu0 %v3526
        %v3546 = vpop.f32.mrf.mxu0
        %v3547 = vadd.f32 0.0, %v3546
        %v3548 = vpop.f32.mrf.mxu0
        %v3549 = vadd.f32 0.0, %v3548
        %3550 = vmatmul.bf16.gmra.mxu0 %v3529
        %v3551 = vpop.f32.mrf.mxu0
        %v3552 = vadd.f32 0.0, %v3551
        %v3553 = vpop.f32.mrf.mxu0
        %v3554 = vadd.f32 0.0, %v3553
        %3555 = vmatmul.bf16.gmra.mxu0 %v3532
        %v3556 = vpop.f32.mrf.mxu0
        %v3557 = vadd.f32 0.0, %v3556
        %v3558 = vpop.f32.mrf.mxu0
        %v3559 = vadd.f32 0.0, %v3558
        %3560 = vmatmul.bf16.gmra.mxu0 %v3535
        %v3561 = vpop.f32.mrf.mxu0
        %v3562 = vadd.f32 0.0, %v3561
        %v3563 = vpop.f32.mrf.mxu0
        %v3564 = vadd.f32 0.0, %v3563
        %3565 = vdwg.mxu0
        %v3566 = vmul.f32 %v3547, 0.25
        %v3567 = vmul.f32 %v3549, 0.25
        %v3568 = vmul.f32 %v3552, 0.25
        %v3569 = vmul.f32 %v3554, 0.25
        %v3570 = vmul.f32 %v3557, 0.25
        %v3571 = vmul.f32 %v3559, 0.25
        %v3572 = vmul.f32 %v3562, 0.25
        %v3573 = vmul.f32 %v3564, 0.25
        %v3574 = vpack.c.bf16 %v3566, %v3566
        %v3575 = vpack.c.bf16 %v3567, %v3567
        %v3576 = vpack.c.bf16 %v3568, %v3568
        %v3577 = vpack.c.bf16 %v3569, %v3569
        %v3578 = vpack.c.bf16 %v3570, %v3570
        %v3579 = vpack.c.bf16 %v3571, %v3571
        %v3580 = vpack.c.bf16 %v3572, %v3572
        %v3581 = vpack.c.bf16 %v3573, %v3573
        %v3590 = vunpack.c.l.b16 %v3574
        %v3591 = vunpack.c.l.b16 %v3575
        %v3592 = vunpack.c.l.b16 %v3576
        %v3593 = vunpack.c.l.b16 %v3577
        %v3594 = vunpack.c.l.b16 %v3578
        %v3595 = vunpack.c.l.b16 %v3579
        %v3596 = vunpack.c.l.b16 %v3580
        %v3597 = vunpack.c.l.b16 %v3581
        %v3598 = vpack.c.b16 %v3591, %v3590
        %v3599 = vpack.c.b16 %v3593, %v3592
        %v3600 = vpack.c.b16 %v3595, %v3594
        %v3601 = vpack.c.b16 %v3597, %v3596
        %v3603 = vsel %vm2163, %v3598, 0
        %v3606 = vsel %vm2163, %v3599, 0
        %v3609 = vsel %vm2163, %v3600, 0
        %v3612 = vsel %vm2163, %v3601, 0
        %v3615 = vsel %vm2163, %v3470, 0
        %3617 = vmatpush.bf16.xpose.msra.mxu0 0
        %3618 = vmatpush.bf16.xpose.msra.mxu0 0
        %3619 = vmatpush.bf16.xpose.msra.mxu0 0
        %3620 = vmatpush.bf16.xpose.msra.mxu0 0
        %3621 = vmatpush.bf16.xpose.msra.mxu0 0
        %3622 = vmatpush.bf16.xpose.msra.mxu0 0
        %3623 = vmatpush.bf16.xpose.msra.mxu0 0
        %3624 = vmatpush.bf16.xpose.msra.mxu0 %v3615
        %3625 = vmatmul.bf16.gmra.mxu0 %v3603
        %v3626 = vpop.f32.mrf.mxu0
        %v3627 = vadd.f32 0.0, %v3626
        %v3628 = vpop.f32.mrf.mxu0
        %v3629 = vadd.f32 0.0, %v3628
        %3630 = vmatmul.bf16.gmra.mxu0 %v3606
        %v3631 = vpop.f32.mrf.mxu0
        %v3632 = vadd.f32 0.0, %v3631
        %v3633 = vpop.f32.mrf.mxu0
        %v3634 = vadd.f32 0.0, %v3633
        %3635 = vmatmul.bf16.gmra.mxu0 %v3609
        %v3636 = vpop.f32.mrf.mxu0
        %v3637 = vadd.f32 0.0, %v3636
        %v3638 = vpop.f32.mrf.mxu0
        %v3639 = vadd.f32 0.0, %v3638
        %3640 = vmatmul.bf16.gmra.mxu0 %v3612
        %v3641 = vpop.f32.mrf.mxu0
        %v3642 = vadd.f32 0.0, %v3641
        %v3643 = vpop.f32.mrf.mxu0
        %v3644 = vadd.f32 0.0, %v3643
        %3645 = vdwg.mxu0
        %vm3646 = vcmask 64512
        %v3647 = vsel %vm3646, %v3627, -inf
        %3648 = vmax.xlane.f32.xlu0 %v3647
        %v3649 = vpop.xlane.xlu0 %3648
        %v3650 = vsel %vm3646, %v3629, -inf
        %3651 = vmax.xlane.f32.xlu0 %v3650
        %v3652 = vpop.xlane.xlu0 %3651
        %v3653 = vsel %vm3646, %v3632, -inf
        %3654 = vmax.xlane.f32.xlu0 %v3653
        %v3655 = vpop.xlane.xlu0 %3654
        %v3656 = vsel %vm3646, %v3634, -inf
        %3657 = vmax.xlane.f32.xlu0 %v3656
        %v3658 = vpop.xlane.xlu0 %3657
        %v3659 = vsel %vm3646, %v3637, -inf
        %3660 = vmax.xlane.f32.xlu0 %v3659
        %v3661 = vpop.xlane.xlu0 %3660
        %v3662 = vsel %vm3646, %v3639, -inf
        %3663 = vmax.xlane.f32.xlu0 %v3662
        %v3664 = vpop.xlane.xlu0 %3663
        %v3665 = vsel %vm3646, %v3642, -inf
        %3666 = vmax.xlane.f32.xlu0 %v3665
        %v3667 = vpop.xlane.xlu0 %3666
        %v3668 = vsel %vm3646, %v3644, -inf
        %3669 = vmax.xlane.f32.xlu0 %v3668
        %v3670 = vpop.xlane.xlu0 %3669
        %v3671 = vsub.f32 %v3627, %v3649
        %v3672 = vsub.f32 %v3629, %v3652
        %v3673 = vsub.f32 %v3632, %v3655
        %v3674 = vsub.f32 %v3634, %v3658
        %v3675 = vsub.f32 %v3637, %v3661
        %v3676 = vsub.f32 %v3639, %v3664
        %v3677 = vsub.f32 %v3642, %v3667
        %v3678 = vsub.f32 %v3644, %v3670
        %v3679 = vmul.f32 %v3671, 1.442695
        %v3680 = vpow.pop %v3679
        %v3681 = vmul.f32 %v3672, 1.442695
        %v3682 = vpow.pop %v3681
        %v3683 = vmul.f32 %v3673, 1.442695
        %v3684 = vpow.pop %v3683
        %v3685 = vmul.f32 %v3674, 1.442695
        %v3686 = vpow.pop %v3685
        %v3687 = vmul.f32 %v3675, 1.442695
        %v3688 = vpow.pop %v3687
        %v3689 = vmul.f32 %v3676, 1.442695
        %v3690 = vpow.pop %v3689
        %v3691 = vmul.f32 %v3677, 1.442695
        %v3692 = vpow.pop %v3691
        %v3693 = vmul.f32 %v3678, 1.442695
        %v3694 = vpow.pop %v3693
        %v3695 = vsel %vm3646, %v3680, 0.0
        %3696 = vadd.xlane.f32.xlu0 %v3695
        %v3697 = vpop.xlane.xlu0 %3696
        %v3698 = vsel %vm3646, %v3682, 0.0
        %3699 = vadd.xlane.f32.xlu0 %v3698
        %v3700 = vpop.xlane.xlu0 %3699
        %v3701 = vsel %vm3646, %v3684, 0.0
        %3702 = vadd.xlane.f32.xlu0 %v3701
        %v3703 = vpop.xlane.xlu0 %3702
        %v3704 = vsel %vm3646, %v3686, 0.0
        %3705 = vadd.xlane.f32.xlu0 %v3704
        %v3706 = vpop.xlane.xlu0 %3705
        %v3707 = vsel %vm3646, %v3688, 0.0
        %3708 = vadd.xlane.f32.xlu0 %v3707
        %v3709 = vpop.xlane.xlu0 %3708
        %v3710 = vsel %vm3646, %v3690, 0.0
        %3711 = vadd.xlane.f32.xlu0 %v3710
        %v3712 = vpop.xlane.xlu0 %3711
        %v3713 = vsel %vm3646, %v3692, 0.0
        %3714 = vadd.xlane.f32.xlu0 %v3713
        %v3715 = vpop.xlane.xlu0 %3714
        %v3716 = vsel %vm3646, %v3694, 0.0
        %3717 = vadd.xlane.f32.xlu0 %v3716
        %v3718 = vpop.xlane.xlu0 %3717
        %v3719 = vpack.c.bf16 %v3682, %v3680
        %v3720 = vpack.c.bf16 %v3686, %v3684
        %v3721 = vpack.c.bf16 %v3690, %v3688
        %v3722 = vpack.c.bf16 %v3694, %v3692
        %v3724 = vsel %vm3646, %v3719, 0
        %v3727 = vsel %vm3646, %v3720, 0
        %v3730 = vsel %vm3646, %v3721, 0
        %v3733 = vsel %vm3646, %v3722, 0
        %vm3735 = vcmask 1043456
        %v3737 = vsel %vm3735, %v3500, 0
        %3739 = vmatpush.bf16.msra.mxu0 0
        %3740 = vmatpush.bf16.msra.mxu0 0
        %3741 = vmatpush.bf16.msra.mxu0 0
        %3742 = vmatpush.bf16.msra.mxu0 0
        %3743 = vmatpush.bf16.msra.mxu0 0
        %3744 = vmatpush.bf16.msra.mxu0 0
        %3745 = vmatpush.bf16.msra.mxu0 0
        %3746 = vmatpush.bf16.msra.mxu0 %v3737
        %3747 = vmatmul.bf16.gmra.mxu0 %v3724
        %v3748 = vpop.f32.mrf.mxu0
        %v3749 = vadd.f32 0.0, %v3748
        %v3750 = vpop.f32.mrf.mxu0
        %v3751 = vadd.f32 0.0, %v3750
        %3752 = vmatmul.bf16.gmra.mxu0 %v3727
        %v3753 = vpop.f32.mrf.mxu0
        %v3754 = vadd.f32 0.0, %v3753
        %v3755 = vpop.f32.mrf.mxu0
        %v3756 = vadd.f32 0.0, %v3755
        %3757 = vmatmul.bf16.gmra.mxu0 %v3730
        %v3758 = vpop.f32.mrf.mxu0
        %v3759 = vadd.f32 0.0, %v3758
        %v3760 = vpop.f32.mrf.mxu0
        %v3761 = vadd.f32 0.0, %v3760
        %3762 = vmatmul.bf16.gmra.mxu0 %v3733
        %v3763 = vpop.f32.mrf.mxu0
        %v3764 = vadd.f32 0.0, %v3763
        %v3765 = vpop.f32.mrf.mxu0
        %v3766 = vadd.f32 0.0, %v3765
        %3767 = vdwg.mxu0
        %v3768 = vrcp.pop %v3697
        %v3769 = vrcp.pop %v3700
        %v3770 = vrcp.pop %v3703
        %v3771 = vrcp.pop %v3706
        %v3772 = vrcp.pop %v3709
        %v3773 = vrcp.pop %v3712
        %v3774 = vrcp.pop %v3715
        %v3775 = vrcp.pop %v3718
        %v3776 = vmul.f32 %v3749, %v3768
        %v3777 = vmul.f32 %v3751, %v3769
        %v3778 = vmul.f32 %v3754, %v3770
        %v3779 = vmul.f32 %v3756, %v3771
        %v3780 = vmul.f32 %v3759, %v3772
        %v3781 = vmul.f32 %v3761, %v3773
        %v3782 = vmul.f32 %v3764, %v3774
        %v3783 = vmul.f32 %v3766, %v3775
        %3784 = vrot.lane.b32.xlu0 %v3598, 112
        %v3785 = vpop.permute.xlu0 %3784
        %3786 = vrot.lane.b32.xlu0 %v3599, 112
        %v3787 = vpop.permute.xlu0 %3786
        %3788 = vrot.lane.b32.xlu0 %v3600, 112
        %v3789 = vpop.permute.xlu0 %3788
        %3790 = vrot.lane.b32.xlu0 %v3601, 112
        %v3791 = vpop.permute.xlu0 %3790
        %v3793 = vunpack.c.l.b16 %v3470
        %v3794 = vpack.c.b16 %v3793, %v3793
        %3795 = vrot.lane.b32.xlu0 %v3794, 112
        %v3796 = vpop.permute.xlu0 %3795
        %v3798 = vsel %vm2163, %v3785, 0
        %v3801 = vsel %vm2163, %v3787, 0
        %v3804 = vsel %vm2163, %v3789, 0
        %v3807 = vsel %vm2163, %v3791, 0
        %v3810 = vsel %vm2163, %v3796, 0
        %3812 = vmatpush.bf16.xpose.msra.mxu0 0
        %3813 = vmatpush.bf16.xpose.msra.mxu0 0
        %3814 = vmatpush.bf16.xpose.msra.mxu0 0
        %3815 = vmatpush.bf16.xpose.msra.mxu0 0
        %3816 = vmatpush.bf16.xpose.msra.mxu0 0
        %3817 = vmatpush.bf16.xpose.msra.mxu0 0
        %3818 = vmatpush.bf16.xpose.msra.mxu0 0
        %3819 = vmatpush.bf16.xpose.msra.mxu0 %v3810
        %3820 = vmatmul.bf16.gmra.mxu0 %v3798
        %v3821 = vpop.f32.mrf.mxu0
        %v3822 = vadd.f32 0.0, %v3821
        %v3823 = vpop.f32.mrf.mxu0
        %v3824 = vadd.f32 0.0, %v3823
        %3825 = vmatmul.bf16.gmra.mxu0 %v3801
        %v3826 = vpop.f32.mrf.mxu0
        %v3827 = vadd.f32 0.0, %v3826
        %v3828 = vpop.f32.mrf.mxu0
        %v3829 = vadd.f32 0.0, %v3828
        %3830 = vmatmul.bf16.gmra.mxu0 %v3804
        %v3831 = vpop.f32.mrf.mxu0
        %v3832 = vadd.f32 0.0, %v3831
        %v3833 = vpop.f32.mrf.mxu0
        %v3834 = vadd.f32 0.0, %v3833
        %3835 = vmatmul.bf16.gmra.mxu0 %v3807
        %v3836 = vpop.f32.mrf.mxu0
        %v3837 = vadd.f32 0.0, %v3836
        %v3838 = vpop.f32.mrf.mxu0
        %v3839 = vadd.f32 0.0, %v3838
        %3840 = vdwg.mxu0
        %v3841 = vsel %vm3646, %v3822, -inf
        %3842 = vmax.xlane.f32.xlu0 %v3841
        %v3843 = vpop.xlane.xlu0 %3842
        %v3844 = vsel %vm3646, %v3824, -inf
        %3845 = vmax.xlane.f32.xlu0 %v3844
        %v3846 = vpop.xlane.xlu0 %3845
        %v3847 = vsel %vm3646, %v3827, -inf
        %3848 = vmax.xlane.f32.xlu0 %v3847
        %v3849 = vpop.xlane.xlu0 %3848
        %v3850 = vsel %vm3646, %v3829, -inf
        %3851 = vmax.xlane.f32.xlu0 %v3850
        %v3852 = vpop.xlane.xlu0 %3851
        %v3853 = vsel %vm3646, %v3832, -inf
        %3854 = vmax.xlane.f32.xlu0 %v3853
        %v3855 = vpop.xlane.xlu0 %3854
        %v3856 = vsel %vm3646, %v3834, -inf
        %3857 = vmax.xlane.f32.xlu0 %v3856
        %v3858 = vpop.xlane.xlu0 %3857
        %v3859 = vsel %vm3646, %v3837, -inf
        %3860 = vmax.xlane.f32.xlu0 %v3859
        %v3861 = vpop.xlane.xlu0 %3860
        %v3862 = vsel %vm3646, %v3839, -inf
        %3863 = vmax.xlane.f32.xlu0 %v3862
        %v3864 = vpop.xlane.xlu0 %3863
        %v3865 = vsub.f32 %v3822, %v3843
        %v3866 = vsub.f32 %v3824, %v3846
        %v3867 = vsub.f32 %v3827, %v3849
        %v3868 = vsub.f32 %v3829, %v3852
        %v3869 = vsub.f32 %v3832, %v3855
        %v3870 = vsub.f32 %v3834, %v3858
        %v3871 = vsub.f32 %v3837, %v3861
        %v3872 = vsub.f32 %v3839, %v3864
        %v3873 = vmul.f32 %v3865, 1.442695
        %v3874 = vpow.pop %v3873
        %v3875 = vmul.f32 %v3866, 1.442695
        %v3876 = vpow.pop %v3875
        %v3877 = vmul.f32 %v3867, 1.442695
        %v3878 = vpow.pop %v3877
        %v3879 = vmul.f32 %v3868, 1.442695
        %v3880 = vpow.pop %v3879
        %v3881 = vmul.f32 %v3869, 1.442695
        %v3882 = vpow.pop %v3881
        %v3883 = vmul.f32 %v3870, 1.442695
        %v3884 = vpow.pop %v3883
        %v3885 = vmul.f32 %v3871, 1.442695
        %v3886 = vpow.pop %v3885
        %v3887 = vmul.f32 %v3872, 1.442695
        %v3888 = vpow.pop %v3887
        %v3889 = vsel %vm3646, %v3874, 0.0
        %3890 = vadd.xlane.f32.xlu0 %v3889
        %v3891 = vpop.xlane.xlu0 %3890
        %v3892 = vsel %vm3646, %v3876, 0.0
        %3893 = vadd.xlane.f32.xlu0 %v3892
        %v3894 = vpop.xlane.xlu0 %3893
        %v3895 = vsel %vm3646, %v3878, 0.0
        %3896 = vadd.xlane.f32.xlu0 %v3895
        %v3897 = vpop.xlane.xlu0 %3896
        %v3898 = vsel %vm3646, %v3880, 0.0
        %3899 = vadd.xlane.f32.xlu0 %v3898
        %v3900 = vpop.xlane.xlu0 %3899
        %v3901 = vsel %vm3646, %v3882, 0.0
        %3902 = vadd.xlane.f32.xlu0 %v3901
        %v3903 = vpop.xlane.xlu0 %3902
        %v3904 = vsel %vm3646, %v3884, 0.0
        %3905 = vadd.xlane.f32.xlu0 %v3904
        %v3906 = vpop.xlane.xlu0 %3905
        %v3907 = vsel %vm3646, %v3886, 0.0
        %3908 = vadd.xlane.f32.xlu0 %v3907
        %v3909 = vpop.xlane.xlu0 %3908
        %v3910 = vsel %vm3646, %v3888, 0.0
        %3911 = vadd.xlane.f32.xlu0 %v3910
        %v3912 = vpop.xlane.xlu0 %3911
        %v3913 = vpack.c.bf16 %v3876, %v3874
        %v3914 = vpack.c.bf16 %v3880, %v3878
        %v3915 = vpack.c.bf16 %v3884, %v3882
        %v3916 = vpack.c.bf16 %v3888, %v3886
        %v3918 = vunpack.c.l.b16 %v3500
        %v3919 = vpack.c.b16 %v3918, %v3918
        %3920 = vrot.lane.b32.xlu0 %v3919, 112
        %v3921 = vpop.permute.xlu0 %3920
        %v3923 = vsel %vm3646, %v3913, 0
        %v3926 = vsel %vm3646, %v3914, 0
        %v3929 = vsel %vm3646, %v3915, 0
        %v3932 = vsel %vm3646, %v3916, 0
        %v3935 = vsel %vm3735, %v3921, 0
        %3937 = vmatpush.bf16.msra.mxu0 0
        %3938 = vmatpush.bf16.msra.mxu0 0
        %3939 = vmatpush.bf16.msra.mxu0 0
        %3940 = vmatpush.bf16.msra.mxu0 0
        %3941 = vmatpush.bf16.msra.mxu0 0
        %3942 = vmatpush.bf16.msra.mxu0 0
        %3943 = vmatpush.bf16.msra.mxu0 0
        %3944 = vmatpush.bf16.msra.mxu0 %v3935
        %3945 = vmatmul.bf16.gmra.mxu0 %v3923
        %v3946 = vpop.f32.mrf.mxu0
        %v3947 = vadd.f32 0.0, %v3946
        %v3948 = vpop.f32.mrf.mxu0
        %v3949 = vadd.f32 0.0, %v3948
        %3950 = vmatmul.bf16.gmra.mxu0 %v3926
        %v3951 = vpop.f32.mrf.mxu0
        %v3952 = vadd.f32 0.0, %v3951
        %v3953 = vpop.f32.mrf.mxu0
        %v3954 = vadd.f32 0.0, %v3953
        %3955 = vmatmul.bf16.gmra.mxu0 %v3929
        %v3956 = vpop.f32.mrf.mxu0
        %v3957 = vadd.f32 0.0, %v3956
        %v3958 = vpop.f32.mrf.mxu0
        %v3959 = vadd.f32 0.0, %v3958
        %3960 = vmatmul.bf16.gmra.mxu0 %v3932
        %v3961 = vpop.f32.mrf.mxu0
        %v3962 = vadd.f32 0.0, %v3961
        %v3963 = vpop.f32.mrf.mxu0
        %v3964 = vadd.f32 0.0, %v3963
        %3965 = vdwg.mxu0
        %v3966 = vrcp.pop %v3891
        %v3967 = vrcp.pop %v3894
        %v3968 = vrcp.pop %v3897
        %v3969 = vrcp.pop %v3900
        %v3970 = vrcp.pop %v3903
        %v3971 = vrcp.pop %v3906
        %v3972 = vrcp.pop %v3909
        %v3973 = vrcp.pop %v3912
        %v3974 = vmul.f32 %v3947, %v3966
        %v3975 = vmul.f32 %v3949, %v3967
        %v3976 = vmul.f32 %v3952, %v3968
        %v3977 = vmul.f32 %v3954, %v3969
        %v3978 = vmul.f32 %v3957, %v3970
        %v3979 = vmul.f32 %v3959, %v3971
        %v3980 = vmul.f32 %v3962, %v3972
        %v3981 = vmul.f32 %v3964, %v3973
        %3982 = vrot.lane.b32.xlu0 %v3598, 96
        %v3983 = vpop.permute.xlu0 %3982
        %3984 = vrot.lane.b32.xlu0 %v3599, 96
        %v3985 = vpop.permute.xlu0 %3984
        %3986 = vrot.lane.b32.xlu0 %v3600, 96
        %v3987 = vpop.permute.xlu0 %3986
        %3988 = vrot.lane.b32.xlu0 %v3601, 96
        %v3989 = vpop.permute.xlu0 %3988
        %3990 = vrot.lane.b32.xlu0 %v3794, 96
        %v3991 = vpop.permute.xlu0 %3990
        %v3993 = vsel %vm2163, %v3983, 0
        %v3996 = vsel %vm2163, %v3985, 0
        %v3999 = vsel %vm2163, %v3987, 0
        %v4002 = vsel %vm2163, %v3989, 0
        %v4005 = vsel %vm2163, %v3991, 0
        %4007 = vmatpush.bf16.xpose.msra.mxu0 0
        %4008 = vmatpush.bf16.xpose.msra.mxu0 0
        %4009 = vmatpush.bf16.xpose.msra.mxu0 0
        %4010 = vmatpush.bf16.xpose.msra.mxu0 0
        %4011 = vmatpush.bf16.xpose.msra.mxu0 0
        %4012 = vmatpush.bf16.xpose.msra.mxu0 0
        %4013 = vmatpush.bf16.xpose.msra.mxu0 0
        %4014 = vmatpush.bf16.xpose.msra.mxu0 %v4005
        %4015 = vmatmul.bf16.gmra.mxu0 %v3993
        %v4016 = vpop.f32.mrf.mxu0
        %v4017 = vadd.f32 0.0, %v4016
        %v4018 = vpop.f32.mrf.mxu0
        %v4019 = vadd.f32 0.0, %v4018
        %4020 = vmatmul.bf16.gmra.mxu0 %v3996
        %v4021 = vpop.f32.mrf.mxu0
        %v4022 = vadd.f32 0.0, %v4021
        %v4023 = vpop.f32.mrf.mxu0
        %v4024 = vadd.f32 0.0, %v4023
        %4025 = vmatmul.bf16.gmra.mxu0 %v3999
        %v4026 = vpop.f32.mrf.mxu0
        %v4027 = vadd.f32 0.0, %v4026
        %v4028 = vpop.f32.mrf.mxu0
        %v4029 = vadd.f32 0.0, %v4028
        %4030 = vmatmul.bf16.gmra.mxu0 %v4002
        %v4031 = vpop.f32.mrf.mxu0
        %v4032 = vadd.f32 0.0, %v4031
        %v4033 = vpop.f32.mrf.mxu0
        %v4034 = vadd.f32 0.0, %v4033
        %4035 = vdwg.mxu0
        %v4036 = vsel %vm3646, %v4017, -inf
        %4037 = vmax.xlane.f32.xlu0 %v4036
        %v4038 = vpop.xlane.xlu0 %4037
        %v4039 = vsel %vm3646, %v4019, -inf
        %4040 = vmax.xlane.f32.xlu0 %v4039
        %v4041 = vpop.xlane.xlu0 %4040
        %v4042 = vsel %vm3646, %v4022, -inf
        %4043 = vmax.xlane.f32.xlu0 %v4042
        %v4044 = vpop.xlane.xlu0 %4043
        %v4045 = vsel %vm3646, %v4024, -inf
        %4046 = vmax.xlane.f32.xlu0 %v4045
        %v4047 = vpop.xlane.xlu0 %4046
        %v4048 = vsel %vm3646, %v4027, -inf
        %4049 = vmax.xlane.f32.xlu0 %v4048
        %v4050 = vpop.xlane.xlu0 %4049
        %v4051 = vsel %vm3646, %v4029, -inf
        %4052 = vmax.xlane.f32.xlu0 %v4051
        %v4053 = vpop.xlane.xlu0 %4052
        %v4054 = vsel %vm3646, %v4032, -inf
        %4055 = vmax.xlane.f32.xlu0 %v4054
        %v4056 = vpop.xlane.xlu0 %4055
        %v4057 = vsel %vm3646, %v4034, -inf
        %4058 = vmax.xlane.f32.xlu0 %v4057
        %v4059 = vpop.xlane.xlu0 %4058
        %v4060 = vsub.f32 %v4017, %v4038
        %v4061 = vsub.f32 %v4019, %v4041
        %v4062 = vsub.f32 %v4022, %v4044
        %v4063 = vsub.f32 %v4024, %v4047
        %v4064 = vsub.f32 %v4027, %v4050
        %v4065 = vsub.f32 %v4029, %v4053
        %v4066 = vsub.f32 %v4032, %v4056
        %v4067 = vsub.f32 %v4034, %v4059
        %v4068 = vmul.f32 %v4060, 1.442695
        %v4069 = vpow.pop %v4068
        %v4070 = vmul.f32 %v4061, 1.442695
        %v4071 = vpow.pop %v4070
        %v4072 = vmul.f32 %v4062, 1.442695
        %v4073 = vpow.pop %v4072
        %v4074 = vmul.f32 %v4063, 1.442695
        %v4075 = vpow.pop %v4074
        %v4076 = vmul.f32 %v4064, 1.442695
        %v4077 = vpow.pop %v4076
        %v4078 = vmul.f32 %v4065, 1.442695
        %v4079 = vpow.pop %v4078
        %v4080 = vmul.f32 %v4066, 1.442695
        %v4081 = vpow.pop %v4080
        %v4082 = vmul.f32 %v4067, 1.442695
        %v4083 = vpow.pop %v4082
        %v4084 = vsel %vm3646, %v4069, 0.0
        %4085 = vadd.xlane.f32.xlu0 %v4084
        %v4086 = vpop.xlane.xlu0 %4085
        %v4087 = vsel %vm3646, %v4071, 0.0
        %4088 = vadd.xlane.f32.xlu0 %v4087
        %v4089 = vpop.xlane.xlu0 %4088
        %v4090 = vsel %vm3646, %v4073, 0.0
        %4091 = vadd.xlane.f32.xlu0 %v4090
        %v4092 = vpop.xlane.xlu0 %4091
        %v4093 = vsel %vm3646, %v4075, 0.0
        %4094 = vadd.xlane.f32.xlu0 %v4093
        %v4095 = vpop.xlane.xlu0 %4094
        %v4096 = vsel %vm3646, %v4077, 0.0
        %4097 = vadd.xlane.f32.xlu0 %v4096
        %v4098 = vpop.xlane.xlu0 %4097
        %v4099 = vsel %vm3646, %v4079, 0.0
        %4100 = vadd.xlane.f32.xlu0 %v4099
        %v4101 = vpop.xlane.xlu0 %4100
        %v4102 = vsel %vm3646, %v4081, 0.0
        %4103 = vadd.xlane.f32.xlu0 %v4102
        %v4104 = vpop.xlane.xlu0 %4103
        %v4105 = vsel %vm3646, %v4083, 0.0
        %4106 = vadd.xlane.f32.xlu0 %v4105
        %v4107 = vpop.xlane.xlu0 %4106
        %v4108 = vpack.c.bf16 %v4071, %v4069
        %v4109 = vpack.c.bf16 %v4075, %v4073
        %v4110 = vpack.c.bf16 %v4079, %v4077
        %v4111 = vpack.c.bf16 %v4083, %v4081
        %4112 = vrot.lane.b32.xlu0 %v3919, 96
        %v4113 = vpop.permute.xlu0 %4112
        %v4115 = vsel %vm3646, %v4108, 0
        %v4118 = vsel %vm3646, %v4109, 0
        %v4121 = vsel %vm3646, %v4110, 0
        %v4124 = vsel %vm3646, %v4111, 0
        %v4127 = vsel %vm3735, %v4113, 0
        %4129 = vmatpush.bf16.msra.mxu0 0
        %4130 = vmatpush.bf16.msra.mxu0 0
        %4131 = vmatpush.bf16.msra.mxu0 0
        %4132 = vmatpush.bf16.msra.mxu0 0
        %4133 = vmatpush.bf16.msra.mxu0 0
        %4134 = vmatpush.bf16.msra.mxu0 0
        %4135 = vmatpush.bf16.msra.mxu0 0
        %4136 = vmatpush.bf16.msra.mxu0 %v4127
        %4137 = vmatmul.bf16.gmra.mxu0 %v4115
        %v4138 = vpop.f32.mrf.mxu0
        %v4139 = vadd.f32 0.0, %v4138
        %v4140 = vpop.f32.mrf.mxu0
        %v4141 = vadd.f32 0.0, %v4140
        %4142 = vmatmul.bf16.gmra.mxu0 %v4118
        %v4143 = vpop.f32.mrf.mxu0
        %v4144 = vadd.f32 0.0, %v4143
        %v4145 = vpop.f32.mrf.mxu0
        %v4146 = vadd.f32 0.0, %v4145
        %4147 = vmatmul.bf16.gmra.mxu0 %v4121
        %v4148 = vpop.f32.mrf.mxu0
        %v4149 = vadd.f32 0.0, %v4148
        %v4150 = vpop.f32.mrf.mxu0
        %v4151 = vadd.f32 0.0, %v4150
        %4152 = vmatmul.bf16.gmra.mxu0 %v4124
        %v4153 = vpop.f32.mrf.mxu0
        %v4154 = vadd.f32 0.0, %v4153
        %v4155 = vpop.f32.mrf.mxu0
        %v4156 = vadd.f32 0.0, %v4155
        %4157 = vdwg.mxu0
        %v4158 = vrcp.pop %v4086
        %v4159 = vrcp.pop %v4089
        %v4160 = vrcp.pop %v4092
        %v4161 = vrcp.pop %v4095
        %v4162 = vrcp.pop %v4098
        %v4163 = vrcp.pop %v4101
        %v4164 = vrcp.pop %v4104
        %v4165 = vrcp.pop %v4107
        %v4166 = vmul.f32 %v4139, %v4158
        %v4167 = vmul.f32 %v4141, %v4159
        %v4168 = vmul.f32 %v4144, %v4160
        %v4169 = vmul.f32 %v4146, %v4161
        %v4170 = vmul.f32 %v4149, %v4162
        %v4171 = vmul.f32 %v4151, %v4163
        %v4172 = vmul.f32 %v4154, %v4164
        %v4173 = vmul.f32 %v4156, %v4165
        %4174 = vrot.lane.b32.xlu0 %v3598, 80
        %v4175 = vpop.permute.xlu0 %4174
        %4176 = vrot.lane.b32.xlu0 %v3599, 80
        %v4177 = vpop.permute.xlu0 %4176
        %4178 = vrot.lane.b32.xlu0 %v3600, 80
        %v4179 = vpop.permute.xlu0 %4178
        %4180 = vrot.lane.b32.xlu0 %v3601, 80
        %v4181 = vpop.permute.xlu0 %4180
        %4182 = vrot.lane.b32.xlu0 %v3794, 80
        %v4183 = vpop.permute.xlu0 %4182
        %v4185 = vsel %vm2163, %v4175, 0
        %v4188 = vsel %vm2163, %v4177, 0
        %v4191 = vsel %vm2163, %v4179, 0
        %v4194 = vsel %vm2163, %v4181, 0
        %v4197 = vsel %vm2163, %v4183, 0
        %4199 = vmatpush.bf16.xpose.msra.mxu0 0
        %4200 = vmatpush.bf16.xpose.msra.mxu0 0
        %4201 = vmatpush.bf16.xpose.msra.mxu0 0
        %4202 = vmatpush.bf16.xpose.msra.mxu0 0
        %4203 = vmatpush.bf16.xpose.msra.mxu0 0
        %4204 = vmatpush.bf16.xpose.msra.mxu0 0
        %4205 = vmatpush.bf16.xpose.msra.mxu0 0
        %4206 = vmatpush.bf16.xpose.msra.mxu0 %v4197
        %4207 = vmatmul.bf16.gmra.mxu0 %v4185
        %v4208 = vpop.f32.mrf.mxu0
        %v4209 = vadd.f32 0.0, %v4208
        %v4210 = vpop.f32.mrf.mxu0
        %v4211 = vadd.f32 0.0, %v4210
        %4212 = vmatmul.bf16.gmra.mxu0 %v4188
        %v4213 = vpop.f32.mrf.mxu0
        %v4214 = vadd.f32 0.0, %v4213
        %v4215 = vpop.f32.mrf.mxu0
        %v4216 = vadd.f32 0.0, %v4215
        %4217 = vmatmul.bf16.gmra.mxu0 %v4191
        %v4218 = vpop.f32.mrf.mxu0
        %v4219 = vadd.f32 0.0, %v4218
        %v4220 = vpop.f32.mrf.mxu0
        %v4221 = vadd.f32 0.0, %v4220
        %4222 = vmatmul.bf16.gmra.mxu0 %v4194
        %v4223 = vpop.f32.mrf.mxu0
        %v4224 = vadd.f32 0.0, %v4223
        %v4225 = vpop.f32.mrf.mxu0
        %v4226 = vadd.f32 0.0, %v4225
        %4227 = vdwg.mxu0
        %v4228 = vsel %vm3646, %v4209, -inf
        %4229 = vmax.xlane.f32.xlu0 %v4228
        %v4230 = vpop.xlane.xlu0 %4229
        %v4231 = vsel %vm3646, %v4211, -inf
        %4232 = vmax.xlane.f32.xlu0 %v4231
        %v4233 = vpop.xlane.xlu0 %4232
        %v4234 = vsel %vm3646, %v4214, -inf
        %4235 = vmax.xlane.f32.xlu0 %v4234
        %v4236 = vpop.xlane.xlu0 %4235
        %v4237 = vsel %vm3646, %v4216, -inf
        %4238 = vmax.xlane.f32.xlu0 %v4237
        %v4239 = vpop.xlane.xlu0 %4238
        %v4240 = vsel %vm3646, %v4219, -inf
        %4241 = vmax.xlane.f32.xlu0 %v4240
        %v4242 = vpop.xlane.xlu0 %4241
        %v4243 = vsel %vm3646, %v4221, -inf
        %4244 = vmax.xlane.f32.xlu0 %v4243
        %v4245 = vpop.xlane.xlu0 %4244
        %v4246 = vsel %vm3646, %v4224, -inf
        %4247 = vmax.xlane.f32.xlu0 %v4246
        %v4248 = vpop.xlane.xlu0 %4247
        %v4249 = vsel %vm3646, %v4226, -inf
        %4250 = vmax.xlane.f32.xlu0 %v4249
        %v4251 = vpop.xlane.xlu0 %4250
        %v4252 = vsub.f32 %v4209, %v4230
        %v4253 = vsub.f32 %v4211, %v4233
        %v4254 = vsub.f32 %v4214, %v4236
        %v4255 = vsub.f32 %v4216, %v4239
        %v4256 = vsub.f32 %v4219, %v4242
        %v4257 = vsub.f32 %v4221, %v4245
        %v4258 = vsub.f32 %v4224, %v4248
        %v4259 = vsub.f32 %v4226, %v4251
        %v4260 = vmul.f32 %v4252, 1.442695
        %v4261 = vpow.pop %v4260
        %v4262 = vmul.f32 %v4253, 1.442695
        %v4263 = vpow.pop %v4262
        %v4264 = vmul.f32 %v4254, 1.442695
        %v4265 = vpow.pop %v4264
        %v4266 = vmul.f32 %v4255, 1.442695
        %v4267 = vpow.pop %v4266
        %v4268 = vmul.f32 %v4256, 1.442695
        %v4269 = vpow.pop %v4268
        %v4270 = vmul.f32 %v4257, 1.442695
        %v4271 = vpow.pop %v4270
        %v4272 = vmul.f32 %v4258, 1.442695
        %v4273 = vpow.pop %v4272
        %v4274 = vmul.f32 %v4259, 1.442695
        %v4275 = vpow.pop %v4274
        %v4276 = vsel %vm3646, %v4261, 0.0
        %4277 = vadd.xlane.f32.xlu0 %v4276
        %v4278 = vpop.xlane.xlu0 %4277
        %v4279 = vsel %vm3646, %v4263, 0.0
        %4280 = vadd.xlane.f32.xlu0 %v4279
        %v4281 = vpop.xlane.xlu0 %4280
        %v4282 = vsel %vm3646, %v4265, 0.0
        %4283 = vadd.xlane.f32.xlu0 %v4282
        %v4284 = vpop.xlane.xlu0 %4283
        %v4285 = vsel %vm3646, %v4267, 0.0
        %4286 = vadd.xlane.f32.xlu0 %v4285
        %v4287 = vpop.xlane.xlu0 %4286
        %v4288 = vsel %vm3646, %v4269, 0.0
        %4289 = vadd.xlane.f32.xlu0 %v4288
        %v4290 = vpop.xlane.xlu0 %4289
        %v4291 = vsel %vm3646, %v4271, 0.0
        %4292 = vadd.xlane.f32.xlu0 %v4291
        %v4293 = vpop.xlane.xlu0 %4292
        %v4294 = vsel %vm3646, %v4273, 0.0
        %4295 = vadd.xlane.f32.xlu0 %v4294
        %v4296 = vpop.xlane.xlu0 %4295
        %v4297 = vsel %vm3646, %v4275, 0.0
        %4298 = vadd.xlane.f32.xlu0 %v4297
        %v4299 = vpop.xlane.xlu0 %4298
        %v4300 = vpack.c.bf16 %v4263, %v4261
        %v4301 = vpack.c.bf16 %v4267, %v4265
        %v4302 = vpack.c.bf16 %v4271, %v4269
        %v4303 = vpack.c.bf16 %v4275, %v4273
        %4304 = vrot.lane.b32.xlu0 %v3919, 80
        %v4305 = vpop.permute.xlu0 %4304
        %v4307 = vsel %vm3646, %v4300, 0
        %v4310 = vsel %vm3646, %v4301, 0
        %v4313 = vsel %vm3646, %v4302, 0
        %v4316 = vsel %vm3646, %v4303, 0
        %v4319 = vsel %vm3735, %v4305, 0
        %4321 = vmatpush.bf16.msra.mxu0 0
        %4322 = vmatpush.bf16.msra.mxu0 0
        %4323 = vmatpush.bf16.msra.mxu0 0
        %4324 = vmatpush.bf16.msra.mxu0 0
        %4325 = vmatpush.bf16.msra.mxu0 0
        %4326 = vmatpush.bf16.msra.mxu0 0
        %4327 = vmatpush.bf16.msra.mxu0 0
        %4328 = vmatpush.bf16.msra.mxu0 %v4319
        %4329 = vmatmul.bf16.gmra.mxu0 %v4307
        %v4330 = vpop.f32.mrf.mxu0
        %v4331 = vadd.f32 0.0, %v4330
        %v4332 = vpop.f32.mrf.mxu0
        %v4333 = vadd.f32 0.0, %v4332
        %4334 = vmatmul.bf16.gmra.mxu0 %v4310
        %v4335 = vpop.f32.mrf.mxu0
        %v4336 = vadd.f32 0.0, %v4335
        %v4337 = vpop.f32.mrf.mxu0
        %v4338 = vadd.f32 0.0, %v4337
        %4339 = vmatmul.bf16.gmra.mxu0 %v4313
        %v4340 = vpop.f32.mrf.mxu0
        %v4341 = vadd.f32 0.0, %v4340
        %v4342 = vpop.f32.mrf.mxu0
        %v4343 = vadd.f32 0.0, %v4342
        %4344 = vmatmul.bf16.gmra.mxu0 %v4316
        %v4345 = vpop.f32.mrf.mxu0
        %v4346 = vadd.f32 0.0, %v4345
        %v4347 = vpop.f32.mrf.mxu0
        %v4348 = vadd.f32 0.0, %v4347
        %4349 = vdwg.mxu0
        %v4350 = vrcp.pop %v4278
        %v4351 = vrcp.pop %v4281
        %v4352 = vrcp.pop %v4284
        %v4353 = vrcp.pop %v4287
        %v4354 = vrcp.pop %v4290
        %v4355 = vrcp.pop %v4293
        %v4356 = vrcp.pop %v4296
        %v4357 = vrcp.pop %v4299
        %v4358 = vmul.f32 %v4331, %v4350
        %v4359 = vmul.f32 %v4333, %v4351
        %v4360 = vmul.f32 %v4336, %v4352
        %v4361 = vmul.f32 %v4338, %v4353
        %v4362 = vmul.f32 %v4341, %v4354
        %v4363 = vmul.f32 %v4343, %v4355
        %v4364 = vmul.f32 %v4346, %v4356
        %v4365 = vmul.f32 %v4348, %v4357
        %4374 = vrot.lane.b32.xlu0 %v3974, 16
        %v4375 = vpop.permute.xlu0 %4374
        %4376 = vrot.lane.b32.xlu0 %v3975, 16
        %v4377 = vpop.permute.xlu0 %4376
        %4378 = vrot.lane.b32.xlu0 %v3976, 16
        %v4379 = vpop.permute.xlu0 %4378
        %4380 = vrot.lane.b32.xlu0 %v3977, 16
        %v4381 = vpop.permute.xlu0 %4380
        %4382 = vrot.lane.b32.xlu0 %v3978, 16
        %v4383 = vpop.permute.xlu0 %4382
        %4384 = vrot.lane.b32.xlu0 %v3979, 16
        %v4385 = vpop.permute.xlu0 %4384
        %4386 = vrot.lane.b32.xlu0 %v3980, 16
        %v4387 = vpop.permute.xlu0 %4386
        %4388 = vrot.lane.b32.xlu0 %v3981, 16
        %v4389 = vpop.permute.xlu0 %4388
        %4406 = vrot.lane.b32.xlu0 %v4166, 32
        %v4407 = vpop.permute.xlu0 %4406
        %4408 = vrot.lane.b32.xlu0 %v4167, 32
        %v4409 = vpop.permute.xlu0 %4408
        %4410 = vrot.lane.b32.xlu0 %v4168, 32
        %v4411 = vpop.permute.xlu0 %4410
        %4412 = vrot.lane.b32.xlu0 %v4169, 32
        %v4413 = vpop.permute.xlu0 %4412
        %4414 = vrot.lane.b32.xlu0 %v4170, 32
        %v4415 = vpop.permute.xlu0 %4414
        %4416 = vrot.lane.b32.xlu0 %v4171, 32
        %v4417 = vpop.permute.xlu0 %4416
        %4418 = vrot.lane.b32.xlu0 %v4172, 32
        %v4419 = vpop.permute.xlu0 %4418
        %4420 = vrot.lane.b32.xlu0 %v4173, 32
        %v4421 = vpop.permute.xlu0 %4420
        %4438 = vrot.lane.b32.xlu0 %v4358, 48
        %v4439 = vpop.permute.xlu0 %4438
        %4440 = vrot.lane.b32.xlu0 %v4359, 48
        %v4441 = vpop.permute.xlu0 %4440
        %4442 = vrot.lane.b32.xlu0 %v4360, 48
        %v4443 = vpop.permute.xlu0 %4442
        %4444 = vrot.lane.b32.xlu0 %v4361, 48
        %v4445 = vpop.permute.xlu0 %4444
        %4446 = vrot.lane.b32.xlu0 %v4362, 48
        %v4447 = vpop.permute.xlu0 %4446
        %4448 = vrot.lane.b32.xlu0 %v4363, 48
        %v4449 = vpop.permute.xlu0 %4448
        %4450 = vrot.lane.b32.xlu0 %v4364, 48
        %v4451 = vpop.permute.xlu0 %4450
        %4452 = vrot.lane.b32.xlu0 %v4365, 48
        %v4453 = vpop.permute.xlu0 %4452
        %v4462 = vsel %vm2163, %v3776, %v4375
        %v4463 = vsel %vm2163, %v3777, %v4377
        %v4464 = vsel %vm2163, %v3778, %v4379
        %v4465 = vsel %vm2163, %v3779, %v4381
        %v4466 = vsel %vm2163, %v3780, %v4383
        %v4467 = vsel %vm2163, %v3781, %v4385
        %v4468 = vsel %vm2163, %v3782, %v4387
        %v4469 = vsel %vm2163, %v3783, %v4389
        %v4470 = vsel %vm1439, %v4462, %v4407
        %v4471 = vsel %vm1439, %v4463, %v4409
        %v4472 = vsel %vm1439, %v4464, %v4411
        %v4473 = vsel %vm1439, %v4465, %v4413
        %v4474 = vsel %vm1439, %v4466, %v4415
        %v4475 = vsel %vm1439, %v4467, %v4417
        %v4476 = vsel %vm1439, %v4468, %v4419
        %v4477 = vsel %vm1439, %v4469, %v4421
        %v4478 = vsel %vm3128, %v4470, %v4439
        %v4479 = vsel %vm3128, %v4471, %v4441
        %v4480 = vsel %vm3128, %v4472, %v4443
        %v4481 = vsel %vm3128, %v4473, %v4445
        %v4482 = vsel %vm3128, %v4474, %v4447
        %v4483 = vsel %vm3128, %v4475, %v4449
        %v4484 = vsel %vm3128, %v4476, %v4451
        %v4485 = vsel %vm3128, %v4477, %v4453
        %v4486 = vpack.c.bf16 %v4479, %v4478
        %v4487 = vpack.c.bf16 %v4481, %v4480
        %v4488 = vpack.c.bf16 %v4483, %v4482
        %v4489 = vpack.c.bf16 %v4485, %v4484
        %v4491 = vperm.slane %v3437, 0
        %v4501 = vunpack.c.l.b16 %v3429
        %v4502 = vunpack.c.l.b16 %v3430
        %v4503 = vunpack.c.l.b16 %v3431
        %v4504 = vunpack.c.l.b16 %v3432
        %v4505 = vunpack.c.l.b16 %v3433
        %v4506 = vunpack.c.l.b16 %v3434
        %v4507 = vunpack.c.l.b16 %v3435
        %v4508 = vunpack.c.l.b16 %v3436
        %v4509 = vpack.c.b16 %v4502, %v4501
        %v4510 = vpack.c.b16 %v4504, %v4503
        %v4511 = vpack.c.b16 %v4506, %v4505
        %v4512 = vpack.c.b16 %v4508, %v4507
        %v4518 = vsel %vm1382, %v4486, 0
        %v4521 = vsel %vm1382, %v4487, 0
        %v4524 = vsel %vm1382, %v4488, 0
        %v4527 = vsel %vm1382, %v4489, 0
        %4529 = vmatpush.bf16.msra.mxu0 0
        %4530 = vmatpush.bf16.msra.mxu0 0
        %4531 = vmatpush.bf16.msra.mxu0 0
        %4532 = vmatpush.bf16.msra.mxu0 0
        %4533 = vmatpush.bf16.msra.mxu0 %v4512
        %4534 = vmatpush.bf16.msra.mxu0 %v4511
        %4535 = vmatpush.bf16.msra.mxu0 %v4510
        %4536 = vmatpush.bf16.msra.mxu0 %v4509
        %4537 = vmatmul.bf16.gmra.mxu0 %v4518
        %v4538 = vpop.f32.mrf.mxu0
        %v4539 = vadd.f32 %v4491, %v4538
        %v4540 = vpop.f32.mrf.mxu0
        %v4541 = vadd.f32 %v4491, %v4540
        %4542 = vmatmul.bf16.gmra.mxu0 %v4521
        %v4543 = vpop.f32.mrf.mxu0
        %v4544 = vadd.f32 %v4491, %v4543
        %v4545 = vpop.f32.mrf.mxu0
        %v4546 = vadd.f32 %v4491, %v4545
        %4547 = vmatmul.bf16.gmra.mxu0 %v4524
        %v4548 = vpop.f32.mrf.mxu0
        %v4549 = vadd.f32 %v4491, %v4548
        %v4550 = vpop.f32.mrf.mxu0
        %v4551 = vadd.f32 %v4491, %v4550
        %4552 = vmatmul.bf16.gmra.mxu0 %v4527
        %v4553 = vpop.f32.mrf.mxu0
        %v4554 = vadd.f32 %v4491, %v4553
        %v4555 = vpop.f32.mrf.mxu0
        %v4556 = vadd.f32 %v4491, %v4555
        %4557 = vdwg.mxu0
        %v4558 = vadd.f32 %v4539, %v3209
        %v4559 = vadd.f32 %v4541, %v3210
        %v4560 = vadd.f32 %v4544, %v3211
        %v4561 = vadd.f32 %v4546, %v3212
        %v4562 = vadd.f32 %v4549, %v3213
        %v4563 = vadd.f32 %v4551, %v3214
        %v4564 = vadd.f32 %v4554, %v3215
        %v4565 = vadd.f32 %v4556, %v3216
        %v4566 = vld [vmem:[#allocation32] sm:$0x1]
        %v4567 = vld [vmem:[#allocation34] sm:$0x1]
        %v4568 = vsel %vm1382, %v4558, 0.0
        %4569 = vadd.xlane.f32.xlu0 %v4568
        %v4570 = vpop.xlane.xlu0 %4569
        %v4571 = vsel %vm1382, %v4559, 0.0
        %4572 = vadd.xlane.f32.xlu0 %v4571
        %v4573 = vpop.xlane.xlu0 %4572
        %v4574 = vsel %vm1382, %v4560, 0.0
        %4575 = vadd.xlane.f32.xlu0 %v4574
        %v4576 = vpop.xlane.xlu0 %4575
        %v4577 = vsel %vm1382, %v4561, 0.0
        %4578 = vadd.xlane.f32.xlu0 %v4577
        %v4579 = vpop.xlane.xlu0 %4578
        %v4580 = vsel %vm1382, %v4562, 0.0
        %4581 = vadd.xlane.f32.xlu0 %v4580
        %v4582 = vpop.xlane.xlu0 %4581
        %v4583 = vsel %vm1382, %v4563, 0.0
        %4584 = vadd.xlane.f32.xlu0 %v4583
        %v4585 = vpop.xlane.xlu0 %4584
        %v4586 = vsel %vm1382, %v4564, 0.0
        %4587 = vadd.xlane.f32.xlu0 %v4586
        %v4588 = vpop.xlane.xlu0 %4587
        %v4589 = vsel %vm1382, %v4565, 0.0
        %4590 = vadd.xlane.f32.xlu0 %v4589
        %v4591 = vpop.xlane.xlu0 %4590
        %v4592 = vmul.f32 %v4570, %v1708
        %v4593 = vmul.f32 %v4573, %v1708
        %v4594 = vmul.f32 %v4576, %v1708
        %v4595 = vmul.f32 %v4579, %v1708
        %v4596 = vmul.f32 %v4582, %v1708
        %v4597 = vmul.f32 %v4585, %v1708
        %v4598 = vmul.f32 %v4588, %v1708
        %v4599 = vmul.f32 %v4591, %v1708
        %v4600 = vsub.f32 %v4558, %v4592
        %v4601 = vsub.f32 %v4559, %v4593
        %v4602 = vsub.f32 %v4560, %v4594
        %v4603 = vsub.f32 %v4561, %v4595
        %v4604 = vsub.f32 %v4562, %v4596
        %v4605 = vsub.f32 %v4563, %v4597
        %v4606 = vsub.f32 %v4564, %v4598
        %v4607 = vsub.f32 %v4565, %v4599
        %v4608 = vmul.f32 %v4600, %v4600
        %v4609 = vmul.f32 %v4601, %v4601
        %v4610 = vmul.f32 %v4602, %v4602
        %v4611 = vmul.f32 %v4603, %v4603
        %v4612 = vmul.f32 %v4604, %v4604
        %v4613 = vmul.f32 %v4605, %v4605
        %v4614 = vmul.f32 %v4606, %v4606
        %v4615 = vmul.f32 %v4607, %v4607
        %v4616 = vsel %vm1382, %v4608, 0.0
        %4617 = vadd.xlane.f32.xlu0 %v4616
        %v4618 = vpop.xlane.xlu0 %4617
        %v4619 = vsel %vm1382, %v4609, 0.0
        %4620 = vadd.xlane.f32.xlu0 %v4619
        %v4621 = vpop.xlane.xlu0 %4620
        %v4622 = vsel %vm1382, %v4610, 0.0
        %4623 = vadd.xlane.f32.xlu0 %v4622
        %v4624 = vpop.xlane.xlu0 %4623
        %v4625 = vsel %vm1382, %v4611, 0.0
        %4626 = vadd.xlane.f32.xlu0 %v4625
        %v4627 = vpop.xlane.xlu0 %4626
        %v4628 = vsel %vm1382, %v4612, 0.0
        %4629 = vadd.xlane.f32.xlu0 %v4628
        %v4630 = vpop.xlane.xlu0 %4629
        %v4631 = vsel %vm1382, %v4613, 0.0
        %4632 = vadd.xlane.f32.xlu0 %v4631
        %v4633 = vpop.xlane.xlu0 %4632
        %v4634 = vsel %vm1382, %v4614, 0.0
        %4635 = vadd.xlane.f32.xlu0 %v4634
        %v4636 = vpop.xlane.xlu0 %4635
        %v4637 = vsel %vm1382, %v4615, 0.0
        %4638 = vadd.xlane.f32.xlu0 %v4637
        %v4639 = vpop.xlane.xlu0 %4638
        %v4640 = vmul.f32 %v4618, %v1708
        %v4641 = vmul.f32 %v4621, %v1708
        %v4642 = vmul.f32 %v4624, %v1708
        %v4643 = vmul.f32 %v4627, %v1708
        %v4644 = vmul.f32 %v4630, %v1708
        %v4645 = vmul.f32 %v4633, %v1708
        %v4646 = vmul.f32 %v4636, %v1708
        %v4647 = vmul.f32 %v4639, %v1708
        %v4648 = vadd.f32 %v4640, 1e-05
        %v4649 = vadd.f32 %v4641, 1e-05
        %v4650 = vadd.f32 %v4642, 1e-05
        %v4651 = vadd.f32 %v4643, 1e-05
        %v4652 = vadd.f32 %v4644, 1e-05
        %v4653 = vadd.f32 %v4645, 1e-05
        %v4654 = vadd.f32 %v4646, 1e-05
        %v4655 = vadd.f32 %v4647, 1e-05
        %v4656 = vrsqrt.pop %v4648
        %v4657 = vmul.f32 %v4656, %v4648
        %v4658 = vmul.f32 %v4657, %v4656
        %v4659 = vmul.f32 0.5, %v4658
        %v4660 = vsub.f32 1.5, %v4659
        %v4661 = vmul.f32 %v4656, %v4660
        %vm4662 = vweird.f32 %v4648
        %vm4663 = vweird.f32 %v4656
        %vm4664 = vmor %vm4662, %vm4663
        %v4665 = vsel %vm4664, %v4656, %v4661
        %v4666 = vrsqrt.pop %v4649
        %v4667 = vmul.f32 %v4666, %v4649
        %v4668 = vmul.f32 %v4667, %v4666
        %v4669 = vmul.f32 0.5, %v4668
        %v4670 = vsub.f32 1.5, %v4669
        %v4671 = vmul.f32 %v4666, %v4670
        %vm4672 = vweird.f32 %v4649
        %vm4673 = vweird.f32 %v4666
        %vm4674 = vmor %vm4672, %vm4673
        %v4675 = vsel %vm4674, %v4666, %v4671
        %v4676 = vrsqrt.pop %v4650
        %v4677 = vmul.f32 %v4676, %v4650
        %v4678 = vmul.f32 %v4677, %v4676
        %v4679 = vmul.f32 0.5, %v4678
        %v4680 = vsub.f32 1.5, %v4679
        %v4681 = vmul.f32 %v4676, %v4680
        %vm4682 = vweird.f32 %v4650
        %vm4683 = vweird.f32 %v4676
        %vm4684 = vmor %vm4682, %vm4683
        %v4685 = vsel %vm4684, %v4676, %v4681
        %v4686 = vrsqrt.pop %v4651
        %v4687 = vmul.f32 %v4686, %v4651
        %v4688 = vmul.f32 %v4687, %v4686
        %v4689 = vmul.f32 0.5, %v4688
        %v4690 = vsub.f32 1.5, %v4689
        %v4691 = vmul.f32 %v4686, %v4690
        %vm4692 = vweird.f32 %v4651
        %vm4693 = vweird.f32 %v4686
        %vm4694 = vmor %vm4692, %vm4693
        %v4695 = vsel %vm4694, %v4686, %v4691
        %v4696 = vrsqrt.pop %v4652
        %v4697 = vmul.f32 %v4696, %v4652
        %v4698 = vmul.f32 %v4697, %v4696
        %v4699 = vmul.f32 0.5, %v4698
        %v4700 = vsub.f32 1.5, %v4699
        %v4701 = vmul.f32 %v4696, %v4700
        %vm4702 = vweird.f32 %v4652
        %vm4703 = vweird.f32 %v4696
        %vm4704 = vmor %vm4702, %vm4703
        %v4705 = vsel %vm4704, %v4696, %v4701
        %v4706 = vrsqrt.pop %v4653
        %v4707 = vmul.f32 %v4706, %v4653
        %v4708 = vmul.f32 %v4707, %v4706
        %v4709 = vmul.f32 0.5, %v4708
        %v4710 = vsub.f32 1.5, %v4709
        %v4711 = vmul.f32 %v4706, %v4710
        %vm4712 = vweird.f32 %v4653
        %vm4713 = vweird.f32 %v4706
        %vm4714 = vmor %vm4712, %vm4713
        %v4715 = vsel %vm4714, %v4706, %v4711
        %v4716 = vrsqrt.pop %v4654
        %v4717 = vmul.f32 %v4716, %v4654
        %v4718 = vmul.f32 %v4717, %v4716
        %v4719 = vmul.f32 0.5, %v4718
        %v4720 = vsub.f32 1.5, %v4719
        %v4721 = vmul.f32 %v4716, %v4720
        %vm4722 = vweird.f32 %v4654
        %vm4723 = vweird.f32 %v4716
        %vm4724 = vmor %vm4722, %vm4723
        %v4725 = vsel %vm4724, %v4716, %v4721
        %v4726 = vrsqrt.pop %v4655
        %v4727 = vmul.f32 %v4726, %v4655
        %v4728 = vmul.f32 %v4727, %v4726
        %v4729 = vmul.f32 0.5, %v4728
        %v4730 = vsub.f32 1.5, %v4729
        %v4731 = vmul.f32 %v4726, %v4730
        %vm4732 = vweird.f32 %v4655
        %vm4733 = vweird.f32 %v4726
        %vm4734 = vmor %vm4732, %vm4733
        %v4735 = vsel %vm4734, %v4726, %v4731
        %v4736 = vmul.f32 %v4600, %v4665
        %v4737 = vmul.f32 %v4601, %v4675
        %v4738 = vmul.f32 %v4602, %v4685
        %v4739 = vmul.f32 %v4603, %v4695
        %v4740 = vmul.f32 %v4604, %v4705
        %v4741 = vmul.f32 %v4605, %v4715
        %v4742 = vmul.f32 %v4606, %v4725
        %v4743 = vmul.f32 %v4607, %v4735
        %v4745 = vperm.slane %v4566, 0
        %v4747 = vmul.f32 %v4736, %v4745
        %v4748 = vmul.f32 %v4737, %v4745
        %v4749 = vmul.f32 %v4738, %v4745
        %v4750 = vmul.f32 %v4739, %v4745
        %v4751 = vmul.f32 %v4740, %v4745
        %v4752 = vmul.f32 %v4741, %v4745
        %v4753 = vmul.f32 %v4742, %v4745
        %v4754 = vmul.f32 %v4743, %v4745
        %v4756 = vperm.slane %v4567, 0
        %v4758 = vadd.f32 %v4747, %v4756
        %v4759 = vadd.f32 %v4748, %v4756
        %v4760 = vadd.f32 %v4749, %v4756
        %v4761 = vadd.f32 %v4750, %v4756
        %v4762 = vadd.f32 %v4751, %v4756
        %v4763 = vadd.f32 %v4752, %v4756
        %v4764 = vadd.f32 %v4753, %v4756
        %v4765 = vadd.f32 %v4754, %v4756
        %v4766 = vpack.c.bf16 %v4759, %v4758
        %v4767 = vpack.c.bf16 %v4761, %v4760
        %v4768 = vpack.c.bf16 %v4763, %v4762
        %v4769 = vpack.c.bf16 %v4765, %v4764
        %v4770 = vld [vmem:[%s47] sm:$0xff]
        %v4771 = vld [vmem:[%s47 + $0x8] sm:$0xff]
        %v4772 = vld [vmem:[%s47 + $0x10] sm:$0xff]
        %v4773 = vld [vmem:[%s47 + $0x18] sm:$0xff]
        %v4774 = vld [vmem:[%s47 + $0x20] sm:$0xff]
        %v4775 = vld [vmem:[%s47 + $0x28] sm:$0xff]
        %v4776 = vld [vmem:[%s47 + $0x30] sm:$0xff]
        %v4777 = vld [vmem:[%s47 + $0x38] sm:$0xff]
        %v4778 = vld [vmem:[%s49] sm:$0x3]
        %v4779 = vld [vmem:[#allocation35] sm:$0xff]
        %v4780 = vld [vmem:[#allocation35 + $0x8] sm:$0xff]
        %v4781 = vld [vmem:[#allocation35 + $0x10] sm:$0xff]
        %v4782 = vld [vmem:[#allocation35 + $0x18] sm:$0xff]
        %v4783 = vld [vmem:[#allocation35 + $0x20] sm:$0xff]
        %v4784 = vld [vmem:[#allocation35 + $0x28] sm:$0xff]
        %v4785 = vld [vmem:[#allocation35 + $0x30] sm:$0xff]
        %v4786 = vld [vmem:[#allocation35 + $0x38] sm:$0xff]
        %v4787 = vld [vmem:[%s53] sm:$0x3]
        %v4788 = vld [vmem:[%s55] sm:$0xf]
        %v4789 = vld [vmem:[%s55 + $0x4] sm:$0xf]
        %v4790 = vld [vmem:[%s55 + $0x8] sm:$0xf]
        %v4791 = vld [vmem:[%s55 + $0xc] sm:$0xf]
        %v4792 = vld [vmem:[%s55 + $0x10] sm:$0xf]
        %v4793 = vld [vmem:[%s55 + $0x14] sm:$0xf]
        %v4794 = vld [vmem:[%s55 + $0x18] sm:$0xf]
        %v4795 = vld [vmem:[%s55 + $0x1c] sm:$0xf]
        %v4796 = vld [vmem:[%s55 + $0x20] sm:$0xf]
        %v4797 = vld [vmem:[%s55 + $0x24] sm:$0xf]
        %v4798 = vld [vmem:[%s55 + $0x28] sm:$0xf]
        %v4799 = vld [vmem:[%s55 + $0x2c] sm:$0xf]
        %v4800 = vld [vmem:[%s55 + $0x30] sm:$0xf]
        %v4801 = vld [vmem:[%s55 + $0x34] sm:$0xf]
        %v4802 = vld [vmem:[%s55 + $0x38] sm:$0xf]
        %v4803 = vld [vmem:[%s55 + $0x3c] sm:$0xf]
        %v4804 = vld [vmem:[%s55 + $0x40] sm:$0xf]
        %v4805 = vld [vmem:[%s55 + $0x44] sm:$0xf]
        %v4806 = vld [vmem:[%s55 + $0x48] sm:$0xf]
        %v4807 = vld [vmem:[%s55 + $0x4c] sm:$0xf]
        %v4808 = vld [vmem:[%s55 + $0x50] sm:$0xf]
        %v4809 = vld [vmem:[%s55 + $0x54] sm:$0xf]
        %v4810 = vld [vmem:[%s55 + $0x58] sm:$0xf]
        %v4811 = vld [vmem:[%s55 + $0x5c] sm:$0xf]
        %v4812 = vld [vmem:[%s55 + $0x60] sm:$0xf]
        %v4813 = vld [vmem:[%s55 + $0x64] sm:$0xf]
        %v4814 = vld [vmem:[%s55 + $0x68] sm:$0xf]
        %v4815 = vld [vmem:[%s55 + $0x6c] sm:$0xf]
        %v4816 = vld [vmem:[%s55 + $0x70] sm:$0xf]
        %v4817 = vld [vmem:[%s55 + $0x74] sm:$0xf]
        %v4818 = vld [vmem:[%s55 + $0x78] sm:$0xf]
        %v4819 = vld [vmem:[%s55 + $0x7c] sm:$0xf]
        %v4820 = vld [vmem:[%s57] sm:$0x1]
        %v4822 = vperm.slane %v4778, 0
        %v4823 = vperm.slane %v4778, 1
        %v4834 = vunpack.c.l.b16 %v4770
        %v4835 = vunpack.c.h.b16 %v4770
        %v4836 = vunpack.c.l.b16 %v4771
        %v4837 = vunpack.c.h.b16 %v4771
        %v4838 = vunpack.c.l.b16 %v4772
        %v4839 = vunpack.c.h.b16 %v4772
        %v4840 = vunpack.c.l.b16 %v4773
        %v4841 = vunpack.c.h.b16 %v4773
        %v4842 = vunpack.c.l.b16 %v4774
        %v4843 = vunpack.c.h.b16 %v4774
        %v4844 = vunpack.c.l.b16 %v4775
        %v4845 = vunpack.c.h.b16 %v4775
        %v4846 = vunpack.c.l.b16 %v4776
        %v4847 = vunpack.c.h.b16 %v4776
        %v4848 = vunpack.c.l.b16 %v4777
        %v4849 = vunpack.c.h.b16 %v4777
        %v4850 = vpack.c.b16 %v4836, %v4834
        %v4851 = vpack.c.b16 %v4837, %v4835
        %v4852 = vpack.c.b16 %v4840, %v4838
        %v4853 = vpack.c.b16 %v4841, %v4839
        %v4854 = vpack.c.b16 %v4844, %v4842
        %v4855 = vpack.c.b16 %v4845, %v4843
        %v4856 = vpack.c.b16 %v4848, %v4846
        %v4857 = vpack.c.b16 %v4849, %v4847
        %v4867 = vsel %vm1382, %v4766, 0
        %v4870 = vsel %vm1382, %v4767, 0
        %v4873 = vsel %vm1382, %v4768, 0
        %v4876 = vsel %vm1382, %v4769, 0
        %4878 = vmatpush.bf16.msra.mxu0 0
        %4879 = vmatpush.bf16.msra.mxu0 0
        %4880 = vmatpush.bf16.msra.mxu0 0
        %4881 = vmatpush.bf16.msra.mxu0 0
        %4882 = vmatpush.bf16.msra.mxu0 %v4856
        %4883 = vmatpush.bf16.msra.mxu0 %v4854
        %4884 = vmatpush.bf16.msra.mxu0 %v4852
        %4885 = vmatpush.bf16.msra.mxu0 %v4850
        %4886 = vmatmul.bf16.gmra.mxu0 %v4867
        %v4887 = vpop.f32.mrf.mxu0
        %v4888 = vadd.f32 %v4822, %v4887
        %v4889 = vpop.f32.mrf.mxu0
        %v4890 = vadd.f32 %v4822, %v4889
        %4891 = vmatmul.bf16.gmra.mxu0 %v4870
        %v4892 = vpop.f32.mrf.mxu0
        %v4893 = vadd.f32 %v4822, %v4892
        %v4894 = vpop.f32.mrf.mxu0
        %v4895 = vadd.f32 %v4822, %v4894
        %4896 = vmatmul.bf16.gmra.mxu0 %v4873
        %v4897 = vpop.f32.mrf.mxu0
        %v4898 = vadd.f32 %v4822, %v4897
        %v4899 = vpop.f32.mrf.mxu0
        %v4900 = vadd.f32 %v4822, %v4899
        %4901 = vmatmul.bf16.gmra.mxu0 %v4876
        %v4902 = vpop.f32.mrf.mxu0
        %v4903 = vadd.f32 %v4822, %v4902
        %v4904 = vpop.f32.mrf.mxu0
        %v4905 = vadd.f32 %v4822, %v4904
        %4906 = vdwg.mxu0
        %4907 = vmatpush.bf16.msra.mxu0 0
        %4908 = vmatpush.bf16.msra.mxu0 0
        %4909 = vmatpush.bf16.msra.mxu0 0
        %4910 = vmatpush.bf16.msra.mxu0 0
        %4911 = vmatpush.bf16.msra.mxu0 %v4857
        %4912 = vmatpush.bf16.msra.mxu0 %v4855
        %4913 = vmatpush.bf16.msra.mxu0 %v4853
        %4914 = vmatpush.bf16.msra.mxu0 %v4851
        %4915 = vmatmul.bf16.gmra.mxu0 %v4867
        %v4916 = vpop.f32.mrf.mxu0
        %v4917 = vadd.f32 %v4823, %v4916
        %v4918 = vpop.f32.mrf.mxu0
        %v4919 = vadd.f32 %v4823, %v4918
        %4920 = vmatmul.bf16.gmra.mxu0 %v4870
        %v4921 = vpop.f32.mrf.mxu0
        %v4922 = vadd.f32 %v4823, %v4921
        %v4923 = vpop.f32.mrf.mxu0
        %v4924 = vadd.f32 %v4823, %v4923
        %4925 = vmatmul.bf16.gmra.mxu0 %v4873
        %v4926 = vpop.f32.mrf.mxu0
        %v4927 = vadd.f32 %v4823, %v4926
        %v4928 = vpop.f32.mrf.mxu0
        %v4929 = vadd.f32 %v4823, %v4928
        %4930 = vmatmul.bf16.gmra.mxu0 %v4876
        %v4931 = vpop.f32.mrf.mxu0
        %v4932 = vadd.f32 %v4823, %v4931
        %v4933 = vpop.f32.mrf.mxu0
        %v4934 = vadd.f32 %v4823, %v4933
        %4935 = vdwg.mxu0
        %v4937 = vperm.slane %v4787, 0
        %v4938 = vperm.slane %v4787, 1
        %v4949 = vunpack.c.l.b16 %v4779
        %v4950 = vunpack.c.h.b16 %v4779
        %v4951 = vunpack.c.l.b16 %v4780
        %v4952 = vunpack.c.h.b16 %v4780
        %v4953 = vunpack.c.l.b16 %v4781
        %v4954 = vunpack.c.h.b16 %v4781
        %v4955 = vunpack.c.l.b16 %v4782
        %v4956 = vunpack.c.h.b16 %v4782
        %v4957 = vunpack.c.l.b16 %v4783
        %v4958 = vunpack.c.h.b16 %v4783
        %v4959 = vunpack.c.l.b16 %v4784
        %v4960 = vunpack.c.h.b16 %v4784
        %v4961 = vunpack.c.l.b16 %v4785
        %v4962 = vunpack.c.h.b16 %v4785
        %v4963 = vunpack.c.l.b16 %v4786
        %v4964 = vunpack.c.h.b16 %v4786
        %v4965 = vpack.c.b16 %v4951, %v4949
        %v4966 = vpack.c.b16 %v4952, %v4950
        %v4967 = vpack.c.b16 %v4955, %v4953
        %v4968 = vpack.c.b16 %v4956, %v4954
        %v4969 = vpack.c.b16 %v4959, %v4957
        %v4970 = vpack.c.b16 %v4960, %v4958
        %v4971 = vpack.c.b16 %v4963, %v4961
        %v4972 = vpack.c.b16 %v4964, %v4962
        %4981 = vmatpush.bf16.msra.mxu0 0
        %4982 = vmatpush.bf16.msra.mxu0 0
        %4983 = vmatpush.bf16.msra.mxu0 0
        %4984 = vmatpush.bf16.msra.mxu0 0
        %4985 = vmatpush.bf16.msra.mxu0 %v4971
        %4986 = vmatpush.bf16.msra.mxu0 %v4969
        %4987 = vmatpush.bf16.msra.mxu0 %v4967
        %4988 = vmatpush.bf16.msra.mxu0 %v4965
        %4989 = vmatmul.bf16.gmra.mxu0 %v4867
        %v4990 = vpop.f32.mrf.mxu0
        %v4991 = vadd.f32 %v4937, %v4990
        %v4992 = vpop.f32.mrf.mxu0
        %v4993 = vadd.f32 %v4937, %v4992
        %4994 = vmatmul.bf16.gmra.mxu0 %v4870
        %v4995 = vpop.f32.mrf.mxu0
        %v4996 = vadd.f32 %v4937, %v4995
        %v4997 = vpop.f32.mrf.mxu0
        %v4998 = vadd.f32 %v4937, %v4997
        %4999 = vmatmul.bf16.gmra.mxu0 %v4873
        %v5000 = vpop.f32.mrf.mxu0
        %v5001 = vadd.f32 %v4937, %v5000
        %v5002 = vpop.f32.mrf.mxu0
        %v5003 = vadd.f32 %v4937, %v5002
        %5004 = vmatmul.bf16.gmra.mxu0 %v4876
        %v5005 = vpop.f32.mrf.mxu0
        %v5006 = vadd.f32 %v4937, %v5005
        %v5007 = vpop.f32.mrf.mxu0
        %v5008 = vadd.f32 %v4937, %v5007
        %5009 = vdwg.mxu0
        %5010 = vmatpush.bf16.msra.mxu0 0
        %5011 = vmatpush.bf16.msra.mxu0 0
        %5012 = vmatpush.bf16.msra.mxu0 0
        %5013 = vmatpush.bf16.msra.mxu0 0
        %5014 = vmatpush.bf16.msra.mxu0 %v4972
        %5015 = vmatpush.bf16.msra.mxu0 %v4970
        %5016 = vmatpush.bf16.msra.mxu0 %v4968
        %5017 = vmatpush.bf16.msra.mxu0 %v4966
        %5018 = vmatmul.bf16.gmra.mxu0 %v4867
        %v5019 = vpop.f32.mrf.mxu0
        %v5020 = vadd.f32 %v4938, %v5019
        %v5021 = vpop.f32.mrf.mxu0
        %v5022 = vadd.f32 %v4938, %v5021
        %5023 = vmatmul.bf16.gmra.mxu0 %v4870
        %v5024 = vpop.f32.mrf.mxu0
        %v5025 = vadd.f32 %v4938, %v5024
        %v5026 = vpop.f32.mrf.mxu0
        %v5027 = vadd.f32 %v4938, %v5026
        %5028 = vmatmul.bf16.gmra.mxu0 %v4873
        %v5029 = vpop.f32.mrf.mxu0
        %v5030 = vadd.f32 %v4938, %v5029
        %v5031 = vpop.f32.mrf.mxu0
        %v5032 = vadd.f32 %v4938, %v5031
        %5033 = vmatmul.bf16.gmra.mxu0 %v4876
        %v5034 = vpop.f32.mrf.mxu0
        %v5035 = vadd.f32 %v4938, %v5034
        %v5036 = vpop.f32.mrf.mxu0
        %v5037 = vadd.f32 %v4938, %v5036
        %5038 = vdwg.mxu0
        %v5039 = vmul.f32 %v4991, 0.5
        %v5040 = vmul.f32 %v5020, 0.5
        %v5041 = vmul.f32 %v4993, 0.5
        %v5042 = vmul.f32 %v5022, 0.5
        %v5043 = vmul.f32 %v4996, 0.5
        %v5044 = vmul.f32 %v5025, 0.5
        %v5045 = vmul.f32 %v4998, 0.5
        %v5046 = vmul.f32 %v5027, 0.5
        %v5047 = vmul.f32 %v5001, 0.5
        %v5048 = vmul.f32 %v5030, 0.5
        %v5049 = vmul.f32 %v5003, 0.5
        %v5050 = vmul.f32 %v5032, 0.5
        %v5051 = vmul.f32 %v5006, 0.5
        %v5052 = vmul.f32 %v5035, 0.5
        %v5053 = vmul.f32 %v5008, 0.5
        %v5054 = vmul.f32 %v5037, 0.5
        %v5055 = vmul.f32 %v4991, 0.70710677
        %v5056 = vmul.f32 %v5020, 0.70710677
        %v5057 = vmul.f32 %v4993, 0.70710677
        %v5058 = vmul.f32 %v5022, 0.70710677
        %v5059 = vmul.f32 %v4996, 0.70710677
        %v5060 = vmul.f32 %v5025, 0.70710677
        %v5061 = vmul.f32 %v4998, 0.70710677
        %v5062 = vmul.f32 %v5027, 0.70710677
        %v5063 = vmul.f32 %v5001, 0.70710677
        %v5064 = vmul.f32 %v5030, 0.70710677
        %v5065 = vmul.f32 %v5003, 0.70710677
        %v5066 = vmul.f32 %v5032, 0.70710677
        %v5067 = vmul.f32 %v5006, 0.70710677
        %v5068 = vmul.f32 %v5035, 0.70710677
        %v5069 = vmul.f32 %v5008, 0.70710677
        %v5070 = vmul.f32 %v5037, 0.70710677
        %v5071 = vmul.f32 %v5055, %v5055
        %v5072 = vmin.f32 16.0, %v5071
        %v5073 = vmul.f32 %v5072, 2.1237322e-06
        %v5074 = vadd.f32 %v5073, 0.00028619796
        %v5075 = vmul.f32 %v5072, %v5074
        %v5076 = vadd.f32 %v5075, 0.0036580483
        %v5077 = vmul.f32 %v5072, %v5076
        %v5078 = vadd.f32 %v5077, 0.05243302
        %v5079 = vmul.f32 %v5072, %v5078
        %v5080 = vadd.f32 %v5079, 0.18741608
        %v5081 = vmul.f32 %v5072, %v5080
        %v5082 = vadd.f32 %v5081, 1.1283791
        %v5083 = vmul.f32 %v5055, %v5082
        %v5084 = vmul.f32 %v5072, 3.8918573e-05
        %v5085 = vadd.f32 %v5084, 0.001143296
        %v5086 = vmul.f32 %v5072, %v5085
        %v5087 = vadd.f32 %v5086, 0.014752088
        %v5088 = vmul.f32 %v5072, %v5087
        %v5089 = vadd.f32 %v5088, 0.112945676
        %v5090 = vmul.f32 %v5072, %v5089
        %v5091 = vadd.f32 %v5090, 0.4994258
        %v5092 = vmul.f32 %v5072, %v5091
        %v5093 = vadd.f32 %v5092, 1.0
        %v5094 = vrcp.pop %v5093
        %v5095 = vmul.f32 %v5093, %v5094
        %v5096 = vsub.f32 1.0, %v5095
        %v5097 = vmul.f32 %v5094, %v5096
        %v5098 = vadd.f32 %v5094, %v5097
        %vm5099 = vweird.f32 %v5093
        %vm5100 = vweird.f32 %v5094
        %vm5101 = vmor %vm5099, %vm5100
        %v5102 = vsel %vm5101, %v5094, %v5098
        %v5103 = vand.u32 2147483647, %v5093
        %vm5104 = vcmp.eq.f32.partialorder %v5103, 8.507059e+37
        %v5105 = vand.u32 %v5093, 2147483648
        %v5106 = vor.u32 1.1754944e-38, %v5105
        %v5107 = vsel %vm5104, %v5106, %v5102
        %v5108 = vmul.f32 %v5083, %v5107
        %v5109 = vmin.f32 %v5108, 1.0
        %v5110 = vmax.f32 %v5109, -1.0
        %v5111 = vmul.f32 %v5056, %v5056
        %v5112 = vmin.f32 16.0, %v5111
        %v5113 = vmul.f32 %v5112, 2.1237322e-06
        %v5114 = vadd.f32 %v5113, 0.00028619796
        %v5115 = vmul.f32 %v5112, %v5114
        %v5116 = vadd.f32 %v5115, 0.0036580483
        %v5117 = vmul.f32 %v5112, %v5116
        %v5118 = vadd.f32 %v5117, 0.05243302
        %v5119 = vmul.f32 %v5112, %v5118
        %v5120 = vadd.f32 %v5119, 0.18741608
        %v5121 = vmul.f32 %v5112, %v5120
        %v5122 = vadd.f32 %v5121, 1.1283791
        %v5123 = vmul.f32 %v5056, %v5122
        %v5124 = vmul.f32 %v5112, 3.8918573e-05
        %v5125 = vadd.f32 %v5124, 0.001143296
        %v5126 = vmul.f32 %v5112, %v5125
        %v5127 = vadd.f32 %v5126, 0.014752088
        %v5128 = vmul.f32 %v5112, %v5127
        %v5129 = vadd.f32 %v5128, 0.112945676
        %v5130 = vmul.f32 %v5112, %v5129
        %v5131 = vadd.f32 %v5130, 0.4994258
        %v5132 = vmul.f32 %v5112, %v5131
        %v5133 = vadd.f32 %v5132, 1.0
        %v5134 = vrcp.pop %v5133
        %v5135 = vmul.f32 %v5133, %v5134
        %v5136 = vsub.f32 1.0, %v5135
        %v5137 = vmul.f32 %v5134, %v5136
        %v5138 = vadd.f32 %v5134, %v5137
        %vm5139 = vweird.f32 %v5133
        %vm5140 = vweird.f32 %v5134
        %vm5141 = vmor %vm5139, %vm5140
        %v5142 = vsel %vm5141, %v5134, %v5138
        %v5143 = vand.u32 2147483647, %v5133
        %vm5144 = vcmp.eq.f32.partialorder %v5143, 8.507059e+37
        %v5145 = vand.u32 %v5133, 2147483648
        %v5146 = vor.u32 1.1754944e-38, %v5145
        %v5147 = vsel %vm5144, %v5146, %v5142
        %v5148 = vmul.f32 %v5123, %v5147
        %v5149 = vmin.f32 %v5148, 1.0
        %v5150 = vmax.f32 %v5149, -1.0
        %v5151 = vmul.f32 %v5057, %v5057
        %v5152 = vmin.f32 16.0, %v5151
        %v5153 = vmul.f32 %v5152, 2.1237322e-06
        %v5154 = vadd.f32 %v5153, 0.00028619796
        %v5155 = vmul.f32 %v5152, %v5154
        %v5156 = vadd.f32 %v5155, 0.0036580483
        %v5157 = vmul.f32 %v5152, %v5156
        %v5158 = vadd.f32 %v5157, 0.05243302
        %v5159 = vmul.f32 %v5152, %v5158
        %v5160 = vadd.f32 %v5159, 0.18741608
        %v5161 = vmul.f32 %v5152, %v5160
        %v5162 = vadd.f32 %v5161, 1.1283791
        %v5163 = vmul.f32 %v5057, %v5162
        %v5164 = vmul.f32 %v5152, 3.8918573e-05
        %v5165 = vadd.f32 %v5164, 0.001143296
        %v5166 = vmul.f32 %v5152, %v5165
        %v5167 = vadd.f32 %v5166, 0.014752088
        %v5168 = vmul.f32 %v5152, %v5167
        %v5169 = vadd.f32 %v5168, 0.112945676
        %v5170 = vmul.f32 %v5152, %v5169
        %v5171 = vadd.f32 %v5170, 0.4994258
        %v5172 = vmul.f32 %v5152, %v5171
        %v5173 = vadd.f32 %v5172, 1.0
        %v5174 = vrcp.pop %v5173
        %v5175 = vmul.f32 %v5173, %v5174
        %v5176 = vsub.f32 1.0, %v5175
        %v5177 = vmul.f32 %v5174, %v5176
        %v5178 = vadd.f32 %v5174, %v5177
        %vm5179 = vweird.f32 %v5173
        %vm5180 = vweird.f32 %v5174
        %vm5181 = vmor %vm5179, %vm5180
        %v5182 = vsel %vm5181, %v5174, %v5178
        %v5183 = vand.u32 2147483647, %v5173
        %vm5184 = vcmp.eq.f32.partialorder %v5183, 8.507059e+37
        %v5185 = vand.u32 %v5173, 2147483648
        %v5186 = vor.u32 1.1754944e-38, %v5185
        %v5187 = vsel %vm5184, %v5186, %v5182
        %v5188 = vmul.f32 %v5163, %v5187
        %v5189 = vmin.f32 %v5188, 1.0
        %v5190 = vmax.f32 %v5189, -1.0
        %v5191 = vmul.f32 %v5058, %v5058
        %v5192 = vmin.f32 16.0, %v5191
        %v5193 = vmul.f32 %v5192, 2.1237322e-06
        %v5194 = vadd.f32 %v5193, 0.00028619796
        %v5195 = vmul.f32 %v5192, %v5194
        %v5196 = vadd.f32 %v5195, 0.0036580483
        %v5197 = vmul.f32 %v5192, %v5196
        %v5198 = vadd.f32 %v5197, 0.05243302
        %v5199 = vmul.f32 %v5192, %v5198
        %v5200 = vadd.f32 %v5199, 0.18741608
        %v5201 = vmul.f32 %v5192, %v5200
        %v5202 = vadd.f32 %v5201, 1.1283791
        %v5203 = vmul.f32 %v5058, %v5202
        %v5204 = vmul.f32 %v5192, 3.8918573e-05
        %v5205 = vadd.f32 %v5204, 0.001143296
        %v5206 = vmul.f32 %v5192, %v5205
        %v5207 = vadd.f32 %v5206, 0.014752088
        %v5208 = vmul.f32 %v5192, %v5207
        %v5209 = vadd.f32 %v5208, 0.112945676
        %v5210 = vmul.f32 %v5192, %v5209
        %v5211 = vadd.f32 %v5210, 0.4994258
        %v5212 = vmul.f32 %v5192, %v5211
        %v5213 = vadd.f32 %v5212, 1.0
        %v5214 = vrcp.pop %v5213
        %v5215 = vmul.f32 %v5213, %v5214
        %v5216 = vsub.f32 1.0, %v5215
        %v5217 = vmul.f32 %v5214, %v5216
        %v5218 = vadd.f32 %v5214, %v5217
        %vm5219 = vweird.f32 %v5213
        %vm5220 = vweird.f32 %v5214
        %vm5221 = vmor %vm5219, %vm5220
        %v5222 = vsel %vm5221, %v5214, %v5218
        %v5223 = vand.u32 2147483647, %v5213
        %vm5224 = vcmp.eq.f32.partialorder %v5223, 8.507059e+37
        %v5225 = vand.u32 %v5213, 2147483648
        %v5226 = vor.u32 1.1754944e-38, %v5225
        %v5227 = vsel %vm5224, %v5226, %v5222
        %v5228 = vmul.f32 %v5203, %v5227
        %v5229 = vmin.f32 %v5228, 1.0
        %v5230 = vmax.f32 %v5229, -1.0
        %v5231 = vmul.f32 %v5059, %v5059
        %v5232 = vmin.f32 16.0, %v5231
        %v5233 = vmul.f32 %v5232, 2.1237322e-06
        %v5234 = vadd.f32 %v5233, 0.00028619796
        %v5235 = vmul.f32 %v5232, %v5234
        %v5236 = vadd.f32 %v5235, 0.0036580483
        %v5237 = vmul.f32 %v5232, %v5236
        %v5238 = vadd.f32 %v5237, 0.05243302
        %v5239 = vmul.f32 %v5232, %v5238
        %v5240 = vadd.f32 %v5239, 0.18741608
        %v5241 = vmul.f32 %v5232, %v5240
        %v5242 = vadd.f32 %v5241, 1.1283791
        %v5243 = vmul.f32 %v5059, %v5242
        %v5244 = vmul.f32 %v5232, 3.8918573e-05
        %v5245 = vadd.f32 %v5244, 0.001143296
        %v5246 = vmul.f32 %v5232, %v5245
        %v5247 = vadd.f32 %v5246, 0.014752088
        %v5248 = vmul.f32 %v5232, %v5247
        %v5249 = vadd.f32 %v5248, 0.112945676
        %v5250 = vmul.f32 %v5232, %v5249
        %v5251 = vadd.f32 %v5250, 0.4994258
        %v5252 = vmul.f32 %v5232, %v5251
        %v5253 = vadd.f32 %v5252, 1.0
        %v5254 = vrcp.pop %v5253
        %v5255 = vmul.f32 %v5253, %v5254
        %v5256 = vsub.f32 1.0, %v5255
        %v5257 = vmul.f32 %v5254, %v5256
        %v5258 = vadd.f32 %v5254, %v5257
        %vm5259 = vweird.f32 %v5253
        %vm5260 = vweird.f32 %v5254
        %vm5261 = vmor %vm5259, %vm5260
        %v5262 = vsel %vm5261, %v5254, %v5258
        %v5263 = vand.u32 2147483647, %v5253
        %vm5264 = vcmp.eq.f32.partialorder %v5263, 8.507059e+37
        %v5265 = vand.u32 %v5253, 2147483648
        %v5266 = vor.u32 1.1754944e-38, %v5265
        %v5267 = vsel %vm5264, %v5266, %v5262
        %v5268 = vmul.f32 %v5243, %v5267
        %v5269 = vmin.f32 %v5268, 1.0
        %v5270 = vmax.f32 %v5269, -1.0
        %v5271 = vmul.f32 %v5060, %v5060
        %v5272 = vmin.f32 16.0, %v5271
        %v5273 = vmul.f32 %v5272, 2.1237322e-06
        %v5274 = vadd.f32 %v5273, 0.00028619796
        %v5275 = vmul.f32 %v5272, %v5274
        %v5276 = vadd.f32 %v5275, 0.0036580483
        %v5277 = vmul.f32 %v5272, %v5276
        %v5278 = vadd.f32 %v5277, 0.05243302
        %v5279 = vmul.f32 %v5272, %v5278
        %v5280 = vadd.f32 %v5279, 0.18741608
        %v5281 = vmul.f32 %v5272, %v5280
        %v5282 = vadd.f32 %v5281, 1.1283791
        %v5283 = vmul.f32 %v5060, %v5282
        %v5284 = vmul.f32 %v5272, 3.8918573e-05
        %v5285 = vadd.f32 %v5284, 0.001143296
        %v5286 = vmul.f32 %v5272, %v5285
        %v5287 = vadd.f32 %v5286, 0.014752088
        %v5288 = vmul.f32 %v5272, %v5287
        %v5289 = vadd.f32 %v5288, 0.112945676
        %v5290 = vmul.f32 %v5272, %v5289
        %v5291 = vadd.f32 %v5290, 0.4994258
        %v5292 = vmul.f32 %v5272, %v5291
        %v5293 = vadd.f32 %v5292, 1.0
        %v5294 = vrcp.pop %v5293
        %v5295 = vmul.f32 %v5293, %v5294
        %v5296 = vsub.f32 1.0, %v5295
        %v5297 = vmul.f32 %v5294, %v5296
        %v5298 = vadd.f32 %v5294, %v5297
        %vm5299 = vweird.f32 %v5293
        %vm5300 = vweird.f32 %v5294
        %vm5301 = vmor %vm5299, %vm5300
        %v5302 = vsel %vm5301, %v5294, %v5298
        %v5303 = vand.u32 2147483647, %v5293
        %vm5304 = vcmp.eq.f32.partialorder %v5303, 8.507059e+37
        %v5305 = vand.u32 %v5293, 2147483648
        %v5306 = vor.u32 1.1754944e-38, %v5305
        %v5307 = vsel %vm5304, %v5306, %v5302
        %v5308 = vmul.f32 %v5283, %v5307
        %v5309 = vmin.f32 %v5308, 1.0
        %v5310 = vmax.f32 %v5309, -1.0
        %v5311 = vmul.f32 %v5061, %v5061
        %v5312 = vmin.f32 16.0, %v5311
        %v5313 = vmul.f32 %v5312, 2.1237322e-06
        %v5314 = vadd.f32 %v5313, 0.00028619796
        %v5315 = vmul.f32 %v5312, %v5314
        %v5316 = vadd.f32 %v5315, 0.0036580483
        %v5317 = vmul.f32 %v5312, %v5316
        %v5318 = vadd.f32 %v5317, 0.05243302
        %v5319 = vmul.f32 %v5312, %v5318
        %v5320 = vadd.f32 %v5319, 0.18741608
        %v5321 = vmul.f32 %v5312, %v5320
        %v5322 = vadd.f32 %v5321, 1.1283791
        %v5323 = vmul.f32 %v5061, %v5322
        %v5324 = vmul.f32 %v5312, 3.8918573e-05
        %v5325 = vadd.f32 %v5324, 0.001143296
        %v5326 = vmul.f32 %v5312, %v5325
        %v5327 = vadd.f32 %v5326, 0.014752088
        %v5328 = vmul.f32 %v5312, %v5327
        %v5329 = vadd.f32 %v5328, 0.112945676
        %v5330 = vmul.f32 %v5312, %v5329
        %v5331 = vadd.f32 %v5330, 0.4994258
        %v5332 = vmul.f32 %v5312, %v5331
        %v5333 = vadd.f32 %v5332, 1.0
        %v5334 = vrcp.pop %v5333
        %v5335 = vmul.f32 %v5333, %v5334
        %v5336 = vsub.f32 1.0, %v5335
        %v5337 = vmul.f32 %v5334, %v5336
        %v5338 = vadd.f32 %v5334, %v5337
        %vm5339 = vweird.f32 %v5333
        %vm5340 = vweird.f32 %v5334
        %vm5341 = vmor %vm5339, %vm5340
        %v5342 = vsel %vm5341, %v5334, %v5338
        %v5343 = vand.u32 2147483647, %v5333
        %vm5344 = vcmp.eq.f32.partialorder %v5343, 8.507059e+37
        %v5345 = vand.u32 %v5333, 2147483648
        %v5346 = vor.u32 1.1754944e-38, %v5345
        %v5347 = vsel %vm5344, %v5346, %v5342
        %v5348 = vmul.f32 %v5323, %v5347
        %v5349 = vmin.f32 %v5348, 1.0
        %v5350 = vmax.f32 %v5349, -1.0
        %v5351 = vmul.f32 %v5062, %v5062
        %v5352 = vmin.f32 16.0, %v5351
        %v5353 = vmul.f32 %v5352, 2.1237322e-06
        %v5354 = vadd.f32 %v5353, 0.00028619796
        %v5355 = vmul.f32 %v5352, %v5354
        %v5356 = vadd.f32 %v5355, 0.0036580483
        %v5357 = vmul.f32 %v5352, %v5356
        %v5358 = vadd.f32 %v5357, 0.05243302
        %v5359 = vmul.f32 %v5352, %v5358
        %v5360 = vadd.f32 %v5359, 0.18741608
        %v5361 = vmul.f32 %v5352, %v5360
        %v5362 = vadd.f32 %v5361, 1.1283791
        %v5363 = vmul.f32 %v5062, %v5362
        %v5364 = vmul.f32 %v5352, 3.8918573e-05
        %v5365 = vadd.f32 %v5364, 0.001143296
        %v5366 = vmul.f32 %v5352, %v5365
        %v5367 = vadd.f32 %v5366, 0.014752088
        %v5368 = vmul.f32 %v5352, %v5367
        %v5369 = vadd.f32 %v5368, 0.112945676
        %v5370 = vmul.f32 %v5352, %v5369
        %v5371 = vadd.f32 %v5370, 0.4994258
        %v5372 = vmul.f32 %v5352, %v5371
        %v5373 = vadd.f32 %v5372, 1.0
        %v5374 = vrcp.pop %v5373
        %v5375 = vmul.f32 %v5373, %v5374
        %v5376 = vsub.f32 1.0, %v5375
        %v5377 = vmul.f32 %v5374, %v5376
        %v5378 = vadd.f32 %v5374, %v5377
        %vm5379 = vweird.f32 %v5373
        %vm5380 = vweird.f32 %v5374
        %vm5381 = vmor %vm5379, %vm5380
        %v5382 = vsel %vm5381, %v5374, %v5378
        %v5383 = vand.u32 2147483647, %v5373
        %vm5384 = vcmp.eq.f32.partialorder %v5383, 8.507059e+37
        %v5385 = vand.u32 %v5373, 2147483648
        %v5386 = vor.u32 1.1754944e-38, %v5385
        %v5387 = vsel %vm5384, %v5386, %v5382
        %v5388 = vmul.f32 %v5363, %v5387
        %v5389 = vmin.f32 %v5388, 1.0
        %v5390 = vmax.f32 %v5389, -1.0
        %v5391 = vmul.f32 %v5063, %v5063
        %v5392 = vmin.f32 16.0, %v5391
        %v5393 = vmul.f32 %v5392, 2.1237322e-06
        %v5394 = vadd.f32 %v5393, 0.00028619796
        %v5395 = vmul.f32 %v5392, %v5394
        %v5396 = vadd.f32 %v5395, 0.0036580483
        %v5397 = vmul.f32 %v5392, %v5396
        %v5398 = vadd.f32 %v5397, 0.05243302
        %v5399 = vmul.f32 %v5392, %v5398
        %v5400 = vadd.f32 %v5399, 0.18741608
        %v5401 = vmul.f32 %v5392, %v5400
        %v5402 = vadd.f32 %v5401, 1.1283791
        %v5403 = vmul.f32 %v5063, %v5402
        %v5404 = vmul.f32 %v5392, 3.8918573e-05
        %v5405 = vadd.f32 %v5404, 0.001143296
        %v5406 = vmul.f32 %v5392, %v5405
        %v5407 = vadd.f32 %v5406, 0.014752088
        %v5408 = vmul.f32 %v5392, %v5407
        %v5409 = vadd.f32 %v5408, 0.112945676
        %v5410 = vmul.f32 %v5392, %v5409
        %v5411 = vadd.f32 %v5410, 0.4994258
        %v5412 = vmul.f32 %v5392, %v5411
        %v5413 = vadd.f32 %v5412, 1.0
        %v5414 = vrcp.pop %v5413
        %v5415 = vmul.f32 %v5413, %v5414
        %v5416 = vsub.f32 1.0, %v5415
        %v5417 = vmul.f32 %v5414, %v5416
        %v5418 = vadd.f32 %v5414, %v5417
        %vm5419 = vweird.f32 %v5413
        %vm5420 = vweird.f32 %v5414
        %vm5421 = vmor %vm5419, %vm5420
        %v5422 = vsel %vm5421, %v5414, %v5418
        %v5423 = vand.u32 2147483647, %v5413
        %vm5424 = vcmp.eq.f32.partialorder %v5423, 8.507059e+37
        %v5425 = vand.u32 %v5413, 2147483648
        %v5426 = vor.u32 1.1754944e-38, %v5425
        %v5427 = vsel %vm5424, %v5426, %v5422
        %v5428 = vmul.f32 %v5403, %v5427
        %v5429 = vmin.f32 %v5428, 1.0
        %v5430 = vmax.f32 %v5429, -1.0
        %v5431 = vmul.f32 %v5064, %v5064
        %v5432 = vmin.f32 16.0, %v5431
        %v5433 = vmul.f32 %v5432, 2.1237322e-06
        %v5434 = vadd.f32 %v5433, 0.00028619796
        %v5435 = vmul.f32 %v5432, %v5434
        %v5436 = vadd.f32 %v5435, 0.0036580483
        %v5437 = vmul.f32 %v5432, %v5436
        %v5438 = vadd.f32 %v5437, 0.05243302
        %v5439 = vmul.f32 %v5432, %v5438
        %v5440 = vadd.f32 %v5439, 0.18741608
        %v5441 = vmul.f32 %v5432, %v5440
        %v5442 = vadd.f32 %v5441, 1.1283791
        %v5443 = vmul.f32 %v5064, %v5442
        %v5444 = vmul.f32 %v5432, 3.8918573e-05
        %v5445 = vadd.f32 %v5444, 0.001143296
        %v5446 = vmul.f32 %v5432, %v5445
        %v5447 = vadd.f32 %v5446, 0.014752088
        %v5448 = vmul.f32 %v5432, %v5447
        %v5449 = vadd.f32 %v5448, 0.112945676
        %v5450 = vmul.f32 %v5432, %v5449
        %v5451 = vadd.f32 %v5450, 0.4994258
        %v5452 = vmul.f32 %v5432, %v5451
        %v5453 = vadd.f32 %v5452, 1.0
        %v5454 = vrcp.pop %v5453
        %v5455 = vmul.f32 %v5453, %v5454
        %v5456 = vsub.f32 1.0, %v5455
        %v5457 = vmul.f32 %v5454, %v5456
        %v5458 = vadd.f32 %v5454, %v5457
        %vm5459 = vweird.f32 %v5453
        %vm5460 = vweird.f32 %v5454
        %vm5461 = vmor %vm5459, %vm5460
        %v5462 = vsel %vm5461, %v5454, %v5458
        %v5463 = vand.u32 2147483647, %v5453
        %vm5464 = vcmp.eq.f32.partialorder %v5463, 8.507059e+37
        %v5465 = vand.u32 %v5453, 2147483648
        %v5466 = vor.u32 1.1754944e-38, %v5465
        %v5467 = vsel %vm5464, %v5466, %v5462
        %v5468 = vmul.f32 %v5443, %v5467
        %v5469 = vmin.f32 %v5468, 1.0
        %v5470 = vmax.f32 %v5469, -1.0
        %v5471 = vmul.f32 %v5065, %v5065
        %v5472 = vmin.f32 16.0, %v5471
        %v5473 = vmul.f32 %v5472, 2.1237322e-06
        %v5474 = vadd.f32 %v5473, 0.00028619796
        %v5475 = vmul.f32 %v5472, %v5474
        %v5476 = vadd.f32 %v5475, 0.0036580483
        %v5477 = vmul.f32 %v5472, %v5476
        %v5478 = vadd.f32 %v5477, 0.05243302
        %v5479 = vmul.f32 %v5472, %v5478
        %v5480 = vadd.f32 %v5479, 0.18741608
        %v5481 = vmul.f32 %v5472, %v5480
        %v5482 = vadd.f32 %v5481, 1.1283791
        %v5483 = vmul.f32 %v5065, %v5482
        %v5484 = vmul.f32 %v5472, 3.8918573e-05
        %v5485 = vadd.f32 %v5484, 0.001143296
        %v5486 = vmul.f32 %v5472, %v5485
        %v5487 = vadd.f32 %v5486, 0.014752088
        %v5488 = vmul.f32 %v5472, %v5487
        %v5489 = vadd.f32 %v5488, 0.112945676
        %v5490 = vmul.f32 %v5472, %v5489
        %v5491 = vadd.f32 %v5490, 0.4994258
        %v5492 = vmul.f32 %v5472, %v5491
        %v5493 = vadd.f32 %v5492, 1.0
        %v5494 = vrcp.pop %v5493
        %v5495 = vmul.f32 %v5493, %v5494
        %v5496 = vsub.f32 1.0, %v5495
        %v5497 = vmul.f32 %v5494, %v5496
        %v5498 = vadd.f32 %v5494, %v5497
        %vm5499 = vweird.f32 %v5493
        %vm5500 = vweird.f32 %v5494
        %vm5501 = vmor %vm5499, %vm5500
        %v5502 = vsel %vm5501, %v5494, %v5498
        %v5503 = vand.u32 2147483647, %v5493
        %vm5504 = vcmp.eq.f32.partialorder %v5503, 8.507059e+37
        %v5505 = vand.u32 %v5493, 2147483648
        %v5506 = vor.u32 1.1754944e-38, %v5505
        %v5507 = vsel %vm5504, %v5506, %v5502
        %v5508 = vmul.f32 %v5483, %v5507
        %v5509 = vmin.f32 %v5508, 1.0
        %v5510 = vmax.f32 %v5509, -1.0
        %v5511 = vmul.f32 %v5066, %v5066
        %v5512 = vmin.f32 16.0, %v5511
        %v5513 = vmul.f32 %v5512, 2.1237322e-06
        %v5514 = vadd.f32 %v5513, 0.00028619796
        %v5515 = vmul.f32 %v5512, %v5514
        %v5516 = vadd.f32 %v5515, 0.0036580483
        %v5517 = vmul.f32 %v5512, %v5516
        %v5518 = vadd.f32 %v5517, 0.05243302
        %v5519 = vmul.f32 %v5512, %v5518
        %v5520 = vadd.f32 %v5519, 0.18741608
        %v5521 = vmul.f32 %v5512, %v5520
        %v5522 = vadd.f32 %v5521, 1.1283791
        %v5523 = vmul.f32 %v5066, %v5522
        %v5524 = vmul.f32 %v5512, 3.8918573e-05
        %v5525 = vadd.f32 %v5524, 0.001143296
        %v5526 = vmul.f32 %v5512, %v5525
        %v5527 = vadd.f32 %v5526, 0.014752088
        %v5528 = vmul.f32 %v5512, %v5527
        %v5529 = vadd.f32 %v5528, 0.112945676
        %v5530 = vmul.f32 %v5512, %v5529
        %v5531 = vadd.f32 %v5530, 0.4994258
        %v5532 = vmul.f32 %v5512, %v5531
        %v5533 = vadd.f32 %v5532, 1.0
        %v5534 = vrcp.pop %v5533
        %v5535 = vmul.f32 %v5533, %v5534
        %v5536 = vsub.f32 1.0, %v5535
        %v5537 = vmul.f32 %v5534, %v5536
        %v5538 = vadd.f32 %v5534, %v5537
        %vm5539 = vweird.f32 %v5533
        %vm5540 = vweird.f32 %v5534
        %vm5541 = vmor %vm5539, %vm5540
        %v5542 = vsel %vm5541, %v5534, %v5538
        %v5543 = vand.u32 2147483647, %v5533
        %vm5544 = vcmp.eq.f32.partialorder %v5543, 8.507059e+37
        %v5545 = vand.u32 %v5533, 2147483648
        %v5546 = vor.u32 1.1754944e-38, %v5545
        %v5547 = vsel %vm5544, %v5546, %v5542
        %v5548 = vmul.f32 %v5523, %v5547
        %v5549 = vmin.f32 %v5548, 1.0
        %v5550 = vmax.f32 %v5549, -1.0
        %v5551 = vmul.f32 %v5067, %v5067
        %v5552 = vmin.f32 16.0, %v5551
        %v5553 = vmul.f32 %v5552, 2.1237322e-06
        %v5554 = vadd.f32 %v5553, 0.00028619796
        %v5555 = vmul.f32 %v5552, %v5554
        %v5556 = vadd.f32 %v5555, 0.0036580483
        %v5557 = vmul.f32 %v5552, %v5556
        %v5558 = vadd.f32 %v5557, 0.05243302
        %v5559 = vmul.f32 %v5552, %v5558
        %v5560 = vadd.f32 %v5559, 0.18741608
        %v5561 = vmul.f32 %v5552, %v5560
        %v5562 = vadd.f32 %v5561, 1.1283791
        %v5563 = vmul.f32 %v5067, %v5562
        %v5564 = vmul.f32 %v5552, 3.8918573e-05
        %v5565 = vadd.f32 %v5564, 0.001143296
        %v5566 = vmul.f32 %v5552, %v5565
        %v5567 = vadd.f32 %v5566, 0.014752088
        %v5568 = vmul.f32 %v5552, %v5567
        %v5569 = vadd.f32 %v5568, 0.112945676
        %v5570 = vmul.f32 %v5552, %v5569
        %v5571 = vadd.f32 %v5570, 0.4994258
        %v5572 = vmul.f32 %v5552, %v5571
        %v5573 = vadd.f32 %v5572, 1.0
        %v5574 = vrcp.pop %v5573
        %v5575 = vmul.f32 %v5573, %v5574
        %v5576 = vsub.f32 1.0, %v5575
        %v5577 = vmul.f32 %v5574, %v5576
        %v5578 = vadd.f32 %v5574, %v5577
        %vm5579 = vweird.f32 %v5573
        %vm5580 = vweird.f32 %v5574
        %vm5581 = vmor %vm5579, %vm5580
        %v5582 = vsel %vm5581, %v5574, %v5578
        %v5583 = vand.u32 2147483647, %v5573
        %vm5584 = vcmp.eq.f32.partialorder %v5583, 8.507059e+37
        %v5585 = vand.u32 %v5573, 2147483648
        %v5586 = vor.u32 1.1754944e-38, %v5585
        %v5587 = vsel %vm5584, %v5586, %v5582
        %v5588 = vmul.f32 %v5563, %v5587
        %v5589 = vmin.f32 %v5588, 1.0
        %v5590 = vmax.f32 %v5589, -1.0
        %v5591 = vmul.f32 %v5068, %v5068
        %v5592 = vmin.f32 16.0, %v5591
        %v5593 = vmul.f32 %v5592, 2.1237322e-06
        %v5594 = vadd.f32 %v5593, 0.00028619796
        %v5595 = vmul.f32 %v5592, %v5594
        %v5596 = vadd.f32 %v5595, 0.0036580483
        %v5597 = vmul.f32 %v5592, %v5596
        %v5598 = vadd.f32 %v5597, 0.05243302
        %v5599 = vmul.f32 %v5592, %v5598
        %v5600 = vadd.f32 %v5599, 0.18741608
        %v5601 = vmul.f32 %v5592, %v5600
        %v5602 = vadd.f32 %v5601, 1.1283791
        %v5603 = vmul.f32 %v5068, %v5602
        %v5604 = vmul.f32 %v5592, 3.8918573e-05
        %v5605 = vadd.f32 %v5604, 0.001143296
        %v5606 = vmul.f32 %v5592, %v5605
        %v5607 = vadd.f32 %v5606, 0.014752088
        %v5608 = vmul.f32 %v5592, %v5607
        %v5609 = vadd.f32 %v5608, 0.112945676
        %v5610 = vmul.f32 %v5592, %v5609
        %v5611 = vadd.f32 %v5610, 0.4994258
        %v5612 = vmul.f32 %v5592, %v5611
        %v5613 = vadd.f32 %v5612, 1.0
        %v5614 = vrcp.pop %v5613
        %v5615 = vmul.f32 %v5613, %v5614
        %v5616 = vsub.f32 1.0, %v5615
        %v5617 = vmul.f32 %v5614, %v5616
        %v5618 = vadd.f32 %v5614, %v5617
        %vm5619 = vweird.f32 %v5613
        %vm5620 = vweird.f32 %v5614
        %vm5621 = vmor %vm5619, %vm5620
        %v5622 = vsel %vm5621, %v5614, %v5618
        %v5623 = vand.u32 2147483647, %v5613
        %vm5624 = vcmp.eq.f32.partialorder %v5623, 8.507059e+37
        %v5625 = vand.u32 %v5613, 2147483648
        %v5626 = vor.u32 1.1754944e-38, %v5625
        %v5627 = vsel %vm5624, %v5626, %v5622
        %v5628 = vmul.f32 %v5603, %v5627
        %v5629 = vmin.f32 %v5628, 1.0
        %v5630 = vmax.f32 %v5629, -1.0
        %v5631 = vmul.f32 %v5069, %v5069
        %v5632 = vmin.f32 16.0, %v5631
        %v5633 = vmul.f32 %v5632, 2.1237322e-06
        %v5634 = vadd.f32 %v5633, 0.00028619796
        %v5635 = vmul.f32 %v5632, %v5634
        %v5636 = vadd.f32 %v5635, 0.0036580483
        %v5637 = vmul.f32 %v5632, %v5636
        %v5638 = vadd.f32 %v5637, 0.05243302
        %v5639 = vmul.f32 %v5632, %v5638
        %v5640 = vadd.f32 %v5639, 0.18741608
        %v5641 = vmul.f32 %v5632, %v5640
        %v5642 = vadd.f32 %v5641, 1.1283791
        %v5643 = vmul.f32 %v5069, %v5642
        %v5644 = vmul.f32 %v5632, 3.8918573e-05
        %v5645 = vadd.f32 %v5644, 0.001143296
        %v5646 = vmul.f32 %v5632, %v5645
        %v5647 = vadd.f32 %v5646, 0.014752088
        %v5648 = vmul.f32 %v5632, %v5647
        %v5649 = vadd.f32 %v5648, 0.112945676
        %v5650 = vmul.f32 %v5632, %v5649
        %v5651 = vadd.f32 %v5650, 0.4994258
        %v5652 = vmul.f32 %v5632, %v5651
        %v5653 = vadd.f32 %v5652, 1.0
        %v5654 = vrcp.pop %v5653
        %v5655 = vmul.f32 %v5653, %v5654
        %v5656 = vsub.f32 1.0, %v5655
        %v5657 = vmul.f32 %v5654, %v5656
        %v5658 = vadd.f32 %v5654, %v5657
        %vm5659 = vweird.f32 %v5653
        %vm5660 = vweird.f32 %v5654
        %vm5661 = vmor %vm5659, %vm5660
        %v5662 = vsel %vm5661, %v5654, %v5658
        %v5663 = vand.u32 2147483647, %v5653
        %vm5664 = vcmp.eq.f32.partialorder %v5663, 8.507059e+37
        %v5665 = vand.u32 %v5653, 2147483648
        %v5666 = vor.u32 1.1754944e-38, %v5665
        %v5667 = vsel %vm5664, %v5666, %v5662
        %v5668 = vmul.f32 %v5643, %v5667
        %v5669 = vmin.f32 %v5668, 1.0
        %v5670 = vmax.f32 %v5669, -1.0
        %v5671 = vmul.f32 %v5070, %v5070
        %v5672 = vmin.f32 16.0, %v5671
        %v5673 = vmul.f32 %v5672, 2.1237322e-06
        %v5674 = vadd.f32 %v5673, 0.00028619796
        %v5675 = vmul.f32 %v5672, %v5674
        %v5676 = vadd.f32 %v5675, 0.0036580483
        %v5677 = vmul.f32 %v5672, %v5676
        %v5678 = vadd.f32 %v5677, 0.05243302
        %v5679 = vmul.f32 %v5672, %v5678
        %v5680 = vadd.f32 %v5679, 0.18741608
        %v5681 = vmul.f32 %v5672, %v5680
        %v5682 = vadd.f32 %v5681, 1.1283791
        %v5683 = vmul.f32 %v5070, %v5682
        %v5684 = vmul.f32 %v5672, 3.8918573e-05
        %v5685 = vadd.f32 %v5684, 0.001143296
        %v5686 = vmul.f32 %v5672, %v5685
        %v5687 = vadd.f32 %v5686, 0.014752088
        %v5688 = vmul.f32 %v5672, %v5687
        %v5689 = vadd.f32 %v5688, 0.112945676
        %v5690 = vmul.f32 %v5672, %v5689
        %v5691 = vadd.f32 %v5690, 0.4994258
        %v5692 = vmul.f32 %v5672, %v5691
        %v5693 = vadd.f32 %v5692, 1.0
        %v5694 = vrcp.pop %v5693
        %v5695 = vmul.f32 %v5693, %v5694
        %v5696 = vsub.f32 1.0, %v5695
        %v5697 = vmul.f32 %v5694, %v5696
        %v5698 = vadd.f32 %v5694, %v5697
        %vm5699 = vweird.f32 %v5693
        %vm5700 = vweird.f32 %v5694
        %vm5701 = vmor %vm5699, %vm5700
        %v5702 = vsel %vm5701, %v5694, %v5698
        %v5703 = vand.u32 2147483647, %v5693
        %vm5704 = vcmp.eq.f32.partialorder %v5703, 8.507059e+37
        %v5705 = vand.u32 %v5693, 2147483648
        %v5706 = vor.u32 1.1754944e-38, %v5705
        %v5707 = vsel %vm5704, %v5706, %v5702
        %v5708 = vmul.f32 %v5683, %v5707
        %v5709 = vmin.f32 %v5708, 1.0
        %v5710 = vmax.f32 %v5709, -1.0
        %v5711 = vadd.f32 %v5110, 1.0
        %v5712 = vadd.f32 %v5150, 1.0
        %v5713 = vadd.f32 %v5190, 1.0
        %v5714 = vadd.f32 %v5230, 1.0
        %v5715 = vadd.f32 %v5270, 1.0
        %v5716 = vadd.f32 %v5310, 1.0
        %v5717 = vadd.f32 %v5350, 1.0
        %v5718 = vadd.f32 %v5390, 1.0
        %v5719 = vadd.f32 %v5430, 1.0
        %v5720 = vadd.f32 %v5470, 1.0
        %v5721 = vadd.f32 %v5510, 1.0
        %v5722 = vadd.f32 %v5550, 1.0
        %v5723 = vadd.f32 %v5590, 1.0
        %v5724 = vadd.f32 %v5630, 1.0
        %v5725 = vadd.f32 %v5670, 1.0
        %v5726 = vadd.f32 %v5710, 1.0
        %v5727 = vmul.f32 %v5039, %v5711
        %v5728 = vmul.f32 %v5040, %v5712
        %v5729 = vmul.f32 %v5041, %v5713
        %v5730 = vmul.f32 %v5042, %v5714
        %v5731 = vmul.f32 %v5043, %v5715
        %v5732 = vmul.f32 %v5044, %v5716
        %v5733 = vmul.f32 %v5045, %v5717
        %v5734 = vmul.f32 %v5046, %v5718
        %v5735 = vmul.f32 %v5047, %v5719
        %v5736 = vmul.f32 %v5048, %v5720
        %v5737 = vmul.f32 %v5049, %v5721
        %v5738 = vmul.f32 %v5050, %v5722
        %v5739 = vmul.f32 %v5051, %v5723
        %v5740 = vmul.f32 %v5052, %v5724
        %v5741 = vmul.f32 %v5053, %v5725
        %v5742 = vmul.f32 %v5054, %v5726
        %v5743 = vmul.f32 %v4888, %v5727
        %v5744 = vmul.f32 %v4917, %v5728
        %v5745 = vmul.f32 %v4890, %v5729
        %v5746 = vmul.f32 %v4919, %v5730
        %v5747 = vmul.f32 %v4893, %v5731
        %v5748 = vmul.f32 %v4922, %v5732
        %v5749 = vmul.f32 %v4895, %v5733
        %v5750 = vmul.f32 %v4924, %v5734
        %v5751 = vmul.f32 %v4898, %v5735
        %v5752 = vmul.f32 %v4927, %v5736
        %v5753 = vmul.f32 %v4900, %v5737
        %v5754 = vmul.f32 %v4929, %v5738
        %v5755 = vmul.f32 %v4903, %v5739
        %v5756 = vmul.f32 %v4932, %v5740
        %v5757 = vmul.f32 %v4905, %v5741
        %v5758 = vmul.f32 %v4934, %v5742
        %v5759 = vpack.c.bf16 %v5745, %v5743
        %v5760 = vpack.c.bf16 %v5746, %v5744
        %v5761 = vpack.c.bf16 %v5749, %v5747
        %v5762 = vpack.c.bf16 %v5750, %v5748
        %v5763 = vpack.c.bf16 %v5753, %v5751
        %v5764 = vpack.c.bf16 %v5754, %v5752
        %v5765 = vpack.c.bf16 %v5757, %v5755
        %v5766 = vpack.c.bf16 %v5758, %v5756
        %v5768 = vperm.slane %v4820, 0
        %v5802 = vunpack.c.l.b16 %v4788
        %v5803 = vunpack.c.l.b16 %v4789
        %v5804 = vunpack.c.l.b16 %v4790
        %v5805 = vunpack.c.l.b16 %v4791
        %v5806 = vunpack.c.l.b16 %v4792
        %v5807 = vunpack.c.l.b16 %v4793
        %v5808 = vunpack.c.l.b16 %v4794
        %v5809 = vunpack.c.l.b16 %v4795
        %v5810 = vunpack.c.l.b16 %v4796
        %v5811 = vunpack.c.l.b16 %v4797
        %v5812 = vunpack.c.l.b16 %v4798
        %v5813 = vunpack.c.l.b16 %v4799
        %v5814 = vunpack.c.l.b16 %v4800
        %v5815 = vunpack.c.l.b16 %v4801
        %v5816 = vunpack.c.l.b16 %v4802
        %v5817 = vunpack.c.l.b16 %v4803
        %v5818 = vunpack.c.l.b16 %v4804
        %v5819 = vunpack.c.l.b16 %v4805
        %v5820 = vunpack.c.l.b16 %v4806
        %v5821 = vunpack.c.l.b16 %v4807
        %v5822 = vunpack.c.l.b16 %v4808
        %v5823 = vunpack.c.l.b16 %v4809
        %v5824 = vunpack.c.l.b16 %v4810
        %v5825 = vunpack.c.l.b16 %v4811
        %v5826 = vunpack.c.l.b16 %v4812
        %v5827 = vunpack.c.l.b16 %v4813
        %v5828 = vunpack.c.l.b16 %v4814
        %v5829 = vunpack.c.l.b16 %v4815
        %v5830 = vunpack.c.l.b16 %v4816
        %v5831 = vunpack.c.l.b16 %v4817
        %v5832 = vunpack.c.l.b16 %v4818
        %v5833 = vunpack.c.l.b16 %v4819
        %v5834 = vpack.c.b16 %v5803, %v5802
        %v5835 = vpack.c.b16 %v5805, %v5804
        %v5836 = vpack.c.b16 %v5807, %v5806
        %v5837 = vpack.c.b16 %v5809, %v5808
        %v5838 = vpack.c.b16 %v5811, %v5810
        %v5839 = vpack.c.b16 %v5813, %v5812
        %v5840 = vpack.c.b16 %v5815, %v5814
        %v5841 = vpack.c.b16 %v5817, %v5816
        %v5842 = vpack.c.b16 %v5819, %v5818
        %v5843 = vpack.c.b16 %v5821, %v5820
        %v5844 = vpack.c.b16 %v5823, %v5822
        %v5845 = vpack.c.b16 %v5825, %v5824
        %v5846 = vpack.c.b16 %v5827, %v5826
        %v5847 = vpack.c.b16 %v5829, %v5828
        %v5848 = vpack.c.b16 %v5831, %v5830
        %v5849 = vpack.c.b16 %v5833, %v5832
        %5866 = vmatpush.bf16.msra.mxu0 %v5841
        %5867 = vmatpush.bf16.msra.mxu0 %v5840
        %5868 = vmatpush.bf16.msra.mxu0 %v5839
        %5869 = vmatpush.bf16.msra.mxu0 %v5838
        %5870 = vmatpush.bf16.msra.mxu0 %v5837
        %5871 = vmatpush.bf16.msra.mxu0 %v5836
        %5872 = vmatpush.bf16.msra.mxu0 %v5835
        %5873 = vmatpush.bf16.msra.mxu0 %v5834
        %5874 = vmatmul.bf16.gmra.mxu0 %v5759
        %v5875 = vpop.f32.mrf.mxu0
        %v5876 = vadd.f32 %v5768, %v5875
        %v5877 = vpop.f32.mrf.mxu0
        %v5878 = vadd.f32 %v5768, %v5877
        %5879 = vmatmul.bf16.gmra.mxu0 %v5761
        %v5880 = vpop.f32.mrf.mxu0
        %v5881 = vadd.f32 %v5768, %v5880
        %v5882 = vpop.f32.mrf.mxu0
        %v5883 = vadd.f32 %v5768, %v5882
        %5884 = vmatmul.bf16.gmra.mxu0 %v5763
        %v5885 = vpop.f32.mrf.mxu0
        %v5886 = vadd.f32 %v5768, %v5885
        %v5887 = vpop.f32.mrf.mxu0
        %v5888 = vadd.f32 %v5768, %v5887
        %5889 = vmatmul.bf16.gmra.mxu0 %v5765
        %v5890 = vpop.f32.mrf.mxu0
        %v5891 = vadd.f32 %v5768, %v5890
        %v5892 = vpop.f32.mrf.mxu0
        %v5893 = vadd.f32 %v5768, %v5892
        %5894 = vdwg.mxu0
        %5895 = vmatpush.bf16.msra.mxu0 %v5849
        %5896 = vmatpush.bf16.msra.mxu0 %v5848
        %5897 = vmatpush.bf16.msra.mxu0 %v5847
        %5898 = vmatpush.bf16.msra.mxu0 %v5846
        %5899 = vmatpush.bf16.msra.mxu0 %v5845
        %5900 = vmatpush.bf16.msra.mxu0 %v5844
        %5901 = vmatpush.bf16.msra.mxu0 %v5843
        %5902 = vmatpush.bf16.msra.mxu0 %v5842
        %5903 = vmatmul.bf16.gmra.mxu0 %v5760
        %v5904 = vpop.f32.mrf.mxu0
        %v5905 = vadd.f32 %v5876, %v5904
        %v5906 = vpop.f32.mrf.mxu0
        %v5907 = vadd.f32 %v5878, %v5906
        %5908 = vmatmul.bf16.gmra.mxu0 %v5762
        %v5909 = vpop.f32.mrf.mxu0
        %v5910 = vadd.f32 %v5881, %v5909
        %v5911 = vpop.f32.mrf.mxu0
        %v5912 = vadd.f32 %v5883, %v5911
        %5913 = vmatmul.bf16.gmra.mxu0 %v5764
        %v5914 = vpop.f32.mrf.mxu0
        %v5915 = vadd.f32 %v5886, %v5914
        %v5916 = vpop.f32.mrf.mxu0
        %v5917 = vadd.f32 %v5888, %v5916
        %5918 = vmatmul.bf16.gmra.mxu0 %v5766
        %v5919 = vpop.f32.mrf.mxu0
        %v5920 = vadd.f32 %v5891, %v5919
        %v5921 = vpop.f32.mrf.mxu0
        %v5922 = vadd.f32 %v5893, %v5921
        %5923 = vdwg.mxu0
        %v5924 = vadd.f32 %v5905, %v4558
        %v5925 = vadd.f32 %v5907, %v4559
        %v5926 = vadd.f32 %v5910, %v4560
        %v5927 = vadd.f32 %v5912, %v4561
        %v5928 = vadd.f32 %v5915, %v4562
        %v5929 = vadd.f32 %v5917, %v4563
        %v5930 = vadd.f32 %v5920, %v4564
        %v5931 = vadd.f32 %v5922, %v4565
        %v5932 = vpack.c.bf16 %v5925, %v5924
        %v5933 = vpack.c.bf16 %v5927, %v5926
        %v5934 = vpack.c.bf16 %v5929, %v5928
        %v5935 = vpack.c.bf16 %v5931, %v5930
        %v5936 = vld [vmem:[#allocation37] sm:$0xf]
        %v5937 = vld [vmem:[#allocation37 + $0x4] sm:$0xf]
        %v5938 = vld [vmem:[#allocation37 + $0x8] sm:$0xf]
        %v5939 = vld [vmem:[#allocation37 + $0xc] sm:$0xf]
        %v5940 = vld [vmem:[#allocation37 + $0x10] sm:$0xf]
        %v5941 = vld [vmem:[#allocation37 + $0x14] sm:$0xf]
        %v5942 = vld [vmem:[#allocation37 + $0x18] sm:$0xf]
        %v5943 = vld [vmem:[#allocation37 + $0x1c] sm:$0xf]
        %v5944 = vld [vmem:[%s61] sm:$0x1]
        %v5946 = vperm.slane %v5944, 0
        %v5956 = vunpack.c.l.b16 %v5936
        %v5957 = vunpack.c.l.b16 %v5937
        %v5958 = vunpack.c.l.b16 %v5938
        %v5959 = vunpack.c.l.b16 %v5939
        %v5960 = vunpack.c.l.b16 %v5940
        %v5961 = vunpack.c.l.b16 %v5941
        %v5962 = vunpack.c.l.b16 %v5942
        %v5963 = vunpack.c.l.b16 %v5943
        %v5964 = vpack.c.b16 %v5957, %v5956
        %v5965 = vpack.c.b16 %v5959, %v5958
        %v5966 = vpack.c.b16 %v5961, %v5960
        %v5967 = vpack.c.b16 %v5963, %v5962
        %v5973 = vsel %vm1382, %v5932, 0
        %v5976 = vsel %vm1382, %v5933, 0
        %v5979 = vsel %vm1382, %v5934, 0
        %v5982 = vsel %vm1382, %v5935, 0
        %5984 = vmatpush.bf16.msra.mxu0 0
        %5985 = vmatpush.bf16.msra.mxu0 0
        %5986 = vmatpush.bf16.msra.mxu0 0
        %5987 = vmatpush.bf16.msra.mxu0 0
        %5988 = vmatpush.bf16.msra.mxu0 %v5967
        %5989 = vmatpush.bf16.msra.mxu0 %v5966
        %5990 = vmatpush.bf16.msra.mxu0 %v5965
        %5991 = vmatpush.bf16.msra.mxu0 %v5964
        %5992 = vmatmul.bf16.gmra.mxu0 %v5973
        %v5993 = vpop.f32.mrf.mxu0
        %v5994 = vadd.f32 %v5946, %v5993
        %v5995 = vpop.f32.mrf.mxu0
        %v5996 = vadd.f32 %v5946, %v5995
        %5997 = vmatmul.bf16.gmra.mxu0 %v5976
        %v5998 = vpop.f32.mrf.mxu0
        %v5999 = vadd.f32 %v5946, %v5998
        %v6000 = vpop.f32.mrf.mxu0
        %v6001 = vadd.f32 %v5946, %v6000
        %6002 = vmatmul.bf16.gmra.mxu0 %v5979
        %v6003 = vpop.f32.mrf.mxu0
        %v6004 = vadd.f32 %v5946, %v6003
        %v6005 = vpop.f32.mrf.mxu0
        %v6006 = vadd.f32 %v5946, %v6005
        %6007 = vmatmul.bf16.gmra.mxu0 %v5982
        %v6008 = vpop.f32.mrf.mxu0
        %v6009 = vadd.f32 %v5946, %v6008
        %v6010 = vpop.f32.mrf.mxu0
        %v6011 = vadd.f32 %v5946, %v6010
        %6012 = vdwg.mxu0
        %v6013 = vadd.f32 %v5994, %v1362
        %v6014 = vadd.f32 %v5996, %v1363
        %v6015 = vadd.f32 %v5999, %v1364
        %v6016 = vadd.f32 %v6001, %v1365
        %v6017 = vadd.f32 %v6004, %v1366
        %v6018 = vadd.f32 %v6006, %v1367
        %v6019 = vadd.f32 %v6009, %v1368
        %v6020 = vadd.f32 %v6011, %v1369
        %6021 = vxpose.xlu0.b32.start [1/16] %v6013, 128
        %6022 = vxpose.xlu0.b32.cont [2/16] %v6014, 128
        %6023 = vxpose.xlu0.b32.cont [3/16] %v6015, 128
        %6024 = vxpose.xlu0.b32.cont [4/16] %v6016, 128
        %6025 = vxpose.xlu0.b32.cont [5/16] %v6017, 128
        %6026 = vxpose.xlu0.b32.cont [6/16] %v6018, 128
        %6027 = vxpose.xlu0.b32.cont [7/16] %v6019, 128
        %6028 = vxpose.xlu0.b32.cont [8/16] %v6020, 128
        %6029 = vxpose.xlu0.b32.cont [9/16] 0.0, 128
        %6030 = vxpose.xlu0.b32.cont [10/16] 0.0, 128
        %6031 = vxpose.xlu0.b32.cont [11/16] 0.0, 128
        %6032 = vxpose.xlu0.b32.cont [12/16] 0.0, 128
        %6033 = vxpose.xlu0.b32.cont [13/16] 0.0, 128
        %6034 = vxpose.xlu0.b32.cont [14/16] 0.0, 128
        %6035 = vxpose.xlu0.b32.cont [15/16] 0.0, 128
        %6036 = vxpose.xlu0.b32.end [16/16] 0.0, 128
        %v6037 = vpop.trf.xlu0
        %v6038 = vpop.trf.xlu0
        %v6039 = vpop.trf.xlu0
        %v6040 = vpop.trf.xlu0
        %v6041 = vpop.trf.xlu0
        %v6042 = vpop.trf.xlu0
        %v6043 = vpop.trf.xlu0
        %v6044 = vpop.trf.xlu0
        %v6045 = vpop.trf.xlu0
        %v6046 = vpop.trf.xlu0
        %v6047 = vpop.trf.xlu0
        %v6048 = vpop.trf.xlu0
        %v6049 = vpop.trf.xlu0
        %v6050 = vpop.trf.xlu0
        %v6051 = vpop.trf.xlu0
        %v6052 = vpop.trf.xlu0
        %6053 = vst.msk [vmem:[%s1331] sm:$0xff] %vm1382, %v6037
        %6054 = vst.msk [vmem:[%s1331 + $0x8] sm:$0xff] %vm1382, %v6038
        %6055 = vst.msk [vmem:[%s1331 + $0x10] sm:$0xff] %vm1382, %v6039
        %6056 = vst.msk [vmem:[%s1331 + $0x18] sm:$0xff] %vm1382, %v6040
        %6057 = vst.msk [vmem:[%s1331 + $0x20] sm:$0xff] %vm1382, %v6041
        %6058 = vst.msk [vmem:[%s1331 + $0x28] sm:$0xff] %vm1382, %v6042
        %6059 = vst.msk [vmem:[%s1331 + $0x30] sm:$0xff] %vm1382, %v6043
        %6060 = vst.msk [vmem:[%s1331 + $0x38] sm:$0xff] %vm1382, %v6044
        %s6061 = sand.u32 %s760, 1
        %s6062 = scalar_lea.sflag [#allocation4], %s6061
        %s6063 = sand.u32 %s760, 1
        %s6064 = smul.addr %s6063, 64
        %s6065 = scalar_lea.vmem [#allocation38], %s6064
        // Predicated region
        $region237: #{tpu_custom_call.1} parent=143 // pred_check
          %p6066 = pneg %p770
        $region238: #{tpu_custom_call.1} parent=143 // pred_check_branch
          %6068 = sbr.rel (%p6066) target = $region240
        $region239: #{tpu_custom_call.1} parent=143 // pred_region
          %6070 = vsyncadd %s6062, 0
          %s6071 = smul.addr %s91, 8
          %s6072 = smul.addr %s6071, 8
          %s6073 = scalar_lea.hbm %s63, %s6072
          %s6074 = sshll.u32 %s6065, 4
          %s6075 = int_to_ptr.vmem [resolvable:$true] %s6074
          %s6076 = sshll.u32 %s6073, 4
          %s6077 = int_to_ptr.hbm [resolvable:$true] %s6076
          %6082 = dma.vmem_to_hbm [thread:$0]  %s6075, 1024, %s6077, %s6062, 128, 128, 8
        $region240: #{tpu_custom_call.1} parent=143 // pred_fallthru
          _
      $region144: #{tpu_custom_call.1} parent=5 // pred_fallthru
        _
      %p6083 = scmp.le.s32.totalorder 2, %s86
      // Predicated region
      $region241: #{tpu_custom_call.1} parent=5 // pred_check
        %p6084 = pneg %p6083
      $region242: #{tpu_custom_call.1} parent=5 // pred_check_branch
        %6086 = sbr.rel (%p6084) target = $region244
      $region243: #{tpu_custom_call.1} parent=5 // pred_region
        %s6087 = ssub.s32 %s86, 2
        // Predicated region
        $region245: #{tpu_custom_call.1} parent=243 // pred_check
          %p6088 = pneg %p776
        $region246: #{tpu_custom_call.1} parent=243 // pred_check_branch
          %6090 = sbr.rel (%p6088) target = $region248
        $region247: #{tpu_custom_call.1} parent=243 // pred_region
          %s6091 = sand.u32 %s761, 1
          %s6092 = scalar_lea.sflag [#allocation4], %s6091
          %s6093 = sand.u32 %s761, 1
          %s6094 = smul.addr %s6093, 64
          %s6095 = scalar_lea.vmem [#allocation38], %s6094
          %6097 = dma.done %s6092, 1024
        $region248: #{tpu_custom_call.1} parent=243 // pred_fallthru
          _
      $region244: #{tpu_custom_call.1} parent=5 // pred_fallthru
        _
    $region6: #{tpu_custom_call.1} parent=1 // loop_footer
      %s90 = sadd.s32 1, %s86
    $region7: #{tpu_custom_call.1} parent=1 // loop_footer_branch
      %85 = sbr.rel target = $region3
    $region8: #{tpu_custom_call.1} parent=1 // loop_exit
      _
    %6098 = vsyncpa [#allocation3], 1
    %s6099 = scalar_lea.sflag [#allocation3], 1
    %6100 = vsyncpa %s6099, 1
    %6101 = vsyncpa [#allocation6], 1
    %6102 = vsyncpa [#allocation9], 1
    %6103 = vsyncpa [#allocation12], 1
    %6104 = vsyncpa [#allocation15], 1
    %6105 = vsyncpa [#allocation18], 1
    %6106 = vsyncpa [#allocation21], 1
    %6107 = vsyncpa [#allocation24], 1
    %6108 = vsyncpa [#allocation27], 1
    %6109 = vsyncpa [#allocation30], 1
    %6110 = vsyncpa [#allocation33], 1
    %6111 = vsyncpa [#allocation36], 1
    %6112 = vsyncpa [#allocation4], 1
    %s6113 = scalar_lea.sflag [#allocation4], 1
    %6114 = vsyncpa %s6113, 1

</llo_original>
